<compile_context>
chip_gen: v7x
topology: tpu7x:2x2x1
jax: 0.10.0
libtpu: 0.0.40
codegen_flags: <defaults>
</compile_context>

<pallas_src>
import functools

import jax
import jax.numpy as jnp
from jax import lax
from jax.experimental import pallas as pl
from jax.experimental.pallas import tpu as pltpu

GN_GROUPS = 32
GN_EPS = 1e-5
K = 5        # depthwise kernel size
STRIDE = 2
PAD = 2


def _round_up(x, m):
    return -(-x // m) * m


def _gn_affine(s1, s2, ind_cg, ind_gc, gamma, beta, inv_cnt):
    """Per-sample GroupNorm scale/shift from per-channel moments.

    s1, s2:  (B, C) per-channel sum / sum-of-squares over all spatial rows.
    ind_cg:  (C, G) 0/1 channel->group indicator (padded channels all-zero).
    ind_gc:  (G, C) its transpose (group->channel scatter-back).
    gamma, beta: (1, C) affine params (padding = 0).
    Returns scale, shift of shape (B, C) so that GN(x) = x*scale + shift.
    """
    hp = lax.Precision.HIGHEST  # keep the tiny stat matmuls f32-exact
    g_mean = jnp.dot(s1, ind_cg, precision=hp,
                     preferred_element_type=jnp.float32) * inv_cnt   # (B, G)
    g_msq = jnp.dot(s2, ind_cg, precision=hp,
                    preferred_element_type=jnp.float32) * inv_cnt    # (B, G)
    g_var = jnp.maximum(g_msq - g_mean * g_mean, 0.0)
    g_rstd = lax.rsqrt(g_var + GN_EPS)
    mean_c = jnp.dot(g_mean, ind_gc, precision=hp,
                     preferred_element_type=jnp.float32)             # (B, C)
    rstd_c = jnp.dot(g_rstd, ind_gc, precision=hp,
                     preferred_element_type=jnp.float32)             # (B, C)
    scale = rstd_c * gamma
    shift = beta - mean_c * scale
    return scale, shift


def _p6_kernel(x_ref, wdw_ref, g1_ref, b1_ref, w1_ref, g2_ref, b2_ref,
               i1cg_ref, i1gc_ref, i2cg_ref, i2gc_ref,
               out_ref, ydw_ref, *, H2, W2, TH, cpg_in, cpg_out):
    # x_ref:   (B, 4, Hp2, Wp2, C_in)  phase-decomposed, zero-padded NHWC input
    #          x_ref[b, 2*ph+pw, a, c, :] == padded_input[b, 2a+ph, 2c+pw, :]
    # wdw_ref: (K*K, C_in)             depthwise 5x5 weights, row = kh*K + kw
    # w1_ref:  (C_in, C_out_pad)       1x1 conv weights (zero-padded columns)
    # g*/b*:   (1, C)                  GroupNorm affine params (padding = 0)
    # i*_ref:  channel<->group indicator matrices (precomputed in wrapper)
    # out_ref: (B, H2*W2, C_out_pad)   lane-dense output slab
    # ydw_ref: (B, H2, W2, C_in)       VMEM scratch for the depthwise output
    B = x_ref.shape[0]
    C_in = x_ref.shape[-1]
    C_out_pad = out_ref.shape[-1]
    M = H2 * W2

    w_dw = wdw_ref[...]                     # (K*K, C_in), loaded once
    x_all = x_ref[...]                      # (B, 4, Hp2, Wp2, C_in)

    # Hoist the sublane (W) shifts out of the tap loop: ow in {0,1,2} only,
    # so at most 3 shifted slabs are materialized, once each.
    xw = [x_all[:, :, :, ow:ow + W2, :] for ow in range((K - 1) // 2 + 1)]

    # --- depthwise 5x5 / stride 2, row-tiled so acc stays ~vreg-resident -----
    s1 = jnp.zeros((B, C_in), jnp.float32)
    s2 = jnp.zeros((B, C_in), jnp.float32)
    for r0 in range(0, H2, TH):
        th = min(TH, H2 - r0)
        acc = jnp.zeros((B, th, W2, C_in), jnp.float32)
        for kh in range(K):
            ph, oh = kh % 2, kh // 2
            for kw in range(K):
                pw, ow = kw % 2, kw // 2
                # phase + row slice are non-layout dims -> cheap per-tap view
                tap = xw[ow][:, ph * 2 + pw, r0 + oh:r0 + oh + th, :, :]
                acc = acc + tap * w_dw[kh * K + kw][None, None, None, :]
        ydw_ref[:, r0:r0 + th, :, :] = acc              # single store per block
        s1 = s1 + jnp.sum(acc, axis=(1, 2))             # GN1 moments, per block
        s2 = s2 + jnp.sum(acc * acc, axis=(1, 2))

    # --- GroupNorm 1 + ReLU (lane-dense stats, no big reshape) ---------------
    scale1, shift1 = _gn_affine(s1, s2, i1cg_ref[...], i1gc_ref[...],
                                g1_ref[...], b1_ref[...],
                                1.0 / float(cpg_in * M))
    y = jnp.maximum(ydw_ref[...] * scale1[:, None, None, :]
                    + shift1[:, None, None, :], 0.0)    # (B, H2, W2, C_in)

    # --- 1x1 conv == one fat MXU matmul over all B*M rows --------------------
    mm_dtype = w1_ref.dtype
    prec = (lax.Precision.HIGHEST if mm_dtype == jnp.float32
            else lax.Precision.DEFAULT)
    y2 = jnp.dot(y.reshape(B * M, C_in).astype(mm_dtype), w1_ref[...],
                 precision=prec,
                 preferred_element_type=jnp.float32).reshape(B, M, C_out_pad)

    # --- GroupNorm 2 + ReLU (padded channels masked out of the stats) --------
    s1b = jnp.sum(y2, axis=1)
    s2b = jnp.sum(y2 * y2, axis=1)
    scale2, shift2 = _gn_affine(s1b, s2b, i2cg_ref[...], i2gc_ref[...],
                                g2_ref[...], b2_ref[...],
                                1.0 / float(cpg_out * M))
    out_ref[...] = jnp.maximum(y2 * scale2[:, None, :] + shift2[:, None, :],
                               0.0).astype(out_ref.dtype)


def _group_indicator(c_pad, c_real, groups):
    """(c_pad, groups) 0/1 indicator; channels >= c_real map to no group."""
    cpg = c_real // groups
    ch = jnp.arange(c_pad, dtype=jnp.int32)[:, None]
    gr = jnp.arange(groups, dtype=jnp.int32)[None, :]
    return jnp.where((ch // cpg == gr) & (ch < c_real), 1.0, 0.0
                     ).astype(jnp.float32)


def last_level_p6_dw(p5_nchw, params, *, matmul_dtype=jnp.float32):
    """Pallas implementation of LastLevelP6DW.forward. Returns [p6] in NCHW."""
    wdw, g1, b1, w1, g2, b2 = params
    N, C_in, H, W = p5_nchw.shape
    C_out = w1.shape[1]
    assert C_in % GN_GROUPS == 0 and C_out % GN_GROUPS == 0, \
        "GroupNorm(32) requires channel counts divisible by 32"
    H2 = (H + 2 * PAD - K) // STRIDE + 1
    W2 = (W + 2 * PAD - K) // STRIDE + 1
    M = H2 * W2

    # padded, even spatial extents of the 2x2-phase decomposition
    Hp2 = -(-(H + 2 * PAD) // 2)
    Wp2 = -(-(W + 2 * PAD) // 2)

    # lane-dense output channels (unmasked stores)
    C_out_pad = _round_up(C_out, 128)

    # samples per grid step: fatten the 1x1 matmul (target >= 512 rows), but
    # keep >= 2 "parallel" grid steps when N >= 2 (v7x megacore).
    B = max(1, min(N, -(-512 // M)))
    steps = -(-N // B)
    if steps == 1 and N >= 2:
        B = -(-N // 2)
        steps = 2
    N_pad = steps * B

    # in-kernel row-tile height: keep the 25-tap accumulator ~vreg-resident
    # (~8K f32 elements across the B samples of one grid step).
    TH = max(1, min(H2, 8192 // max(1, B * W2 * C_in)))

    # --- wrapper glue: pad + stride-2 phase decomposition + NHWC -------------
    x = jnp.pad(p5_nchw.astype(jnp.float32),
                ((0, N_pad - N), (0, 0),
                 (PAD, 2 * Hp2 - H - PAD), (PAD, 2 * Wp2 - W - PAD)))
    x = x.reshape(N_pad, C_in, Hp2, 2, Wp2, 2)
    x = jnp.transpose(x, (0, 3, 5, 2, 4, 1))          # (N_pad, 2, 2, Hp2, Wp2, C)
    x = x.reshape(N_pad, 4, Hp2, Wp2, C_in)

    wdw_flat = wdw.reshape(K * K, C_in).astype(jnp.float32)
    w1_p = jnp.pad(w1, ((0, 0), (0, C_out_pad - C_out))).astype(matmul_dtype)
    g2_p = jnp.pad(g2, ((0, 0), (0, C_out_pad - C_out)))
    b2_p = jnp.pad(b2, ((0, 0), (0, C_out_pad - C_out)))

    ind1_cg = _group_indicator(C_in, C_in, GN_GROUPS)
    ind1_gc = ind1_cg.T
    ind2_cg = _group_indicator(C_out_pad, C_out, GN_GROUPS)
    ind2_gc = ind2_cg.T

    kernel = functools.partial(_p6_kernel, H2=H2, W2=W2, TH=TH,
                               cpg_in=C_in // GN_GROUPS,
                               cpg_out=C_out // GN_GROUPS)

    fixed = lambda s: (0, 0)
    out = pl.pallas_call(
        kernel,
        out_shape=jax.ShapeDtypeStruct((N_pad, M, C_out_pad), jnp.float32),
        grid_spec=pltpu.PrefetchScalarGridSpec(
            num_scalar_prefetch=0,
            grid=(steps,),
            in_specs=[
                pl.BlockSpec((B, 4, Hp2, Wp2, C_in), lambda s: (s, 0, 0, 0, 0)),
                pl.BlockSpec((K * K, C_in), fixed),
                pl.BlockSpec((1, C_in), fixed),
                pl.BlockSpec((1, C_in), fixed),
                pl.BlockSpec((C_in, C_out_pad), fixed),
                pl.BlockSpec((1, C_out_pad), fixed),
                pl.BlockSpec((1, C_out_pad), fixed),
                pl.BlockSpec((C_in, GN_GROUPS), fixed),
                pl.BlockSpec((GN_GROUPS, C_in), fixed),
                pl.BlockSpec((C_out_pad, GN_GROUPS), fixed),
                pl.BlockSpec((GN_GROUPS, C_out_pad), fixed),
            ],
            out_specs=pl.BlockSpec((B, M, C_out_pad), lambda s: (s, 0, 0)),
            scratch_shapes=[pltpu.VMEM((B, H2, W2, C_in), jnp.float32)],
        ),
        compiler_params=pltpu.CompilerParams(
            dimension_semantics=("parallel",),
            vmem_limit_bytes=64 * 1024 * 1024),
    )(x, wdw_flat, g1, b1, w1_p, g2_p, b2_p,
      ind1_cg, ind1_gc, ind2_cg, ind2_gc)

    # slice away batch/channel padding, back to NCHW
    p6 = out[:N, :, :C_out].reshape(N, H2, W2, C_out)
    p6 = jnp.transpose(p6, (0, 3, 1, 2))
    return [p6]


# ---------------- pure-JAX reference (for correctness check) ----------------

def _gn_nchw(x, gamma, beta, groups, eps=GN_EPS):
    N, C, H, W = x.shape
    xg = x.reshape(N, groups, C // groups, H, W)
    mean = jnp.mean(xg, axis=(2, 3, 4), keepdims=True)
    var = jnp.mean(jnp.square(xg - mean), axis=(2, 3, 4), keepdims=True)
    xn = ((xg - mean) * lax.rsqrt(var + eps)).reshape(N, C, H, W)
    return xn * gamma[None, :, None, None] + beta[None, :, None, None]


def reference(p5, params):
    wdw, g1, b1, w1, g2, b2 = params
    N, C_in, H, W = p5.shape
    w_dw = jnp.transpose(wdw, (2, 0, 1))[:, None, :, :]        # (C_in,1,5,5) OIHW
    y = lax.conv_general_dilated(
        p5, w_dw, (STRIDE, STRIDE), [(PAD, PAD), (PAD, PAD)],
        feature_group_count=C_in,
        dimension_numbers=("NCHW", "OIHW", "NCHW"),
        precision=lax.Precision.HIGHEST)
    y = jnp.maximum(_gn_nchw(y, g1[0], b1[0], GN_GROUPS), 0.0)
    w_pw = jnp.transpose(w1, (1, 0))[:, :, None, None]         # (C_out,C_in,1,1)
    z = lax.conv_general_dilated(
        y, w_pw, (1, 1), [(0, 0), (0, 0)],
        dimension_numbers=("NCHW", "OIHW", "NCHW"),
        precision=lax.Precision.HIGHEST)
    z = jnp.maximum(_gn_nchw(z, g2[0], b2[0], GN_GROUPS), 0.0)
    return [z]


# ---------------------------------------------------------------------------

def make_params(key, c_in, c_out):
    """Deterministic synthetic init mirroring c2_msra_fill (kaiming fan_out)."""
    k1, k2, k3, k4, k5, k6 = jax.random.split(key, 6)
    # depthwise conv: fan_out = (C_out/groups)*K*K = K*K
    std_dw = (2.0 / (K * K)) ** 0.5
    wdw = jax.random.normal(k1, (K, K, c_in), jnp.float32) * std_dw
    # 1x1 conv: fan_out = C_out
    std_pw = (2.0 / c_out) ** 0.5
    w1 = jax.random.normal(k2, (c_in, c_out), jnp.float32) * std_pw
    # GN affine (default init is gamma=1, beta=0; perturb to exercise the path)
    g1 = 1.0 + 0.1 * jax.random.normal(k3, (1, c_in), jnp.float32)
    b1 = 0.1 * jax.random.normal(k4, (1, c_in), jnp.float32)
    g2 = 1.0 + 0.1 * jax.random.normal(k5, (1, c_out), jnp.float32)
    b2 = 0.1 * jax.random.normal(k6, (1, c_out), jnp.float32)
    return (wdw, g1, b1, w1, g2, b2)


if __name__ == "__main__":
    # GN uses 32 groups (detectron2 get_norm('GN', C) == GroupNorm(32, C)),
    # so channels must be multiples of 32.
    N, C_IN, C_OUT, H, W = 2, 32, 64, 16, 16

    key = jax.random.PRNGKey(0)
    kx, kp = jax.random.split(key)
    p5 = jax.random.normal(kx, (N, C_IN, H, W), jnp.float32)
    params = make_params(kp, C_IN, C_OUT)

    ref = reference(p5, params)
    ref = [jax.block_until_ready(r) for r in ref]

    # faithful f32 MXU path
    out = last_level_p6_dw(p5, params)
    out = [jax.block_until_ready(o) for o in out]
    assert out[0].shape == (N, C_OUT, H // 2, W // 2), out[0].shape
    max_err = float(jnp.max(jnp.abs(out[0] - ref[0])))
    assert jnp.allclose(out[0], ref[0], rtol=2e-3, atol=2e-3), max_err

    # bf16 MXU path (perf option for v5e/v6e/v7x) -- looser tolerance
    out_bf = last_level_p6_dw(p5, params, matmul_dtype=jnp.bfloat16)
    out_bf = [jax.block_until_ready(o) for o in out_bf]
    max_err_bf = float(jnp.max(jnp.abs(out_bf[0] - ref[0])))
    assert jnp.allclose(out_bf[0], ref[0], rtol=5e-2, atol=5e-2), max_err_bf

    print("KERNEL_OK")
</pallas_src>

<mosaic_0001>
module attributes {stable_mosaic.version = 11 : i64} {
  func.func @_p6_kernel(%arg0: i32, %arg1: memref<1x4x10x10x32xf32, #tpu.memory_space<vmem>>, %arg2: memref<25x32xf32, #tpu.memory_space<vmem>>, %arg3: memref<1x32xf32, #tpu.memory_space<vmem>>, %arg4: memref<1x32xf32, #tpu.memory_space<vmem>>, %arg5: memref<32x128xf32, #tpu.memory_space<vmem>>, %arg6: memref<1x128xf32, #tpu.memory_space<vmem>>, %arg7: memref<1x128xf32, #tpu.memory_space<vmem>>, %arg8: memref<32x32xf32, #tpu.memory_space<vmem>>, %arg9: memref<32x32xf32, #tpu.memory_space<vmem>>, %arg10: memref<128x32xf32, #tpu.memory_space<vmem>>, %arg11: memref<32x128xf32, #tpu.memory_space<vmem>>, %arg12: memref<1x64x128xf32, #tpu.memory_space<vmem>>, %arg13: memref<1x8x8x32xf32, #tpu.memory_space<vmem>>) attributes {dimension_semantics = [#tpu.dimension_semantics<parallel>], iteration_bounds = array<i64: 2>, scalar_prefetch = 0 : i64, scratch_operands = 1 : i64, tpu.core_type = #tpu.core_type<tc>, window_params = [{transform_indices = @transform_0, window_bounds = array<i64: 1, 4, 10, 10, 32>}, {pipeline_mode = #tpu.pipeline_mode<synchronous>, transform_indices = @transform_1, window_bounds = array<i64: 25, 32>}, {pipeline_mode = #tpu.pipeline_mode<synchronous>, transform_indices = @transform_2, window_bounds = array<i64: 1, 32>}, {pipeline_mode = #tpu.pipeline_mode<synchronous>, transform_indices = @transform_3, window_bounds = array<i64: 1, 32>}, {pipeline_mode = #tpu.pipeline_mode<synchronous>, transform_indices = @transform_4, window_bounds = array<i64: 32, 128>}, {pipeline_mode = #tpu.pipeline_mode<synchronous>, transform_indices = @transform_5, window_bounds = array<i64: 1, 128>}, {pipeline_mode = #tpu.pipeline_mode<synchronous>, transform_indices = @transform_6, window_bounds = array<i64: 1, 128>}, {pipeline_mode = #tpu.pipeline_mode<synchronous>, transform_indices = @transform_7, window_bounds = array<i64: 32, 32>}, {pipeline_mode = #tpu.pipeline_mode<synchronous>, transform_indices = @transform_8, window_bounds = array<i64: 32, 32>}, {pipeline_mode = #tpu.pipeline_mode<synchronous>, transform_indices = @transform_9, window_bounds = array<i64: 128, 32>}, {pipeline_mode = #tpu.pipeline_mode<synchronous>, transform_indices = @transform_10, window_bounds = array<i64: 32, 128>}, {transform_indices = @transform_11, window_bounds = array<i64: 1, 64, 128>}]} {
    %c0 = arith.constant 0 : index
    %c0_0 = arith.constant 0 : index
    %0 = vector.load %arg2[%c0, %c0_0] : memref<25x32xf32, #tpu.memory_space<vmem>>, vector<25x32xf32>
    %c0_1 = arith.constant 0 : index
    %c0_2 = arith.constant 0 : index
    %c0_3 = arith.constant 0 : index
    %c0_4 = arith.constant 0 : index
    %c0_5 = arith.constant 0 : index
    %1 = vector.load %arg1[%c0_1, %c0_2, %c0_3, %c0_4, %c0_5] : memref<1x4x10x10x32xf32, #tpu.memory_space<vmem>>, vector<1x4x10x10x32xf32>
    %2 = vector.extract_strided_slice %1 {offsets = [0, 0, 0, 0, 0], sizes = [1, 4, 10, 8, 32], strides = [1, 1, 1, 1, 1]} : vector<1x4x10x10x32xf32> to vector<1x4x10x8x32xf32>
    %3 = vector.extract_strided_slice %1 {offsets = [0, 0, 0, 1, 0], sizes = [1, 4, 10, 8, 32], strides = [1, 1, 1, 1, 1]} : vector<1x4x10x10x32xf32> to vector<1x4x10x8x32xf32>
    %4 = vector.extract_strided_slice %1 {offsets = [0, 0, 0, 2, 0], sizes = [1, 4, 10, 8, 32], strides = [1, 1, 1, 1, 1]} : vector<1x4x10x10x32xf32> to vector<1x4x10x8x32xf32>
    %cst = arith.constant 0.000000e+00 : f32
    %5 = vector.broadcast %cst : f32 to vector<1x32xf32>
    %cst_6 = arith.constant 0.000000e+00 : f32
    %6 = vector.broadcast %cst_6 : f32 to vector<1x32xf32>
    %cst_7 = arith.constant 0.000000e+00 : f32
    %7 = vector.broadcast %cst_7 : f32 to vector<1x8x8x32xf32>
    %8 = vector.extract_strided_slice %2 {offsets = [0, 0, 0, 0, 0], sizes = [1, 1, 8, 8, 32], strides = [1, 1, 1, 1, 1]} : vector<1x4x10x8x32xf32> to vector<1x1x8x8x32xf32>
    %9 = vector.shape_cast %8 : vector<1x1x8x8x32xf32> to vector<1x8x8x32xf32>
    %10 = vector.extract_strided_slice %0 {offsets = [0, 0], sizes = [1, 32], strides = [1, 1]} : vector<25x32xf32> to vector<1x32xf32>
    %11 = vector.shape_cast %10 : vector<1x32xf32> to vector<32xf32>
    %12 = vector.shape_cast %11 : vector<32xf32> to vector<1x1x1x32xf32>
    %13 = vector.broadcast %12 : vector<1x1x1x32xf32> to vector<1x8x8x32xf32>
    %14 = arith.mulf %9, %13 : vector<1x8x8x32xf32>
    %15 = arith.addf %7, %14 : vector<1x8x8x32xf32>
    %16 = vector.extract_strided_slice %2 {offsets = [0, 1, 0, 0, 0], sizes = [1, 1, 8, 8, 32], strides = [1, 1, 1, 1, 1]} : vector<1x4x10x8x32xf32> to vector<1x1x8x8x32xf32>
    %17 = vector.shape_cast %16 : vector<1x1x8x8x32xf32> to vector<1x8x8x32xf32>
    %18 = vector.extract_strided_slice %0 {offsets = [1, 0], sizes = [1, 32], strides = [1, 1]} : vector<25x32xf32> to vector<1x32xf32>
    %19 = vector.shape_cast %18 : vector<1x32xf32> to vector<32xf32>
    %20 = vector.shape_cast %19 : vector<32xf32> to vector<1x1x1x32xf32>
    %21 = vector.broadcast %20 : vector<1x1x1x32xf32> to vector<1x8x8x32xf32>
    %22 = arith.mulf %17, %21 : vector<1x8x8x32xf32>
    %23 = arith.addf %15, %22 : vector<1x8x8x32xf32>
    %24 = vector.extract_strided_slice %3 {offsets = [0, 0, 0, 0, 0], sizes = [1, 1, 8, 8, 32], strides = [1, 1, 1, 1, 1]} : vector<1x4x10x8x32xf32> to vector<1x1x8x8x32xf32>
    %25 = vector.shape_cast %24 : vector<1x1x8x8x32xf32> to vector<1x8x8x32xf32>
    %26 = vector.extract_strided_slice %0 {offsets = [2, 0], sizes = [1, 32], strides = [1, 1]} : vector<25x32xf32> to vector<1x32xf32>
    %27 = vector.shape_cast %26 : vector<1x32xf32> to vector<32xf32>
    %28 = vector.shape_cast %27 : vector<32xf32> to vector<1x1x1x32xf32>
    %29 = vector.broadcast %28 : vector<1x1x1x32xf32> to vector<1x8x8x32xf32>
    %30 = arith.mulf %25, %29 : vector<1x8x8x32xf32>
    %31 = arith.addf %23, %30 : vector<1x8x8x32xf32>
    %32 = vector.extract_strided_slice %3 {offsets = [0, 1, 0, 0, 0], sizes = [1, 1, 8, 8, 32], strides = [1, 1, 1, 1, 1]} : vector<1x4x10x8x32xf32> to vector<1x1x8x8x32xf32>
    %33 = vector.shape_cast %32 : vector<1x1x8x8x32xf32> to vector<1x8x8x32xf32>
    %34 = vector.extract_strided_slice %0 {offsets = [3, 0], sizes = [1, 32], strides = [1, 1]} : vector<25x32xf32> to vector<1x32xf32>
    %35 = vector.shape_cast %34 : vector<1x32xf32> to vector<32xf32>
    %36 = vector.shape_cast %35 : vector<32xf32> to vector<1x1x1x32xf32>
    %37 = vector.broadcast %36 : vector<1x1x1x32xf32> to vector<1x8x8x32xf32>
    %38 = arith.mulf %33, %37 : vector<1x8x8x32xf32>
    %39 = arith.addf %31, %38 : vector<1x8x8x32xf32>
    %40 = vector.extract_strided_slice %4 {offsets = [0, 0, 0, 0, 0], sizes = [1, 1, 8, 8, 32], strides = [1, 1, 1, 1, 1]} : vector<1x4x10x8x32xf32> to vector<1x1x8x8x32xf32>
    %41 = vector.shape_cast %40 : vector<1x1x8x8x32xf32> to vector<1x8x8x32xf32>
    %42 = vector.extract_strided_slice %0 {offsets = [4, 0], sizes = [1, 32], strides = [1, 1]} : vector<25x32xf32> to vector<1x32xf32>
    %43 = vector.shape_cast %42 : vector<1x32xf32> to vector<32xf32>
    %44 = vector.shape_cast %43 : vector<32xf32> to vector<1x1x1x32xf32>
    %45 = vector.broadcast %44 : vector<1x1x1x32xf32> to vector<1x8x8x32xf32>
    %46 = arith.mulf %41, %45 : vector<1x8x8x32xf32>
    %47 = arith.addf %39, %46 : vector<1x8x8x32xf32>
    %48 = vector.extract_strided_slice %2 {offsets = [0, 2, 0, 0, 0], sizes = [1, 1, 8, 8, 32], strides = [1, 1, 1, 1, 1]} : vector<1x4x10x8x32xf32> to vector<1x1x8x8x32xf32>
    %49 = vector.shape_cast %48 : vector<1x1x8x8x32xf32> to vector<1x8x8x32xf32>
    %50 = vector.extract_strided_slice %0 {offsets = [5, 0], sizes = [1, 32], strides = [1, 1]} : vector<25x32xf32> to vector<1x32xf32>
    %51 = vector.shape_cast %50 : vector<1x32xf32> to vector<32xf32>
    %52 = vector.shape_cast %51 : vector<32xf32> to vector<1x1x1x32xf32>
    %53 = vector.broadcast %52 : vector<1x1x1x32xf32> to vector<1x8x8x32xf32>
    %54 = arith.mulf %49, %53 : vector<1x8x8x32xf32>
    %55 = arith.addf %47, %54 : vector<1x8x8x32xf32>
    %56 = vector.extract_strided_slice %2 {offsets = [0, 3, 0, 0, 0], sizes = [1, 1, 8, 8, 32], strides = [1, 1, 1, 1, 1]} : vector<1x4x10x8x32xf32> to vector<1x1x8x8x32xf32>
    %57 = vector.shape_cast %56 : vector<1x1x8x8x32xf32> to vector<1x8x8x32xf32>
    %58 = vector.extract_strided_slice %0 {offsets = [6, 0], sizes = [1, 32], strides = [1, 1]} : vector<25x32xf32> to vector<1x32xf32>
    %59 = vector.shape_cast %58 : vector<1x32xf32> to vector<32xf32>
    %60 = vector.shape_cast %59 : vector<32xf32> to vector<1x1x1x32xf32>
    %61 = vector.broadcast %60 : vector<1x1x1x32xf32> to vector<1x8x8x32xf32>
    %62 = arith.mulf %57, %61 : vector<1x8x8x32xf32>
    %63 = arith.addf %55, %62 : vector<1x8x8x32xf32>
    %64 = vector.extract_strided_slice %3 {offsets = [0, 2, 0, 0, 0], sizes = [1, 1, 8, 8, 32], strides = [1, 1, 1, 1, 1]} : vector<1x4x10x8x32xf32> to vector<1x1x8x8x32xf32>
    %65 = vector.shape_cast %64 : vector<1x1x8x8x32xf32> to vector<1x8x8x32xf32>
    %66 = vector.extract_strided_slice %0 {offsets = [7, 0], sizes = [1, 32], strides = [1, 1]} : vector<25x32xf32> to vector<1x32xf32>
    %67 = vector.shape_cast %66 : vector<1x32xf32> to vector<32xf32>
    %68 = vector.shape_cast %67 : vector<32xf32> to vector<1x1x1x32xf32>
    %69 = vector.broadcast %68 : vector<1x1x1x32xf32> to vector<1x8x8x32xf32>
    %70 = arith.mulf %65, %69 : vector<1x8x8x32xf32>
    %71 = arith.addf %63, %70 : vector<1x8x8x32xf32>
    %72 = vector.extract_strided_slice %3 {offsets = [0, 3, 0, 0, 0], sizes = [1, 1, 8, 8, 32], strides = [1, 1, 1, 1, 1]} : vector<1x4x10x8x32xf32> to vector<1x1x8x8x32xf32>
    %73 = vector.shape_cast %72 : vector<1x1x8x8x32xf32> to vector<1x8x8x32xf32>
    %74 = vector.extract_strided_slice %0 {offsets = [8, 0], sizes = [1, 32], strides = [1, 1]} : vector<25x32xf32> to vector<1x32xf32>
    %75 = vector.shape_cast %74 : vector<1x32xf32> to vector<32xf32>
    %76 = vector.shape_cast %75 : vector<32xf32> to vector<1x1x1x32xf32>
    %77 = vector.broadcast %76 : vector<1x1x1x32xf32> to vector<1x8x8x32xf32>
    %78 = arith.mulf %73, %77 : vector<1x8x8x32xf32>
    %79 = arith.addf %71, %78 : vector<1x8x8x32xf32>
    %80 = vector.extract_strided_slice %4 {offsets = [0, 2, 0, 0, 0], sizes = [1, 1, 8, 8, 32], strides = [1, 1, 1, 1, 1]} : vector<1x4x10x8x32xf32> to vector<1x1x8x8x32xf32>
    %81 = vector.shape_cast %80 : vector<1x1x8x8x32xf32> to vector<1x8x8x32xf32>
    %82 = vector.extract_strided_slice %0 {offsets = [9, 0], sizes = [1, 32], strides = [1, 1]} : vector<25x32xf32> to vector<1x32xf32>
    %83 = vector.shape_cast %82 : vector<1x32xf32> to vector<32xf32>
    %84 = vector.shape_cast %83 : vector<32xf32> to vector<1x1x1x32xf32>
    %85 = vector.broadcast %84 : vector<1x1x1x32xf32> to vector<1x8x8x32xf32>
    %86 = arith.mulf %81, %85 : vector<1x8x8x32xf32>
    %87 = arith.addf %79, %86 : vector<1x8x8x32xf32>
    %88 = vector.extract_strided_slice %2 {offsets = [0, 0, 1, 0, 0], sizes = [1, 1, 8, 8, 32], strides = [1, 1, 1, 1, 1]} : vector<1x4x10x8x32xf32> to vector<1x1x8x8x32xf32>
    %89 = vector.shape_cast %88 : vector<1x1x8x8x32xf32> to vector<1x8x8x32xf32>
    %90 = vector.extract_strided_slice %0 {offsets = [10, 0], sizes = [1, 32], strides = [1, 1]} : vector<25x32xf32> to vector<1x32xf32>
    %91 = vector.shape_cast %90 : vector<1x32xf32> to vector<32xf32>
    %92 = vector.shape_cast %91 : vector<32xf32> to vector<1x1x1x32xf32>
    %93 = vector.broadcast %92 : vector<1x1x1x32xf32> to vector<1x8x8x32xf32>
    %94 = arith.mulf %89, %93 : vector<1x8x8x32xf32>
    %95 = arith.addf %87, %94 : vector<1x8x8x32xf32>
    %96 = vector.extract_strided_slice %2 {offsets = [0, 1, 1, 0, 0], sizes = [1, 1, 8, 8, 32], strides = [1, 1, 1, 1, 1]} : vector<1x4x10x8x32xf32> to vector<1x1x8x8x32xf32>
    %97 = vector.shape_cast %96 : vector<1x1x8x8x32xf32> to vector<1x8x8x32xf32>
    %98 = vector.extract_strided_slice %0 {offsets = [11, 0], sizes = [1, 32], strides = [1, 1]} : vector<25x32xf32> to vector<1x32xf32>
    %99 = vector.shape_cast %98 : vector<1x32xf32> to vector<32xf32>
    %100 = vector.shape_cast %99 : vector<32xf32> to vector<1x1x1x32xf32>
    %101 = vector.broadcast %100 : vector<1x1x1x32xf32> to vector<1x8x8x32xf32>
    %102 = arith.mulf %97, %101 : vector<1x8x8x32xf32>
    %103 = arith.addf %95, %102 : vector<1x8x8x32xf32>
    %104 = vector.extract_strided_slice %3 {offsets = [0, 0, 1, 0, 0], sizes = [1, 1, 8, 8, 32], strides = [1, 1, 1, 1, 1]} : vector<1x4x10x8x32xf32> to vector<1x1x8x8x32xf32>
    %105 = vector.shape_cast %104 : vector<1x1x8x8x32xf32> to vector<1x8x8x32xf32>
    %106 = vector.extract_strided_slice %0 {offsets = [12, 0], sizes = [1, 32], strides = [1, 1]} : vector<25x32xf32> to vector<1x32xf32>
    %107 = vector.shape_cast %106 : vector<1x32xf32> to vector<32xf32>
    %108 = vector.shape_cast %107 : vector<32xf32> to vector<1x1x1x32xf32>
    %109 = vector.broadcast %108 : vector<1x1x1x32xf32> to vector<1x8x8x32xf32>
    %110 = arith.mulf %105, %109 : vector<1x8x8x32xf32>
    %111 = arith.addf %103, %110 : vector<1x8x8x32xf32>
    %112 = vector.extract_strided_slice %3 {offsets = [0, 1, 1, 0, 0], sizes = [1, 1, 8, 8, 32], strides = [1, 1, 1, 1, 1]} : vector<1x4x10x8x32xf32> to vector<1x1x8x8x32xf32>
    %113 = vector.shape_cast %112 : vector<1x1x8x8x32xf32> to vector<1x8x8x32xf32>
    %114 = vector.extract_strided_slice %0 {offsets = [13, 0], sizes = [1, 32], strides = [1, 1]} : vector<25x32xf32> to vector<1x32xf32>
    %115 = vector.shape_cast %114 : vector<1x32xf32> to vector<32xf32>
    %116 = vector.shape_cast %115 : vector<32xf32> to vector<1x1x1x32xf32>
    %117 = vector.broadcast %116 : vector<1x1x1x32xf32> to vector<1x8x8x32xf32>
    %118 = arith.mulf %113, %117 : vector<1x8x8x32xf32>
    %119 = arith.addf %111, %118 : vector<1x8x8x32xf32>
    %120 = vector.extract_strided_slice %4 {offsets = [0, 0, 1, 0, 0], sizes = [1, 1, 8, 8, 32], strides = [1, 1, 1, 1, 1]} : vector<1x4x10x8x32xf32> to vector<1x1x8x8x32xf32>
    %121 = vector.shape_cast %120 : vector<1x1x8x8x32xf32> to vector<1x8x8x32xf32>
    %122 = vector.extract_strided_slice %0 {offsets = [14, 0], sizes = [1, 32], strides = [1, 1]} : vector<25x32xf32> to vector<1x32xf32>
    %123 = vector.shape_cast %122 : vector<1x32xf32> to vector<32xf32>
    %124 = vector.shape_cast %123 : vector<32xf32> to vector<1x1x1x32xf32>
    %125 = vector.broadcast %124 : vector<1x1x1x32xf32> to vector<1x8x8x32xf32>
    %126 = arith.mulf %121, %125 : vector<1x8x8x32xf32>
    %127 = arith.addf %119, %126 : vector<1x8x8x32xf32>
    %128 = vector.extract_strided_slice %2 {offsets = [0, 2, 1, 0, 0], sizes = [1, 1, 8, 8, 32], strides = [1, 1, 1, 1, 1]} : vector<1x4x10x8x32xf32> to vector<1x1x8x8x32xf32>
    %129 = vector.shape_cast %128 : vector<1x1x8x8x32xf32> to vector<1x8x8x32xf32>
    %130 = vector.extract_strided_slice %0 {offsets = [15, 0], sizes = [1, 32], strides = [1, 1]} : vector<25x32xf32> to vector<1x32xf32>
    %131 = vector.shape_cast %130 : vector<1x32xf32> to vector<32xf32>
    %132 = vector.shape_cast %131 : vector<32xf32> to vector<1x1x1x32xf32>
    %133 = vector.broadcast %132 : vector<1x1x1x32xf32> to vector<1x8x8x32xf32>
    %134 = arith.mulf %129, %133 : vector<1x8x8x32xf32>
    %135 = arith.addf %127, %134 : vector<1x8x8x32xf32>
    %136 = vector.extract_strided_slice %2 {offsets = [0, 3, 1, 0, 0], sizes = [1, 1, 8, 8, 32], strides = [1, 1, 1, 1, 1]} : vector<1x4x10x8x32xf32> to vector<1x1x8x8x32xf32>
    %137 = vector.shape_cast %136 : vector<1x1x8x8x32xf32> to vector<1x8x8x32xf32>
    %138 = vector.extract_strided_slice %0 {offsets = [16, 0], sizes = [1, 32], strides = [1, 1]} : vector<25x32xf32> to vector<1x32xf32>
    %139 = vector.shape_cast %138 : vector<1x32xf32> to vector<32xf32>
    %140 = vector.shape_cast %139 : vector<32xf32> to vector<1x1x1x32xf32>
    %141 = vector.broadcast %140 : vector<1x1x1x32xf32> to vector<1x8x8x32xf32>
    %142 = arith.mulf %137, %141 : vector<1x8x8x32xf32>
    %143 = arith.addf %135, %142 : vector<1x8x8x32xf32>
    %144 = vector.extract_strided_slice %3 {offsets = [0, 2, 1, 0, 0], sizes = [1, 1, 8, 8, 32], strides = [1, 1, 1, 1, 1]} : vector<1x4x10x8x32xf32> to vector<1x1x8x8x32xf32>
    %145 = vector.shape_cast %144 : vector<1x1x8x8x32xf32> to vector<1x8x8x32xf32>
    %146 = vector.extract_strided_slice %0 {offsets = [17, 0], sizes = [1, 32], strides = [1, 1]} : vector<25x32xf32> to vector<1x32xf32>
    %147 = vector.shape_cast %146 : vector<1x32xf32> to vector<32xf32>
    %148 = vector.shape_cast %147 : vector<32xf32> to vector<1x1x1x32xf32>
    %149 = vector.broadcast %148 : vector<1x1x1x32xf32> to vector<1x8x8x32xf32>
    %150 = arith.mulf %145, %149 : vector<1x8x8x32xf32>
    %151 = arith.addf %143, %150 : vector<1x8x8x32xf32>
    %152 = vector.extract_strided_slice %3 {offsets = [0, 3, 1, 0, 0], sizes = [1, 1, 8, 8, 32], strides = [1, 1, 1, 1, 1]} : vector<1x4x10x8x32xf32> to vector<1x1x8x8x32xf32>
    %153 = vector.shape_cast %152 : vector<1x1x8x8x32xf32> to vector<1x8x8x32xf32>
    %154 = vector.extract_strided_slice %0 {offsets = [18, 0], sizes = [1, 32], strides = [1, 1]} : vector<25x32xf32> to vector<1x32xf32>
    %155 = vector.shape_cast %154 : vector<1x32xf32> to vector<32xf32>
    %156 = vector.shape_cast %155 : vector<32xf32> to vector<1x1x1x32xf32>
    %157 = vector.broadcast %156 : vector<1x1x1x32xf32> to vector<1x8x8x32xf32>
    %158 = arith.mulf %153, %157 : vector<1x8x8x32xf32>
    %159 = arith.addf %151, %158 : vector<1x8x8x32xf32>
    %160 = vector.extract_strided_slice %4 {offsets = [0, 2, 1, 0, 0], sizes = [1, 1, 8, 8, 32], strides = [1, 1, 1, 1, 1]} : vector<1x4x10x8x32xf32> to vector<1x1x8x8x32xf32>
    %161 = vector.shape_cast %160 : vector<1x1x8x8x32xf32> to vector<1x8x8x32xf32>
    %162 = vector.extract_strided_slice %0 {offsets = [19, 0], sizes = [1, 32], strides = [1, 1]} : vector<25x32xf32> to vector<1x32xf32>
    %163 = vector.shape_cast %162 : vector<1x32xf32> to vector<32xf32>
    %164 = vector.shape_cast %163 : vector<32xf32> to vector<1x1x1x32xf32>
    %165 = vector.broadcast %164 : vector<1x1x1x32xf32> to vector<1x8x8x32xf32>
    %166 = arith.mulf %161, %165 : vector<1x8x8x32xf32>
    %167 = arith.addf %159, %166 : vector<1x8x8x32xf32>
    %168 = vector.extract_strided_slice %2 {offsets = [0, 0, 2, 0, 0], sizes = [1, 1, 8, 8, 32], strides = [1, 1, 1, 1, 1]} : vector<1x4x10x8x32xf32> to vector<1x1x8x8x32xf32>
    %169 = vector.shape_cast %168 : vector<1x1x8x8x32xf32> to vector<1x8x8x32xf32>
    %170 = vector.extract_strided_slice %0 {offsets = [20, 0], sizes = [1, 32], strides = [1, 1]} : vector<25x32xf32> to vector<1x32xf32>
    %171 = vector.shape_cast %170 : vector<1x32xf32> to vector<32xf32>
    %172 = vector.shape_cast %171 : vector<32xf32> to vector<1x1x1x32xf32>
    %173 = vector.broadcast %172 : vector<1x1x1x32xf32> to vector<1x8x8x32xf32>
    %174 = arith.mulf %169, %173 : vector<1x8x8x32xf32>
    %175 = arith.addf %167, %174 : vector<1x8x8x32xf32>
    %176 = vector.extract_strided_slice %2 {offsets = [0, 1, 2, 0, 0], sizes = [1, 1, 8, 8, 32], strides = [1, 1, 1, 1, 1]} : vector<1x4x10x8x32xf32> to vector<1x1x8x8x32xf32>
    %177 = vector.shape_cast %176 : vector<1x1x8x8x32xf32> to vector<1x8x8x32xf32>
    %178 = vector.extract_strided_slice %0 {offsets = [21, 0], sizes = [1, 32], strides = [1, 1]} : vector<25x32xf32> to vector<1x32xf32>
    %179 = vector.shape_cast %178 : vector<1x32xf32> to vector<32xf32>
    %180 = vector.shape_cast %179 : vector<32xf32> to vector<1x1x1x32xf32>
    %181 = vector.broadcast %180 : vector<1x1x1x32xf32> to vector<1x8x8x32xf32>
    %182 = arith.mulf %177, %181 : vector<1x8x8x32xf32>
    %183 = arith.addf %175, %182 : vector<1x8x8x32xf32>
    %184 = vector.extract_strided_slice %3 {offsets = [0, 0, 2, 0, 0], sizes = [1, 1, 8, 8, 32], strides = [1, 1, 1, 1, 1]} : vector<1x4x10x8x32xf32> to vector<1x1x8x8x32xf32>
    %185 = vector.shape_cast %184 : vector<1x1x8x8x32xf32> to vector<1x8x8x32xf32>
    %186 = vector.extract_strided_slice %0 {offsets = [22, 0], sizes = [1, 32], strides = [1, 1]} : vector<25x32xf32> to vector<1x32xf32>
    %187 = vector.shape_cast %186 : vector<1x32xf32> to vector<32xf32>
    %188 = vector.shape_cast %187 : vector<32xf32> to vector<1x1x1x32xf32>
    %189 = vector.broadcast %188 : vector<1x1x1x32xf32> to vector<1x8x8x32xf32>
    %190 = arith.mulf %185, %189 : vector<1x8x8x32xf32>
    %191 = arith.addf %183, %190 : vector<1x8x8x32xf32>
    %192 = vector.extract_strided_slice %3 {offsets = [0, 1, 2, 0, 0], sizes = [1, 1, 8, 8, 32], strides = [1, 1, 1, 1, 1]} : vector<1x4x10x8x32xf32> to vector<1x1x8x8x32xf32>
    %193 = vector.shape_cast %192 : vector<1x1x8x8x32xf32> to vector<1x8x8x32xf32>
    %194 = vector.extract_strided_slice %0 {offsets = [23, 0], sizes = [1, 32], strides = [1, 1]} : vector<25x32xf32> to vector<1x32xf32>
    %195 = vector.shape_cast %194 : vector<1x32xf32> to vector<32xf32>
    %196 = vector.shape_cast %195 : vector<32xf32> to vector<1x1x1x32xf32>
    %197 = vector.broadcast %196 : vector<1x1x1x32xf32> to vector<1x8x8x32xf32>
    %198 = arith.mulf %193, %197 : vector<1x8x8x32xf32>
    %199 = arith.addf %191, %198 : vector<1x8x8x32xf32>
    %200 = vector.extract_strided_slice %4 {offsets = [0, 0, 2, 0, 0], sizes = [1, 1, 8, 8, 32], strides = [1, 1, 1, 1, 1]} : vector<1x4x10x8x32xf32> to vector<1x1x8x8x32xf32>
    %201 = vector.shape_cast %200 : vector<1x1x8x8x32xf32> to vector<1x8x8x32xf32>
    %202 = vector.extract_strided_slice %0 {offsets = [24, 0], sizes = [1, 32], strides = [1, 1]} : vector<25x32xf32> to vector<1x32xf32>
    %203 = vector.shape_cast %202 : vector<1x32xf32> to vector<32xf32>
    %204 = vector.shape_cast %203 : vector<32xf32> to vector<1x1x1x32xf32>
    %205 = vector.broadcast %204 : vector<1x1x1x32xf32> to vector<1x8x8x32xf32>
    %206 = arith.mulf %201, %205 : vector<1x8x8x32xf32>
    %207 = arith.addf %199, %206 : vector<1x8x8x32xf32>
    %c0_8 = arith.constant 0 : index
    %c0_9 = arith.constant 0 : index
    %c0_10 = arith.constant 0 : index
    %c0_11 = arith.constant 0 : index
    %208 = vector.load %arg13[%c0_8, %c0_9, %c0_10, %c0_11] : memref<1x8x8x32xf32, #tpu.memory_space<vmem>>, vector<1x8x8x32xf32>
    tpu.vector_store %arg13[%c0_8, %c0_9, %c0_10, %c0_11], %207 {strides = array<i32>} : memref<1x8x8x32xf32, #tpu.memory_space<vmem>>, vector<1x8x8x32xf32>,
    %cst_12 = arith.constant dense<0.000000e+00> : vector<1x32xf32>
    %209 = vector.multi_reduction <add>, %207, %cst_12 [1, 2] : vector<1x8x8x32xf32> to vector<1x32xf32>
    %210 = arith.addf %5, %209 : vector<1x32xf32>
    %211 = arith.mulf %207, %207 : vector<1x8x8x32xf32>
    %cst_13 = arith.constant dense<0.000000e+00> : vector<1x32xf32>
    %212 = vector.multi_reduction <add>, %211, %cst_13 [1, 2] : vector<1x8x8x32xf32> to vector<1x32xf32>
    %213 = arith.addf %6, %212 : vector<1x32xf32>
    %c0_14 = arith.constant 0 : index
    %c0_15 = arith.constant 0 : index
    %214 = vector.load %arg8[%c0_14, %c0_15] : memref<32x32xf32, #tpu.memory_space<vmem>>, vector<32x32xf32>
    %c0_16 = arith.constant 0 : index
    %c0_17 = arith.constant 0 : index
    %215 = vector.load %arg9[%c0_16, %c0_17] : memref<32x32xf32, #tpu.memory_space<vmem>>, vector<32x32xf32>
    %c0_18 = arith.constant 0 : index
    %c0_19 = arith.constant 0 : index
    %216 = vector.load %arg3[%c0_18, %c0_19] : memref<1x32xf32, #tpu.memory_space<vmem>>, vector<1x32xf32>
    %c0_20 = arith.constant 0 : index
    %c0_21 = arith.constant 0 : index
    %217 = vector.load %arg4[%c0_20, %c0_21] : memref<1x32xf32, #tpu.memory_space<vmem>>, vector<1x32xf32>
    %cst_22 = arith.constant dense<0.000000e+00> : vector<1x32xf32>
    %218 = tpu.matmul %210, %214, %cst_22 {dimension_numbers = #tpu.dot_dimension_numbers<[1], [0], [0], [1], [0, 0, 1, 1], [], []>, precision = #tpu.contract_precision<fp32>} : vector<1x32xf32>, vector<32x32xf32>, vector<1x32xf32> -> vector<1x32xf32>
    %cst_23 = arith.constant 1.562500e-02 : f32
    %219 = vector.broadcast %cst_23 : f32 to vector<1x32xf32>
    %220 = arith.mulf %218, %219 : vector<1x32xf32>
    %cst_24 = arith.constant dense<0.000000e+00> : vector<1x32xf32>
    %221 = tpu.matmul %213, %214, %cst_24 {dimension_numbers = #tpu.dot_dimension_numbers<[1], [0], [0], [1], [0, 0, 1, 1], [], []>, precision = #tpu.contract_precision<fp32>} : vector<1x32xf32>, vector<32x32xf32>, vector<1x32xf32> -> vector<1x32xf32>
    %cst_25 = arith.constant 1.562500e-02 : f32
    %222 = vector.broadcast %cst_25 : f32 to vector<1x32xf32>
    %223 = arith.mulf %221, %222 : vector<1x32xf32>
    %224 = arith.mulf %220, %220 : vector<1x32xf32>
    %225 = arith.subf %223, %224 : vector<1x32xf32>
    %cst_26 = arith.constant 0.000000e+00 : f32
    %226 = vector.broadcast %cst_26 : f32 to vector<1x32xf32>
    %227 = arith.maximumf %225, %226 : vector<1x32xf32>
    %cst_27 = arith.constant 9.99999974E-6 : f32
    %228 = vector.broadcast %cst_27 : f32 to vector<1x32xf32>
    %229 = arith.addf %227, %228 : vector<1x32xf32>
    %230 = math.rsqrt %229 : vector<1x32xf32>
    %cst_28 = arith.constant dense<0.000000e+00> : vector<1x32xf32>
    %231 = tpu.matmul %220, %215, %cst_28 {dimension_numbers = #tpu.dot_dimension_numbers<[1], [0], [0], [1], [0, 0, 1, 1], [], []>, precision = #tpu.contract_precision<fp32>} : vector<1x32xf32>, vector<32x32xf32>, vector<1x32xf32> -> vector<1x32xf32>
    %cst_29 = arith.constant dense<0.000000e+00> : vector<1x32xf32>
    %232 = tpu.matmul %230, %215, %cst_29 {dimension_numbers = #tpu.dot_dimension_numbers<[1], [0], [0], [1], [0, 0, 1, 1], [], []>, precision = #tpu.contract_precision<fp32>} : vector<1x32xf32>, vector<32x32xf32>, vector<1x32xf32> -> vector<1x32xf32>
    %233 = arith.mulf %232, %216 : vector<1x32xf32>
    %234 = arith.mulf %231, %233 : vector<1x32xf32>
    %235 = arith.subf %217, %234 : vector<1x32xf32>
    %c0_30 = arith.constant 0 : index
    %c0_31 = arith.constant 0 : index
    %c0_32 = arith.constant 0 : index
    %c0_33 = arith.constant 0 : index
    %236 = vector.load %arg13[%c0_30, %c0_31, %c0_32, %c0_33] : memref<1x8x8x32xf32, #tpu.memory_space<vmem>>, vector<1x8x8x32xf32>
    %237 = vector.shape_cast %233 : vector<1x32xf32> to vector<1x1x1x32xf32>
    %238 = vector.broadcast %237 : vector<1x1x1x32xf32> to vector<1x8x8x32xf32>
    %239 = arith.mulf %236, %238 : vector<1x8x8x32xf32>
    %240 = vector.shape_cast %235 : vector<1x32xf32> to vector<1x1x1x32xf32>
    %241 = vector.broadcast %240 : vector<1x1x1x32xf32> to vector<1x8x8x32xf32>
    %242 = arith.addf %239, %241 : vector<1x8x8x32xf32>
    %cst_34 = arith.constant 0.000000e+00 : f32
    %243 = vector.broadcast %cst_34 : f32 to vector<1x8x8x32xf32>
    %244 = arith.maximumf %242, %243 : vector<1x8x8x32xf32>
    %245 = vector.shape_cast %244 : vector<1x8x8x32xf32> to vector<64x32xf32>
    %c0_35 = arith.constant 0 : index
    %c0_36 = arith.constant 0 : index
    %246 = vector.load %arg5[%c0_35, %c0_36] : memref<32x128xf32, #tpu.memory_space<vmem>>, vector<32x128xf32>
    %cst_37 = arith.constant dense<0.000000e+00> : vector<64x128xf32>
    %247 = tpu.matmul %245, %246, %cst_37 {dimension_numbers = #tpu.dot_dimension_numbers<[1], [0], [0], [1], [0, 0, 1, 1], [], []>, precision = #tpu.contract_precision<fp32>} : vector<64x32xf32>, vector<32x128xf32>, vector<64x128xf32> -> vector<64x128xf32>
    %248 = vector.shape_cast %247 : vector<64x128xf32> to vector<1x64x128xf32>
    %cst_38 = arith.constant dense<0.000000e+00> : vector<1x128xf32>
    %249 = vector.multi_reduction <add>, %248, %cst_38 [1] : vector<1x64x128xf32> to vector<1x128xf32>
    %250 = arith.mulf %248, %248 : vector<1x64x128xf32>
    %cst_39 = arith.constant dense<0.000000e+00> : vector<1x128xf32>
    %251 = vector.multi_reduction <add>, %250, %cst_39 [1] : vector<1x64x128xf32> to vector<1x128xf32>
    %c0_40 = arith.constant 0 : index
    %c0_41 = arith.constant 0 : index
    %252 = vector.load %arg10[%c0_40, %c0_41] : memref<128x32xf32, #tpu.memory_space<vmem>>, vector<128x32xf32>
    %c0_42 = arith.constant 0 : index
    %c0_43 = arith.constant 0 : index
    %253 = vector.load %arg11[%c0_42, %c0_43] : memref<32x128xf32, #tpu.memory_space<vmem>>, vector<32x128xf32>
    %c0_44 = arith.constant 0 : index
    %c0_45 = arith.constant 0 : index
    %254 = vector.load %arg6[%c0_44, %c0_45] : memref<1x128xf32, #tpu.memory_space<vmem>>, vector<1x128xf32>
    %c0_46 = arith.constant 0 : index
    %c0_47 = arith.constant 0 : index
    %255 = vector.load %arg7[%c0_46, %c0_47] : memref<1x128xf32, #tpu.memory_space<vmem>>, vector<1x128xf32>
    %cst_48 = arith.constant dense<0.000000e+00> : vector<1x32xf32>
    %256 = tpu.matmul %249, %252, %cst_48 {dimension_numbers = #tpu.dot_dimension_numbers<[1], [0], [0], [1], [0, 0, 1, 1], [], []>, precision = #tpu.contract_precision<fp32>} : vector<1x128xf32>, vector<128x32xf32>, vector<1x32xf32> -> vector<1x32xf32>
    %cst_49 = arith.constant 7.812500e-03 : f32
    %257 = vector.broadcast %cst_49 : f32 to vector<1x32xf32>
    %258 = arith.mulf %256, %257 : vector<1x32xf32>
    %cst_50 = arith.constant dense<0.000000e+00> : vector<1x32xf32>
    %259 = tpu.matmul %251, %252, %cst_50 {dimension_numbers = #tpu.dot_dimension_numbers<[1], [0], [0], [1], [0, 0, 1, 1], [], []>, precision = #tpu.contract_precision<fp32>} : vector<1x128xf32>, vector<128x32xf32>, vector<1x32xf32> -> vector<1x32xf32>
    %cst_51 = arith.constant 7.812500e-03 : f32
    %260 = vector.broadcast %cst_51 : f32 to vector<1x32xf32>
    %261 = arith.mulf %259, %260 : vector<1x32xf32>
    %262 = arith.mulf %258, %258 : vector<1x32xf32>
    %263 = arith.subf %261, %262 : vector<1x32xf32>
    %cst_52 = arith.constant 0.000000e+00 : f32
    %264 = vector.broadcast %cst_52 : f32 to vector<1x32xf32>
    %265 = arith.maximumf %263, %264 : vector<1x32xf32>
    %cst_53 = arith.constant 9.99999974E-6 : f32
    %266 = vector.broadcast %cst_53 : f32 to vector<1x32xf32>
    %267 = arith.addf %265, %266 : vector<1x32xf32>
    %268 = math.rsqrt %267 : vector<1x32xf32>
    %cst_54 = arith.constant dense<0.000000e+00> : vector<1x128xf32>
    %269 = tpu.matmul %258, %253, %cst_54 {dimension_numbers = #tpu.dot_dimension_numbers<[1], [0], [0], [1], [0, 0, 1, 1], [], []>, precision = #tpu.contract_precision<fp32>} : vector<1x32xf32>, vector<32x128xf32>, vector<1x128xf32> -> vector<1x128xf32>
    %cst_55 = arith.constant dense<0.000000e+00> : vector<1x128xf32>
    %270 = tpu.matmul %268, %253, %cst_55 {dimension_numbers = #tpu.dot_dimension_numbers<[1], [0], [0], [1], [0, 0, 1, 1], [], []>, precision = #tpu.contract_precision<fp32>} : vector<1x32xf32>, vector<32x128xf32>, vector<1x128xf32> -> vector<1x128xf32>
    %271 = arith.mulf %270, %254 : vector<1x128xf32>
    %272 = arith.mulf %269, %271 : vector<1x128xf32>
    %273 = arith.subf %255, %272 : vector<1x128xf32>
    %274 = vector.shape_cast %271 : vector<1x128xf32> to vector<1x1x128xf32>
    %275 = vector.broadcast %274 : vector<1x1x128xf32> to vector<1x64x128xf32>
    %276 = arith.mulf %248, %275 : vector<1x64x128xf32>
    %277 = vector.shape_cast %273 : vector<1x128xf32> to vector<1x1x128xf32>
    %278 = vector.broadcast %277 : vector<1x1x128xf32> to vector<1x64x128xf32>
    %279 = arith.addf %276, %278 : vector<1x64x128xf32>
    %cst_56 = arith.constant 0.000000e+00 : f32
    %280 = vector.broadcast %cst_56 : f32 to vector<1x64x128xf32>
    %281 = arith.maximumf %279, %280 : vector<1x64x128xf32>
    %c0_57 = arith.constant 0 : index
    %c0_58 = arith.constant 0 : index
    %c0_59 = arith.constant 0 : index
    %282 = vector.load %arg12[%c0_57, %c0_58, %c0_59] : memref<1x64x128xf32, #tpu.memory_space<vmem>>, vector<1x64x128xf32>
    tpu.vector_store %arg12[%c0_57, %c0_58, %c0_59], %281 {strides = array<i32>} : memref<1x64x128xf32, #tpu.memory_space<vmem>>, vector<1x64x128xf32>,
    return
  }
  func.func @transform_0(%arg0: i32) -> (i32, i32, i32, i32, i32) {
    %c0_i32 = arith.constant 0 : i32
    %c0_i32_0 = arith.constant 0 : i32
    %c0_i32_1 = arith.constant 0 : i32
    %c0_i32_2 = arith.constant 0 : i32
    %c0_i32_3 = arith.constant 0 : i32
    return %arg0, %c0_i32, %c0_i32_0, %c0_i32_1, %c0_i32_2 : i32, i32, i32, i32, i32
  }
  func.func @transform_1(%arg0: i32) -> (i32, i32) {
    %c0_i32 = arith.constant 0 : i32
    %c0_i32_0 = arith.constant 0 : i32
    %c0_i32_1 = arith.constant 0 : i32
    return %c0_i32, %c0_i32_0 : i32, i32
  }
  func.func @transform_2(%arg0: i32) -> (i32, i32) {
    %c0_i32 = arith.constant 0 : i32
    %c0_i32_0 = arith.constant 0 : i32
    %c0_i32_1 = arith.constant 0 : i32
    return %c0_i32, %c0_i32_0 : i32, i32
  }
  func.func @transform_3(%arg0: i32) -> (i32, i32) {
    %c0_i32 = arith.constant 0 : i32
    %c0_i32_0 = arith.constant 0 : i32
    %c0_i32_1 = arith.constant 0 : i32
    return %c0_i32, %c0_i32_0 : i32, i32
  }
  func.func @transform_4(%arg0: i32) -> (i32, i32) {
    %c0_i32 = arith.constant 0 : i32
    %c0_i32_0 = arith.constant 0 : i32
    %c0_i32_1 = arith.constant 0 : i32
    return %c0_i32, %c0_i32_0 : i32, i32
  }
  func.func @transform_5(%arg0: i32) -> (i32, i32) {
    %c0_i32 = arith.constant 0 : i32
    %c0_i32_0 = arith.constant 0 : i32
    %c0_i32_1 = arith.constant 0 : i32
    return %c0_i32, %c0_i32_0 : i32, i32
  }
  func.func @transform_6(%arg0: i32) -> (i32, i32) {
    %c0_i32 = arith.constant 0 : i32
    %c0_i32_0 = arith.constant 0 : i32
    %c0_i32_1 = arith.constant 0 : i32
    return %c0_i32, %c0_i32_0 : i32, i32
  }
  func.func @transform_7(%arg0: i32) -> (i32, i32) {
    %c0_i32 = arith.constant 0 : i32
    %c0_i32_0 = arith.constant 0 : i32
    %c0_i32_1 = arith.constant 0 : i32
    return %c0_i32, %c0_i32_0 : i32, i32
  }
  func.func @transform_8(%arg0: i32) -> (i32, i32) {
    %c0_i32 = arith.constant 0 : i32
    %c0_i32_0 = arith.constant 0 : i32
    %c0_i32_1 = arith.constant 0 : i32
    return %c0_i32, %c0_i32_0 : i32, i32
  }
  func.func @transform_9(%arg0: i32) -> (i32, i32) {
    %c0_i32 = arith.constant 0 : i32
    %c0_i32_0 = arith.constant 0 : i32
    %c0_i32_1 = arith.constant 0 : i32
    return %c0_i32, %c0_i32_0 : i32, i32
  }
  func.func @transform_10(%arg0: i32) -> (i32, i32) {
    %c0_i32 = arith.constant 0 : i32
    %c0_i32_0 = arith.constant 0 : i32
    %c0_i32_1 = arith.constant 0 : i32
    return %c0_i32, %c0_i32_0 : i32, i32
  }
  func.func @transform_11(%arg0: i32) -> (i32, i32, i32) {
    %c0_i32 = arith.constant 0 : i32
    %c0_i32_0 = arith.constant 0 : i32
    %c0_i32_1 = arith.constant 0 : i32
    return %arg0, %c0_i32, %c0_i32_0 : i32, i32, i32
  }
}

</mosaic_0001>

<llo_original>
// kernel: tpu_custom_call.1
$region0: #{tpu_custom_call.1}
  #allocation0 [shape = 'u32[]', space=smem, size = 0x4, offset = 0x4, fixed_abs, tag = 'smem constant byte address 0x4 - core index']
  #allocation1 [shape = 'u32[144,128]{1,0:T(1,128)}', space=vmem, size = 0x12000, scoped, tag = 'internal scratch']
  #allocation2 [shape = 'f32[1,8,8,32]{3,2,1,0:T(8,128)}', space=vmem, size = 0x8000, scoped, tag = 'scratch operand']
  %s0 = inlined_call_operand.hbm [shape: f32[2,4,10,10,32], index: 0, kind: input, shape index: {}]
  %s1 = inlined_call_operand.hbm [shape: f32[25,32], index: 1, kind: input, shape index: {}]
  %s2 = inlined_call_operand.hbm [shape: f32[1,32], index: 2, kind: input, shape index: {}]
  %s3 = inlined_call_operand.hbm [shape: f32[1,32], index: 3, kind: input, shape index: {}]
  %s4 = inlined_call_operand.hbm [shape: f32[32,128], index: 4, kind: input, shape index: {}]
  %s5 = inlined_call_operand.hbm [shape: f32[1,128], index: 5, kind: input, shape index: {}]
  %s6 = inlined_call_operand.hbm [shape: f32[1,128], index: 6, kind: input, shape index: {}]
  %s7 = inlined_call_operand.hbm [shape: f32[32,32], index: 7, kind: input, shape index: {}]
  %s8 = inlined_call_operand.hbm [shape: f32[32,32], index: 8, kind: input, shape index: {}]
  %s9 = inlined_call_operand.hbm [shape: f32[128,32], index: 9, kind: input, shape index: {}]
  %s10 = inlined_call_operand.hbm [shape: f32[32,128], index: 10, kind: input, shape index: {}]
  %s11 = inlined_call_operand.hbm [shape: f32[2,64,128], index: 11, kind: output, shape index: {}]
  %s12 = sld [smem:[#allocation0]]
  $region121: #{tpu_custom_call.1} parent=0
    _
  %s14 = ssub.s32 1, %s12
  %s15 = scalar_select 0, %s14, %s12
  $region1: #{tpu_custom_call.1} parent=0
    #allocation3 [shape = 'u8[655360]{0}', space=vmem, size = 0xa0000, scoped, tag = 'input window, operand 0']
    #allocation4 [shape = 's32[2]{0}', space=sflag, size = 0x8, scoped, tag = 'scoped memory for tpu_custom_call.1']
    #allocation5 [shape = 's32[2]{0}', space=sflag, size = 0x8, scoped, tag = 'scoped memory for tpu_custom_call.1']
    #allocation6 [shape = 'u8[16384]{0}', space=vmem, size = 0x4000, scoped, tag = 'input window, operand 1, single buffered']
    #allocation7 [shape = 's32[1]{0}', space=sflag, size = 0x4, scoped, tag = 'scoped memory for tpu_custom_call.1']
    #allocation8 [shape = 'u8[512]{0}', space=vmem, size = 0x400, scoped, tag = 'input window, operand 2, single buffered']
    #allocation9 [shape = 'u8[512]{0}', space=vmem, size = 0x400, scoped, tag = 'input window, operand 3, single buffered']
    #allocation10 [shape = 's32[1]{0}', space=sflag, size = 0x4, scoped, tag = 'scoped memory for tpu_custom_call.1']
    #allocation11 [shape = 'u8[16384]{0}', space=vmem, size = 0x4000, scoped, tag = 'input window, operand 4, single buffered']
    #allocation12 [shape = 'u8[512]{0}', space=vmem, size = 0x400, scoped, tag = 'input window, operand 5, single buffered']
    #allocation13 [shape = 's32[1]{0}', space=sflag, size = 0x4, scoped, tag = 'scoped memory for tpu_custom_call.1']
    #allocation14 [shape = 'u8[512]{0}', space=vmem, size = 0x400, scoped, tag = 'input window, operand 6, single buffered']
    #allocation15 [shape = 'u8[16384]{0}', space=vmem, size = 0x4000, scoped, tag = 'input window, operand 7, single buffered']
    #allocation16 [shape = 's32[1]{0}', space=sflag, size = 0x4, scoped, tag = 'scoped memory for tpu_custom_call.1']
    #allocation17 [shape = 'u8[16384]{0}', space=vmem, size = 0x4000, scoped, tag = 'input window, operand 8, single buffered']
    #allocation18 [shape = 'u8[65536]{0}', space=vmem, size = 0x10000, scoped, tag = 'input window, operand 9, single buffered']
    #allocation19 [shape = 's32[1]{0}', space=sflag, size = 0x4, scoped, tag = 'scoped memory for tpu_custom_call.1']
    #allocation20 [shape = 'u8[16384]{0}', space=vmem, size = 0x4000, scoped, tag = 'input window, operand 10, single buffered']
    #allocation21 [shape = 'u8[65536]{0}', space=vmem, size = 0x10000, scoped, tag = 'output window, operand 0']
    %16 = vsyncpa [#allocation4], 0
    %s17 = scalar_lea.sflag [#allocation4], 1
    %18 = vsyncpa %s17, 0
    %19 = vsyncpa [#allocation7], 0
    %20 = vsyncpa [#allocation10], 0
    %21 = vsyncpa [#allocation13], 0
    %22 = vsyncpa [#allocation16], 0
    %23 = vsyncpa [#allocation19], 0
    %24 = vsyncpa [#allocation5], 0
    %s25 = scalar_lea.sflag [#allocation5], 1
    %26 = vsyncpa %s25, 0
    loop: start=0, step=1, limit=4
    $region2: #{tpu_custom_call.1} parent=1 // loop_pre_header
      _
    $region3: #{tpu_custom_call.1} parent=1 // loop_header
      %s28 = sphi 0, %s32
      %p29 = scmp.ge.s32.totalorder %s28, 4
      %s38 = sphi 0, %s40
      %s41 = sphi 0, %s38
      %s42 = sphi 0, %s41
      %s58 = sphi 0, %s42
      %s62 = sphi 0, %s62
      %s64 = sphi 0, %s62
      %s65 = sphi 0, %s64
      %s79 = sphi 0, %s65
      %s83 = sphi 0, %s83
      %s85 = sphi 0, %s83
      %s86 = sphi 0, %s85
      %s100 = sphi 0, %s86
      %s104 = sphi 0, %s104
      %s106 = sphi 0, %s104
      %s107 = sphi 0, %s106
      %s121 = sphi 0, %s107
      %s125 = sphi 0, %s125
      %s127 = sphi 0, %s125
      %s128 = sphi 0, %s127
      %s142 = sphi 0, %s128
      %s146 = sphi 0, %s146
      %s148 = sphi 0, %s146
      %s149 = sphi 0, %s148
      %s163 = sphi 0, %s149
      %s167 = sphi 0, %s167
      %s169 = sphi 0, %s167
      %s170 = sphi 0, %s169
      %s184 = sphi 0, %s170
      %s188 = sphi 0, %s188
      %s190 = sphi 0, %s188
      %s191 = sphi 0, %s190
      %s205 = sphi 0, %s191
      %s209 = sphi 0, %s209
      %s211 = sphi 0, %s209
      %s212 = sphi 0, %s211
      %s226 = sphi 0, %s212
      %s230 = sphi 0, %s230
      %s232 = sphi 0, %s230
      %s233 = sphi 0, %s232
      %s247 = sphi 0, %s233
      %s251 = sphi 0, %s251
      %s253 = sphi 0, %s251
      %s254 = sphi 0, %s253
      %s268 = sphi 0, %s254
      %s274 = sphi 0, %s276
      %s277 = sphi 0, %s274
      %s278 = sphi 0, %s277
      %s294 = sphi 0, %s278
    $region4: #{tpu_custom_call.1} parent=1 // loop_header_branch
      %31 = sbr.rel (%p29) target = $region8
    $region5: #{tpu_custom_call.1} parent=1 // loop_body
      %s33 = ssub.s32 %s28, 1
      %s34 = ssub.s32 %s28, 2
      %s35 = sadd.s32 %s28, 1
      %s36 = ssub.s32 %s28, %s35
      %p37 = scmp.eq.s32.totalorder %s36, 0
      %s39 = sadd.s32 %s38, 1
      %s40 = scalar_select %p37, %s38, %s39
      %p43 = pneg %p37
      %p44 = scmp.eq.s32.totalorder %s28, 1
      %p45 = por %p43, %p44
      %p46 = scmp.ne.s32.totalorder %s38, %s41
      %p47 = scmp.eq.s32.totalorder %s28, 0
      %p48 = por %p46, %p47
      %p49 = scmp.ne.s32.totalorder %s38, %s41
      %p50 = scmp.eq.s32.totalorder %s33, 1
      %p51 = por %p49, %p50
      %p52 = scmp.ne.s32.totalorder %s41, %s42
      %p53 = scmp.eq.s32.totalorder %s33, 0
      %p54 = por %p52, %p53
      %p55 = scmp.ne.s32.totalorder %s41, %s42
      %p56 = scmp.eq.s32.totalorder %s34, 1
      %p57 = por %p55, %p56
      %p59 = scmp.ne.s32.totalorder %s42, %s58
      %p60 = scmp.eq.s32.totalorder %s34, 0
      %p61 = por %p59, %p60
      %s63 = sadd.s32 %s62, 1
      %p66 = scmp.eq.s32.totalorder %s28, 1
      %p67 = scmp.ne.s32.totalorder %s62, %s64
      %p68 = scmp.eq.s32.totalorder %s28, 0
      %p69 = por %p67, %p68
      %p70 = scmp.ne.s32.totalorder %s62, %s64
      %p71 = scmp.eq.s32.totalorder %s33, 1
      %p72 = por %p70, %p71
      %p73 = scmp.ne.s32.totalorder %s64, %s65
      %p74 = scmp.eq.s32.totalorder %s33, 0
      %p75 = por %p73, %p74
      %p76 = scmp.ne.s32.totalorder %s64, %s65
      %p77 = scmp.eq.s32.totalorder %s34, 1
      %p78 = por %p76, %p77
      %p80 = scmp.ne.s32.totalorder %s65, %s79
      %p81 = scmp.eq.s32.totalorder %s34, 0
      %p82 = por %p80, %p81
      %s84 = sadd.s32 %s83, 1
      %p87 = scmp.eq.s32.totalorder %s28, 1
      %p88 = scmp.ne.s32.totalorder %s83, %s85
      %p89 = scmp.eq.s32.totalorder %s28, 0
      %p90 = por %p88, %p89
      %p91 = scmp.ne.s32.totalorder %s83, %s85
      %p92 = scmp.eq.s32.totalorder %s33, 1
      %p93 = por %p91, %p92
      %p94 = scmp.ne.s32.totalorder %s85, %s86
      %p95 = scmp.eq.s32.totalorder %s33, 0
      %p96 = por %p94, %p95
      %p97 = scmp.ne.s32.totalorder %s85, %s86
      %p98 = scmp.eq.s32.totalorder %s34, 1
      %p99 = por %p97, %p98
      %p101 = scmp.ne.s32.totalorder %s86, %s100
      %p102 = scmp.eq.s32.totalorder %s34, 0
      %p103 = por %p101, %p102
      %s105 = sadd.s32 %s104, 1
      %p108 = scmp.eq.s32.totalorder %s28, 1
      %p109 = scmp.ne.s32.totalorder %s104, %s106
      %p110 = scmp.eq.s32.totalorder %s28, 0
      %p111 = por %p109, %p110
      %p112 = scmp.ne.s32.totalorder %s104, %s106
      %p113 = scmp.eq.s32.totalorder %s33, 1
      %p114 = por %p112, %p113
      %p115 = scmp.ne.s32.totalorder %s106, %s107
      %p116 = scmp.eq.s32.totalorder %s33, 0
      %p117 = por %p115, %p116
      %p118 = scmp.ne.s32.totalorder %s106, %s107
      %p119 = scmp.eq.s32.totalorder %s34, 1
      %p120 = por %p118, %p119
      %p122 = scmp.ne.s32.totalorder %s107, %s121
      %p123 = scmp.eq.s32.totalorder %s34, 0
      %p124 = por %p122, %p123
      %s126 = sadd.s32 %s125, 1
      %p129 = scmp.eq.s32.totalorder %s28, 1
      %p130 = scmp.ne.s32.totalorder %s125, %s127
      %p131 = scmp.eq.s32.totalorder %s28, 0
      %p132 = por %p130, %p131
      %p133 = scmp.ne.s32.totalorder %s125, %s127
      %p134 = scmp.eq.s32.totalorder %s33, 1
      %p135 = por %p133, %p134
      %p136 = scmp.ne.s32.totalorder %s127, %s128
      %p137 = scmp.eq.s32.totalorder %s33, 0
      %p138 = por %p136, %p137
      %p139 = scmp.ne.s32.totalorder %s127, %s128
      %p140 = scmp.eq.s32.totalorder %s34, 1
      %p141 = por %p139, %p140
      %p143 = scmp.ne.s32.totalorder %s128, %s142
      %p144 = scmp.eq.s32.totalorder %s34, 0
      %p145 = por %p143, %p144
      %s147 = sadd.s32 %s146, 1
      %p150 = scmp.eq.s32.totalorder %s28, 1
      %p151 = scmp.ne.s32.totalorder %s146, %s148
      %p152 = scmp.eq.s32.totalorder %s28, 0
      %p153 = por %p151, %p152
      %p154 = scmp.ne.s32.totalorder %s146, %s148
      %p155 = scmp.eq.s32.totalorder %s33, 1
      %p156 = por %p154, %p155
      %p157 = scmp.ne.s32.totalorder %s148, %s149
      %p158 = scmp.eq.s32.totalorder %s33, 0
      %p159 = por %p157, %p158
      %p160 = scmp.ne.s32.totalorder %s148, %s149
      %p161 = scmp.eq.s32.totalorder %s34, 1
      %p162 = por %p160, %p161
      %p164 = scmp.ne.s32.totalorder %s149, %s163
      %p165 = scmp.eq.s32.totalorder %s34, 0
      %p166 = por %p164, %p165
      %s168 = sadd.s32 %s167, 1
      %p171 = scmp.eq.s32.totalorder %s28, 1
      %p172 = scmp.ne.s32.totalorder %s167, %s169
      %p173 = scmp.eq.s32.totalorder %s28, 0
      %p174 = por %p172, %p173
      %p175 = scmp.ne.s32.totalorder %s167, %s169
      %p176 = scmp.eq.s32.totalorder %s33, 1
      %p177 = por %p175, %p176
      %p178 = scmp.ne.s32.totalorder %s169, %s170
      %p179 = scmp.eq.s32.totalorder %s33, 0
      %p180 = por %p178, %p179
      %p181 = scmp.ne.s32.totalorder %s169, %s170
      %p182 = scmp.eq.s32.totalorder %s34, 1
      %p183 = por %p181, %p182
      %p185 = scmp.ne.s32.totalorder %s170, %s184
      %p186 = scmp.eq.s32.totalorder %s34, 0
      %p187 = por %p185, %p186
      %s189 = sadd.s32 %s188, 1
      %p192 = scmp.eq.s32.totalorder %s28, 1
      %p193 = scmp.ne.s32.totalorder %s188, %s190
      %p194 = scmp.eq.s32.totalorder %s28, 0
      %p195 = por %p193, %p194
      %p196 = scmp.ne.s32.totalorder %s188, %s190
      %p197 = scmp.eq.s32.totalorder %s33, 1
      %p198 = por %p196, %p197
      %p199 = scmp.ne.s32.totalorder %s190, %s191
      %p200 = scmp.eq.s32.totalorder %s33, 0
      %p201 = por %p199, %p200
      %p202 = scmp.ne.s32.totalorder %s190, %s191
      %p203 = scmp.eq.s32.totalorder %s34, 1
      %p204 = por %p202, %p203
      %p206 = scmp.ne.s32.totalorder %s191, %s205
      %p207 = scmp.eq.s32.totalorder %s34, 0
      %p208 = por %p206, %p207
      %s210 = sadd.s32 %s209, 1
      %p213 = scmp.eq.s32.totalorder %s28, 1
      %p214 = scmp.ne.s32.totalorder %s209, %s211
      %p215 = scmp.eq.s32.totalorder %s28, 0
      %p216 = por %p214, %p215
      %p217 = scmp.ne.s32.totalorder %s209, %s211
      %p218 = scmp.eq.s32.totalorder %s33, 1
      %p219 = por %p217, %p218
      %p220 = scmp.ne.s32.totalorder %s211, %s212
      %p221 = scmp.eq.s32.totalorder %s33, 0
      %p222 = por %p220, %p221
      %p223 = scmp.ne.s32.totalorder %s211, %s212
      %p224 = scmp.eq.s32.totalorder %s34, 1
      %p225 = por %p223, %p224
      %p227 = scmp.ne.s32.totalorder %s212, %s226
      %p228 = scmp.eq.s32.totalorder %s34, 0
      %p229 = por %p227, %p228
      %s231 = sadd.s32 %s230, 1
      %p234 = scmp.eq.s32.totalorder %s28, 1
      %p235 = scmp.ne.s32.totalorder %s230, %s232
      %p236 = scmp.eq.s32.totalorder %s28, 0
      %p237 = por %p235, %p236
      %p238 = scmp.ne.s32.totalorder %s230, %s232
      %p239 = scmp.eq.s32.totalorder %s33, 1
      %p240 = por %p238, %p239
      %p241 = scmp.ne.s32.totalorder %s232, %s233
      %p242 = scmp.eq.s32.totalorder %s33, 0
      %p243 = por %p241, %p242
      %p244 = scmp.ne.s32.totalorder %s232, %s233
      %p245 = scmp.eq.s32.totalorder %s34, 1
      %p246 = por %p244, %p245
      %p248 = scmp.ne.s32.totalorder %s233, %s247
      %p249 = scmp.eq.s32.totalorder %s34, 0
      %p250 = por %p248, %p249
      %s252 = sadd.s32 %s251, 1
      %p255 = scmp.eq.s32.totalorder %s28, 1
      %p256 = scmp.ne.s32.totalorder %s251, %s253
      %p257 = scmp.eq.s32.totalorder %s28, 0
      %p258 = por %p256, %p257
      %p259 = scmp.ne.s32.totalorder %s251, %s253
      %p260 = scmp.eq.s32.totalorder %s33, 1
      %p261 = por %p259, %p260
      %p262 = scmp.ne.s32.totalorder %s253, %s254
      %p263 = scmp.eq.s32.totalorder %s33, 0
      %p264 = por %p262, %p263
      %p265 = scmp.ne.s32.totalorder %s253, %s254
      %p266 = scmp.eq.s32.totalorder %s34, 1
      %p267 = por %p265, %p266
      %p269 = scmp.ne.s32.totalorder %s254, %s268
      %p270 = scmp.eq.s32.totalorder %s34, 0
      %p271 = por %p269, %p270
      %s272 = ssub.s32 %s28, %s35
      %p273 = scmp.eq.s32.totalorder %s272, 0
      %s275 = sadd.s32 %s274, 1
      %s276 = scalar_select %p273, %s274, %s275
      %p279 = pneg %p273
      %p280 = scmp.eq.s32.totalorder %s28, 1
      %p281 = por %p279, %p280
      %p282 = scmp.ne.s32.totalorder %s274, %s277
      %p283 = scmp.eq.s32.totalorder %s28, 0
      %p284 = por %p282, %p283
      %p285 = scmp.ne.s32.totalorder %s274, %s277
      %p286 = scmp.eq.s32.totalorder %s33, 1
      %p287 = por %p285, %p286
      %p288 = scmp.ne.s32.totalorder %s277, %s278
      %p289 = scmp.eq.s32.totalorder %s33, 0
      %p290 = por %p288, %p289
      %p291 = scmp.ne.s32.totalorder %s277, %s278
      %p292 = scmp.eq.s32.totalorder %s34, 1
      %p293 = por %p291, %p292
      %p295 = scmp.ne.s32.totalorder %s278, %s294
      %p296 = scmp.eq.s32.totalorder %s34, 0
      %p297 = por %p295, %p296
      %p298 = scmp.le.s32.totalorder 1, %s28
      %p299 = scmp.lt.s32.totalorder %s28, 3
      %p300 = pnand %p298, %p299
      %p301 = pneg %p300
      // Predicated region
      $region9: #{tpu_custom_call.1} parent=5 // pred_check
        _
      $region10: #{tpu_custom_call.1} parent=5 // pred_check_branch
        %303 = sbr.rel (%p300) target = $region12
      $region11: #{tpu_custom_call.1} parent=5 // pred_region
        %s304 = ssub.s32 %s28, 1
        // Predicated region
        $region13: #{tpu_custom_call.1} parent=11 // pred_check
          %p305 = pneg %p75
        $region14: #{tpu_custom_call.1} parent=11 // pred_check_branch
          %307 = sbr.rel (%p305) target = $region16
        $region15: #{tpu_custom_call.1} parent=11 // pred_region
          %s309 = ssub.s32 512, 512
          %310 = vsyncadd [#allocation7], %s309
          %s311 = sshll.u32 [#allocation6], 4
          %s312 = int_to_ptr.vmem [resolvable:$true] %s311
          %317 = dma.hbm_to_vmem [thread:$0]  %s1, 512, %s312, [#allocation7], 128, 128, 8
        $region16: #{tpu_custom_call.1} parent=11 // pred_fallthru
          _
        // Predicated region
        $region17: #{tpu_custom_call.1} parent=11 // pred_check
          %p318 = pneg %p96
        $region18: #{tpu_custom_call.1} parent=11 // pred_check_branch
          %320 = sbr.rel (%p318) target = $region20
        $region19: #{tpu_custom_call.1} parent=11 // pred_region
          %s322 = ssub.s32 16, 16
          %323 = vsyncadd [#allocation7], %s322
          %s325 = sshll.u32 [#allocation8], 4
          %s326 = int_to_ptr.vmem [resolvable:$true] %s325
          %328 = dma.hbm_to_vmem [thread:$0]  %s2, 16, %s326, [#allocation7]
        $region20: #{tpu_custom_call.1} parent=11 // pred_fallthru
          _
        // Predicated region
        $region21: #{tpu_custom_call.1} parent=11 // pred_check
          %p329 = pneg %p117
        $region22: #{tpu_custom_call.1} parent=11 // pred_check_branch
          %331 = sbr.rel (%p329) target = $region24
        $region23: #{tpu_custom_call.1} parent=11 // pred_region
          %s333 = ssub.s32 16, 16
          %334 = vsyncadd [#allocation10], %s333
          %s336 = sshll.u32 [#allocation9], 4
          %s337 = int_to_ptr.vmem [resolvable:$true] %s336
          %339 = dma.hbm_to_vmem [thread:$0]  %s3, 16, %s337, [#allocation10]
        $region24: #{tpu_custom_call.1} parent=11 // pred_fallthru
          _
        // Predicated region
        $region25: #{tpu_custom_call.1} parent=11 // pred_check
          %p340 = pneg %p138
        $region26: #{tpu_custom_call.1} parent=11 // pred_check_branch
          %342 = sbr.rel (%p340) target = $region28
        $region27: #{tpu_custom_call.1} parent=11 // pred_region
          %s344 = ssub.s32 512, 512
          %345 = vsyncadd [#allocation10], %s344
          %s346 = sshll.u32 [#allocation11], 4
          %s347 = int_to_ptr.vmem [resolvable:$true] %s346
          %352 = dma.hbm_to_vmem [thread:$0]  %s4, 512, %s347, [#allocation10], 128, 128, 8
        $region28: #{tpu_custom_call.1} parent=11 // pred_fallthru
          _
        // Predicated region
        $region29: #{tpu_custom_call.1} parent=11 // pred_check
          %p353 = pneg %p159
        $region30: #{tpu_custom_call.1} parent=11 // pred_check_branch
          %355 = sbr.rel (%p353) target = $region32
        $region31: #{tpu_custom_call.1} parent=11 // pred_region
          %s357 = ssub.s32 16, 16
          %358 = vsyncadd [#allocation13], %s357
          %s360 = sshll.u32 [#allocation12], 4
          %s361 = int_to_ptr.vmem [resolvable:$true] %s360
          %363 = dma.hbm_to_vmem [thread:$0]  %s5, 16, %s361, [#allocation13]
        $region32: #{tpu_custom_call.1} parent=11 // pred_fallthru
          _
        // Predicated region
        $region33: #{tpu_custom_call.1} parent=11 // pred_check
          %p364 = pneg %p180
        $region34: #{tpu_custom_call.1} parent=11 // pred_check_branch
          %366 = sbr.rel (%p364) target = $region36
        $region35: #{tpu_custom_call.1} parent=11 // pred_region
          %s368 = ssub.s32 16, 16
          %369 = vsyncadd [#allocation13], %s368
          %s371 = sshll.u32 [#allocation14], 4
          %s372 = int_to_ptr.vmem [resolvable:$true] %s371
          %374 = dma.hbm_to_vmem [thread:$0]  %s6, 16, %s372, [#allocation13]
        $region36: #{tpu_custom_call.1} parent=11 // pred_fallthru
          _
        // Predicated region
        $region37: #{tpu_custom_call.1} parent=11 // pred_check
          %p375 = pneg %p201
        $region38: #{tpu_custom_call.1} parent=11 // pred_check_branch
          %377 = sbr.rel (%p375) target = $region40
        $region39: #{tpu_custom_call.1} parent=11 // pred_region
          %s379 = ssub.s32 512, 512
          %380 = vsyncadd [#allocation16], %s379
          %s381 = sshll.u32 [#allocation15], 4
          %s382 = int_to_ptr.vmem [resolvable:$true] %s381
          %387 = dma.hbm_to_vmem [thread:$0]  %s7, 512, %s382, [#allocation16], 128, 128, 8
        $region40: #{tpu_custom_call.1} parent=11 // pred_fallthru
          _
        // Predicated region
        $region41: #{tpu_custom_call.1} parent=11 // pred_check
          %p388 = pneg %p222
        $region42: #{tpu_custom_call.1} parent=11 // pred_check_branch
          %390 = sbr.rel (%p388) target = $region44
        $region43: #{tpu_custom_call.1} parent=11 // pred_region
          %s392 = ssub.s32 512, 512
          %393 = vsyncadd [#allocation16], %s392
          %s394 = sshll.u32 [#allocation17], 4
          %s395 = int_to_ptr.vmem [resolvable:$true] %s394
          %400 = dma.hbm_to_vmem [thread:$0]  %s8, 512, %s395, [#allocation16], 128, 128, 8
        $region44: #{tpu_custom_call.1} parent=11 // pred_fallthru
          _
        // Predicated region
        $region45: #{tpu_custom_call.1} parent=11 // pred_check
          %p401 = pneg %p243
        $region46: #{tpu_custom_call.1} parent=11 // pred_check_branch
          %403 = sbr.rel (%p401) target = $region48
        $region47: #{tpu_custom_call.1} parent=11 // pred_region
          %s405 = ssub.s32 2048, 2048
          %406 = vsyncadd [#allocation19], %s405
          %s407 = sshll.u32 [#allocation18], 4
          %s408 = int_to_ptr.vmem [resolvable:$true] %s407
          %413 = dma.hbm_to_vmem [thread:$0]  %s9, 2048, %s408, [#allocation19], 128, 128, 8
        $region48: #{tpu_custom_call.1} parent=11 // pred_fallthru
          _
        // Predicated region
        $region49: #{tpu_custom_call.1} parent=11 // pred_check
          %p414 = pneg %p264
        $region50: #{tpu_custom_call.1} parent=11 // pred_check_branch
          %416 = sbr.rel (%p414) target = $region52
        $region51: #{tpu_custom_call.1} parent=11 // pred_region
          %s418 = ssub.s32 512, 512
          %419 = vsyncadd [#allocation19], %s418
          %s420 = sshll.u32 [#allocation20], 4
          %s421 = int_to_ptr.vmem [resolvable:$true] %s420
          %426 = dma.hbm_to_vmem [thread:$0]  %s10, 512, %s421, [#allocation19], 128, 128, 8
        $region52: #{tpu_custom_call.1} parent=11 // pred_fallthru
          _
      $region12: #{tpu_custom_call.1} parent=5 // pred_fallthru
        _
      %p427 = scmp.lt.s32.totalorder %s28, 2
      // Predicated region
      $region53: #{tpu_custom_call.1} parent=5 // pred_check
        %p428 = pneg %p427
      $region54: #{tpu_custom_call.1} parent=5 // pred_check_branch
        %430 = sbr.rel (%p428) target = $region56
      $region55: #{tpu_custom_call.1} parent=5 // pred_region
        // Predicated region
        $region57: #{tpu_custom_call.1} parent=55 // pred_check
          %p431 = pneg %p48
        $region58: #{tpu_custom_call.1} parent=55 // pred_check_branch
          %433 = sbr.rel (%p431) target = $region60
        $region59: #{tpu_custom_call.1} parent=55 // pred_region
          %s434 = sand.u32 %s38, 1
          %s435 = scalar_lea.sflag [#allocation4], %s434
          %s436 = sand.u32 %s38, 1
          %s437 = smul.addr %s436, 640
          %s438 = scalar_lea.vmem [#allocation3], %s437
          %s440 = ssub.s32 10240, 10240
          %441 = vsyncadd %s435, %s440
          %s442 = smul.addr %s28, 80
          %s443 = smul.addr %s442, 128
          %s444 = scalar_lea.hbm %s0, %s443
          %s445 = sshll.u32 %s438, 4
          %s446 = int_to_ptr.vmem [resolvable:$true] %s445
          %451 = dma.hbm_to_vmem [thread:$0]  %s444, 10240, %s446, %s435, 128, 128, 8
        $region60: #{tpu_custom_call.1} parent=55 // pred_fallthru
          _
      $region56: #{tpu_custom_call.1} parent=5 // pred_fallthru
        _
      %p452 = scmp.le.s32.totalorder 1, %s28
      %p453 = scmp.lt.s32.totalorder %s28, 3
      %p454 = pnand %p452, %p453
      %p455 = pneg %p454
      // Predicated region
      $region61: #{tpu_custom_call.1} parent=5 // pred_check
        _
      $region62: #{tpu_custom_call.1} parent=5 // pred_check_branch
        %457 = sbr.rel (%p454) target = $region64
      $region63: #{tpu_custom_call.1} parent=5 // pred_region
        %s458 = ssub.s32 %s28, 1
        %s459 = sand.u32 %s41, 1
        %s460 = scalar_lea.sflag [#allocation4], %s459
        %s461 = sand.u32 %s41, 1
        %s462 = smul.addr %s461, 640
        %s463 = scalar_lea.vmem [#allocation3], %s462
        // Predicated region
        $region65: #{tpu_custom_call.1} parent=63 // pred_check
          %p464 = pneg %p54
        $region66: #{tpu_custom_call.1} parent=63 // pred_check_branch
          %466 = sbr.rel (%p464) target = $region68
        $region67: #{tpu_custom_call.1} parent=63 // pred_region
          %467 = dma.done %s460, 10240
        $region68: #{tpu_custom_call.1} parent=63 // pred_fallthru
          _
        // Predicated region
        $region69: #{tpu_custom_call.1} parent=63 // pred_check
          %p468 = pneg %p75
        $region70: #{tpu_custom_call.1} parent=63 // pred_check_branch
          %470 = sbr.rel (%p468) target = $region72
        $region71: #{tpu_custom_call.1} parent=63 // pred_region
          %471 = dma.done [#allocation7], 512
        $region72: #{tpu_custom_call.1} parent=63 // pred_fallthru
          _
        // Predicated region
        $region73: #{tpu_custom_call.1} parent=63 // pred_check
          %p472 = pneg %p96
        $region74: #{tpu_custom_call.1} parent=63 // pred_check_branch
          %474 = sbr.rel (%p472) target = $region76
        $region75: #{tpu_custom_call.1} parent=63 // pred_region
          %475 = dma.done [#allocation7], 16
        $region76: #{tpu_custom_call.1} parent=63 // pred_fallthru
          _
        // Predicated region
        $region77: #{tpu_custom_call.1} parent=63 // pred_check
          %p476 = pneg %p117
        $region78: #{tpu_custom_call.1} parent=63 // pred_check_branch
          %478 = sbr.rel (%p476) target = $region80
        $region79: #{tpu_custom_call.1} parent=63 // pred_region
          %479 = dma.done [#allocation10], 16
        $region80: #{tpu_custom_call.1} parent=63 // pred_fallthru
          _
        // Predicated region
        $region81: #{tpu_custom_call.1} parent=63 // pred_check
          %p480 = pneg %p138
        $region82: #{tpu_custom_call.1} parent=63 // pred_check_branch
          %482 = sbr.rel (%p480) target = $region84
        $region83: #{tpu_custom_call.1} parent=63 // pred_region
          %483 = dma.done [#allocation10], 512
        $region84: #{tpu_custom_call.1} parent=63 // pred_fallthru
          _
        // Predicated region
        $region85: #{tpu_custom_call.1} parent=63 // pred_check
          %p484 = pneg %p159
        $region86: #{tpu_custom_call.1} parent=63 // pred_check_branch
          %486 = sbr.rel (%p484) target = $region88
        $region87: #{tpu_custom_call.1} parent=63 // pred_region
          %487 = dma.done [#allocation13], 16
        $region88: #{tpu_custom_call.1} parent=63 // pred_fallthru
          _
        // Predicated region
        $region89: #{tpu_custom_call.1} parent=63 // pred_check
          %p488 = pneg %p180
        $region90: #{tpu_custom_call.1} parent=63 // pred_check_branch
          %490 = sbr.rel (%p488) target = $region92
        $region91: #{tpu_custom_call.1} parent=63 // pred_region
          %491 = dma.done [#allocation13], 16
        $region92: #{tpu_custom_call.1} parent=63 // pred_fallthru
          _
        // Predicated region
        $region93: #{tpu_custom_call.1} parent=63 // pred_check
          %p492 = pneg %p201
        $region94: #{tpu_custom_call.1} parent=63 // pred_check_branch
          %494 = sbr.rel (%p492) target = $region96
        $region95: #{tpu_custom_call.1} parent=63 // pred_region
          %495 = dma.done [#allocation16], 512
        $region96: #{tpu_custom_call.1} parent=63 // pred_fallthru
          _
        // Predicated region
        $region97: #{tpu_custom_call.1} parent=63 // pred_check
          %p496 = pneg %p222
        $region98: #{tpu_custom_call.1} parent=63 // pred_check_branch
          %498 = sbr.rel (%p496) target = $region100
        $region99: #{tpu_custom_call.1} parent=63 // pred_region
          %499 = dma.done [#allocation16], 512
        $region100: #{tpu_custom_call.1} parent=63 // pred_fallthru
          _
        // Predicated region
        $region101: #{tpu_custom_call.1} parent=63 // pred_check
          %p500 = pneg %p243
        $region102: #{tpu_custom_call.1} parent=63 // pred_check_branch
          %502 = sbr.rel (%p500) target = $region104
        $region103: #{tpu_custom_call.1} parent=63 // pred_region
          %503 = dma.done [#allocation19], 2048
        $region104: #{tpu_custom_call.1} parent=63 // pred_fallthru
          _
        // Predicated region
        $region105: #{tpu_custom_call.1} parent=63 // pred_check
          %p504 = pneg %p264
        $region106: #{tpu_custom_call.1} parent=63 // pred_check_branch
          %506 = sbr.rel (%p504) target = $region108
        $region107: #{tpu_custom_call.1} parent=63 // pred_region
          %507 = dma.done [#allocation19], 512
        $region108: #{tpu_custom_call.1} parent=63 // pred_fallthru
          _
        %s508 = sand.u32 %s41, 1
        %s509 = scalar_lea.sflag [#allocation4], %s508
        %s510 = sand.u32 %s41, 1
        %s511 = smul.addr %s510, 640
        %s512 = scalar_lea.vmem [#allocation3], %s511
        %p513 = pneg %p54
        %p514 = pneg %p51
        %p515 = pneg %p75
        %p516 = pneg %p72
        %p517 = pneg %p96
        %p518 = pneg %p93
        %p519 = pneg %p117
        %p520 = pneg %p114
        %p521 = pneg %p138
        %p522 = pneg %p135
        %p523 = pneg %p159
        %p524 = pneg %p156
        %p525 = pneg %p180
        %p526 = pneg %p177
        %p527 = pneg %p201
        %p528 = pneg %p198
        %p529 = pneg %p222
        %p530 = pneg %p219
        %p531 = pneg %p243
        %p532 = pneg %p240
        %p533 = pneg %p264
        %p534 = pneg %p261
        %p535 = pneg %p290
        %p536 = pneg %p287
        %s537 = sand.u32 %s277, 1
        %s538 = scalar_lea.sflag [#allocation5], %s537
        %s539 = sand.u32 %s277, 1
        %s540 = smul.addr %s539, 64
        %s541 = scalar_lea.vmem [#allocation21], %s540
        %v542 = vld [vmem:[#allocation6] sm:$0xff]
        %v543 = vld [vmem:[#allocation6 + $0x8] sm:$0xff]
        %v544 = vld [vmem:[#allocation6 + $0x10] sm:$0xff]
        %v545 = vld [vmem:[#allocation6 + $0x18] sm:$0x1]
        %v546 = vld [vmem:[%s463] sm:$0xff]
        %v547 = vld [vmem:[%s463 + $0x8] sm:$0x3]
        %v548 = vld [vmem:[%s463 + $0x10] sm:$0xff]
        %v549 = vld [vmem:[%s463 + $0x18] sm:$0x3]
        %v550 = vld [vmem:[%s463 + $0x20] sm:$0xff]
        %v551 = vld [vmem:[%s463 + $0x28] sm:$0x3]
        %v552 = vld [vmem:[%s463 + $0x30] sm:$0xff]
        %v553 = vld [vmem:[%s463 + $0x38] sm:$0x3]
        %v554 = vld [vmem:[%s463 + $0x40] sm:$0xff]
        %v555 = vld [vmem:[%s463 + $0x48] sm:$0x3]
        %v556 = vld [vmem:[%s463 + $0x50] sm:$0xff]
        %v557 = vld [vmem:[%s463 + $0x58] sm:$0x3]
        %v558 = vld [vmem:[%s463 + $0x60] sm:$0xff]
        %v559 = vld [vmem:[%s463 + $0x68] sm:$0x3]
        %v560 = vld [vmem:[%s463 + $0x70] sm:$0xff]
        %v561 = vld [vmem:[%s463 + $0x78] sm:$0x3]
        %v562 = vld [vmem:[%s463 + $0x80] sm:$0xff]
        %v563 = vld [vmem:[%s463 + $0x88] sm:$0x3]
        %v564 = vld [vmem:[%s463 + $0x90] sm:$0xff]
        %v565 = vld [vmem:[%s463 + $0x98] sm:$0x3]
        %v566 = vld [vmem:[%s463 + $0xa0] sm:$0xff]
        %v567 = vld [vmem:[%s463 + $0xa8] sm:$0x3]
        %v568 = vld [vmem:[%s463 + $0xb0] sm:$0xff]
        %v569 = vld [vmem:[%s463 + $0xb8] sm:$0x3]
        %v570 = vld [vmem:[%s463 + $0xc0] sm:$0xff]
        %v571 = vld [vmem:[%s463 + $0xc8] sm:$0x3]
        %v572 = vld [vmem:[%s463 + $0xd0] sm:$0xff]
        %v573 = vld [vmem:[%s463 + $0xd8] sm:$0x3]
        %v574 = vld [vmem:[%s463 + $0xe0] sm:$0xff]
        %v575 = vld [vmem:[%s463 + $0xe8] sm:$0x3]
        %v576 = vld [vmem:[%s463 + $0xf0] sm:$0xff]
        %v577 = vld [vmem:[%s463 + $0xf8] sm:$0x3]
        %v578 = vld [vmem:[%s463 + $0x100] sm:$0xff]
        %v579 = vld [vmem:[%s463 + $0x108] sm:$0x3]
        %v580 = vld [vmem:[%s463 + $0x110] sm:$0xff]
        %v581 = vld [vmem:[%s463 + $0x118] sm:$0x3]
        %v582 = vld [vmem:[%s463 + $0x120] sm:$0xff]
        %v583 = vld [vmem:[%s463 + $0x128] sm:$0x3]
        %v584 = vld [vmem:[%s463 + $0x130] sm:$0xff]
        %v585 = vld [vmem:[%s463 + $0x138] sm:$0x3]
        %v586 = vld [vmem:[%s463 + $0x140] sm:$0xff]
        %v587 = vld [vmem:[%s463 + $0x148] sm:$0x3]
        %v588 = vld [vmem:[%s463 + $0x150] sm:$0xff]
        %v589 = vld [vmem:[%s463 + $0x158] sm:$0x3]
        %v590 = vld [vmem:[%s463 + $0x160] sm:$0xff]
        %v591 = vld [vmem:[%s463 + $0x168] sm:$0x3]
        %v592 = vld [vmem:[%s463 + $0x170] sm:$0xff]
        %v593 = vld [vmem:[%s463 + $0x178] sm:$0x3]
        %v594 = vld [vmem:[%s463 + $0x180] sm:$0xff]
        %v595 = vld [vmem:[%s463 + $0x188] sm:$0x3]
        %v596 = vld [vmem:[%s463 + $0x190] sm:$0xff]
        %v597 = vld [vmem:[%s463 + $0x198] sm:$0x3]
        %v598 = vld [vmem:[%s463 + $0x1a0] sm:$0xff]
        %v599 = vld [vmem:[%s463 + $0x1a8] sm:$0x3]
        %v600 = vld [vmem:[%s463 + $0x1b0] sm:$0xff]
        %v601 = vld [vmem:[%s463 + $0x1b8] sm:$0x3]
        %v602 = vld [vmem:[%s463 + $0x1c0] sm:$0xff]
        %v603 = vld [vmem:[%s463 + $0x1c8] sm:$0x3]
        %v604 = vld [vmem:[%s463 + $0x1e0] sm:$0xff]
        %v605 = vld [vmem:[%s463 + $0x1e8] sm:$0x3]
        %v606 = vld [vmem:[%s463 + $0x1f0] sm:$0xff]
        %v607 = vld [vmem:[%s463 + $0x1f8] sm:$0x3]
        %v608 = vld [vmem:[%s463 + $0x200] sm:$0xff]
        %v609 = vld [vmem:[%s463 + $0x208] sm:$0x3]
        %v610 = vld [vmem:[%s463 + $0x210] sm:$0xff]
        %v611 = vld [vmem:[%s463 + $0x218] sm:$0x3]
        %v612 = vld [vmem:[%s463 + $0x220] sm:$0xff]
        %v613 = vld [vmem:[%s463 + $0x228] sm:$0x3]
        %v614 = vld [vmem:[%s463 + $0x230] sm:$0xff]
        %v615 = vld [vmem:[%s463 + $0x238] sm:$0x3]
        %v616 = vld [vmem:[%s463 + $0x240] sm:$0xff]
        %v617 = vld [vmem:[%s463 + $0x248] sm:$0x3]
        %v618 = vld [vmem:[%s463 + $0x250] sm:$0xff]
        %v619 = vld [vmem:[%s463 + $0x258] sm:$0x3]
        %v620 = vld [vmem:[%s463 + $0x260] sm:$0xff]
        %v621 = vld [vmem:[%s463 + $0x268] sm:$0x3]
        %v622 = vlaneseq
        %v623 = vshrl.u32 %v622, 7
        %v624 = vsub.s32 0, %v623
        %v625 = vrot.slane %v542, %v624
        %v626 = vmul.f32 %v546, %v625
        %v627 = vmul.f32 %v548, %v625
        %v628 = vmul.f32 %v550, %v625
        %v629 = vmul.f32 %v552, %v625
        %v630 = vmul.f32 %v554, %v625
        %v631 = vmul.f32 %v556, %v625
        %v632 = vmul.f32 %v558, %v625
        %v633 = vmul.f32 %v560, %v625
        %v634 = vadd.f32 %v626, 0.0
        %v635 = vadd.f32 %v627, 0.0
        %v636 = vadd.f32 %v628, 0.0
        %v637 = vadd.f32 %v629, 0.0
        %v638 = vadd.f32 %v630, 0.0
        %v639 = vadd.f32 %v631, 0.0
        %v640 = vadd.f32 %v632, 0.0
        %v641 = vadd.f32 %v633, 0.0
        %v642 = vlaneseq
        %v643 = vshrl.u32 %v642, 7
        %v644 = vsub.s32 1, %v643
        %v645 = vrot.slane %v542, %v644
        %v646 = vmul.f32 %v566, %v645
        %v647 = vmul.f32 %v568, %v645
        %v648 = vmul.f32 %v570, %v645
        %v649 = vmul.f32 %v572, %v645
        %v650 = vmul.f32 %v574, %v645
        %v651 = vmul.f32 %v576, %v645
        %v652 = vmul.f32 %v578, %v645
        %v653 = vmul.f32 %v580, %v645
        %v654 = vadd.f32 %v634, %v646
        %v655 = vadd.f32 %v635, %v647
        %v656 = vadd.f32 %v636, %v648
        %v657 = vadd.f32 %v637, %v649
        %v658 = vadd.f32 %v638, %v650
        %v659 = vadd.f32 %v639, %v651
        %v660 = vadd.f32 %v640, %v652
        %v661 = vadd.f32 %v641, %v653
        %v662 = vlaneseq
        %v663 = vshrl.u32 %v662, 7
        %v664 = vsub.s32 2, %v663
        %v665 = vrot.slane %v542, %v664
        %v666 = vmul.f32 %v546, %v665
        %v667 = vmul.f32 %v547, %v665
        %v668 = vmul.f32 %v548, %v665
        %v669 = vmul.f32 %v549, %v665
        %v670 = vmul.f32 %v550, %v665
        %v671 = vmul.f32 %v551, %v665
        %v672 = vmul.f32 %v552, %v665
        %v673 = vmul.f32 %v553, %v665
        %v674 = vmul.f32 %v554, %v665
        %v675 = vmul.f32 %v555, %v665
        %v676 = vmul.f32 %v556, %v665
        %v677 = vmul.f32 %v557, %v665
        %v678 = vmul.f32 %v558, %v665
        %v679 = vmul.f32 %v559, %v665
        %v680 = vmul.f32 %v560, %v665
        %v681 = vmul.f32 %v561, %v665
        %vm698 = vcmask 1046528
        %v699 = vrot.slane %v666, 1
        %v700 = vrot.slane %v667, 1
        %v701 = vsel %vm698, %v699, %v700
        %v702 = vrot.slane %v668, 1
        %v703 = vrot.slane %v669, 1
        %v704 = vsel %vm698, %v702, %v703
        %v705 = vrot.slane %v670, 1
        %v706 = vrot.slane %v671, 1
        %v707 = vsel %vm698, %v705, %v706
        %v708 = vrot.slane %v672, 1
        %v709 = vrot.slane %v673, 1
        %v710 = vsel %vm698, %v708, %v709
        %v711 = vrot.slane %v674, 1
        %v712 = vrot.slane %v675, 1
        %v713 = vsel %vm698, %v711, %v712
        %v714 = vrot.slane %v676, 1
        %v715 = vrot.slane %v677, 1
        %v716 = vsel %vm698, %v714, %v715
        %v717 = vrot.slane %v678, 1
        %v718 = vrot.slane %v679, 1
        %v719 = vsel %vm698, %v717, %v718
        %v720 = vrot.slane %v680, 1
        %v721 = vrot.slane %v681, 1
        %v722 = vsel %vm698, %v720, %v721
        %v731 = vadd.f32 %v654, %v701
        %v732 = vadd.f32 %v655, %v704
        %v733 = vadd.f32 %v656, %v707
        %v734 = vadd.f32 %v657, %v710
        %v735 = vadd.f32 %v658, %v713
        %v736 = vadd.f32 %v659, %v716
        %v737 = vadd.f32 %v660, %v719
        %v738 = vadd.f32 %v661, %v722
        %v739 = vlaneseq
        %v740 = vshrl.u32 %v739, 7
        %v741 = vsub.s32 3, %v740
        %v742 = vrot.slane %v542, %v741
        %v743 = vmul.f32 %v566, %v742
        %v744 = vmul.f32 %v567, %v742
        %v745 = vmul.f32 %v568, %v742
        %v746 = vmul.f32 %v569, %v742
        %v747 = vmul.f32 %v570, %v742
        %v748 = vmul.f32 %v571, %v742
        %v749 = vmul.f32 %v572, %v742
        %v750 = vmul.f32 %v573, %v742
        %v751 = vmul.f32 %v574, %v742
        %v752 = vmul.f32 %v575, %v742
        %v753 = vmul.f32 %v576, %v742
        %v754 = vmul.f32 %v577, %v742
        %v755 = vmul.f32 %v578, %v742
        %v756 = vmul.f32 %v579, %v742
        %v757 = vmul.f32 %v580, %v742
        %v758 = vmul.f32 %v581, %v742
        %v775 = vrot.slane %v743, 1
        %v776 = vrot.slane %v744, 1
        %v777 = vsel %vm698, %v775, %v776
        %v778 = vrot.slane %v745, 1
        %v779 = vrot.slane %v746, 1
        %v780 = vsel %vm698, %v778, %v779
        %v781 = vrot.slane %v747, 1
        %v782 = vrot.slane %v748, 1
        %v783 = vsel %vm698, %v781, %v782
        %v784 = vrot.slane %v749, 1
        %v785 = vrot.slane %v750, 1
        %v786 = vsel %vm698, %v784, %v785
        %v787 = vrot.slane %v751, 1
        %v788 = vrot.slane %v752, 1
        %v789 = vsel %vm698, %v787, %v788
        %v790 = vrot.slane %v753, 1
        %v791 = vrot.slane %v754, 1
        %v792 = vsel %vm698, %v790, %v791
        %v793 = vrot.slane %v755, 1
        %v794 = vrot.slane %v756, 1
        %v795 = vsel %vm698, %v793, %v794
        %v796 = vrot.slane %v757, 1
        %v797 = vrot.slane %v758, 1
        %v798 = vsel %vm698, %v796, %v797
        %v807 = vadd.f32 %v731, %v777
        %v808 = vadd.f32 %v732, %v780
        %v809 = vadd.f32 %v733, %v783
        %v810 = vadd.f32 %v734, %v786
        %v811 = vadd.f32 %v735, %v789
        %v812 = vadd.f32 %v736, %v792
        %v813 = vadd.f32 %v737, %v795
        %v814 = vadd.f32 %v738, %v798
        %v815 = vlaneseq
        %v816 = vshrl.u32 %v815, 7
        %v817 = vsub.s32 4, %v816
        %v818 = vrot.slane %v542, %v817
        %v819 = vmul.f32 %v546, %v818
        %v820 = vmul.f32 %v547, %v818
        %v821 = vmul.f32 %v548, %v818
        %v822 = vmul.f32 %v549, %v818
        %v823 = vmul.f32 %v550, %v818
        %v824 = vmul.f32 %v551, %v818
        %v825 = vmul.f32 %v552, %v818
        %v826 = vmul.f32 %v553, %v818
        %v827 = vmul.f32 %v554, %v818
        %v828 = vmul.f32 %v555, %v818
        %v829 = vmul.f32 %v556, %v818
        %v830 = vmul.f32 %v557, %v818
        %v831 = vmul.f32 %v558, %v818
        %v832 = vmul.f32 %v559, %v818
        %v833 = vmul.f32 %v560, %v818
        %v834 = vmul.f32 %v561, %v818
        %vm851 = vcmask 1045504
        %v852 = vrot.slane %v819, 2
        %v853 = vrot.slane %v820, 2
        %v854 = vsel %vm851, %v852, %v853
        %v855 = vrot.slane %v821, 2
        %v856 = vrot.slane %v822, 2
        %v857 = vsel %vm851, %v855, %v856
        %v858 = vrot.slane %v823, 2
        %v859 = vrot.slane %v824, 2
        %v860 = vsel %vm851, %v858, %v859
        %v861 = vrot.slane %v825, 2
        %v862 = vrot.slane %v826, 2
        %v863 = vsel %vm851, %v861, %v862
        %v864 = vrot.slane %v827, 2
        %v865 = vrot.slane %v828, 2
        %v866 = vsel %vm851, %v864, %v865
        %v867 = vrot.slane %v829, 2
        %v868 = vrot.slane %v830, 2
        %v869 = vsel %vm851, %v867, %v868
        %v870 = vrot.slane %v831, 2
        %v871 = vrot.slane %v832, 2
        %v872 = vsel %vm851, %v870, %v871
        %v873 = vrot.slane %v833, 2
        %v874 = vrot.slane %v834, 2
        %v875 = vsel %vm851, %v873, %v874
        %v884 = vadd.f32 %v807, %v854
        %v885 = vadd.f32 %v808, %v857
        %v886 = vadd.f32 %v809, %v860
        %v887 = vadd.f32 %v810, %v863
        %v888 = vadd.f32 %v811, %v866
        %v889 = vadd.f32 %v812, %v869
        %v890 = vadd.f32 %v813, %v872
        %v891 = vadd.f32 %v814, %v875
        %v892 = vlaneseq
        %v893 = vshrl.u32 %v892, 7
        %v894 = vsub.s32 5, %v893
        %v895 = vrot.slane %v542, %v894
        %v896 = vmul.f32 %v586, %v895
        %v897 = vmul.f32 %v588, %v895
        %v898 = vmul.f32 %v590, %v895
        %v899 = vmul.f32 %v592, %v895
        %v900 = vmul.f32 %v594, %v895
        %v901 = vmul.f32 %v596, %v895
        %v902 = vmul.f32 %v598, %v895
        %v903 = vmul.f32 %v600, %v895
        %v904 = vadd.f32 %v884, %v896
        %v905 = vadd.f32 %v885, %v897
        %v906 = vadd.f32 %v886, %v898
        %v907 = vadd.f32 %v887, %v899
        %v908 = vadd.f32 %v888, %v900
        %v909 = vadd.f32 %v889, %v901
        %v910 = vadd.f32 %v890, %v902
        %v911 = vadd.f32 %v891, %v903
        %v912 = vlaneseq
        %v913 = vshrl.u32 %v912, 7
        %v914 = vsub.s32 6, %v913
        %v915 = vrot.slane %v542, %v914
        %v916 = vmul.f32 %v604, %v915
        %v917 = vmul.f32 %v606, %v915
        %v918 = vmul.f32 %v608, %v915
        %v919 = vmul.f32 %v610, %v915
        %v920 = vmul.f32 %v612, %v915
        %v921 = vmul.f32 %v614, %v915
        %v922 = vmul.f32 %v616, %v915
        %v923 = vmul.f32 %v618, %v915
        %v924 = vadd.f32 %v904, %v916
        %v925 = vadd.f32 %v905, %v917
        %v926 = vadd.f32 %v906, %v918
        %v927 = vadd.f32 %v907, %v919
        %v928 = vadd.f32 %v908, %v920
        %v929 = vadd.f32 %v909, %v921
        %v930 = vadd.f32 %v910, %v922
        %v931 = vadd.f32 %v911, %v923
        %v932 = vlaneseq
        %v933 = vshrl.u32 %v932, 7
        %v934 = vsub.s32 7, %v933
        %v935 = vrot.slane %v542, %v934
        %v936 = vmul.f32 %v586, %v935
        %v937 = vmul.f32 %v587, %v935
        %v938 = vmul.f32 %v588, %v935
        %v939 = vmul.f32 %v589, %v935
        %v940 = vmul.f32 %v590, %v935
        %v941 = vmul.f32 %v591, %v935
        %v942 = vmul.f32 %v592, %v935
        %v943 = vmul.f32 %v593, %v935
        %v944 = vmul.f32 %v594, %v935
        %v945 = vmul.f32 %v595, %v935
        %v946 = vmul.f32 %v596, %v935
        %v947 = vmul.f32 %v597, %v935
        %v948 = vmul.f32 %v598, %v935
        %v949 = vmul.f32 %v599, %v935
        %v950 = vmul.f32 %v600, %v935
        %v951 = vmul.f32 %v601, %v935
        %v968 = vrot.slane %v936, 1
        %v969 = vrot.slane %v937, 1
        %v970 = vsel %vm698, %v968, %v969
        %v971 = vrot.slane %v938, 1
        %v972 = vrot.slane %v939, 1
        %v973 = vsel %vm698, %v971, %v972
        %v974 = vrot.slane %v940, 1
        %v975 = vrot.slane %v941, 1
        %v976 = vsel %vm698, %v974, %v975
        %v977 = vrot.slane %v942, 1
        %v978 = vrot.slane %v943, 1
        %v979 = vsel %vm698, %v977, %v978
        %v980 = vrot.slane %v944, 1
        %v981 = vrot.slane %v945, 1
        %v982 = vsel %vm698, %v980, %v981
        %v983 = vrot.slane %v946, 1
        %v984 = vrot.slane %v947, 1
        %v985 = vsel %vm698, %v983, %v984
        %v986 = vrot.slane %v948, 1
        %v987 = vrot.slane %v949, 1
        %v988 = vsel %vm698, %v986, %v987
        %v989 = vrot.slane %v950, 1
        %v990 = vrot.slane %v951, 1
        %v991 = vsel %vm698, %v989, %v990
        %v1000 = vadd.f32 %v924, %v970
        %v1001 = vadd.f32 %v925, %v973
        %v1002 = vadd.f32 %v926, %v976
        %v1003 = vadd.f32 %v927, %v979
        %v1004 = vadd.f32 %v928, %v982
        %v1005 = vadd.f32 %v929, %v985
        %v1006 = vadd.f32 %v930, %v988
        %v1007 = vadd.f32 %v931, %v991
        %v1008 = vlaneseq
        %v1009 = vshrl.u32 %v1008, 7
        %v1010 = vsub.s32 0, %v1009
        %v1011 = vrot.slane %v543, %v1010
        %v1012 = vmul.f32 %v604, %v1011
        %v1013 = vmul.f32 %v605, %v1011
        %v1014 = vmul.f32 %v606, %v1011
        %v1015 = vmul.f32 %v607, %v1011
        %v1016 = vmul.f32 %v608, %v1011
        %v1017 = vmul.f32 %v609, %v1011
        %v1018 = vmul.f32 %v610, %v1011
        %v1019 = vmul.f32 %v611, %v1011
        %v1020 = vmul.f32 %v612, %v1011
        %v1021 = vmul.f32 %v613, %v1011
        %v1022 = vmul.f32 %v614, %v1011
        %v1023 = vmul.f32 %v615, %v1011
        %v1024 = vmul.f32 %v616, %v1011
        %v1025 = vmul.f32 %v617, %v1011
        %v1026 = vmul.f32 %v618, %v1011
        %v1027 = vmul.f32 %v619, %v1011
        %v1044 = vrot.slane %v1012, 1
        %v1045 = vrot.slane %v1013, 1
        %v1046 = vsel %vm698, %v1044, %v1045
        %v1047 = vrot.slane %v1014, 1
        %v1048 = vrot.slane %v1015, 1
        %v1049 = vsel %vm698, %v1047, %v1048
        %v1050 = vrot.slane %v1016, 1
        %v1051 = vrot.slane %v1017, 1
        %v1052 = vsel %vm698, %v1050, %v1051
        %v1053 = vrot.slane %v1018, 1
        %v1054 = vrot.slane %v1019, 1
        %v1055 = vsel %vm698, %v1053, %v1054
        %v1056 = vrot.slane %v1020, 1
        %v1057 = vrot.slane %v1021, 1
        %v1058 = vsel %vm698, %v1056, %v1057
        %v1059 = vrot.slane %v1022, 1
        %v1060 = vrot.slane %v1023, 1
        %v1061 = vsel %vm698, %v1059, %v1060
        %v1062 = vrot.slane %v1024, 1
        %v1063 = vrot.slane %v1025, 1
        %v1064 = vsel %vm698, %v1062, %v1063
        %v1065 = vrot.slane %v1026, 1
        %v1066 = vrot.slane %v1027, 1
        %v1067 = vsel %vm698, %v1065, %v1066
        %v1076 = vadd.f32 %v1000, %v1046
        %v1077 = vadd.f32 %v1001, %v1049
        %v1078 = vadd.f32 %v1002, %v1052
        %v1079 = vadd.f32 %v1003, %v1055
        %v1080 = vadd.f32 %v1004, %v1058
        %v1081 = vadd.f32 %v1005, %v1061
        %v1082 = vadd.f32 %v1006, %v1064
        %v1083 = vadd.f32 %v1007, %v1067
        %v1084 = vlaneseq
        %v1085 = vshrl.u32 %v1084, 7
        %v1086 = vsub.s32 1, %v1085
        %v1087 = vrot.slane %v543, %v1086
        %v1088 = vmul.f32 %v586, %v1087
        %v1089 = vmul.f32 %v587, %v1087
        %v1090 = vmul.f32 %v588, %v1087
        %v1091 = vmul.f32 %v589, %v1087
        %v1092 = vmul.f32 %v590, %v1087
        %v1093 = vmul.f32 %v591, %v1087
        %v1094 = vmul.f32 %v592, %v1087
        %v1095 = vmul.f32 %v593, %v1087
        %v1096 = vmul.f32 %v594, %v1087
        %v1097 = vmul.f32 %v595, %v1087
        %v1098 = vmul.f32 %v596, %v1087
        %v1099 = vmul.f32 %v597, %v1087
        %v1100 = vmul.f32 %v598, %v1087
        %v1101 = vmul.f32 %v599, %v1087
        %v1102 = vmul.f32 %v600, %v1087
        %v1103 = vmul.f32 %v601, %v1087
        %v1120 = vrot.slane %v1088, 2
        %v1121 = vrot.slane %v1089, 2
        %v1122 = vsel %vm851, %v1120, %v1121
        %v1123 = vrot.slane %v1090, 2
        %v1124 = vrot.slane %v1091, 2
        %v1125 = vsel %vm851, %v1123, %v1124
        %v1126 = vrot.slane %v1092, 2
        %v1127 = vrot.slane %v1093, 2
        %v1128 = vsel %vm851, %v1126, %v1127
        %v1129 = vrot.slane %v1094, 2
        %v1130 = vrot.slane %v1095, 2
        %v1131 = vsel %vm851, %v1129, %v1130
        %v1132 = vrot.slane %v1096, 2
        %v1133 = vrot.slane %v1097, 2
        %v1134 = vsel %vm851, %v1132, %v1133
        %v1135 = vrot.slane %v1098, 2
        %v1136 = vrot.slane %v1099, 2
        %v1137 = vsel %vm851, %v1135, %v1136
        %v1138 = vrot.slane %v1100, 2
        %v1139 = vrot.slane %v1101, 2
        %v1140 = vsel %vm851, %v1138, %v1139
        %v1141 = vrot.slane %v1102, 2
        %v1142 = vrot.slane %v1103, 2
        %v1143 = vsel %vm851, %v1141, %v1142
        %v1152 = vadd.f32 %v1076, %v1122
        %v1153 = vadd.f32 %v1077, %v1125
        %v1154 = vadd.f32 %v1078, %v1128
        %v1155 = vadd.f32 %v1079, %v1131
        %v1156 = vadd.f32 %v1080, %v1134
        %v1157 = vadd.f32 %v1081, %v1137
        %v1158 = vadd.f32 %v1082, %v1140
        %v1159 = vadd.f32 %v1083, %v1143
        %v1160 = vlaneseq
        %v1161 = vshrl.u32 %v1160, 7
        %v1162 = vsub.s32 2, %v1161
        %v1163 = vrot.slane %v543, %v1162
        %v1164 = vmul.f32 %v548, %v1163
        %v1165 = vmul.f32 %v550, %v1163
        %v1166 = vmul.f32 %v552, %v1163
        %v1167 = vmul.f32 %v554, %v1163
        %v1168 = vmul.f32 %v556, %v1163
        %v1169 = vmul.f32 %v558, %v1163
        %v1170 = vmul.f32 %v560, %v1163
        %v1171 = vmul.f32 %v562, %v1163
        %v1172 = vadd.f32 %v1152, %v1164
        %v1173 = vadd.f32 %v1153, %v1165
        %v1174 = vadd.f32 %v1154, %v1166
        %v1175 = vadd.f32 %v1155, %v1167
        %v1176 = vadd.f32 %v1156, %v1168
        %v1177 = vadd.f32 %v1157, %v1169
        %v1178 = vadd.f32 %v1158, %v1170
        %v1179 = vadd.f32 %v1159, %v1171
        %v1180 = vlaneseq
        %v1181 = vshrl.u32 %v1180, 7
        %v1182 = vsub.s32 3, %v1181
        %v1183 = vrot.slane %v543, %v1182
        %v1184 = vmul.f32 %v568, %v1183
        %v1185 = vmul.f32 %v570, %v1183
        %v1186 = vmul.f32 %v572, %v1183
        %v1187 = vmul.f32 %v574, %v1183
        %v1188 = vmul.f32 %v576, %v1183
        %v1189 = vmul.f32 %v578, %v1183
        %v1190 = vmul.f32 %v580, %v1183
        %v1191 = vmul.f32 %v582, %v1183
        %v1192 = vadd.f32 %v1172, %v1184
        %v1193 = vadd.f32 %v1173, %v1185
        %v1194 = vadd.f32 %v1174, %v1186
        %v1195 = vadd.f32 %v1175, %v1187
        %v1196 = vadd.f32 %v1176, %v1188
        %v1197 = vadd.f32 %v1177, %v1189
        %v1198 = vadd.f32 %v1178, %v1190
        %v1199 = vadd.f32 %v1179, %v1191
        %v1200 = vlaneseq
        %v1201 = vshrl.u32 %v1200, 7
        %v1202 = vsub.s32 4, %v1201
        %v1203 = vrot.slane %v543, %v1202
        %v1204 = vmul.f32 %v548, %v1203
        %v1205 = vmul.f32 %v549, %v1203
        %v1206 = vmul.f32 %v550, %v1203
        %v1207 = vmul.f32 %v551, %v1203
        %v1208 = vmul.f32 %v552, %v1203
        %v1209 = vmul.f32 %v553, %v1203
        %v1210 = vmul.f32 %v554, %v1203
        %v1211 = vmul.f32 %v555, %v1203
        %v1212 = vmul.f32 %v556, %v1203
        %v1213 = vmul.f32 %v557, %v1203
        %v1214 = vmul.f32 %v558, %v1203
        %v1215 = vmul.f32 %v559, %v1203
        %v1216 = vmul.f32 %v560, %v1203
        %v1217 = vmul.f32 %v561, %v1203
        %v1218 = vmul.f32 %v562, %v1203
        %v1219 = vmul.f32 %v563, %v1203
        %v1236 = vrot.slane %v1204, 1
        %v1237 = vrot.slane %v1205, 1
        %v1238 = vsel %vm698, %v1236, %v1237
        %v1239 = vrot.slane %v1206, 1
        %v1240 = vrot.slane %v1207, 1
        %v1241 = vsel %vm698, %v1239, %v1240
        %v1242 = vrot.slane %v1208, 1
        %v1243 = vrot.slane %v1209, 1
        %v1244 = vsel %vm698, %v1242, %v1243
        %v1245 = vrot.slane %v1210, 1
        %v1246 = vrot.slane %v1211, 1
        %v1247 = vsel %vm698, %v1245, %v1246
        %v1248 = vrot.slane %v1212, 1
        %v1249 = vrot.slane %v1213, 1
        %v1250 = vsel %vm698, %v1248, %v1249
        %v1251 = vrot.slane %v1214, 1
        %v1252 = vrot.slane %v1215, 1
        %v1253 = vsel %vm698, %v1251, %v1252
        %v1254 = vrot.slane %v1216, 1
        %v1255 = vrot.slane %v1217, 1
        %v1256 = vsel %vm698, %v1254, %v1255
        %v1257 = vrot.slane %v1218, 1
        %v1258 = vrot.slane %v1219, 1
        %v1259 = vsel %vm698, %v1257, %v1258
        %v1268 = vadd.f32 %v1192, %v1238
        %v1269 = vadd.f32 %v1193, %v1241
        %v1270 = vadd.f32 %v1194, %v1244
        %v1271 = vadd.f32 %v1195, %v1247
        %v1272 = vadd.f32 %v1196, %v1250
        %v1273 = vadd.f32 %v1197, %v1253
        %v1274 = vadd.f32 %v1198, %v1256
        %v1275 = vadd.f32 %v1199, %v1259
        %v1276 = vlaneseq
        %v1277 = vshrl.u32 %v1276, 7
        %v1278 = vsub.s32 5, %v1277
        %v1279 = vrot.slane %v543, %v1278
        %v1280 = vmul.f32 %v568, %v1279
        %v1281 = vmul.f32 %v569, %v1279
        %v1282 = vmul.f32 %v570, %v1279
        %v1283 = vmul.f32 %v571, %v1279
        %v1284 = vmul.f32 %v572, %v1279
        %v1285 = vmul.f32 %v573, %v1279
        %v1286 = vmul.f32 %v574, %v1279
        %v1287 = vmul.f32 %v575, %v1279
        %v1288 = vmul.f32 %v576, %v1279
        %v1289 = vmul.f32 %v577, %v1279
        %v1290 = vmul.f32 %v578, %v1279
        %v1291 = vmul.f32 %v579, %v1279
        %v1292 = vmul.f32 %v580, %v1279
        %v1293 = vmul.f32 %v581, %v1279
        %v1294 = vmul.f32 %v582, %v1279
        %v1295 = vmul.f32 %v583, %v1279
        %v1312 = vrot.slane %v1280, 1
        %v1313 = vrot.slane %v1281, 1
        %v1314 = vsel %vm698, %v1312, %v1313
        %v1315 = vrot.slane %v1282, 1
        %v1316 = vrot.slane %v1283, 1
        %v1317 = vsel %vm698, %v1315, %v1316
        %v1318 = vrot.slane %v1284, 1
        %v1319 = vrot.slane %v1285, 1
        %v1320 = vsel %vm698, %v1318, %v1319
        %v1321 = vrot.slane %v1286, 1
        %v1322 = vrot.slane %v1287, 1
        %v1323 = vsel %vm698, %v1321, %v1322
        %v1324 = vrot.slane %v1288, 1
        %v1325 = vrot.slane %v1289, 1
        %v1326 = vsel %vm698, %v1324, %v1325
        %v1327 = vrot.slane %v1290, 1
        %v1328 = vrot.slane %v1291, 1
        %v1329 = vsel %vm698, %v1327, %v1328
        %v1330 = vrot.slane %v1292, 1
        %v1331 = vrot.slane %v1293, 1
        %v1332 = vsel %vm698, %v1330, %v1331
        %v1333 = vrot.slane %v1294, 1
        %v1334 = vrot.slane %v1295, 1
        %v1335 = vsel %vm698, %v1333, %v1334
        %v1344 = vadd.f32 %v1268, %v1314
        %v1345 = vadd.f32 %v1269, %v1317
        %v1346 = vadd.f32 %v1270, %v1320
        %v1347 = vadd.f32 %v1271, %v1323
        %v1348 = vadd.f32 %v1272, %v1326
        %v1349 = vadd.f32 %v1273, %v1329
        %v1350 = vadd.f32 %v1274, %v1332
        %v1351 = vadd.f32 %v1275, %v1335
        %v1352 = vlaneseq
        %v1353 = vshrl.u32 %v1352, 7
        %v1354 = vsub.s32 6, %v1353
        %v1355 = vrot.slane %v543, %v1354
        %v1356 = vmul.f32 %v548, %v1355
        %v1357 = vmul.f32 %v549, %v1355
        %v1358 = vmul.f32 %v550, %v1355
        %v1359 = vmul.f32 %v551, %v1355
        %v1360 = vmul.f32 %v552, %v1355
        %v1361 = vmul.f32 %v553, %v1355
        %v1362 = vmul.f32 %v554, %v1355
        %v1363 = vmul.f32 %v555, %v1355
        %v1364 = vmul.f32 %v556, %v1355
        %v1365 = vmul.f32 %v557, %v1355
        %v1366 = vmul.f32 %v558, %v1355
        %v1367 = vmul.f32 %v559, %v1355
        %v1368 = vmul.f32 %v560, %v1355
        %v1369 = vmul.f32 %v561, %v1355
        %v1370 = vmul.f32 %v562, %v1355
        %v1371 = vmul.f32 %v563, %v1355
        %v1388 = vrot.slane %v1356, 2
        %v1389 = vrot.slane %v1357, 2
        %v1390 = vsel %vm851, %v1388, %v1389
        %v1391 = vrot.slane %v1358, 2
        %v1392 = vrot.slane %v1359, 2
        %v1393 = vsel %vm851, %v1391, %v1392
        %v1394 = vrot.slane %v1360, 2
        %v1395 = vrot.slane %v1361, 2
        %v1396 = vsel %vm851, %v1394, %v1395
        %v1397 = vrot.slane %v1362, 2
        %v1398 = vrot.slane %v1363, 2
        %v1399 = vsel %vm851, %v1397, %v1398
        %v1400 = vrot.slane %v1364, 2
        %v1401 = vrot.slane %v1365, 2
        %v1402 = vsel %vm851, %v1400, %v1401
        %v1403 = vrot.slane %v1366, 2
        %v1404 = vrot.slane %v1367, 2
        %v1405 = vsel %vm851, %v1403, %v1404
        %v1406 = vrot.slane %v1368, 2
        %v1407 = vrot.slane %v1369, 2
        %v1408 = vsel %vm851, %v1406, %v1407
        %v1409 = vrot.slane %v1370, 2
        %v1410 = vrot.slane %v1371, 2
        %v1411 = vsel %vm851, %v1409, %v1410
        %v1420 = vadd.f32 %v1344, %v1390
        %v1421 = vadd.f32 %v1345, %v1393
        %v1422 = vadd.f32 %v1346, %v1396
        %v1423 = vadd.f32 %v1347, %v1399
        %v1424 = vadd.f32 %v1348, %v1402
        %v1425 = vadd.f32 %v1349, %v1405
        %v1426 = vadd.f32 %v1350, %v1408
        %v1427 = vadd.f32 %v1351, %v1411
        %v1428 = vlaneseq
        %v1429 = vshrl.u32 %v1428, 7
        %v1430 = vsub.s32 7, %v1429
        %v1431 = vrot.slane %v543, %v1430
        %v1432 = vmul.f32 %v588, %v1431
        %v1433 = vmul.f32 %v590, %v1431
        %v1434 = vmul.f32 %v592, %v1431
        %v1435 = vmul.f32 %v594, %v1431
        %v1436 = vmul.f32 %v596, %v1431
        %v1437 = vmul.f32 %v598, %v1431
        %v1438 = vmul.f32 %v600, %v1431
        %v1439 = vmul.f32 %v602, %v1431
        %v1440 = vadd.f32 %v1420, %v1432
        %v1441 = vadd.f32 %v1421, %v1433
        %v1442 = vadd.f32 %v1422, %v1434
        %v1443 = vadd.f32 %v1423, %v1435
        %v1444 = vadd.f32 %v1424, %v1436
        %v1445 = vadd.f32 %v1425, %v1437
        %v1446 = vadd.f32 %v1426, %v1438
        %v1447 = vadd.f32 %v1427, %v1439
        %v1448 = vlaneseq
        %v1449 = vshrl.u32 %v1448, 7
        %v1450 = vsub.s32 0, %v1449
        %v1451 = vrot.slane %v544, %v1450
        %v1452 = vmul.f32 %v606, %v1451
        %v1453 = vmul.f32 %v608, %v1451
        %v1454 = vmul.f32 %v610, %v1451
        %v1455 = vmul.f32 %v612, %v1451
        %v1456 = vmul.f32 %v614, %v1451
        %v1457 = vmul.f32 %v616, %v1451
        %v1458 = vmul.f32 %v618, %v1451
        %v1459 = vmul.f32 %v620, %v1451
        %v1460 = vadd.f32 %v1440, %v1452
        %v1461 = vadd.f32 %v1441, %v1453
        %v1462 = vadd.f32 %v1442, %v1454
        %v1463 = vadd.f32 %v1443, %v1455
        %v1464 = vadd.f32 %v1444, %v1456
        %v1465 = vadd.f32 %v1445, %v1457
        %v1466 = vadd.f32 %v1446, %v1458
        %v1467 = vadd.f32 %v1447, %v1459
        %v1468 = vlaneseq
        %v1469 = vshrl.u32 %v1468, 7
        %v1470 = vsub.s32 1, %v1469
        %v1471 = vrot.slane %v544, %v1470
        %v1472 = vmul.f32 %v588, %v1471
        %v1473 = vmul.f32 %v589, %v1471
        %v1474 = vmul.f32 %v590, %v1471
        %v1475 = vmul.f32 %v591, %v1471
        %v1476 = vmul.f32 %v592, %v1471
        %v1477 = vmul.f32 %v593, %v1471
        %v1478 = vmul.f32 %v594, %v1471
        %v1479 = vmul.f32 %v595, %v1471
        %v1480 = vmul.f32 %v596, %v1471
        %v1481 = vmul.f32 %v597, %v1471
        %v1482 = vmul.f32 %v598, %v1471
        %v1483 = vmul.f32 %v599, %v1471
        %v1484 = vmul.f32 %v600, %v1471
        %v1485 = vmul.f32 %v601, %v1471
        %v1486 = vmul.f32 %v602, %v1471
        %v1487 = vmul.f32 %v603, %v1471
        %v1504 = vrot.slane %v1472, 1
        %v1505 = vrot.slane %v1473, 1
        %v1506 = vsel %vm698, %v1504, %v1505
        %v1507 = vrot.slane %v1474, 1
        %v1508 = vrot.slane %v1475, 1
        %v1509 = vsel %vm698, %v1507, %v1508
        %v1510 = vrot.slane %v1476, 1
        %v1511 = vrot.slane %v1477, 1
        %v1512 = vsel %vm698, %v1510, %v1511
        %v1513 = vrot.slane %v1478, 1
        %v1514 = vrot.slane %v1479, 1
        %v1515 = vsel %vm698, %v1513, %v1514
        %v1516 = vrot.slane %v1480, 1
        %v1517 = vrot.slane %v1481, 1
        %v1518 = vsel %vm698, %v1516, %v1517
        %v1519 = vrot.slane %v1482, 1
        %v1520 = vrot.slane %v1483, 1
        %v1521 = vsel %vm698, %v1519, %v1520
        %v1522 = vrot.slane %v1484, 1
        %v1523 = vrot.slane %v1485, 1
        %v1524 = vsel %vm698, %v1522, %v1523
        %v1525 = vrot.slane %v1486, 1
        %v1526 = vrot.slane %v1487, 1
        %v1527 = vsel %vm698, %v1525, %v1526
        %v1536 = vadd.f32 %v1460, %v1506
        %v1537 = vadd.f32 %v1461, %v1509
        %v1538 = vadd.f32 %v1462, %v1512
        %v1539 = vadd.f32 %v1463, %v1515
        %v1540 = vadd.f32 %v1464, %v1518
        %v1541 = vadd.f32 %v1465, %v1521
        %v1542 = vadd.f32 %v1466, %v1524
        %v1543 = vadd.f32 %v1467, %v1527
        %v1544 = vlaneseq
        %v1545 = vshrl.u32 %v1544, 7
        %v1546 = vsub.s32 2, %v1545
        %v1547 = vrot.slane %v544, %v1546
        %v1548 = vmul.f32 %v606, %v1547
        %v1549 = vmul.f32 %v607, %v1547
        %v1550 = vmul.f32 %v608, %v1547
        %v1551 = vmul.f32 %v609, %v1547
        %v1552 = vmul.f32 %v610, %v1547
        %v1553 = vmul.f32 %v611, %v1547
        %v1554 = vmul.f32 %v612, %v1547
        %v1555 = vmul.f32 %v613, %v1547
        %v1556 = vmul.f32 %v614, %v1547
        %v1557 = vmul.f32 %v615, %v1547
        %v1558 = vmul.f32 %v616, %v1547
        %v1559 = vmul.f32 %v617, %v1547
        %v1560 = vmul.f32 %v618, %v1547
        %v1561 = vmul.f32 %v619, %v1547
        %v1562 = vmul.f32 %v620, %v1547
        %v1563 = vmul.f32 %v621, %v1547
        %v1580 = vrot.slane %v1548, 1
        %v1581 = vrot.slane %v1549, 1
        %v1582 = vsel %vm698, %v1580, %v1581
        %v1583 = vrot.slane %v1550, 1
        %v1584 = vrot.slane %v1551, 1
        %v1585 = vsel %vm698, %v1583, %v1584
        %v1586 = vrot.slane %v1552, 1
        %v1587 = vrot.slane %v1553, 1
        %v1588 = vsel %vm698, %v1586, %v1587
        %v1589 = vrot.slane %v1554, 1
        %v1590 = vrot.slane %v1555, 1
        %v1591 = vsel %vm698, %v1589, %v1590
        %v1592 = vrot.slane %v1556, 1
        %v1593 = vrot.slane %v1557, 1
        %v1594 = vsel %vm698, %v1592, %v1593
        %v1595 = vrot.slane %v1558, 1
        %v1596 = vrot.slane %v1559, 1
        %v1597 = vsel %vm698, %v1595, %v1596
        %v1598 = vrot.slane %v1560, 1
        %v1599 = vrot.slane %v1561, 1
        %v1600 = vsel %vm698, %v1598, %v1599
        %v1601 = vrot.slane %v1562, 1
        %v1602 = vrot.slane %v1563, 1
        %v1603 = vsel %vm698, %v1601, %v1602
        %v1612 = vadd.f32 %v1536, %v1582
        %v1613 = vadd.f32 %v1537, %v1585
        %v1614 = vadd.f32 %v1538, %v1588
        %v1615 = vadd.f32 %v1539, %v1591
        %v1616 = vadd.f32 %v1540, %v1594
        %v1617 = vadd.f32 %v1541, %v1597
        %v1618 = vadd.f32 %v1542, %v1600
        %v1619 = vadd.f32 %v1543, %v1603
        %v1620 = vlaneseq
        %v1621 = vshrl.u32 %v1620, 7
        %v1622 = vsub.s32 3, %v1621
        %v1623 = vrot.slane %v544, %v1622
        %v1624 = vmul.f32 %v588, %v1623
        %v1625 = vmul.f32 %v589, %v1623
        %v1626 = vmul.f32 %v590, %v1623
        %v1627 = vmul.f32 %v591, %v1623
        %v1628 = vmul.f32 %v592, %v1623
        %v1629 = vmul.f32 %v593, %v1623
        %v1630 = vmul.f32 %v594, %v1623
        %v1631 = vmul.f32 %v595, %v1623
        %v1632 = vmul.f32 %v596, %v1623
        %v1633 = vmul.f32 %v597, %v1623
        %v1634 = vmul.f32 %v598, %v1623
        %v1635 = vmul.f32 %v599, %v1623
        %v1636 = vmul.f32 %v600, %v1623
        %v1637 = vmul.f32 %v601, %v1623
        %v1638 = vmul.f32 %v602, %v1623
        %v1639 = vmul.f32 %v603, %v1623
        %v1656 = vrot.slane %v1624, 2
        %v1657 = vrot.slane %v1625, 2
        %v1658 = vsel %vm851, %v1656, %v1657
        %v1659 = vrot.slane %v1626, 2
        %v1660 = vrot.slane %v1627, 2
        %v1661 = vsel %vm851, %v1659, %v1660
        %v1662 = vrot.slane %v1628, 2
        %v1663 = vrot.slane %v1629, 2
        %v1664 = vsel %vm851, %v1662, %v1663
        %v1665 = vrot.slane %v1630, 2
        %v1666 = vrot.slane %v1631, 2
        %v1667 = vsel %vm851, %v1665, %v1666
        %v1668 = vrot.slane %v1632, 2
        %v1669 = vrot.slane %v1633, 2
        %v1670 = vsel %vm851, %v1668, %v1669
        %v1671 = vrot.slane %v1634, 2
        %v1672 = vrot.slane %v1635, 2
        %v1673 = vsel %vm851, %v1671, %v1672
        %v1674 = vrot.slane %v1636, 2
        %v1675 = vrot.slane %v1637, 2
        %v1676 = vsel %vm851, %v1674, %v1675
        %v1677 = vrot.slane %v1638, 2
        %v1678 = vrot.slane %v1639, 2
        %v1679 = vsel %vm851, %v1677, %v1678
        %v1688 = vadd.f32 %v1612, %v1658
        %v1689 = vadd.f32 %v1613, %v1661
        %v1690 = vadd.f32 %v1614, %v1664
        %v1691 = vadd.f32 %v1615, %v1667
        %v1692 = vadd.f32 %v1616, %v1670
        %v1693 = vadd.f32 %v1617, %v1673
        %v1694 = vadd.f32 %v1618, %v1676
        %v1695 = vadd.f32 %v1619, %v1679
        %v1696 = vlaneseq
        %v1697 = vshrl.u32 %v1696, 7
        %v1698 = vsub.s32 4, %v1697
        %v1699 = vrot.slane %v544, %v1698
        %v1700 = vmul.f32 %v550, %v1699
        %v1701 = vmul.f32 %v552, %v1699
        %v1702 = vmul.f32 %v554, %v1699
        %v1703 = vmul.f32 %v556, %v1699
        %v1704 = vmul.f32 %v558, %v1699
        %v1705 = vmul.f32 %v560, %v1699
        %v1706 = vmul.f32 %v562, %v1699
        %v1707 = vmul.f32 %v564, %v1699
        %v1708 = vadd.f32 %v1688, %v1700
        %v1709 = vadd.f32 %v1689, %v1701
        %v1710 = vadd.f32 %v1690, %v1702
        %v1711 = vadd.f32 %v1691, %v1703
        %v1712 = vadd.f32 %v1692, %v1704
        %v1713 = vadd.f32 %v1693, %v1705
        %v1714 = vadd.f32 %v1694, %v1706
        %v1715 = vadd.f32 %v1695, %v1707
        %v1716 = vlaneseq
        %v1717 = vshrl.u32 %v1716, 7
        %v1718 = vsub.s32 5, %v1717
        %v1719 = vrot.slane %v544, %v1718
        %v1720 = vmul.f32 %v570, %v1719
        %v1721 = vmul.f32 %v572, %v1719
        %v1722 = vmul.f32 %v574, %v1719
        %v1723 = vmul.f32 %v576, %v1719
        %v1724 = vmul.f32 %v578, %v1719
        %v1725 = vmul.f32 %v580, %v1719
        %v1726 = vmul.f32 %v582, %v1719
        %v1727 = vmul.f32 %v584, %v1719
        %v1728 = vadd.f32 %v1708, %v1720
        %v1729 = vadd.f32 %v1709, %v1721
        %v1730 = vadd.f32 %v1710, %v1722
        %v1731 = vadd.f32 %v1711, %v1723
        %v1732 = vadd.f32 %v1712, %v1724
        %v1733 = vadd.f32 %v1713, %v1725
        %v1734 = vadd.f32 %v1714, %v1726
        %v1735 = vadd.f32 %v1715, %v1727
        %v1736 = vlaneseq
        %v1737 = vshrl.u32 %v1736, 7
        %v1738 = vsub.s32 6, %v1737
        %v1739 = vrot.slane %v544, %v1738
        %v1740 = vmul.f32 %v550, %v1739
        %v1741 = vmul.f32 %v551, %v1739
        %v1742 = vmul.f32 %v552, %v1739
        %v1743 = vmul.f32 %v553, %v1739
        %v1744 = vmul.f32 %v554, %v1739
        %v1745 = vmul.f32 %v555, %v1739
        %v1746 = vmul.f32 %v556, %v1739
        %v1747 = vmul.f32 %v557, %v1739
        %v1748 = vmul.f32 %v558, %v1739
        %v1749 = vmul.f32 %v559, %v1739
        %v1750 = vmul.f32 %v560, %v1739
        %v1751 = vmul.f32 %v561, %v1739
        %v1752 = vmul.f32 %v562, %v1739
        %v1753 = vmul.f32 %v563, %v1739
        %v1754 = vmul.f32 %v564, %v1739
        %v1755 = vmul.f32 %v565, %v1739
        %v1772 = vrot.slane %v1740, 1
        %v1773 = vrot.slane %v1741, 1
        %v1774 = vsel %vm698, %v1772, %v1773
        %v1775 = vrot.slane %v1742, 1
        %v1776 = vrot.slane %v1743, 1
        %v1777 = vsel %vm698, %v1775, %v1776
        %v1778 = vrot.slane %v1744, 1
        %v1779 = vrot.slane %v1745, 1
        %v1780 = vsel %vm698, %v1778, %v1779
        %v1781 = vrot.slane %v1746, 1
        %v1782 = vrot.slane %v1747, 1
        %v1783 = vsel %vm698, %v1781, %v1782
        %v1784 = vrot.slane %v1748, 1
        %v1785 = vrot.slane %v1749, 1
        %v1786 = vsel %vm698, %v1784, %v1785
        %v1787 = vrot.slane %v1750, 1
        %v1788 = vrot.slane %v1751, 1
        %v1789 = vsel %vm698, %v1787, %v1788
        %v1790 = vrot.slane %v1752, 1
        %v1791 = vrot.slane %v1753, 1
        %v1792 = vsel %vm698, %v1790, %v1791
        %v1793 = vrot.slane %v1754, 1
        %v1794 = vrot.slane %v1755, 1
        %v1795 = vsel %vm698, %v1793, %v1794
        %v1804 = vadd.f32 %v1728, %v1774
        %v1805 = vadd.f32 %v1729, %v1777
        %v1806 = vadd.f32 %v1730, %v1780
        %v1807 = vadd.f32 %v1731, %v1783
        %v1808 = vadd.f32 %v1732, %v1786
        %v1809 = vadd.f32 %v1733, %v1789
        %v1810 = vadd.f32 %v1734, %v1792
        %v1811 = vadd.f32 %v1735, %v1795
        %v1812 = vlaneseq
        %v1813 = vshrl.u32 %v1812, 7
        %v1814 = vsub.s32 7, %v1813
        %v1815 = vrot.slane %v544, %v1814
        %v1816 = vmul.f32 %v570, %v1815
        %v1817 = vmul.f32 %v571, %v1815
        %v1818 = vmul.f32 %v572, %v1815
        %v1819 = vmul.f32 %v573, %v1815
        %v1820 = vmul.f32 %v574, %v1815
        %v1821 = vmul.f32 %v575, %v1815
        %v1822 = vmul.f32 %v576, %v1815
        %v1823 = vmul.f32 %v577, %v1815
        %v1824 = vmul.f32 %v578, %v1815
        %v1825 = vmul.f32 %v579, %v1815
        %v1826 = vmul.f32 %v580, %v1815
        %v1827 = vmul.f32 %v581, %v1815
        %v1828 = vmul.f32 %v582, %v1815
        %v1829 = vmul.f32 %v583, %v1815
        %v1830 = vmul.f32 %v584, %v1815
        %v1831 = vmul.f32 %v585, %v1815
        %v1848 = vrot.slane %v1816, 1
        %v1849 = vrot.slane %v1817, 1
        %v1850 = vsel %vm698, %v1848, %v1849
        %v1851 = vrot.slane %v1818, 1
        %v1852 = vrot.slane %v1819, 1
        %v1853 = vsel %vm698, %v1851, %v1852
        %v1854 = vrot.slane %v1820, 1
        %v1855 = vrot.slane %v1821, 1
        %v1856 = vsel %vm698, %v1854, %v1855
        %v1857 = vrot.slane %v1822, 1
        %v1858 = vrot.slane %v1823, 1
        %v1859 = vsel %vm698, %v1857, %v1858
        %v1860 = vrot.slane %v1824, 1
        %v1861 = vrot.slane %v1825, 1
        %v1862 = vsel %vm698, %v1860, %v1861
        %v1863 = vrot.slane %v1826, 1
        %v1864 = vrot.slane %v1827, 1
        %v1865 = vsel %vm698, %v1863, %v1864
        %v1866 = vrot.slane %v1828, 1
        %v1867 = vrot.slane %v1829, 1
        %v1868 = vsel %vm698, %v1866, %v1867
        %v1869 = vrot.slane %v1830, 1
        %v1870 = vrot.slane %v1831, 1
        %v1871 = vsel %vm698, %v1869, %v1870
        %v1880 = vadd.f32 %v1804, %v1850
        %v1881 = vadd.f32 %v1805, %v1853
        %v1882 = vadd.f32 %v1806, %v1856
        %v1883 = vadd.f32 %v1807, %v1859
        %v1884 = vadd.f32 %v1808, %v1862
        %v1885 = vadd.f32 %v1809, %v1865
        %v1886 = vadd.f32 %v1810, %v1868
        %v1887 = vadd.f32 %v1811, %v1871
        %v1888 = vlaneseq
        %v1889 = vshrl.u32 %v1888, 7
        %v1890 = vsub.s32 0, %v1889
        %v1891 = vrot.slane %v545, %v1890
        %v1892 = vmul.f32 %v550, %v1891
        %v1893 = vmul.f32 %v551, %v1891
        %v1894 = vmul.f32 %v552, %v1891
        %v1895 = vmul.f32 %v553, %v1891
        %v1896 = vmul.f32 %v554, %v1891
        %v1897 = vmul.f32 %v555, %v1891
        %v1898 = vmul.f32 %v556, %v1891
        %v1899 = vmul.f32 %v557, %v1891
        %v1900 = vmul.f32 %v558, %v1891
        %v1901 = vmul.f32 %v559, %v1891
        %v1902 = vmul.f32 %v560, %v1891
        %v1903 = vmul.f32 %v561, %v1891
        %v1904 = vmul.f32 %v562, %v1891
        %v1905 = vmul.f32 %v563, %v1891
        %v1906 = vmul.f32 %v564, %v1891
        %v1907 = vmul.f32 %v565, %v1891
        %v1924 = vrot.slane %v1892, 2
        %v1925 = vrot.slane %v1893, 2
        %v1926 = vsel %vm851, %v1924, %v1925
        %v1927 = vrot.slane %v1894, 2
        %v1928 = vrot.slane %v1895, 2
        %v1929 = vsel %vm851, %v1927, %v1928
        %v1930 = vrot.slane %v1896, 2
        %v1931 = vrot.slane %v1897, 2
        %v1932 = vsel %vm851, %v1930, %v1931
        %v1933 = vrot.slane %v1898, 2
        %v1934 = vrot.slane %v1899, 2
        %v1935 = vsel %vm851, %v1933, %v1934
        %v1936 = vrot.slane %v1900, 2
        %v1937 = vrot.slane %v1901, 2
        %v1938 = vsel %vm851, %v1936, %v1937
        %v1939 = vrot.slane %v1902, 2
        %v1940 = vrot.slane %v1903, 2
        %v1941 = vsel %vm851, %v1939, %v1940
        %v1942 = vrot.slane %v1904, 2
        %v1943 = vrot.slane %v1905, 2
        %v1944 = vsel %vm851, %v1942, %v1943
        %v1945 = vrot.slane %v1906, 2
        %v1946 = vrot.slane %v1907, 2
        %v1947 = vsel %vm851, %v1945, %v1946
        %v1956 = vadd.f32 %v1880, %v1926
        %v1957 = vadd.f32 %v1881, %v1929
        %v1958 = vadd.f32 %v1882, %v1932
        %v1959 = vadd.f32 %v1883, %v1935
        %v1960 = vadd.f32 %v1884, %v1938
        %v1961 = vadd.f32 %v1885, %v1941
        %v1962 = vadd.f32 %v1886, %v1944
        %v1963 = vadd.f32 %v1887, %v1947
        %vm1964 = vcmask 261120
        %1965 = vst.msk [vmem:[#allocation2] sm:$0xff] %vm1964, %v1956
        %1966 = vst.msk [vmem:[#allocation2 + $0x8] sm:$0xff] %vm1964, %v1957
        %1967 = vst.msk [vmem:[#allocation2 + $0x10] sm:$0xff] %vm1964, %v1958
        %1968 = vst.msk [vmem:[#allocation2 + $0x18] sm:$0xff] %vm1964, %v1959
        %1969 = vst.msk [vmem:[#allocation2 + $0x20] sm:$0xff] %vm1964, %v1960
        %1970 = vst.msk [vmem:[#allocation2 + $0x28] sm:$0xff] %vm1964, %v1961
        %1971 = vst.msk [vmem:[#allocation2 + $0x30] sm:$0xff] %vm1964, %v1962
        %1972 = vst.msk [vmem:[#allocation2 + $0x38] sm:$0xff] %vm1964, %v1963
        %v1973 = vsel %vm1964, %v1956, 0.0
        %v1974 = vsel %vm1964, %v1957, 0.0
        %v1975 = vadd.f32 %v1973, %v1974
        %v1976 = vsel %vm1964, %v1958, 0.0
        %v1977 = vadd.f32 %v1975, %v1976
        %v1978 = vsel %vm1964, %v1959, 0.0
        %v1979 = vadd.f32 %v1977, %v1978
        %v1980 = vsel %vm1964, %v1960, 0.0
        %v1981 = vadd.f32 %v1979, %v1980
        %v1982 = vsel %vm1964, %v1961, 0.0
        %v1983 = vadd.f32 %v1981, %v1982
        %v1984 = vsel %vm1964, %v1962, 0.0
        %v1985 = vadd.f32 %v1983, %v1984
        %v1986 = vsel %vm1964, %v1963, 0.0
        %v1987 = vadd.f32 %v1985, %v1986
        %v1988 = vrot.slane %v1987, 4
        %v1989 = vadd.f32 %v1987, %v1988
        %v1990 = vrot.slane %v1989, 2
        %v1991 = vadd.f32 %v1989, %v1990
        %v1992 = vrot.slane %v1991, 1
        %v1993 = vadd.f32 %v1991, %v1992
        %v1994 = vadd.f32 %v1993, 0.0
        %v1995 = vmul.f32 %v1956, %v1956
        %v1996 = vmul.f32 %v1957, %v1957
        %v1997 = vmul.f32 %v1958, %v1958
        %v1998 = vmul.f32 %v1959, %v1959
        %v1999 = vmul.f32 %v1960, %v1960
        %v2000 = vmul.f32 %v1961, %v1961
        %v2001 = vmul.f32 %v1962, %v1962
        %v2002 = vmul.f32 %v1963, %v1963
        %v2003 = vsel %vm1964, %v1995, 0.0
        %v2004 = vsel %vm1964, %v1996, 0.0
        %v2005 = vadd.f32 %v2003, %v2004
        %v2006 = vsel %vm1964, %v1997, 0.0
        %v2007 = vadd.f32 %v2005, %v2006
        %v2008 = vsel %vm1964, %v1998, 0.0
        %v2009 = vadd.f32 %v2007, %v2008
        %v2010 = vsel %vm1964, %v1999, 0.0
        %v2011 = vadd.f32 %v2009, %v2010
        %v2012 = vsel %vm1964, %v2000, 0.0
        %v2013 = vadd.f32 %v2011, %v2012
        %v2014 = vsel %vm1964, %v2001, 0.0
        %v2015 = vadd.f32 %v2013, %v2014
        %v2016 = vsel %vm1964, %v2002, 0.0
        %v2017 = vadd.f32 %v2015, %v2016
        %v2018 = vrot.slane %v2017, 4
        %v2019 = vadd.f32 %v2017, %v2018
        %v2020 = vrot.slane %v2019, 2
        %v2021 = vadd.f32 %v2019, %v2020
        %v2022 = vrot.slane %v2021, 1
        %v2023 = vadd.f32 %v2021, %v2022
        %v2024 = vadd.f32 %v2023, 0.0
        %v2025 = vld [vmem:[#allocation15] sm:$0xff]
        %v2026 = vld [vmem:[#allocation15 + $0x8] sm:$0xff]
        %v2027 = vld [vmem:[#allocation15 + $0x10] sm:$0xff]
        %v2028 = vld [vmem:[#allocation15 + $0x18] sm:$0xff]
        %v2029 = vld [vmem:[#allocation17] sm:$0xff]
        %v2030 = vld [vmem:[#allocation17 + $0x8] sm:$0xff]
        %v2031 = vld [vmem:[#allocation17 + $0x10] sm:$0xff]
        %v2032 = vld [vmem:[#allocation17 + $0x18] sm:$0xff]
        %v2033 = vld [vmem:[#allocation8] sm:$0x1]
        %v2034 = vld [vmem:[#allocation9] sm:$0x1]
        %v2036 = vsel %vm1964, %v1994, 0
        %2038 = vmatprep.subr.mxu0 0.0
        %v2039 = vand.u32 %v2025, 4294901760
        %2040 = vmatpush1.msra.mxu0 %v2039
        %2041 = vmatprep.subr.mxu0 0.0
        %v2042 = vand.u32 %v2026, 4294901760
        %2043 = vmatpush1.msra.mxu0 %v2042
        %2044 = vmatprep.subr.mxu0 0.0
        %v2045 = vand.u32 %v2027, 4294901760
        %2046 = vmatpush1.msra.mxu0 %v2045
        %2047 = vmatprep.subr.mxu0 0.0
        %v2048 = vand.u32 %v2028, 4294901760
        %2049 = vmatpush1.msra.mxu0 %v2048
        %2050 = vmatprep.subr.mxu0 0.0
        %2051 = vmatpush1.msra.mxu0 0.0
        %2052 = vmatprep.subr.mxu0 0.0
        %2053 = vmatpush1.msra.mxu0 0.0
        %2054 = vmatprep.subr.mxu0 0.0
        %2055 = vmatpush1.msra.mxu0 0.0
        %2056 = vmatprep.subr.mxu0 0.0
        %2057 = vmatpush1.msra.mxu0 0.0
        %2058 = vmatprep.subr.mxu0 0.0
        %2059 = vmatpush1.msra.mxu0 0.0
        %2060 = vmatprep.subr.mxu0 0.0
        %2061 = vmatpush1.msra.mxu0 0.0
        %2062 = vmatprep.subr.mxu0 0.0
        %2063 = vmatpush1.msra.mxu0 0.0
        %2064 = vmatprep.subr.mxu0 0.0
        %2065 = vmatpush1.msra.mxu0 0.0
        %2066 = vmatprep.subr.mxu0 0.0
        %2067 = vmatpush1.msra.mxu0 0.0
        %2068 = vmatprep.subr.mxu0 0.0
        %2069 = vmatpush1.msra.mxu0 0.0
        %2070 = vmatprep.subr.mxu0 0.0
        %2071 = vmatpush1.msra.mxu0 0.0
        %2072 = vmatprep.subr.mxu0 0.0
        %2073 = vmatpush1.msra.mxu0 0.0
        %2074 = vmatprep.subr.mxu0 0.0
        %2075 = vmatpush1.msra.mxu0 0.0
        %2076 = vmatprep.subr.mxu0 0.0
        %2077 = vmatpush1.msra.mxu0 0.0
        %2078 = vmatprep.subr.mxu0 0.0
        %2079 = vmatpush1.msra.mxu0 0.0
        %2080 = vmatprep.subr.mxu0 0.0
        %2081 = vmatpush1.msra.mxu0 0.0
        %2082 = vmatprep.subr.mxu0 0.0
        %2083 = vmatpush1.msra.mxu0 0.0
        %2084 = vmatprep.subr.mxu0 0.0
        %2085 = vmatpush1.msra.mxu0 0.0
        %2086 = vmatprep.subr.mxu0 0.0
        %2087 = vmatpush1.msra.mxu0 0.0
        %2088 = vmatprep.subr.mxu0 0.0
        %2089 = vmatpush1.msra.mxu0 0.0
        %2090 = vmatprep.subr.mxu0 0.0
        %2091 = vmatpush1.msra.mxu0 0.0
        %2092 = vmatprep.subr.mxu0 0.0
        %2093 = vmatpush1.msra.mxu0 0.0
        %2094 = vmatprep.subr.mxu0 0.0
        %2095 = vmatpush1.msra.mxu0 0.0
        %2096 = vmatprep.subr.mxu0 0.0
        %2097 = vmatpush1.msra.mxu0 0.0
        %2098 = vmatprep.subr.mxu0 0.0
        %2099 = vmatpush1.msra.mxu0 0.0
        %2100 = vmatprep.subr.mxu0 0.0
        %2101 = vmatpush1.msra.mxu0 0.0
        %2102 = vmatprep.subr.mxu0 0.0
        %2103 = vmatpush1.msra.mxu0 0.0
        %2104 = vmatprep.subr.mxu0 0.0
        %2105 = vmatpush1.msra.mxu0 0.0
        %2106 = vmatprep.mubr.f32.mxu0 0.0
        %v2107 = vand.u32 %v2036, 4294901760
        %v2108 = vsub.f32 %v2036, %v2107
        %v2109 = vand.u32 %v2108, 4294901760
        %v2110 = vsub.f32 %v2108, %v2109
        %v2111 = vand.u32 %v2110, 4294901760
        %2112 = vmatmul.mubr.f32.gmra.mrb[0].mxu0 %v2111
        %v2113 = vpop.f32.mrb[0].mxu0
        %v2114 = vadd.f32 0.0, %v2113
        %v2115 = vpop.f32.mrb[0].mxu0
        %2116 = vdwg.mxu0
        %2117 = vmatprep.subr.mxu0 0.0
        %v2118 = vand.u32 %v2025, 4294901760
        %v2119 = vsub.f32 %v2025, %v2118
        %v2120 = vand.u32 %v2119, 4294901760
        %v2121 = vsub.f32 %v2119, %v2120
        %v2122 = vand.u32 %v2121, 4294901760
        %2123 = vmatpush1.msra.mxu0 %v2122
        %2124 = vmatprep.subr.mxu0 0.0
        %v2125 = vand.u32 %v2026, 4294901760
        %v2126 = vsub.f32 %v2026, %v2125
        %v2127 = vand.u32 %v2126, 4294901760
        %v2128 = vsub.f32 %v2126, %v2127
        %v2129 = vand.u32 %v2128, 4294901760
        %2130 = vmatpush1.msra.mxu0 %v2129
        %2131 = vmatprep.subr.mxu0 0.0
        %v2132 = vand.u32 %v2027, 4294901760
        %v2133 = vsub.f32 %v2027, %v2132
        %v2134 = vand.u32 %v2133, 4294901760
        %v2135 = vsub.f32 %v2133, %v2134
        %v2136 = vand.u32 %v2135, 4294901760
        %2137 = vmatpush1.msra.mxu0 %v2136
        %2138 = vmatprep.subr.mxu0 0.0
        %v2139 = vand.u32 %v2028, 4294901760
        %v2140 = vsub.f32 %v2028, %v2139
        %v2141 = vand.u32 %v2140, 4294901760
        %v2142 = vsub.f32 %v2140, %v2141
        %v2143 = vand.u32 %v2142, 4294901760
        %2144 = vmatpush1.msra.mxu0 %v2143
        %2145 = vmatprep.subr.mxu0 0.0
        %2146 = vmatpush1.msra.mxu0 0.0
        %2147 = vmatprep.subr.mxu0 0.0
        %2148 = vmatpush1.msra.mxu0 0.0
        %2149 = vmatprep.subr.mxu0 0.0
        %2150 = vmatpush1.msra.mxu0 0.0
        %2151 = vmatprep.subr.mxu0 0.0
        %2152 = vmatpush1.msra.mxu0 0.0
        %2153 = vmatprep.subr.mxu0 0.0
        %2154 = vmatpush1.msra.mxu0 0.0
        %2155 = vmatprep.subr.mxu0 0.0
        %2156 = vmatpush1.msra.mxu0 0.0
        %2157 = vmatprep.subr.mxu0 0.0
        %2158 = vmatpush1.msra.mxu0 0.0
        %2159 = vmatprep.subr.mxu0 0.0
        %2160 = vmatpush1.msra.mxu0 0.0
        %2161 = vmatprep.subr.mxu0 0.0
        %2162 = vmatpush1.msra.mxu0 0.0
        %2163 = vmatprep.subr.mxu0 0.0
        %2164 = vmatpush1.msra.mxu0 0.0
        %2165 = vmatprep.subr.mxu0 0.0
        %2166 = vmatpush1.msra.mxu0 0.0
        %2167 = vmatprep.subr.mxu0 0.0
        %2168 = vmatpush1.msra.mxu0 0.0
        %2169 = vmatprep.subr.mxu0 0.0
        %2170 = vmatpush1.msra.mxu0 0.0
        %2171 = vmatprep.subr.mxu0 0.0
        %2172 = vmatpush1.msra.mxu0 0.0
        %2173 = vmatprep.subr.mxu0 0.0
        %2174 = vmatpush1.msra.mxu0 0.0
        %2175 = vmatprep.subr.mxu0 0.0
        %2176 = vmatpush1.msra.mxu0 0.0
        %2177 = vmatprep.subr.mxu0 0.0
        %2178 = vmatpush1.msra.mxu0 0.0
        %2179 = vmatprep.subr.mxu0 0.0
        %2180 = vmatpush1.msra.mxu0 0.0
        %2181 = vmatprep.subr.mxu0 0.0
        %2182 = vmatpush1.msra.mxu0 0.0
        %2183 = vmatprep.subr.mxu0 0.0
        %2184 = vmatpush1.msra.mxu0 0.0
        %2185 = vmatprep.subr.mxu0 0.0
        %2186 = vmatpush1.msra.mxu0 0.0
        %2187 = vmatprep.subr.mxu0 0.0
        %2188 = vmatpush1.msra.mxu0 0.0
        %2189 = vmatprep.subr.mxu0 0.0
        %2190 = vmatpush1.msra.mxu0 0.0
        %2191 = vmatprep.subr.mxu0 0.0
        %2192 = vmatpush1.msra.mxu0 0.0
        %2193 = vmatprep.subr.mxu0 0.0
        %2194 = vmatpush1.msra.mxu0 0.0
        %2195 = vmatprep.subr.mxu0 0.0
        %2196 = vmatpush1.msra.mxu0 0.0
        %2197 = vmatprep.subr.mxu0 0.0
        %2198 = vmatpush1.msra.mxu0 0.0
        %2199 = vmatprep.subr.mxu0 0.0
        %2200 = vmatpush1.msra.mxu0 0.0
        %2201 = vmatprep.mubr.f32.mxu0 0.0
        %v2202 = vand.u32 %v2036, 4294901760
        %2203 = vmatmul.mubr.f32.gmra.mrb[0].mxu0 %v2202
        %v2204 = vpop.f32.mrb[0].mxu0
        %v2205 = vadd.f32 %v2114, %v2204
        %v2206 = vpop.f32.mrb[0].mxu0
        %2207 = vdwg.mxu0
        %2208 = vmatprep.subr.mxu0 0.0
        %v2209 = vand.u32 %v2025, 4294901760
        %v2210 = vsub.f32 %v2025, %v2209
        %2211 = vmatpush1.msra.mxu0 %v2210
        %2212 = vmatprep.subr.mxu0 0.0
        %v2213 = vand.u32 %v2026, 4294901760
        %v2214 = vsub.f32 %v2026, %v2213
        %2215 = vmatpush1.msra.mxu0 %v2214
        %2216 = vmatprep.subr.mxu0 0.0
        %v2217 = vand.u32 %v2027, 4294901760
        %v2218 = vsub.f32 %v2027, %v2217
        %2219 = vmatpush1.msra.mxu0 %v2218
        %2220 = vmatprep.subr.mxu0 0.0
        %v2221 = vand.u32 %v2028, 4294901760
        %v2222 = vsub.f32 %v2028, %v2221
        %2223 = vmatpush1.msra.mxu0 %v2222
        %2224 = vmatprep.subr.mxu0 0.0
        %2225 = vmatpush1.msra.mxu0 0.0
        %2226 = vmatprep.subr.mxu0 0.0
        %2227 = vmatpush1.msra.mxu0 0.0
        %2228 = vmatprep.subr.mxu0 0.0
        %2229 = vmatpush1.msra.mxu0 0.0
        %2230 = vmatprep.subr.mxu0 0.0
        %2231 = vmatpush1.msra.mxu0 0.0
        %2232 = vmatprep.subr.mxu0 0.0
        %2233 = vmatpush1.msra.mxu0 0.0
        %2234 = vmatprep.subr.mxu0 0.0
        %2235 = vmatpush1.msra.mxu0 0.0
        %2236 = vmatprep.subr.mxu0 0.0
        %2237 = vmatpush1.msra.mxu0 0.0
        %2238 = vmatprep.subr.mxu0 0.0
        %2239 = vmatpush1.msra.mxu0 0.0
        %2240 = vmatprep.subr.mxu0 0.0
        %2241 = vmatpush1.msra.mxu0 0.0
        %2242 = vmatprep.subr.mxu0 0.0
        %2243 = vmatpush1.msra.mxu0 0.0
        %2244 = vmatprep.subr.mxu0 0.0
        %2245 = vmatpush1.msra.mxu0 0.0
        %2246 = vmatprep.subr.mxu0 0.0
        %2247 = vmatpush1.msra.mxu0 0.0
        %2248 = vmatprep.subr.mxu0 0.0
        %2249 = vmatpush1.msra.mxu0 0.0
        %2250 = vmatprep.subr.mxu0 0.0
        %2251 = vmatpush1.msra.mxu0 0.0
        %2252 = vmatprep.subr.mxu0 0.0
        %2253 = vmatpush1.msra.mxu0 0.0
        %2254 = vmatprep.subr.mxu0 0.0
        %2255 = vmatpush1.msra.mxu0 0.0
        %2256 = vmatprep.subr.mxu0 0.0
        %2257 = vmatpush1.msra.mxu0 0.0
        %2258 = vmatprep.subr.mxu0 0.0
        %2259 = vmatpush1.msra.mxu0 0.0
        %2260 = vmatprep.subr.mxu0 0.0
        %2261 = vmatpush1.msra.mxu0 0.0
        %2262 = vmatprep.subr.mxu0 0.0
        %2263 = vmatpush1.msra.mxu0 0.0
        %2264 = vmatprep.subr.mxu0 0.0
        %2265 = vmatpush1.msra.mxu0 0.0
        %2266 = vmatprep.subr.mxu0 0.0
        %2267 = vmatpush1.msra.mxu0 0.0
        %2268 = vmatprep.subr.mxu0 0.0
        %2269 = vmatpush1.msra.mxu0 0.0
        %2270 = vmatprep.subr.mxu0 0.0
        %2271 = vmatpush1.msra.mxu0 0.0
        %2272 = vmatprep.subr.mxu0 0.0
        %2273 = vmatpush1.msra.mxu0 0.0
        %2274 = vmatprep.subr.mxu0 0.0
        %2275 = vmatpush1.msra.mxu0 0.0
        %2276 = vmatprep.subr.mxu0 0.0
        %2277 = vmatpush1.msra.mxu0 0.0
        %2278 = vmatprep.subr.mxu0 0.0
        %2279 = vmatpush1.msra.mxu0 0.0
        %2280 = vmatprep.mubr.f32.mxu0 0.0
        %v2281 = vand.u32 %v2036, 4294901760
        %v2282 = vsub.f32 %v2036, %v2281
        %2283 = vmatmul.mubr.f32.gmra.mrb[0].mxu0 %v2282
        %v2284 = vpop.f32.mrb[0].mxu0
        %v2285 = vadd.f32 %v2205, %v2284
        %v2286 = vpop.f32.mrb[0].mxu0
        %2287 = vdwg.mxu0
        %2288 = vmatprep.subr.mxu0 0.0
        %v2289 = vand.u32 %v2025, 4294901760
        %2290 = vmatpush1.msra.mxu0 %v2289
        %2291 = vmatprep.subr.mxu0 0.0
        %v2292 = vand.u32 %v2026, 4294901760
        %2293 = vmatpush1.msra.mxu0 %v2292
        %2294 = vmatprep.subr.mxu0 0.0
        %v2295 = vand.u32 %v2027, 4294901760
        %2296 = vmatpush1.msra.mxu0 %v2295
        %2297 = vmatprep.subr.mxu0 0.0
        %v2298 = vand.u32 %v2028, 4294901760
        %2299 = vmatpush1.msra.mxu0 %v2298
        %2300 = vmatprep.subr.mxu0 0.0
        %2301 = vmatpush1.msra.mxu0 0.0
        %2302 = vmatprep.subr.mxu0 0.0
        %2303 = vmatpush1.msra.mxu0 0.0
        %2304 = vmatprep.subr.mxu0 0.0
        %2305 = vmatpush1.msra.mxu0 0.0
        %2306 = vmatprep.subr.mxu0 0.0
        %2307 = vmatpush1.msra.mxu0 0.0
        %2308 = vmatprep.subr.mxu0 0.0
        %2309 = vmatpush1.msra.mxu0 0.0
        %2310 = vmatprep.subr.mxu0 0.0
        %2311 = vmatpush1.msra.mxu0 0.0
        %2312 = vmatprep.subr.mxu0 0.0
        %2313 = vmatpush1.msra.mxu0 0.0
        %2314 = vmatprep.subr.mxu0 0.0
        %2315 = vmatpush1.msra.mxu0 0.0
        %2316 = vmatprep.subr.mxu0 0.0
        %2317 = vmatpush1.msra.mxu0 0.0
        %2318 = vmatprep.subr.mxu0 0.0
        %2319 = vmatpush1.msra.mxu0 0.0
        %2320 = vmatprep.subr.mxu0 0.0
        %2321 = vmatpush1.msra.mxu0 0.0
        %2322 = vmatprep.subr.mxu0 0.0
        %2323 = vmatpush1.msra.mxu0 0.0
        %2324 = vmatprep.subr.mxu0 0.0
        %2325 = vmatpush1.msra.mxu0 0.0
        %2326 = vmatprep.subr.mxu0 0.0
        %2327 = vmatpush1.msra.mxu0 0.0
        %2328 = vmatprep.subr.mxu0 0.0
        %2329 = vmatpush1.msra.mxu0 0.0
        %2330 = vmatprep.subr.mxu0 0.0
        %2331 = vmatpush1.msra.mxu0 0.0
        %2332 = vmatprep.subr.mxu0 0.0
        %2333 = vmatpush1.msra.mxu0 0.0
        %2334 = vmatprep.subr.mxu0 0.0
        %2335 = vmatpush1.msra.mxu0 0.0
        %2336 = vmatprep.subr.mxu0 0.0
        %2337 = vmatpush1.msra.mxu0 0.0
        %2338 = vmatprep.subr.mxu0 0.0
        %2339 = vmatpush1.msra.mxu0 0.0
        %2340 = vmatprep.subr.mxu0 0.0
        %2341 = vmatpush1.msra.mxu0 0.0
        %2342 = vmatprep.subr.mxu0 0.0
        %2343 = vmatpush1.msra.mxu0 0.0
        %2344 = vmatprep.subr.mxu0 0.0
        %2345 = vmatpush1.msra.mxu0 0.0
        %2346 = vmatprep.subr.mxu0 0.0
        %2347 = vmatpush1.msra.mxu0 0.0
        %2348 = vmatprep.subr.mxu0 0.0
        %2349 = vmatpush1.msra.mxu0 0.0
        %2350 = vmatprep.subr.mxu0 0.0
        %2351 = vmatpush1.msra.mxu0 0.0
        %2352 = vmatprep.subr.mxu0 0.0
        %2353 = vmatpush1.msra.mxu0 0.0
        %2354 = vmatprep.subr.mxu0 0.0
        %2355 = vmatpush1.msra.mxu0 0.0
        %2356 = vmatprep.mubr.f32.mxu0 0.0
        %v2357 = vand.u32 %v2036, 4294901760
        %v2358 = vsub.f32 %v2036, %v2357
        %v2359 = vand.u32 %v2358, 4294901760
        %2360 = vmatmul.mubr.f32.gmra.mrb[0].mxu0 %v2359
        %v2361 = vpop.f32.mrb[0].mxu0
        %v2362 = vadd.f32 %v2285, %v2361
        %v2363 = vpop.f32.mrb[0].mxu0
        %2364 = vdwg.mxu0
        %2365 = vmatprep.subr.mxu0 0.0
        %v2366 = vand.u32 %v2025, 4294901760
        %v2367 = vsub.f32 %v2025, %v2366
        %v2368 = vand.u32 %v2367, 4294901760
        %2369 = vmatpush1.msra.mxu0 %v2368
        %2370 = vmatprep.subr.mxu0 0.0
        %v2371 = vand.u32 %v2026, 4294901760
        %v2372 = vsub.f32 %v2026, %v2371
        %v2373 = vand.u32 %v2372, 4294901760
        %2374 = vmatpush1.msra.mxu0 %v2373
        %2375 = vmatprep.subr.mxu0 0.0
        %v2376 = vand.u32 %v2027, 4294901760
        %v2377 = vsub.f32 %v2027, %v2376
        %v2378 = vand.u32 %v2377, 4294901760
        %2379 = vmatpush1.msra.mxu0 %v2378
        %2380 = vmatprep.subr.mxu0 0.0
        %v2381 = vand.u32 %v2028, 4294901760
        %v2382 = vsub.f32 %v2028, %v2381
        %v2383 = vand.u32 %v2382, 4294901760
        %2384 = vmatpush1.msra.mxu0 %v2383
        %2385 = vmatprep.subr.mxu0 0.0
        %2386 = vmatpush1.msra.mxu0 0.0
        %2387 = vmatprep.subr.mxu0 0.0
        %2388 = vmatpush1.msra.mxu0 0.0
        %2389 = vmatprep.subr.mxu0 0.0
        %2390 = vmatpush1.msra.mxu0 0.0
        %2391 = vmatprep.subr.mxu0 0.0
        %2392 = vmatpush1.msra.mxu0 0.0
        %2393 = vmatprep.subr.mxu0 0.0
        %2394 = vmatpush1.msra.mxu0 0.0
        %2395 = vmatprep.subr.mxu0 0.0
        %2396 = vmatpush1.msra.mxu0 0.0
        %2397 = vmatprep.subr.mxu0 0.0
        %2398 = vmatpush1.msra.mxu0 0.0
        %2399 = vmatprep.subr.mxu0 0.0
        %2400 = vmatpush1.msra.mxu0 0.0
        %2401 = vmatprep.subr.mxu0 0.0
        %2402 = vmatpush1.msra.mxu0 0.0
        %2403 = vmatprep.subr.mxu0 0.0
        %2404 = vmatpush1.msra.mxu0 0.0
        %2405 = vmatprep.subr.mxu0 0.0
        %2406 = vmatpush1.msra.mxu0 0.0
        %2407 = vmatprep.subr.mxu0 0.0
        %2408 = vmatpush1.msra.mxu0 0.0
        %2409 = vmatprep.subr.mxu0 0.0
        %2410 = vmatpush1.msra.mxu0 0.0
        %2411 = vmatprep.subr.mxu0 0.0
        %2412 = vmatpush1.msra.mxu0 0.0
        %2413 = vmatprep.subr.mxu0 0.0
        %2414 = vmatpush1.msra.mxu0 0.0
        %2415 = vmatprep.subr.mxu0 0.0
        %2416 = vmatpush1.msra.mxu0 0.0
        %2417 = vmatprep.subr.mxu0 0.0
        %2418 = vmatpush1.msra.mxu0 0.0
        %2419 = vmatprep.subr.mxu0 0.0
        %2420 = vmatpush1.msra.mxu0 0.0
        %2421 = vmatprep.subr.mxu0 0.0
        %2422 = vmatpush1.msra.mxu0 0.0
        %2423 = vmatprep.subr.mxu0 0.0
        %2424 = vmatpush1.msra.mxu0 0.0
        %2425 = vmatprep.subr.mxu0 0.0
        %2426 = vmatpush1.msra.mxu0 0.0
        %2427 = vmatprep.subr.mxu0 0.0
        %2428 = vmatpush1.msra.mxu0 0.0
        %2429 = vmatprep.subr.mxu0 0.0
        %2430 = vmatpush1.msra.mxu0 0.0
        %2431 = vmatprep.subr.mxu0 0.0
        %2432 = vmatpush1.msra.mxu0 0.0
        %2433 = vmatprep.subr.mxu0 0.0
        %2434 = vmatpush1.msra.mxu0 0.0
        %2435 = vmatprep.subr.mxu0 0.0
        %2436 = vmatpush1.msra.mxu0 0.0
        %2437 = vmatprep.subr.mxu0 0.0
        %2438 = vmatpush1.msra.mxu0 0.0
        %2439 = vmatprep.subr.mxu0 0.0
        %2440 = vmatpush1.msra.mxu0 0.0
        %2441 = vmatprep.mubr.f32.mxu0 0.0
        %v2442 = vand.u32 %v2036, 4294901760
        %2443 = vmatmul.mubr.f32.gmra.mrb[0].mxu0 %v2442
        %v2444 = vpop.f32.mrb[0].mxu0
        %v2445 = vadd.f32 %v2362, %v2444
        %v2446 = vpop.f32.mrb[0].mxu0
        %2447 = vdwg.mxu0
        %2448 = vmatprep.subr.mxu0 0.0
        %v2449 = vand.u32 %v2025, 4294901760
        %2450 = vmatpush1.msra.mxu0 %v2449
        %2451 = vmatprep.subr.mxu0 0.0
        %v2452 = vand.u32 %v2026, 4294901760
        %2453 = vmatpush1.msra.mxu0 %v2452
        %2454 = vmatprep.subr.mxu0 0.0
        %v2455 = vand.u32 %v2027, 4294901760
        %2456 = vmatpush1.msra.mxu0 %v2455
        %2457 = vmatprep.subr.mxu0 0.0
        %v2458 = vand.u32 %v2028, 4294901760
        %2459 = vmatpush1.msra.mxu0 %v2458
        %2460 = vmatprep.subr.mxu0 0.0
        %2461 = vmatpush1.msra.mxu0 0.0
        %2462 = vmatprep.subr.mxu0 0.0
        %2463 = vmatpush1.msra.mxu0 0.0
        %2464 = vmatprep.subr.mxu0 0.0
        %2465 = vmatpush1.msra.mxu0 0.0
        %2466 = vmatprep.subr.mxu0 0.0
        %2467 = vmatpush1.msra.mxu0 0.0
        %2468 = vmatprep.subr.mxu0 0.0
        %2469 = vmatpush1.msra.mxu0 0.0
        %2470 = vmatprep.subr.mxu0 0.0
        %2471 = vmatpush1.msra.mxu0 0.0
        %2472 = vmatprep.subr.mxu0 0.0
        %2473 = vmatpush1.msra.mxu0 0.0
        %2474 = vmatprep.subr.mxu0 0.0
        %2475 = vmatpush1.msra.mxu0 0.0
        %2476 = vmatprep.subr.mxu0 0.0
        %2477 = vmatpush1.msra.mxu0 0.0
        %2478 = vmatprep.subr.mxu0 0.0
        %2479 = vmatpush1.msra.mxu0 0.0
        %2480 = vmatprep.subr.mxu0 0.0
        %2481 = vmatpush1.msra.mxu0 0.0
        %2482 = vmatprep.subr.mxu0 0.0
        %2483 = vmatpush1.msra.mxu0 0.0
        %2484 = vmatprep.subr.mxu0 0.0
        %2485 = vmatpush1.msra.mxu0 0.0
        %2486 = vmatprep.subr.mxu0 0.0
        %2487 = vmatpush1.msra.mxu0 0.0
        %2488 = vmatprep.subr.mxu0 0.0
        %2489 = vmatpush1.msra.mxu0 0.0
        %2490 = vmatprep.subr.mxu0 0.0
        %2491 = vmatpush1.msra.mxu0 0.0
        %2492 = vmatprep.subr.mxu0 0.0
        %2493 = vmatpush1.msra.mxu0 0.0
        %2494 = vmatprep.subr.mxu0 0.0
        %2495 = vmatpush1.msra.mxu0 0.0
        %2496 = vmatprep.subr.mxu0 0.0
        %2497 = vmatpush1.msra.mxu0 0.0
        %2498 = vmatprep.subr.mxu0 0.0
        %2499 = vmatpush1.msra.mxu0 0.0
        %2500 = vmatprep.subr.mxu0 0.0
        %2501 = vmatpush1.msra.mxu0 0.0
        %2502 = vmatprep.subr.mxu0 0.0
        %2503 = vmatpush1.msra.mxu0 0.0
        %2504 = vmatprep.subr.mxu0 0.0
        %2505 = vmatpush1.msra.mxu0 0.0
        %2506 = vmatprep.subr.mxu0 0.0
        %2507 = vmatpush1.msra.mxu0 0.0
        %2508 = vmatprep.subr.mxu0 0.0
        %2509 = vmatpush1.msra.mxu0 0.0
        %2510 = vmatprep.subr.mxu0 0.0
        %2511 = vmatpush1.msra.mxu0 0.0
        %2512 = vmatprep.subr.mxu0 0.0
        %2513 = vmatpush1.msra.mxu0 0.0
        %2514 = vmatprep.subr.mxu0 0.0
        %2515 = vmatpush1.msra.mxu0 0.0
        %2516 = vmatprep.mubr.f32.mxu0 0.0
        %v2517 = vand.u32 %v2036, 4294901760
        %2518 = vmatmul.mubr.f32.gmra.mrb[0].mxu0 %v2517
        %v2519 = vpop.f32.mrb[0].mxu0
        %v2520 = vadd.f32 %v2445, %v2519
        %v2521 = vpop.f32.mrb[0].mxu0
        %2522 = vdwg.mxu0
        %v2523 = vmul.f32 %v2520, 0.015625
        %v2525 = vsel %vm1964, %v2024, 0
        %2527 = vmatprep.subr.mxu0 0.0
        %v2528 = vand.u32 %v2025, 4294901760
        %2529 = vmatpush1.msra.mxu0 %v2528
        %2530 = vmatprep.subr.mxu0 0.0
        %v2531 = vand.u32 %v2026, 4294901760
        %2532 = vmatpush1.msra.mxu0 %v2531
        %2533 = vmatprep.subr.mxu0 0.0
        %v2534 = vand.u32 %v2027, 4294901760
        %2535 = vmatpush1.msra.mxu0 %v2534
        %2536 = vmatprep.subr.mxu0 0.0
        %v2537 = vand.u32 %v2028, 4294901760
        %2538 = vmatpush1.msra.mxu0 %v2537
        %2539 = vmatprep.subr.mxu0 0.0
        %2540 = vmatpush1.msra.mxu0 0.0
        %2541 = vmatprep.subr.mxu0 0.0
        %2542 = vmatpush1.msra.mxu0 0.0
        %2543 = vmatprep.subr.mxu0 0.0
        %2544 = vmatpush1.msra.mxu0 0.0
        %2545 = vmatprep.subr.mxu0 0.0
        %2546 = vmatpush1.msra.mxu0 0.0
        %2547 = vmatprep.subr.mxu0 0.0
        %2548 = vmatpush1.msra.mxu0 0.0
        %2549 = vmatprep.subr.mxu0 0.0
        %2550 = vmatpush1.msra.mxu0 0.0
        %2551 = vmatprep.subr.mxu0 0.0
        %2552 = vmatpush1.msra.mxu0 0.0
        %2553 = vmatprep.subr.mxu0 0.0
        %2554 = vmatpush1.msra.mxu0 0.0
        %2555 = vmatprep.subr.mxu0 0.0
        %2556 = vmatpush1.msra.mxu0 0.0
        %2557 = vmatprep.subr.mxu0 0.0
        %2558 = vmatpush1.msra.mxu0 0.0
        %2559 = vmatprep.subr.mxu0 0.0
        %2560 = vmatpush1.msra.mxu0 0.0
        %2561 = vmatprep.subr.mxu0 0.0
        %2562 = vmatpush1.msra.mxu0 0.0
        %2563 = vmatprep.subr.mxu0 0.0
        %2564 = vmatpush1.msra.mxu0 0.0
        %2565 = vmatprep.subr.mxu0 0.0
        %2566 = vmatpush1.msra.mxu0 0.0
        %2567 = vmatprep.subr.mxu0 0.0
        %2568 = vmatpush1.msra.mxu0 0.0
        %2569 = vmatprep.subr.mxu0 0.0
        %2570 = vmatpush1.msra.mxu0 0.0
        %2571 = vmatprep.subr.mxu0 0.0
        %2572 = vmatpush1.msra.mxu0 0.0
        %2573 = vmatprep.subr.mxu0 0.0
        %2574 = vmatpush1.msra.mxu0 0.0
        %2575 = vmatprep.subr.mxu0 0.0
        %2576 = vmatpush1.msra.mxu0 0.0
        %2577 = vmatprep.subr.mxu0 0.0
        %2578 = vmatpush1.msra.mxu0 0.0
        %2579 = vmatprep.subr.mxu0 0.0
        %2580 = vmatpush1.msra.mxu0 0.0
        %2581 = vmatprep.subr.mxu0 0.0
        %2582 = vmatpush1.msra.mxu0 0.0
        %2583 = vmatprep.subr.mxu0 0.0
        %2584 = vmatpush1.msra.mxu0 0.0
        %2585 = vmatprep.subr.mxu0 0.0
        %2586 = vmatpush1.msra.mxu0 0.0
        %2587 = vmatprep.subr.mxu0 0.0
        %2588 = vmatpush1.msra.mxu0 0.0
        %2589 = vmatprep.subr.mxu0 0.0
        %2590 = vmatpush1.msra.mxu0 0.0
        %2591 = vmatprep.subr.mxu0 0.0
        %2592 = vmatpush1.msra.mxu0 0.0
        %2593 = vmatprep.subr.mxu0 0.0
        %2594 = vmatpush1.msra.mxu0 0.0
        %2595 = vmatprep.mubr.f32.mxu0 0.0
        %v2596 = vand.u32 %v2525, 4294901760
        %v2597 = vsub.f32 %v2525, %v2596
        %v2598 = vand.u32 %v2597, 4294901760
        %v2599 = vsub.f32 %v2597, %v2598
        %v2600 = vand.u32 %v2599, 4294901760
        %2601 = vmatmul.mubr.f32.gmra.mrb[0].mxu0 %v2600
        %v2602 = vpop.f32.mrb[0].mxu0
        %v2603 = vadd.f32 0.0, %v2602
        %v2604 = vpop.f32.mrb[0].mxu0
        %2605 = vdwg.mxu0
        %2606 = vmatprep.subr.mxu0 0.0
        %v2607 = vand.u32 %v2025, 4294901760
        %v2608 = vsub.f32 %v2025, %v2607
        %v2609 = vand.u32 %v2608, 4294901760
        %v2610 = vsub.f32 %v2608, %v2609
        %v2611 = vand.u32 %v2610, 4294901760
        %2612 = vmatpush1.msra.mxu0 %v2611
        %2613 = vmatprep.subr.mxu0 0.0
        %v2614 = vand.u32 %v2026, 4294901760
        %v2615 = vsub.f32 %v2026, %v2614
        %v2616 = vand.u32 %v2615, 4294901760
        %v2617 = vsub.f32 %v2615, %v2616
        %v2618 = vand.u32 %v2617, 4294901760
        %2619 = vmatpush1.msra.mxu0 %v2618
        %2620 = vmatprep.subr.mxu0 0.0
        %v2621 = vand.u32 %v2027, 4294901760
        %v2622 = vsub.f32 %v2027, %v2621
        %v2623 = vand.u32 %v2622, 4294901760
        %v2624 = vsub.f32 %v2622, %v2623
        %v2625 = vand.u32 %v2624, 4294901760
        %2626 = vmatpush1.msra.mxu0 %v2625
        %2627 = vmatprep.subr.mxu0 0.0
        %v2628 = vand.u32 %v2028, 4294901760
        %v2629 = vsub.f32 %v2028, %v2628
        %v2630 = vand.u32 %v2629, 4294901760
        %v2631 = vsub.f32 %v2629, %v2630
        %v2632 = vand.u32 %v2631, 4294901760
        %2633 = vmatpush1.msra.mxu0 %v2632
        %2634 = vmatprep.subr.mxu0 0.0
        %2635 = vmatpush1.msra.mxu0 0.0
        %2636 = vmatprep.subr.mxu0 0.0
        %2637 = vmatpush1.msra.mxu0 0.0
        %2638 = vmatprep.subr.mxu0 0.0
        %2639 = vmatpush1.msra.mxu0 0.0
        %2640 = vmatprep.subr.mxu0 0.0
        %2641 = vmatpush1.msra.mxu0 0.0
        %2642 = vmatprep.subr.mxu0 0.0
        %2643 = vmatpush1.msra.mxu0 0.0
        %2644 = vmatprep.subr.mxu0 0.0
        %2645 = vmatpush1.msra.mxu0 0.0
        %2646 = vmatprep.subr.mxu0 0.0
        %2647 = vmatpush1.msra.mxu0 0.0
        %2648 = vmatprep.subr.mxu0 0.0
        %2649 = vmatpush1.msra.mxu0 0.0
        %2650 = vmatprep.subr.mxu0 0.0
        %2651 = vmatpush1.msra.mxu0 0.0
        %2652 = vmatprep.subr.mxu0 0.0
        %2653 = vmatpush1.msra.mxu0 0.0
        %2654 = vmatprep.subr.mxu0 0.0
        %2655 = vmatpush1.msra.mxu0 0.0
        %2656 = vmatprep.subr.mxu0 0.0
        %2657 = vmatpush1.msra.mxu0 0.0
        %2658 = vmatprep.subr.mxu0 0.0
        %2659 = vmatpush1.msra.mxu0 0.0
        %2660 = vmatprep.subr.mxu0 0.0
        %2661 = vmatpush1.msra.mxu0 0.0
        %2662 = vmatprep.subr.mxu0 0.0
        %2663 = vmatpush1.msra.mxu0 0.0
        %2664 = vmatprep.subr.mxu0 0.0
        %2665 = vmatpush1.msra.mxu0 0.0
        %2666 = vmatprep.subr.mxu0 0.0
        %2667 = vmatpush1.msra.mxu0 0.0
        %2668 = vmatprep.subr.mxu0 0.0
        %2669 = vmatpush1.msra.mxu0 0.0
        %2670 = vmatprep.subr.mxu0 0.0
        %2671 = vmatpush1.msra.mxu0 0.0
        %2672 = vmatprep.subr.mxu0 0.0
        %2673 = vmatpush1.msra.mxu0 0.0
        %2674 = vmatprep.subr.mxu0 0.0
        %2675 = vmatpush1.msra.mxu0 0.0
        %2676 = vmatprep.subr.mxu0 0.0
        %2677 = vmatpush1.msra.mxu0 0.0
        %2678 = vmatprep.subr.mxu0 0.0
        %2679 = vmatpush1.msra.mxu0 0.0
        %2680 = vmatprep.subr.mxu0 0.0
        %2681 = vmatpush1.msra.mxu0 0.0
        %2682 = vmatprep.subr.mxu0 0.0
        %2683 = vmatpush1.msra.mxu0 0.0
        %2684 = vmatprep.subr.mxu0 0.0
        %2685 = vmatpush1.msra.mxu0 0.0
        %2686 = vmatprep.subr.mxu0 0.0
        %2687 = vmatpush1.msra.mxu0 0.0
        %2688 = vmatprep.subr.mxu0 0.0
        %2689 = vmatpush1.msra.mxu0 0.0
        %2690 = vmatprep.mubr.f32.mxu0 0.0
        %v2691 = vand.u32 %v2525, 4294901760
        %2692 = vmatmul.mubr.f32.gmra.mrb[0].mxu0 %v2691
        %v2693 = vpop.f32.mrb[0].mxu0
        %v2694 = vadd.f32 %v2603, %v2693
        %v2695 = vpop.f32.mrb[0].mxu0
        %2696 = vdwg.mxu0
        %2697 = vmatprep.subr.mxu0 0.0
        %v2698 = vand.u32 %v2025, 4294901760
        %v2699 = vsub.f32 %v2025, %v2698
        %2700 = vmatpush1.msra.mxu0 %v2699
        %2701 = vmatprep.subr.mxu0 0.0
        %v2702 = vand.u32 %v2026, 4294901760
        %v2703 = vsub.f32 %v2026, %v2702
        %2704 = vmatpush1.msra.mxu0 %v2703
        %2705 = vmatprep.subr.mxu0 0.0
        %v2706 = vand.u32 %v2027, 4294901760
        %v2707 = vsub.f32 %v2027, %v2706
        %2708 = vmatpush1.msra.mxu0 %v2707
        %2709 = vmatprep.subr.mxu0 0.0
        %v2710 = vand.u32 %v2028, 4294901760
        %v2711 = vsub.f32 %v2028, %v2710
        %2712 = vmatpush1.msra.mxu0 %v2711
        %2713 = vmatprep.subr.mxu0 0.0
        %2714 = vmatpush1.msra.mxu0 0.0
        %2715 = vmatprep.subr.mxu0 0.0
        %2716 = vmatpush1.msra.mxu0 0.0
        %2717 = vmatprep.subr.mxu0 0.0
        %2718 = vmatpush1.msra.mxu0 0.0
        %2719 = vmatprep.subr.mxu0 0.0
        %2720 = vmatpush1.msra.mxu0 0.0
        %2721 = vmatprep.subr.mxu0 0.0
        %2722 = vmatpush1.msra.mxu0 0.0
        %2723 = vmatprep.subr.mxu0 0.0
        %2724 = vmatpush1.msra.mxu0 0.0
        %2725 = vmatprep.subr.mxu0 0.0
        %2726 = vmatpush1.msra.mxu0 0.0
        %2727 = vmatprep.subr.mxu0 0.0
        %2728 = vmatpush1.msra.mxu0 0.0
        %2729 = vmatprep.subr.mxu0 0.0
        %2730 = vmatpush1.msra.mxu0 0.0
        %2731 = vmatprep.subr.mxu0 0.0
        %2732 = vmatpush1.msra.mxu0 0.0
        %2733 = vmatprep.subr.mxu0 0.0
        %2734 = vmatpush1.msra.mxu0 0.0
        %2735 = vmatprep.subr.mxu0 0.0
        %2736 = vmatpush1.msra.mxu0 0.0
        %2737 = vmatprep.subr.mxu0 0.0
        %2738 = vmatpush1.msra.mxu0 0.0
        %2739 = vmatprep.subr.mxu0 0.0
        %2740 = vmatpush1.msra.mxu0 0.0
        %2741 = vmatprep.subr.mxu0 0.0
        %2742 = vmatpush1.msra.mxu0 0.0
        %2743 = vmatprep.subr.mxu0 0.0
        %2744 = vmatpush1.msra.mxu0 0.0
        %2745 = vmatprep.subr.mxu0 0.0
        %2746 = vmatpush1.msra.mxu0 0.0
        %2747 = vmatprep.subr.mxu0 0.0
        %2748 = vmatpush1.msra.mxu0 0.0
        %2749 = vmatprep.subr.mxu0 0.0
        %2750 = vmatpush1.msra.mxu0 0.0
        %2751 = vmatprep.subr.mxu0 0.0
        %2752 = vmatpush1.msra.mxu0 0.0
        %2753 = vmatprep.subr.mxu0 0.0
        %2754 = vmatpush1.msra.mxu0 0.0
        %2755 = vmatprep.subr.mxu0 0.0
        %2756 = vmatpush1.msra.mxu0 0.0
        %2757 = vmatprep.subr.mxu0 0.0
        %2758 = vmatpush1.msra.mxu0 0.0
        %2759 = vmatprep.subr.mxu0 0.0
        %2760 = vmatpush1.msra.mxu0 0.0
        %2761 = vmatprep.subr.mxu0 0.0
        %2762 = vmatpush1.msra.mxu0 0.0
        %2763 = vmatprep.subr.mxu0 0.0
        %2764 = vmatpush1.msra.mxu0 0.0
        %2765 = vmatprep.subr.mxu0 0.0
        %2766 = vmatpush1.msra.mxu0 0.0
        %2767 = vmatprep.subr.mxu0 0.0
        %2768 = vmatpush1.msra.mxu0 0.0
        %2769 = vmatprep.mubr.f32.mxu0 0.0
        %v2770 = vand.u32 %v2525, 4294901760
        %v2771 = vsub.f32 %v2525, %v2770
        %2772 = vmatmul.mubr.f32.gmra.mrb[0].mxu0 %v2771
        %v2773 = vpop.f32.mrb[0].mxu0
        %v2774 = vadd.f32 %v2694, %v2773
        %v2775 = vpop.f32.mrb[0].mxu0
        %2776 = vdwg.mxu0
        %2777 = vmatprep.subr.mxu0 0.0
        %v2778 = vand.u32 %v2025, 4294901760
        %2779 = vmatpush1.msra.mxu0 %v2778
        %2780 = vmatprep.subr.mxu0 0.0
        %v2781 = vand.u32 %v2026, 4294901760
        %2782 = vmatpush1.msra.mxu0 %v2781
        %2783 = vmatprep.subr.mxu0 0.0
        %v2784 = vand.u32 %v2027, 4294901760
        %2785 = vmatpush1.msra.mxu0 %v2784
        %2786 = vmatprep.subr.mxu0 0.0
        %v2787 = vand.u32 %v2028, 4294901760
        %2788 = vmatpush1.msra.mxu0 %v2787
        %2789 = vmatprep.subr.mxu0 0.0
        %2790 = vmatpush1.msra.mxu0 0.0
        %2791 = vmatprep.subr.mxu0 0.0
        %2792 = vmatpush1.msra.mxu0 0.0
        %2793 = vmatprep.subr.mxu0 0.0
        %2794 = vmatpush1.msra.mxu0 0.0
        %2795 = vmatprep.subr.mxu0 0.0
        %2796 = vmatpush1.msra.mxu0 0.0
        %2797 = vmatprep.subr.mxu0 0.0
        %2798 = vmatpush1.msra.mxu0 0.0
        %2799 = vmatprep.subr.mxu0 0.0
        %2800 = vmatpush1.msra.mxu0 0.0
        %2801 = vmatprep.subr.mxu0 0.0
        %2802 = vmatpush1.msra.mxu0 0.0
        %2803 = vmatprep.subr.mxu0 0.0
        %2804 = vmatpush1.msra.mxu0 0.0
        %2805 = vmatprep.subr.mxu0 0.0
        %2806 = vmatpush1.msra.mxu0 0.0
        %2807 = vmatprep.subr.mxu0 0.0
        %2808 = vmatpush1.msra.mxu0 0.0
        %2809 = vmatprep.subr.mxu0 0.0
        %2810 = vmatpush1.msra.mxu0 0.0
        %2811 = vmatprep.subr.mxu0 0.0
        %2812 = vmatpush1.msra.mxu0 0.0
        %2813 = vmatprep.subr.mxu0 0.0
        %2814 = vmatpush1.msra.mxu0 0.0
        %2815 = vmatprep.subr.mxu0 0.0
        %2816 = vmatpush1.msra.mxu0 0.0
        %2817 = vmatprep.subr.mxu0 0.0
        %2818 = vmatpush1.msra.mxu0 0.0
        %2819 = vmatprep.subr.mxu0 0.0
        %2820 = vmatpush1.msra.mxu0 0.0
        %2821 = vmatprep.subr.mxu0 0.0
        %2822 = vmatpush1.msra.mxu0 0.0
        %2823 = vmatprep.subr.mxu0 0.0
        %2824 = vmatpush1.msra.mxu0 0.0
        %2825 = vmatprep.subr.mxu0 0.0
        %2826 = vmatpush1.msra.mxu0 0.0
        %2827 = vmatprep.subr.mxu0 0.0
        %2828 = vmatpush1.msra.mxu0 0.0
        %2829 = vmatprep.subr.mxu0 0.0
        %2830 = vmatpush1.msra.mxu0 0.0
        %2831 = vmatprep.subr.mxu0 0.0
        %2832 = vmatpush1.msra.mxu0 0.0
        %2833 = vmatprep.subr.mxu0 0.0
        %2834 = vmatpush1.msra.mxu0 0.0
        %2835 = vmatprep.subr.mxu0 0.0
        %2836 = vmatpush1.msra.mxu0 0.0
        %2837 = vmatprep.subr.mxu0 0.0
        %2838 = vmatpush1.msra.mxu0 0.0
        %2839 = vmatprep.subr.mxu0 0.0
        %2840 = vmatpush1.msra.mxu0 0.0
        %2841 = vmatprep.subr.mxu0 0.0
        %2842 = vmatpush1.msra.mxu0 0.0
        %2843 = vmatprep.subr.mxu0 0.0
        %2844 = vmatpush1.msra.mxu0 0.0
        %2845 = vmatprep.mubr.f32.mxu0 0.0
        %v2846 = vand.u32 %v2525, 4294901760
        %v2847 = vsub.f32 %v2525, %v2846
        %v2848 = vand.u32 %v2847, 4294901760
        %2849 = vmatmul.mubr.f32.gmra.mrb[0].mxu0 %v2848
        %v2850 = vpop.f32.mrb[0].mxu0
        %v2851 = vadd.f32 %v2774, %v2850
        %v2852 = vpop.f32.mrb[0].mxu0
        %2853 = vdwg.mxu0
        %2854 = vmatprep.subr.mxu0 0.0
        %v2855 = vand.u32 %v2025, 4294901760
        %v2856 = vsub.f32 %v2025, %v2855
        %v2857 = vand.u32 %v2856, 4294901760
        %2858 = vmatpush1.msra.mxu0 %v2857
        %2859 = vmatprep.subr.mxu0 0.0
        %v2860 = vand.u32 %v2026, 4294901760
        %v2861 = vsub.f32 %v2026, %v2860
        %v2862 = vand.u32 %v2861, 4294901760
        %2863 = vmatpush1.msra.mxu0 %v2862
        %2864 = vmatprep.subr.mxu0 0.0
        %v2865 = vand.u32 %v2027, 4294901760
        %v2866 = vsub.f32 %v2027, %v2865
        %v2867 = vand.u32 %v2866, 4294901760
        %2868 = vmatpush1.msra.mxu0 %v2867
        %2869 = vmatprep.subr.mxu0 0.0
        %v2870 = vand.u32 %v2028, 4294901760
        %v2871 = vsub.f32 %v2028, %v2870
        %v2872 = vand.u32 %v2871, 4294901760
        %2873 = vmatpush1.msra.mxu0 %v2872
        %2874 = vmatprep.subr.mxu0 0.0
        %2875 = vmatpush1.msra.mxu0 0.0
        %2876 = vmatprep.subr.mxu0 0.0
        %2877 = vmatpush1.msra.mxu0 0.0
        %2878 = vmatprep.subr.mxu0 0.0
        %2879 = vmatpush1.msra.mxu0 0.0
        %2880 = vmatprep.subr.mxu0 0.0
        %2881 = vmatpush1.msra.mxu0 0.0
        %2882 = vmatprep.subr.mxu0 0.0
        %2883 = vmatpush1.msra.mxu0 0.0
        %2884 = vmatprep.subr.mxu0 0.0
        %2885 = vmatpush1.msra.mxu0 0.0
        %2886 = vmatprep.subr.mxu0 0.0
        %2887 = vmatpush1.msra.mxu0 0.0
        %2888 = vmatprep.subr.mxu0 0.0
        %2889 = vmatpush1.msra.mxu0 0.0
        %2890 = vmatprep.subr.mxu0 0.0
        %2891 = vmatpush1.msra.mxu0 0.0
        %2892 = vmatprep.subr.mxu0 0.0
        %2893 = vmatpush1.msra.mxu0 0.0
        %2894 = vmatprep.subr.mxu0 0.0
        %2895 = vmatpush1.msra.mxu0 0.0
        %2896 = vmatprep.subr.mxu0 0.0
        %2897 = vmatpush1.msra.mxu0 0.0
        %2898 = vmatprep.subr.mxu0 0.0
        %2899 = vmatpush1.msra.mxu0 0.0
        %2900 = vmatprep.subr.mxu0 0.0
        %2901 = vmatpush1.msra.mxu0 0.0
        %2902 = vmatprep.subr.mxu0 0.0
        %2903 = vmatpush1.msra.mxu0 0.0
        %2904 = vmatprep.subr.mxu0 0.0
        %2905 = vmatpush1.msra.mxu0 0.0
        %2906 = vmatprep.subr.mxu0 0.0
        %2907 = vmatpush1.msra.mxu0 0.0
        %2908 = vmatprep.subr.mxu0 0.0
        %2909 = vmatpush1.msra.mxu0 0.0
        %2910 = vmatprep.subr.mxu0 0.0
        %2911 = vmatpush1.msra.mxu0 0.0
        %2912 = vmatprep.subr.mxu0 0.0
        %2913 = vmatpush1.msra.mxu0 0.0
        %2914 = vmatprep.subr.mxu0 0.0
        %2915 = vmatpush1.msra.mxu0 0.0
        %2916 = vmatprep.subr.mxu0 0.0
        %2917 = vmatpush1.msra.mxu0 0.0
        %2918 = vmatprep.subr.mxu0 0.0
        %2919 = vmatpush1.msra.mxu0 0.0
        %2920 = vmatprep.subr.mxu0 0.0
        %2921 = vmatpush1.msra.mxu0 0.0
        %2922 = vmatprep.subr.mxu0 0.0
        %2923 = vmatpush1.msra.mxu0 0.0
        %2924 = vmatprep.subr.mxu0 0.0
        %2925 = vmatpush1.msra.mxu0 0.0
        %2926 = vmatprep.subr.mxu0 0.0
        %2927 = vmatpush1.msra.mxu0 0.0
        %2928 = vmatprep.subr.mxu0 0.0
        %2929 = vmatpush1.msra.mxu0 0.0
        %2930 = vmatprep.mubr.f32.mxu0 0.0
        %v2931 = vand.u32 %v2525, 4294901760
        %2932 = vmatmul.mubr.f32.gmra.mrb[0].mxu0 %v2931
        %v2933 = vpop.f32.mrb[0].mxu0
        %v2934 = vadd.f32 %v2851, %v2933
        %v2935 = vpop.f32.mrb[0].mxu0
        %2936 = vdwg.mxu0
        %2937 = vmatprep.subr.mxu0 0.0
        %v2938 = vand.u32 %v2025, 4294901760
        %2939 = vmatpush1.msra.mxu0 %v2938
        %2940 = vmatprep.subr.mxu0 0.0
        %v2941 = vand.u32 %v2026, 4294901760
        %2942 = vmatpush1.msra.mxu0 %v2941
        %2943 = vmatprep.subr.mxu0 0.0
        %v2944 = vand.u32 %v2027, 4294901760
        %2945 = vmatpush1.msra.mxu0 %v2944
        %2946 = vmatprep.subr.mxu0 0.0
        %v2947 = vand.u32 %v2028, 4294901760
        %2948 = vmatpush1.msra.mxu0 %v2947
        %2949 = vmatprep.subr.mxu0 0.0
        %2950 = vmatpush1.msra.mxu0 0.0
        %2951 = vmatprep.subr.mxu0 0.0
        %2952 = vmatpush1.msra.mxu0 0.0
        %2953 = vmatprep.subr.mxu0 0.0
        %2954 = vmatpush1.msra.mxu0 0.0
        %2955 = vmatprep.subr.mxu0 0.0
        %2956 = vmatpush1.msra.mxu0 0.0
        %2957 = vmatprep.subr.mxu0 0.0
        %2958 = vmatpush1.msra.mxu0 0.0
        %2959 = vmatprep.subr.mxu0 0.0
        %2960 = vmatpush1.msra.mxu0 0.0
        %2961 = vmatprep.subr.mxu0 0.0
        %2962 = vmatpush1.msra.mxu0 0.0
        %2963 = vmatprep.subr.mxu0 0.0
        %2964 = vmatpush1.msra.mxu0 0.0
        %2965 = vmatprep.subr.mxu0 0.0
        %2966 = vmatpush1.msra.mxu0 0.0
        %2967 = vmatprep.subr.mxu0 0.0
        %2968 = vmatpush1.msra.mxu0 0.0
        %2969 = vmatprep.subr.mxu0 0.0
        %2970 = vmatpush1.msra.mxu0 0.0
        %2971 = vmatprep.subr.mxu0 0.0
        %2972 = vmatpush1.msra.mxu0 0.0
        %2973 = vmatprep.subr.mxu0 0.0
        %2974 = vmatpush1.msra.mxu0 0.0
        %2975 = vmatprep.subr.mxu0 0.0
        %2976 = vmatpush1.msra.mxu0 0.0
        %2977 = vmatprep.subr.mxu0 0.0
        %2978 = vmatpush1.msra.mxu0 0.0
        %2979 = vmatprep.subr.mxu0 0.0
        %2980 = vmatpush1.msra.mxu0 0.0
        %2981 = vmatprep.subr.mxu0 0.0
        %2982 = vmatpush1.msra.mxu0 0.0
        %2983 = vmatprep.subr.mxu0 0.0
        %2984 = vmatpush1.msra.mxu0 0.0
        %2985 = vmatprep.subr.mxu0 0.0
        %2986 = vmatpush1.msra.mxu0 0.0
        %2987 = vmatprep.subr.mxu0 0.0
        %2988 = vmatpush1.msra.mxu0 0.0
        %2989 = vmatprep.subr.mxu0 0.0
        %2990 = vmatpush1.msra.mxu0 0.0
        %2991 = vmatprep.subr.mxu0 0.0
        %2992 = vmatpush1.msra.mxu0 0.0
        %2993 = vmatprep.subr.mxu0 0.0
        %2994 = vmatpush1.msra.mxu0 0.0
        %2995 = vmatprep.subr.mxu0 0.0
        %2996 = vmatpush1.msra.mxu0 0.0
        %2997 = vmatprep.subr.mxu0 0.0
        %2998 = vmatpush1.msra.mxu0 0.0
        %2999 = vmatprep.subr.mxu0 0.0
        %3000 = vmatpush1.msra.mxu0 0.0
        %3001 = vmatprep.subr.mxu0 0.0
        %3002 = vmatpush1.msra.mxu0 0.0
        %3003 = vmatprep.subr.mxu0 0.0
        %3004 = vmatpush1.msra.mxu0 0.0
        %3005 = vmatprep.mubr.f32.mxu0 0.0
        %v3006 = vand.u32 %v2525, 4294901760
        %3007 = vmatmul.mubr.f32.gmra.mrb[0].mxu0 %v3006
        %v3008 = vpop.f32.mrb[0].mxu0
        %v3009 = vadd.f32 %v2934, %v3008
        %v3010 = vpop.f32.mrb[0].mxu0
        %3011 = vdwg.mxu0
        %v3012 = vmul.f32 %v3009, 0.015625
        %v3013 = vmul.f32 %v2523, %v2523
        %v3014 = vsub.f32 %v3012, %v3013
        %v3015 = vmax.f32 %v3014, 0.0
        %v3016 = vadd.f32 %v3015, 1e-05
        %v3017 = vrsqrt.pop %v3016
        %v3019 = vsel %vm1964, %v2523, 0
        %3021 = vmatprep.subr.mxu0 0.0
        %v3022 = vand.u32 %v2029, 4294901760
        %3023 = vmatpush1.msra.mxu0 %v3022
        %3024 = vmatprep.subr.mxu0 0.0
        %v3025 = vand.u32 %v2030, 4294901760
        %3026 = vmatpush1.msra.mxu0 %v3025
        %3027 = vmatprep.subr.mxu0 0.0
        %v3028 = vand.u32 %v2031, 4294901760
        %3029 = vmatpush1.msra.mxu0 %v3028
        %3030 = vmatprep.subr.mxu0 0.0
        %v3031 = vand.u32 %v2032, 4294901760
        %3032 = vmatpush1.msra.mxu0 %v3031
        %3033 = vmatprep.subr.mxu0 0.0
        %3034 = vmatpush1.msra.mxu0 0.0
        %3035 = vmatprep.subr.mxu0 0.0
        %3036 = vmatpush1.msra.mxu0 0.0
        %3037 = vmatprep.subr.mxu0 0.0
        %3038 = vmatpush1.msra.mxu0 0.0
        %3039 = vmatprep.subr.mxu0 0.0
        %3040 = vmatpush1.msra.mxu0 0.0
        %3041 = vmatprep.subr.mxu0 0.0
        %3042 = vmatpush1.msra.mxu0 0.0
        %3043 = vmatprep.subr.mxu0 0.0
        %3044 = vmatpush1.msra.mxu0 0.0
        %3045 = vmatprep.subr.mxu0 0.0
        %3046 = vmatpush1.msra.mxu0 0.0
        %3047 = vmatprep.subr.mxu0 0.0
        %3048 = vmatpush1.msra.mxu0 0.0
        %3049 = vmatprep.subr.mxu0 0.0
        %3050 = vmatpush1.msra.mxu0 0.0
        %3051 = vmatprep.subr.mxu0 0.0
        %3052 = vmatpush1.msra.mxu0 0.0
        %3053 = vmatprep.subr.mxu0 0.0
        %3054 = vmatpush1.msra.mxu0 0.0
        %3055 = vmatprep.subr.mxu0 0.0
        %3056 = vmatpush1.msra.mxu0 0.0
        %3057 = vmatprep.subr.mxu0 0.0
        %3058 = vmatpush1.msra.mxu0 0.0
        %3059 = vmatprep.subr.mxu0 0.0
        %3060 = vmatpush1.msra.mxu0 0.0
        %3061 = vmatprep.subr.mxu0 0.0
        %3062 = vmatpush1.msra.mxu0 0.0
        %3063 = vmatprep.subr.mxu0 0.0
        %3064 = vmatpush1.msra.mxu0 0.0
        %3065 = vmatprep.subr.mxu0 0.0
        %3066 = vmatpush1.msra.mxu0 0.0
        %3067 = vmatprep.subr.mxu0 0.0
        %3068 = vmatpush1.msra.mxu0 0.0
        %3069 = vmatprep.subr.mxu0 0.0
        %3070 = vmatpush1.msra.mxu0 0.0
        %3071 = vmatprep.subr.mxu0 0.0
        %3072 = vmatpush1.msra.mxu0 0.0
        %3073 = vmatprep.subr.mxu0 0.0
        %3074 = vmatpush1.msra.mxu0 0.0
        %3075 = vmatprep.subr.mxu0 0.0
        %3076 = vmatpush1.msra.mxu0 0.0
        %3077 = vmatprep.subr.mxu0 0.0
        %3078 = vmatpush1.msra.mxu0 0.0
        %3079 = vmatprep.subr.mxu0 0.0
        %3080 = vmatpush1.msra.mxu0 0.0
        %3081 = vmatprep.subr.mxu0 0.0
        %3082 = vmatpush1.msra.mxu0 0.0
        %3083 = vmatprep.subr.mxu0 0.0
        %3084 = vmatpush1.msra.mxu0 0.0
        %3085 = vmatprep.subr.mxu0 0.0
        %3086 = vmatpush1.msra.mxu0 0.0
        %3087 = vmatprep.subr.mxu0 0.0
        %3088 = vmatpush1.msra.mxu0 0.0
        %3089 = vmatprep.mubr.f32.mxu0 0.0
        %v3090 = vand.u32 %v3019, 4294901760
        %v3091 = vsub.f32 %v3019, %v3090
        %v3092 = vand.u32 %v3091, 4294901760
        %v3093 = vsub.f32 %v3091, %v3092
        %v3094 = vand.u32 %v3093, 4294901760
        %3095 = vmatmul.mubr.f32.gmra.mrb[0].mxu0 %v3094
        %v3096 = vpop.f32.mrb[0].mxu0
        %v3097 = vadd.f32 0.0, %v3096
        %v3098 = vpop.f32.mrb[0].mxu0
        %3099 = vdwg.mxu0
        %3100 = vmatprep.subr.mxu0 0.0
        %v3101 = vand.u32 %v2029, 4294901760
        %v3102 = vsub.f32 %v2029, %v3101
        %v3103 = vand.u32 %v3102, 4294901760
        %v3104 = vsub.f32 %v3102, %v3103
        %v3105 = vand.u32 %v3104, 4294901760
        %3106 = vmatpush1.msra.mxu0 %v3105
        %3107 = vmatprep.subr.mxu0 0.0
        %v3108 = vand.u32 %v2030, 4294901760
        %v3109 = vsub.f32 %v2030, %v3108
        %v3110 = vand.u32 %v3109, 4294901760
        %v3111 = vsub.f32 %v3109, %v3110
        %v3112 = vand.u32 %v3111, 4294901760
        %3113 = vmatpush1.msra.mxu0 %v3112
        %3114 = vmatprep.subr.mxu0 0.0
        %v3115 = vand.u32 %v2031, 4294901760
        %v3116 = vsub.f32 %v2031, %v3115
        %v3117 = vand.u32 %v3116, 4294901760
        %v3118 = vsub.f32 %v3116, %v3117
        %v3119 = vand.u32 %v3118, 4294901760
        %3120 = vmatpush1.msra.mxu0 %v3119
        %3121 = vmatprep.subr.mxu0 0.0
        %v3122 = vand.u32 %v2032, 4294901760
        %v3123 = vsub.f32 %v2032, %v3122
        %v3124 = vand.u32 %v3123, 4294901760
        %v3125 = vsub.f32 %v3123, %v3124
        %v3126 = vand.u32 %v3125, 4294901760
        %3127 = vmatpush1.msra.mxu0 %v3126
        %3128 = vmatprep.subr.mxu0 0.0
        %3129 = vmatpush1.msra.mxu0 0.0
        %3130 = vmatprep.subr.mxu0 0.0
        %3131 = vmatpush1.msra.mxu0 0.0
        %3132 = vmatprep.subr.mxu0 0.0
        %3133 = vmatpush1.msra.mxu0 0.0
        %3134 = vmatprep.subr.mxu0 0.0
        %3135 = vmatpush1.msra.mxu0 0.0
        %3136 = vmatprep.subr.mxu0 0.0
        %3137 = vmatpush1.msra.mxu0 0.0
        %3138 = vmatprep.subr.mxu0 0.0
        %3139 = vmatpush1.msra.mxu0 0.0
        %3140 = vmatprep.subr.mxu0 0.0
        %3141 = vmatpush1.msra.mxu0 0.0
        %3142 = vmatprep.subr.mxu0 0.0
        %3143 = vmatpush1.msra.mxu0 0.0
        %3144 = vmatprep.subr.mxu0 0.0
        %3145 = vmatpush1.msra.mxu0 0.0
        %3146 = vmatprep.subr.mxu0 0.0
        %3147 = vmatpush1.msra.mxu0 0.0
        %3148 = vmatprep.subr.mxu0 0.0
        %3149 = vmatpush1.msra.mxu0 0.0
        %3150 = vmatprep.subr.mxu0 0.0
        %3151 = vmatpush1.msra.mxu0 0.0
        %3152 = vmatprep.subr.mxu0 0.0
        %3153 = vmatpush1.msra.mxu0 0.0
        %3154 = vmatprep.subr.mxu0 0.0
        %3155 = vmatpush1.msra.mxu0 0.0
        %3156 = vmatprep.subr.mxu0 0.0
        %3157 = vmatpush1.msra.mxu0 0.0
        %3158 = vmatprep.subr.mxu0 0.0
        %3159 = vmatpush1.msra.mxu0 0.0
        %3160 = vmatprep.subr.mxu0 0.0
        %3161 = vmatpush1.msra.mxu0 0.0
        %3162 = vmatprep.subr.mxu0 0.0
        %3163 = vmatpush1.msra.mxu0 0.0
        %3164 = vmatprep.subr.mxu0 0.0
        %3165 = vmatpush1.msra.mxu0 0.0
        %3166 = vmatprep.subr.mxu0 0.0
        %3167 = vmatpush1.msra.mxu0 0.0
        %3168 = vmatprep.subr.mxu0 0.0
        %3169 = vmatpush1.msra.mxu0 0.0
        %3170 = vmatprep.subr.mxu0 0.0
        %3171 = vmatpush1.msra.mxu0 0.0
        %3172 = vmatprep.subr.mxu0 0.0
        %3173 = vmatpush1.msra.mxu0 0.0
        %3174 = vmatprep.subr.mxu0 0.0
        %3175 = vmatpush1.msra.mxu0 0.0
        %3176 = vmatprep.subr.mxu0 0.0
        %3177 = vmatpush1.msra.mxu0 0.0
        %3178 = vmatprep.subr.mxu0 0.0
        %3179 = vmatpush1.msra.mxu0 0.0
        %3180 = vmatprep.subr.mxu0 0.0
        %3181 = vmatpush1.msra.mxu0 0.0
        %3182 = vmatprep.subr.mxu0 0.0
        %3183 = vmatpush1.msra.mxu0 0.0
        %3184 = vmatprep.mubr.f32.mxu0 0.0
        %v3185 = vand.u32 %v3019, 4294901760
        %3186 = vmatmul.mubr.f32.gmra.mrb[0].mxu0 %v3185
        %v3187 = vpop.f32.mrb[0].mxu0
        %v3188 = vadd.f32 %v3097, %v3187
        %v3189 = vpop.f32.mrb[0].mxu0
        %3190 = vdwg.mxu0
        %3191 = vmatprep.subr.mxu0 0.0
        %v3192 = vand.u32 %v2029, 4294901760
        %v3193 = vsub.f32 %v2029, %v3192
        %3194 = vmatpush1.msra.mxu0 %v3193
        %3195 = vmatprep.subr.mxu0 0.0
        %v3196 = vand.u32 %v2030, 4294901760
        %v3197 = vsub.f32 %v2030, %v3196
        %3198 = vmatpush1.msra.mxu0 %v3197
        %3199 = vmatprep.subr.mxu0 0.0
        %v3200 = vand.u32 %v2031, 4294901760
        %v3201 = vsub.f32 %v2031, %v3200
        %3202 = vmatpush1.msra.mxu0 %v3201
        %3203 = vmatprep.subr.mxu0 0.0
        %v3204 = vand.u32 %v2032, 4294901760
        %v3205 = vsub.f32 %v2032, %v3204
        %3206 = vmatpush1.msra.mxu0 %v3205
        %3207 = vmatprep.subr.mxu0 0.0
        %3208 = vmatpush1.msra.mxu0 0.0
        %3209 = vmatprep.subr.mxu0 0.0
        %3210 = vmatpush1.msra.mxu0 0.0
        %3211 = vmatprep.subr.mxu0 0.0
        %3212 = vmatpush1.msra.mxu0 0.0
        %3213 = vmatprep.subr.mxu0 0.0
        %3214 = vmatpush1.msra.mxu0 0.0
        %3215 = vmatprep.subr.mxu0 0.0
        %3216 = vmatpush1.msra.mxu0 0.0
        %3217 = vmatprep.subr.mxu0 0.0
        %3218 = vmatpush1.msra.mxu0 0.0
        %3219 = vmatprep.subr.mxu0 0.0
        %3220 = vmatpush1.msra.mxu0 0.0
        %3221 = vmatprep.subr.mxu0 0.0
        %3222 = vmatpush1.msra.mxu0 0.0
        %3223 = vmatprep.subr.mxu0 0.0
        %3224 = vmatpush1.msra.mxu0 0.0
        %3225 = vmatprep.subr.mxu0 0.0
        %3226 = vmatpush1.msra.mxu0 0.0
        %3227 = vmatprep.subr.mxu0 0.0
        %3228 = vmatpush1.msra.mxu0 0.0
        %3229 = vmatprep.subr.mxu0 0.0
        %3230 = vmatpush1.msra.mxu0 0.0
        %3231 = vmatprep.subr.mxu0 0.0
        %3232 = vmatpush1.msra.mxu0 0.0
        %3233 = vmatprep.subr.mxu0 0.0
        %3234 = vmatpush1.msra.mxu0 0.0
        %3235 = vmatprep.subr.mxu0 0.0
        %3236 = vmatpush1.msra.mxu0 0.0
        %3237 = vmatprep.subr.mxu0 0.0
        %3238 = vmatpush1.msra.mxu0 0.0
        %3239 = vmatprep.subr.mxu0 0.0
        %3240 = vmatpush1.msra.mxu0 0.0
        %3241 = vmatprep.subr.mxu0 0.0
        %3242 = vmatpush1.msra.mxu0 0.0
        %3243 = vmatprep.subr.mxu0 0.0
        %3244 = vmatpush1.msra.mxu0 0.0
        %3245 = vmatprep.subr.mxu0 0.0
        %3246 = vmatpush1.msra.mxu0 0.0
        %3247 = vmatprep.subr.mxu0 0.0
        %3248 = vmatpush1.msra.mxu0 0.0
        %3249 = vmatprep.subr.mxu0 0.0
        %3250 = vmatpush1.msra.mxu0 0.0
        %3251 = vmatprep.subr.mxu0 0.0
        %3252 = vmatpush1.msra.mxu0 0.0
        %3253 = vmatprep.subr.mxu0 0.0
        %3254 = vmatpush1.msra.mxu0 0.0
        %3255 = vmatprep.subr.mxu0 0.0
        %3256 = vmatpush1.msra.mxu0 0.0
        %3257 = vmatprep.subr.mxu0 0.0
        %3258 = vmatpush1.msra.mxu0 0.0
        %3259 = vmatprep.subr.mxu0 0.0
        %3260 = vmatpush1.msra.mxu0 0.0
        %3261 = vmatprep.subr.mxu0 0.0
        %3262 = vmatpush1.msra.mxu0 0.0
        %3263 = vmatprep.mubr.f32.mxu0 0.0
        %v3264 = vand.u32 %v3019, 4294901760
        %v3265 = vsub.f32 %v3019, %v3264
        %3266 = vmatmul.mubr.f32.gmra.mrb[0].mxu0 %v3265
        %v3267 = vpop.f32.mrb[0].mxu0
        %v3268 = vadd.f32 %v3188, %v3267
        %v3269 = vpop.f32.mrb[0].mxu0
        %3270 = vdwg.mxu0
        %3271 = vmatprep.subr.mxu0 0.0
        %v3272 = vand.u32 %v2029, 4294901760
        %3273 = vmatpush1.msra.mxu0 %v3272
        %3274 = vmatprep.subr.mxu0 0.0
        %v3275 = vand.u32 %v2030, 4294901760
        %3276 = vmatpush1.msra.mxu0 %v3275
        %3277 = vmatprep.subr.mxu0 0.0
        %v3278 = vand.u32 %v2031, 4294901760
        %3279 = vmatpush1.msra.mxu0 %v3278
        %3280 = vmatprep.subr.mxu0 0.0
        %v3281 = vand.u32 %v2032, 4294901760
        %3282 = vmatpush1.msra.mxu0 %v3281
        %3283 = vmatprep.subr.mxu0 0.0
        %3284 = vmatpush1.msra.mxu0 0.0
        %3285 = vmatprep.subr.mxu0 0.0
        %3286 = vmatpush1.msra.mxu0 0.0
        %3287 = vmatprep.subr.mxu0 0.0
        %3288 = vmatpush1.msra.mxu0 0.0
        %3289 = vmatprep.subr.mxu0 0.0
        %3290 = vmatpush1.msra.mxu0 0.0
        %3291 = vmatprep.subr.mxu0 0.0
        %3292 = vmatpush1.msra.mxu0 0.0
        %3293 = vmatprep.subr.mxu0 0.0
        %3294 = vmatpush1.msra.mxu0 0.0
        %3295 = vmatprep.subr.mxu0 0.0
        %3296 = vmatpush1.msra.mxu0 0.0
        %3297 = vmatprep.subr.mxu0 0.0
        %3298 = vmatpush1.msra.mxu0 0.0
        %3299 = vmatprep.subr.mxu0 0.0
        %3300 = vmatpush1.msra.mxu0 0.0
        %3301 = vmatprep.subr.mxu0 0.0
        %3302 = vmatpush1.msra.mxu0 0.0
        %3303 = vmatprep.subr.mxu0 0.0
        %3304 = vmatpush1.msra.mxu0 0.0
        %3305 = vmatprep.subr.mxu0 0.0
        %3306 = vmatpush1.msra.mxu0 0.0
        %3307 = vmatprep.subr.mxu0 0.0
        %3308 = vmatpush1.msra.mxu0 0.0
        %3309 = vmatprep.subr.mxu0 0.0
        %3310 = vmatpush1.msra.mxu0 0.0
        %3311 = vmatprep.subr.mxu0 0.0
        %3312 = vmatpush1.msra.mxu0 0.0
        %3313 = vmatprep.subr.mxu0 0.0
        %3314 = vmatpush1.msra.mxu0 0.0
        %3315 = vmatprep.subr.mxu0 0.0
        %3316 = vmatpush1.msra.mxu0 0.0
        %3317 = vmatprep.subr.mxu0 0.0
        %3318 = vmatpush1.msra.mxu0 0.0
        %3319 = vmatprep.subr.mxu0 0.0
        %3320 = vmatpush1.msra.mxu0 0.0
        %3321 = vmatprep.subr.mxu0 0.0
        %3322 = vmatpush1.msra.mxu0 0.0
        %3323 = vmatprep.subr.mxu0 0.0
        %3324 = vmatpush1.msra.mxu0 0.0
        %3325 = vmatprep.subr.mxu0 0.0
        %3326 = vmatpush1.msra.mxu0 0.0
        %3327 = vmatprep.subr.mxu0 0.0
        %3328 = vmatpush1.msra.mxu0 0.0
        %3329 = vmatprep.subr.mxu0 0.0
        %3330 = vmatpush1.msra.mxu0 0.0
        %3331 = vmatprep.subr.mxu0 0.0
        %3332 = vmatpush1.msra.mxu0 0.0
        %3333 = vmatprep.subr.mxu0 0.0
        %3334 = vmatpush1.msra.mxu0 0.0
        %3335 = vmatprep.subr.mxu0 0.0
        %3336 = vmatpush1.msra.mxu0 0.0
        %3337 = vmatprep.subr.mxu0 0.0
        %3338 = vmatpush1.msra.mxu0 0.0
        %3339 = vmatprep.mubr.f32.mxu0 0.0
        %v3340 = vand.u32 %v3019, 4294901760
        %v3341 = vsub.f32 %v3019, %v3340
        %v3342 = vand.u32 %v3341, 4294901760
        %3343 = vmatmul.mubr.f32.gmra.mrb[0].mxu0 %v3342
        %v3344 = vpop.f32.mrb[0].mxu0
        %v3345 = vadd.f32 %v3268, %v3344
        %v3346 = vpop.f32.mrb[0].mxu0
        %3347 = vdwg.mxu0
        %3348 = vmatprep.subr.mxu0 0.0
        %v3349 = vand.u32 %v2029, 4294901760
        %v3350 = vsub.f32 %v2029, %v3349
        %v3351 = vand.u32 %v3350, 4294901760
        %3352 = vmatpush1.msra.mxu0 %v3351
        %3353 = vmatprep.subr.mxu0 0.0
        %v3354 = vand.u32 %v2030, 4294901760
        %v3355 = vsub.f32 %v2030, %v3354
        %v3356 = vand.u32 %v3355, 4294901760
        %3357 = vmatpush1.msra.mxu0 %v3356
        %3358 = vmatprep.subr.mxu0 0.0
        %v3359 = vand.u32 %v2031, 4294901760
        %v3360 = vsub.f32 %v2031, %v3359
        %v3361 = vand.u32 %v3360, 4294901760
        %3362 = vmatpush1.msra.mxu0 %v3361
        %3363 = vmatprep.subr.mxu0 0.0
        %v3364 = vand.u32 %v2032, 4294901760
        %v3365 = vsub.f32 %v2032, %v3364
        %v3366 = vand.u32 %v3365, 4294901760
        %3367 = vmatpush1.msra.mxu0 %v3366
        %3368 = vmatprep.subr.mxu0 0.0
        %3369 = vmatpush1.msra.mxu0 0.0
        %3370 = vmatprep.subr.mxu0 0.0
        %3371 = vmatpush1.msra.mxu0 0.0
        %3372 = vmatprep.subr.mxu0 0.0
        %3373 = vmatpush1.msra.mxu0 0.0
        %3374 = vmatprep.subr.mxu0 0.0
        %3375 = vmatpush1.msra.mxu0 0.0
        %3376 = vmatprep.subr.mxu0 0.0
        %3377 = vmatpush1.msra.mxu0 0.0
        %3378 = vmatprep.subr.mxu0 0.0
        %3379 = vmatpush1.msra.mxu0 0.0
        %3380 = vmatprep.subr.mxu0 0.0
        %3381 = vmatpush1.msra.mxu0 0.0
        %3382 = vmatprep.subr.mxu0 0.0
        %3383 = vmatpush1.msra.mxu0 0.0
        %3384 = vmatprep.subr.mxu0 0.0
        %3385 = vmatpush1.msra.mxu0 0.0
        %3386 = vmatprep.subr.mxu0 0.0
        %3387 = vmatpush1.msra.mxu0 0.0
        %3388 = vmatprep.subr.mxu0 0.0
        %3389 = vmatpush1.msra.mxu0 0.0
        %3390 = vmatprep.subr.mxu0 0.0
        %3391 = vmatpush1.msra.mxu0 0.0
        %3392 = vmatprep.subr.mxu0 0.0
        %3393 = vmatpush1.msra.mxu0 0.0
        %3394 = vmatprep.subr.mxu0 0.0
        %3395 = vmatpush1.msra.mxu0 0.0
        %3396 = vmatprep.subr.mxu0 0.0
        %3397 = vmatpush1.msra.mxu0 0.0
        %3398 = vmatprep.subr.mxu0 0.0
        %3399 = vmatpush1.msra.mxu0 0.0
        %3400 = vmatprep.subr.mxu0 0.0
        %3401 = vmatpush1.msra.mxu0 0.0
        %3402 = vmatprep.subr.mxu0 0.0
        %3403 = vmatpush1.msra.mxu0 0.0
        %3404 = vmatprep.subr.mxu0 0.0
        %3405 = vmatpush1.msra.mxu0 0.0
        %3406 = vmatprep.subr.mxu0 0.0
        %3407 = vmatpush1.msra.mxu0 0.0
        %3408 = vmatprep.subr.mxu0 0.0
        %3409 = vmatpush1.msra.mxu0 0.0
        %3410 = vmatprep.subr.mxu0 0.0
        %3411 = vmatpush1.msra.mxu0 0.0
        %3412 = vmatprep.subr.mxu0 0.0
        %3413 = vmatpush1.msra.mxu0 0.0
        %3414 = vmatprep.subr.mxu0 0.0
        %3415 = vmatpush1.msra.mxu0 0.0
        %3416 = vmatprep.subr.mxu0 0.0
        %3417 = vmatpush1.msra.mxu0 0.0
        %3418 = vmatprep.subr.mxu0 0.0
        %3419 = vmatpush1.msra.mxu0 0.0
        %3420 = vmatprep.subr.mxu0 0.0
        %3421 = vmatpush1.msra.mxu0 0.0
        %3422 = vmatprep.subr.mxu0 0.0
        %3423 = vmatpush1.msra.mxu0 0.0
        %3424 = vmatprep.mubr.f32.mxu0 0.0
        %v3425 = vand.u32 %v3019, 4294901760
        %3426 = vmatmul.mubr.f32.gmra.mrb[0].mxu0 %v3425
        %v3427 = vpop.f32.mrb[0].mxu0
        %v3428 = vadd.f32 %v3345, %v3427
        %v3429 = vpop.f32.mrb[0].mxu0
        %3430 = vdwg.mxu0
        %3431 = vmatprep.subr.mxu0 0.0
        %v3432 = vand.u32 %v2029, 4294901760
        %3433 = vmatpush1.msra.mxu0 %v3432
        %3434 = vmatprep.subr.mxu0 0.0
        %v3435 = vand.u32 %v2030, 4294901760
        %3436 = vmatpush1.msra.mxu0 %v3435
        %3437 = vmatprep.subr.mxu0 0.0
        %v3438 = vand.u32 %v2031, 4294901760
        %3439 = vmatpush1.msra.mxu0 %v3438
        %3440 = vmatprep.subr.mxu0 0.0
        %v3441 = vand.u32 %v2032, 4294901760
        %3442 = vmatpush1.msra.mxu0 %v3441
        %3443 = vmatprep.subr.mxu0 0.0
        %3444 = vmatpush1.msra.mxu0 0.0
        %3445 = vmatprep.subr.mxu0 0.0
        %3446 = vmatpush1.msra.mxu0 0.0
        %3447 = vmatprep.subr.mxu0 0.0
        %3448 = vmatpush1.msra.mxu0 0.0
        %3449 = vmatprep.subr.mxu0 0.0
        %3450 = vmatpush1.msra.mxu0 0.0
        %3451 = vmatprep.subr.mxu0 0.0
        %3452 = vmatpush1.msra.mxu0 0.0
        %3453 = vmatprep.subr.mxu0 0.0
        %3454 = vmatpush1.msra.mxu0 0.0
        %3455 = vmatprep.subr.mxu0 0.0
        %3456 = vmatpush1.msra.mxu0 0.0
        %3457 = vmatprep.subr.mxu0 0.0
        %3458 = vmatpush1.msra.mxu0 0.0
        %3459 = vmatprep.subr.mxu0 0.0
        %3460 = vmatpush1.msra.mxu0 0.0
        %3461 = vmatprep.subr.mxu0 0.0
        %3462 = vmatpush1.msra.mxu0 0.0
        %3463 = vmatprep.subr.mxu0 0.0
        %3464 = vmatpush1.msra.mxu0 0.0
        %3465 = vmatprep.subr.mxu0 0.0
        %3466 = vmatpush1.msra.mxu0 0.0
        %3467 = vmatprep.subr.mxu0 0.0
        %3468 = vmatpush1.msra.mxu0 0.0
        %3469 = vmatprep.subr.mxu0 0.0
        %3470 = vmatpush1.msra.mxu0 0.0
        %3471 = vmatprep.subr.mxu0 0.0
        %3472 = vmatpush1.msra.mxu0 0.0
        %3473 = vmatprep.subr.mxu0 0.0
        %3474 = vmatpush1.msra.mxu0 0.0
        %3475 = vmatprep.subr.mxu0 0.0
        %3476 = vmatpush1.msra.mxu0 0.0
        %3477 = vmatprep.subr.mxu0 0.0
        %3478 = vmatpush1.msra.mxu0 0.0
        %3479 = vmatprep.subr.mxu0 0.0
        %3480 = vmatpush1.msra.mxu0 0.0
        %3481 = vmatprep.subr.mxu0 0.0
        %3482 = vmatpush1.msra.mxu0 0.0
        %3483 = vmatprep.subr.mxu0 0.0
        %3484 = vmatpush1.msra.mxu0 0.0
        %3485 = vmatprep.subr.mxu0 0.0
        %3486 = vmatpush1.msra.mxu0 0.0
        %3487 = vmatprep.subr.mxu0 0.0
        %3488 = vmatpush1.msra.mxu0 0.0
        %3489 = vmatprep.subr.mxu0 0.0
        %3490 = vmatpush1.msra.mxu0 0.0
        %3491 = vmatprep.subr.mxu0 0.0
        %3492 = vmatpush1.msra.mxu0 0.0
        %3493 = vmatprep.subr.mxu0 0.0
        %3494 = vmatpush1.msra.mxu0 0.0
        %3495 = vmatprep.subr.mxu0 0.0
        %3496 = vmatpush1.msra.mxu0 0.0
        %3497 = vmatprep.subr.mxu0 0.0
        %3498 = vmatpush1.msra.mxu0 0.0
        %3499 = vmatprep.mubr.f32.mxu0 0.0
        %v3500 = vand.u32 %v3019, 4294901760
        %3501 = vmatmul.mubr.f32.gmra.mrb[0].mxu0 %v3500
        %v3502 = vpop.f32.mrb[0].mxu0
        %v3503 = vadd.f32 %v3428, %v3502
        %v3504 = vpop.f32.mrb[0].mxu0
        %3505 = vdwg.mxu0
        %v3507 = vsel %vm1964, %v3017, 0
        %3509 = vmatprep.subr.mxu0 0.0
        %v3510 = vand.u32 %v2029, 4294901760
        %3511 = vmatpush1.msra.mxu0 %v3510
        %3512 = vmatprep.subr.mxu0 0.0
        %v3513 = vand.u32 %v2030, 4294901760
        %3514 = vmatpush1.msra.mxu0 %v3513
        %3515 = vmatprep.subr.mxu0 0.0
        %v3516 = vand.u32 %v2031, 4294901760
        %3517 = vmatpush1.msra.mxu0 %v3516
        %3518 = vmatprep.subr.mxu0 0.0
        %v3519 = vand.u32 %v2032, 4294901760
        %3520 = vmatpush1.msra.mxu0 %v3519
        %3521 = vmatprep.subr.mxu0 0.0
        %3522 = vmatpush1.msra.mxu0 0.0
        %3523 = vmatprep.subr.mxu0 0.0
        %3524 = vmatpush1.msra.mxu0 0.0
        %3525 = vmatprep.subr.mxu0 0.0
        %3526 = vmatpush1.msra.mxu0 0.0
        %3527 = vmatprep.subr.mxu0 0.0
        %3528 = vmatpush1.msra.mxu0 0.0
        %3529 = vmatprep.subr.mxu0 0.0
        %3530 = vmatpush1.msra.mxu0 0.0
        %3531 = vmatprep.subr.mxu0 0.0
        %3532 = vmatpush1.msra.mxu0 0.0
        %3533 = vmatprep.subr.mxu0 0.0
        %3534 = vmatpush1.msra.mxu0 0.0
        %3535 = vmatprep.subr.mxu0 0.0
        %3536 = vmatpush1.msra.mxu0 0.0
        %3537 = vmatprep.subr.mxu0 0.0
        %3538 = vmatpush1.msra.mxu0 0.0
        %3539 = vmatprep.subr.mxu0 0.0
        %3540 = vmatpush1.msra.mxu0 0.0
        %3541 = vmatprep.subr.mxu0 0.0
        %3542 = vmatpush1.msra.mxu0 0.0
        %3543 = vmatprep.subr.mxu0 0.0
        %3544 = vmatpush1.msra.mxu0 0.0
        %3545 = vmatprep.subr.mxu0 0.0
        %3546 = vmatpush1.msra.mxu0 0.0
        %3547 = vmatprep.subr.mxu0 0.0
        %3548 = vmatpush1.msra.mxu0 0.0
        %3549 = vmatprep.subr.mxu0 0.0
        %3550 = vmatpush1.msra.mxu0 0.0
        %3551 = vmatprep.subr.mxu0 0.0
        %3552 = vmatpush1.msra.mxu0 0.0
        %3553 = vmatprep.subr.mxu0 0.0
        %3554 = vmatpush1.msra.mxu0 0.0
        %3555 = vmatprep.subr.mxu0 0.0
        %3556 = vmatpush1.msra.mxu0 0.0
        %3557 = vmatprep.subr.mxu0 0.0
        %3558 = vmatpush1.msra.mxu0 0.0
        %3559 = vmatprep.subr.mxu0 0.0
        %3560 = vmatpush1.msra.mxu0 0.0
        %3561 = vmatprep.subr.mxu0 0.0
        %3562 = vmatpush1.msra.mxu0 0.0
        %3563 = vmatprep.subr.mxu0 0.0
        %3564 = vmatpush1.msra.mxu0 0.0
        %3565 = vmatprep.subr.mxu0 0.0
        %3566 = vmatpush1.msra.mxu0 0.0
        %3567 = vmatprep.subr.mxu0 0.0
        %3568 = vmatpush1.msra.mxu0 0.0
        %3569 = vmatprep.subr.mxu0 0.0
        %3570 = vmatpush1.msra.mxu0 0.0
        %3571 = vmatprep.subr.mxu0 0.0
        %3572 = vmatpush1.msra.mxu0 0.0
        %3573 = vmatprep.subr.mxu0 0.0
        %3574 = vmatpush1.msra.mxu0 0.0
        %3575 = vmatprep.subr.mxu0 0.0
        %3576 = vmatpush1.msra.mxu0 0.0
        %3577 = vmatprep.mubr.f32.mxu0 0.0
        %v3578 = vand.u32 %v3507, 4294901760
        %v3579 = vsub.f32 %v3507, %v3578
        %v3580 = vand.u32 %v3579, 4294901760
        %v3581 = vsub.f32 %v3579, %v3580
        %v3582 = vand.u32 %v3581, 4294901760
        %3583 = vmatmul.mubr.f32.gmra.mrb[0].mxu0 %v3582
        %v3584 = vpop.f32.mrb[0].mxu0
        %v3585 = vadd.f32 0.0, %v3584
        %v3586 = vpop.f32.mrb[0].mxu0
        %3587 = vdwg.mxu0
        %3588 = vmatprep.subr.mxu0 0.0
        %v3589 = vand.u32 %v2029, 4294901760
        %v3590 = vsub.f32 %v2029, %v3589
        %v3591 = vand.u32 %v3590, 4294901760
        %v3592 = vsub.f32 %v3590, %v3591
        %v3593 = vand.u32 %v3592, 4294901760
        %3594 = vmatpush1.msra.mxu0 %v3593
        %3595 = vmatprep.subr.mxu0 0.0
        %v3596 = vand.u32 %v2030, 4294901760
        %v3597 = vsub.f32 %v2030, %v3596
        %v3598 = vand.u32 %v3597, 4294901760
        %v3599 = vsub.f32 %v3597, %v3598
        %v3600 = vand.u32 %v3599, 4294901760
        %3601 = vmatpush1.msra.mxu0 %v3600
        %3602 = vmatprep.subr.mxu0 0.0
        %v3603 = vand.u32 %v2031, 4294901760
        %v3604 = vsub.f32 %v2031, %v3603
        %v3605 = vand.u32 %v3604, 4294901760
        %v3606 = vsub.f32 %v3604, %v3605
        %v3607 = vand.u32 %v3606, 4294901760
        %3608 = vmatpush1.msra.mxu0 %v3607
        %3609 = vmatprep.subr.mxu0 0.0
        %v3610 = vand.u32 %v2032, 4294901760
        %v3611 = vsub.f32 %v2032, %v3610
        %v3612 = vand.u32 %v3611, 4294901760
        %v3613 = vsub.f32 %v3611, %v3612
        %v3614 = vand.u32 %v3613, 4294901760
        %3615 = vmatpush1.msra.mxu0 %v3614
        %3616 = vmatprep.subr.mxu0 0.0
        %3617 = vmatpush1.msra.mxu0 0.0
        %3618 = vmatprep.subr.mxu0 0.0
        %3619 = vmatpush1.msra.mxu0 0.0
        %3620 = vmatprep.subr.mxu0 0.0
        %3621 = vmatpush1.msra.mxu0 0.0
        %3622 = vmatprep.subr.mxu0 0.0
        %3623 = vmatpush1.msra.mxu0 0.0
        %3624 = vmatprep.subr.mxu0 0.0
        %3625 = vmatpush1.msra.mxu0 0.0
        %3626 = vmatprep.subr.mxu0 0.0
        %3627 = vmatpush1.msra.mxu0 0.0
        %3628 = vmatprep.subr.mxu0 0.0
        %3629 = vmatpush1.msra.mxu0 0.0
        %3630 = vmatprep.subr.mxu0 0.0
        %3631 = vmatpush1.msra.mxu0 0.0
        %3632 = vmatprep.subr.mxu0 0.0
        %3633 = vmatpush1.msra.mxu0 0.0
        %3634 = vmatprep.subr.mxu0 0.0
        %3635 = vmatpush1.msra.mxu0 0.0
        %3636 = vmatprep.subr.mxu0 0.0
        %3637 = vmatpush1.msra.mxu0 0.0
        %3638 = vmatprep.subr.mxu0 0.0
        %3639 = vmatpush1.msra.mxu0 0.0
        %3640 = vmatprep.subr.mxu0 0.0
        %3641 = vmatpush1.msra.mxu0 0.0
        %3642 = vmatprep.subr.mxu0 0.0
        %3643 = vmatpush1.msra.mxu0 0.0
        %3644 = vmatprep.subr.mxu0 0.0
        %3645 = vmatpush1.msra.mxu0 0.0
        %3646 = vmatprep.subr.mxu0 0.0
        %3647 = vmatpush1.msra.mxu0 0.0
        %3648 = vmatprep.subr.mxu0 0.0
        %3649 = vmatpush1.msra.mxu0 0.0
        %3650 = vmatprep.subr.mxu0 0.0
        %3651 = vmatpush1.msra.mxu0 0.0
        %3652 = vmatprep.subr.mxu0 0.0
        %3653 = vmatpush1.msra.mxu0 0.0
        %3654 = vmatprep.subr.mxu0 0.0
        %3655 = vmatpush1.msra.mxu0 0.0
        %3656 = vmatprep.subr.mxu0 0.0
        %3657 = vmatpush1.msra.mxu0 0.0
        %3658 = vmatprep.subr.mxu0 0.0
        %3659 = vmatpush1.msra.mxu0 0.0
        %3660 = vmatprep.subr.mxu0 0.0
        %3661 = vmatpush1.msra.mxu0 0.0
        %3662 = vmatprep.subr.mxu0 0.0
        %3663 = vmatpush1.msra.mxu0 0.0
        %3664 = vmatprep.subr.mxu0 0.0
        %3665 = vmatpush1.msra.mxu0 0.0
        %3666 = vmatprep.subr.mxu0 0.0
        %3667 = vmatpush1.msra.mxu0 0.0
        %3668 = vmatprep.subr.mxu0 0.0
        %3669 = vmatpush1.msra.mxu0 0.0
        %3670 = vmatprep.subr.mxu0 0.0
        %3671 = vmatpush1.msra.mxu0 0.0
        %3672 = vmatprep.mubr.f32.mxu0 0.0
        %v3673 = vand.u32 %v3507, 4294901760
        %3674 = vmatmul.mubr.f32.gmra.mrb[0].mxu0 %v3673
        %v3675 = vpop.f32.mrb[0].mxu0
        %v3676 = vadd.f32 %v3585, %v3675
        %v3677 = vpop.f32.mrb[0].mxu0
        %3678 = vdwg.mxu0
        %3679 = vmatprep.subr.mxu0 0.0
        %v3680 = vand.u32 %v2029, 4294901760
        %v3681 = vsub.f32 %v2029, %v3680
        %3682 = vmatpush1.msra.mxu0 %v3681
        %3683 = vmatprep.subr.mxu0 0.0
        %v3684 = vand.u32 %v2030, 4294901760
        %v3685 = vsub.f32 %v2030, %v3684
        %3686 = vmatpush1.msra.mxu0 %v3685
        %3687 = vmatprep.subr.mxu0 0.0
        %v3688 = vand.u32 %v2031, 4294901760
        %v3689 = vsub.f32 %v2031, %v3688
        %3690 = vmatpush1.msra.mxu0 %v3689
        %3691 = vmatprep.subr.mxu0 0.0
        %v3692 = vand.u32 %v2032, 4294901760
        %v3693 = vsub.f32 %v2032, %v3692
        %3694 = vmatpush1.msra.mxu0 %v3693
        %3695 = vmatprep.subr.mxu0 0.0
        %3696 = vmatpush1.msra.mxu0 0.0
        %3697 = vmatprep.subr.mxu0 0.0
        %3698 = vmatpush1.msra.mxu0 0.0
        %3699 = vmatprep.subr.mxu0 0.0
        %3700 = vmatpush1.msra.mxu0 0.0
        %3701 = vmatprep.subr.mxu0 0.0
        %3702 = vmatpush1.msra.mxu0 0.0
        %3703 = vmatprep.subr.mxu0 0.0
        %3704 = vmatpush1.msra.mxu0 0.0
        %3705 = vmatprep.subr.mxu0 0.0
        %3706 = vmatpush1.msra.mxu0 0.0
        %3707 = vmatprep.subr.mxu0 0.0
        %3708 = vmatpush1.msra.mxu0 0.0
        %3709 = vmatprep.subr.mxu0 0.0
        %3710 = vmatpush1.msra.mxu0 0.0
        %3711 = vmatprep.subr.mxu0 0.0
        %3712 = vmatpush1.msra.mxu0 0.0
        %3713 = vmatprep.subr.mxu0 0.0
        %3714 = vmatpush1.msra.mxu0 0.0
        %3715 = vmatprep.subr.mxu0 0.0
        %3716 = vmatpush1.msra.mxu0 0.0
        %3717 = vmatprep.subr.mxu0 0.0
        %3718 = vmatpush1.msra.mxu0 0.0
        %3719 = vmatprep.subr.mxu0 0.0
        %3720 = vmatpush1.msra.mxu0 0.0
        %3721 = vmatprep.subr.mxu0 0.0
        %3722 = vmatpush1.msra.mxu0 0.0
        %3723 = vmatprep.subr.mxu0 0.0
        %3724 = vmatpush1.msra.mxu0 0.0
        %3725 = vmatprep.subr.mxu0 0.0
        %3726 = vmatpush1.msra.mxu0 0.0
        %3727 = vmatprep.subr.mxu0 0.0
        %3728 = vmatpush1.msra.mxu0 0.0
        %3729 = vmatprep.subr.mxu0 0.0
        %3730 = vmatpush1.msra.mxu0 0.0
        %3731 = vmatprep.subr.mxu0 0.0
        %3732 = vmatpush1.msra.mxu0 0.0
        %3733 = vmatprep.subr.mxu0 0.0
        %3734 = vmatpush1.msra.mxu0 0.0
        %3735 = vmatprep.subr.mxu0 0.0
        %3736 = vmatpush1.msra.mxu0 0.0
        %3737 = vmatprep.subr.mxu0 0.0
        %3738 = vmatpush1.msra.mxu0 0.0
        %3739 = vmatprep.subr.mxu0 0.0
        %3740 = vmatpush1.msra.mxu0 0.0
        %3741 = vmatprep.subr.mxu0 0.0
        %3742 = vmatpush1.msra.mxu0 0.0
        %3743 = vmatprep.subr.mxu0 0.0
        %3744 = vmatpush1.msra.mxu0 0.0
        %3745 = vmatprep.subr.mxu0 0.0
        %3746 = vmatpush1.msra.mxu0 0.0
        %3747 = vmatprep.subr.mxu0 0.0
        %3748 = vmatpush1.msra.mxu0 0.0
        %3749 = vmatprep.subr.mxu0 0.0
        %3750 = vmatpush1.msra.mxu0 0.0
        %3751 = vmatprep.mubr.f32.mxu0 0.0
        %v3752 = vand.u32 %v3507, 4294901760
        %v3753 = vsub.f32 %v3507, %v3752
        %3754 = vmatmul.mubr.f32.gmra.mrb[0].mxu0 %v3753
        %v3755 = vpop.f32.mrb[0].mxu0
        %v3756 = vadd.f32 %v3676, %v3755
        %v3757 = vpop.f32.mrb[0].mxu0
        %3758 = vdwg.mxu0
        %3759 = vmatprep.subr.mxu0 0.0
        %v3760 = vand.u32 %v2029, 4294901760
        %3761 = vmatpush1.msra.mxu0 %v3760
        %3762 = vmatprep.subr.mxu0 0.0
        %v3763 = vand.u32 %v2030, 4294901760
        %3764 = vmatpush1.msra.mxu0 %v3763
        %3765 = vmatprep.subr.mxu0 0.0
        %v3766 = vand.u32 %v2031, 4294901760
        %3767 = vmatpush1.msra.mxu0 %v3766
        %3768 = vmatprep.subr.mxu0 0.0
        %v3769 = vand.u32 %v2032, 4294901760
        %3770 = vmatpush1.msra.mxu0 %v3769
        %3771 = vmatprep.subr.mxu0 0.0
        %3772 = vmatpush1.msra.mxu0 0.0
        %3773 = vmatprep.subr.mxu0 0.0
        %3774 = vmatpush1.msra.mxu0 0.0
        %3775 = vmatprep.subr.mxu0 0.0
        %3776 = vmatpush1.msra.mxu0 0.0
        %3777 = vmatprep.subr.mxu0 0.0
        %3778 = vmatpush1.msra.mxu0 0.0
        %3779 = vmatprep.subr.mxu0 0.0
        %3780 = vmatpush1.msra.mxu0 0.0
        %3781 = vmatprep.subr.mxu0 0.0
        %3782 = vmatpush1.msra.mxu0 0.0
        %3783 = vmatprep.subr.mxu0 0.0
        %3784 = vmatpush1.msra.mxu0 0.0
        %3785 = vmatprep.subr.mxu0 0.0
        %3786 = vmatpush1.msra.mxu0 0.0
        %3787 = vmatprep.subr.mxu0 0.0
        %3788 = vmatpush1.msra.mxu0 0.0
        %3789 = vmatprep.subr.mxu0 0.0
        %3790 = vmatpush1.msra.mxu0 0.0
        %3791 = vmatprep.subr.mxu0 0.0
        %3792 = vmatpush1.msra.mxu0 0.0
        %3793 = vmatprep.subr.mxu0 0.0
        %3794 = vmatpush1.msra.mxu0 0.0
        %3795 = vmatprep.subr.mxu0 0.0
        %3796 = vmatpush1.msra.mxu0 0.0
        %3797 = vmatprep.subr.mxu0 0.0
        %3798 = vmatpush1.msra.mxu0 0.0
        %3799 = vmatprep.subr.mxu0 0.0
        %3800 = vmatpush1.msra.mxu0 0.0
        %3801 = vmatprep.subr.mxu0 0.0
        %3802 = vmatpush1.msra.mxu0 0.0
        %3803 = vmatprep.subr.mxu0 0.0
        %3804 = vmatpush1.msra.mxu0 0.0
        %3805 = vmatprep.subr.mxu0 0.0
        %3806 = vmatpush1.msra.mxu0 0.0
        %3807 = vmatprep.subr.mxu0 0.0
        %3808 = vmatpush1.msra.mxu0 0.0
        %3809 = vmatprep.subr.mxu0 0.0
        %3810 = vmatpush1.msra.mxu0 0.0
        %3811 = vmatprep.subr.mxu0 0.0
        %3812 = vmatpush1.msra.mxu0 0.0
        %3813 = vmatprep.subr.mxu0 0.0
        %3814 = vmatpush1.msra.mxu0 0.0
        %3815 = vmatprep.subr.mxu0 0.0
        %3816 = vmatpush1.msra.mxu0 0.0
        %3817 = vmatprep.subr.mxu0 0.0
        %3818 = vmatpush1.msra.mxu0 0.0
        %3819 = vmatprep.subr.mxu0 0.0
        %3820 = vmatpush1.msra.mxu0 0.0
        %3821 = vmatprep.subr.mxu0 0.0
        %3822 = vmatpush1.msra.mxu0 0.0
        %3823 = vmatprep.subr.mxu0 0.0
        %3824 = vmatpush1.msra.mxu0 0.0
        %3825 = vmatprep.subr.mxu0 0.0
        %3826 = vmatpush1.msra.mxu0 0.0
        %3827 = vmatprep.mubr.f32.mxu0 0.0
        %v3828 = vand.u32 %v3507, 4294901760
        %v3829 = vsub.f32 %v3507, %v3828
        %v3830 = vand.u32 %v3829, 4294901760
        %3831 = vmatmul.mubr.f32.gmra.mrb[0].mxu0 %v3830
        %v3832 = vpop.f32.mrb[0].mxu0
        %v3833 = vadd.f32 %v3756, %v3832
        %v3834 = vpop.f32.mrb[0].mxu0
        %3835 = vdwg.mxu0
        %3836 = vmatprep.subr.mxu0 0.0
        %v3837 = vand.u32 %v2029, 4294901760
        %v3838 = vsub.f32 %v2029, %v3837
        %v3839 = vand.u32 %v3838, 4294901760
        %3840 = vmatpush1.msra.mxu0 %v3839
        %3841 = vmatprep.subr.mxu0 0.0
        %v3842 = vand.u32 %v2030, 4294901760
        %v3843 = vsub.f32 %v2030, %v3842
        %v3844 = vand.u32 %v3843, 4294901760
        %3845 = vmatpush1.msra.mxu0 %v3844
        %3846 = vmatprep.subr.mxu0 0.0
        %v3847 = vand.u32 %v2031, 4294901760
        %v3848 = vsub.f32 %v2031, %v3847
        %v3849 = vand.u32 %v3848, 4294901760
        %3850 = vmatpush1.msra.mxu0 %v3849
        %3851 = vmatprep.subr.mxu0 0.0
        %v3852 = vand.u32 %v2032, 4294901760
        %v3853 = vsub.f32 %v2032, %v3852
        %v3854 = vand.u32 %v3853, 4294901760
        %3855 = vmatpush1.msra.mxu0 %v3854
        %3856 = vmatprep.subr.mxu0 0.0
        %3857 = vmatpush1.msra.mxu0 0.0
        %3858 = vmatprep.subr.mxu0 0.0
        %3859 = vmatpush1.msra.mxu0 0.0
        %3860 = vmatprep.subr.mxu0 0.0
        %3861 = vmatpush1.msra.mxu0 0.0
        %3862 = vmatprep.subr.mxu0 0.0
        %3863 = vmatpush1.msra.mxu0 0.0
        %3864 = vmatprep.subr.mxu0 0.0
        %3865 = vmatpush1.msra.mxu0 0.0
        %3866 = vmatprep.subr.mxu0 0.0
        %3867 = vmatpush1.msra.mxu0 0.0
        %3868 = vmatprep.subr.mxu0 0.0
        %3869 = vmatpush1.msra.mxu0 0.0
        %3870 = vmatprep.subr.mxu0 0.0
        %3871 = vmatpush1.msra.mxu0 0.0
        %3872 = vmatprep.subr.mxu0 0.0
        %3873 = vmatpush1.msra.mxu0 0.0
        %3874 = vmatprep.subr.mxu0 0.0
        %3875 = vmatpush1.msra.mxu0 0.0
        %3876 = vmatprep.subr.mxu0 0.0
        %3877 = vmatpush1.msra.mxu0 0.0
        %3878 = vmatprep.subr.mxu0 0.0
        %3879 = vmatpush1.msra.mxu0 0.0
        %3880 = vmatprep.subr.mxu0 0.0
        %3881 = vmatpush1.msra.mxu0 0.0
        %3882 = vmatprep.subr.mxu0 0.0
        %3883 = vmatpush1.msra.mxu0 0.0
        %3884 = vmatprep.subr.mxu0 0.0
        %3885 = vmatpush1.msra.mxu0 0.0
        %3886 = vmatprep.subr.mxu0 0.0
        %3887 = vmatpush1.msra.mxu0 0.0
        %3888 = vmatprep.subr.mxu0 0.0
        %3889 = vmatpush1.msra.mxu0 0.0
        %3890 = vmatprep.subr.mxu0 0.0
        %3891 = vmatpush1.msra.mxu0 0.0
        %3892 = vmatprep.subr.mxu0 0.0
        %3893 = vmatpush1.msra.mxu0 0.0
        %3894 = vmatprep.subr.mxu0 0.0
        %3895 = vmatpush1.msra.mxu0 0.0
        %3896 = vmatprep.subr.mxu0 0.0
        %3897 = vmatpush1.msra.mxu0 0.0
        %3898 = vmatprep.subr.mxu0 0.0
        %3899 = vmatpush1.msra.mxu0 0.0
        %3900 = vmatprep.subr.mxu0 0.0
        %3901 = vmatpush1.msra.mxu0 0.0
        %3902 = vmatprep.subr.mxu0 0.0
        %3903 = vmatpush1.msra.mxu0 0.0
        %3904 = vmatprep.subr.mxu0 0.0
        %3905 = vmatpush1.msra.mxu0 0.0
        %3906 = vmatprep.subr.mxu0 0.0
        %3907 = vmatpush1.msra.mxu0 0.0
        %3908 = vmatprep.subr.mxu0 0.0
        %3909 = vmatpush1.msra.mxu0 0.0
        %3910 = vmatprep.subr.mxu0 0.0
        %3911 = vmatpush1.msra.mxu0 0.0
        %3912 = vmatprep.mubr.f32.mxu0 0.0
        %v3913 = vand.u32 %v3507, 4294901760
        %3914 = vmatmul.mubr.f32.gmra.mrb[0].mxu0 %v3913
        %v3915 = vpop.f32.mrb[0].mxu0
        %v3916 = vadd.f32 %v3833, %v3915
        %v3917 = vpop.f32.mrb[0].mxu0
        %3918 = vdwg.mxu0
        %3919 = vmatprep.subr.mxu0 0.0
        %v3920 = vand.u32 %v2029, 4294901760
        %3921 = vmatpush1.msra.mxu0 %v3920
        %3922 = vmatprep.subr.mxu0 0.0
        %v3923 = vand.u32 %v2030, 4294901760
        %3924 = vmatpush1.msra.mxu0 %v3923
        %3925 = vmatprep.subr.mxu0 0.0
        %v3926 = vand.u32 %v2031, 4294901760
        %3927 = vmatpush1.msra.mxu0 %v3926
        %3928 = vmatprep.subr.mxu0 0.0
        %v3929 = vand.u32 %v2032, 4294901760
        %3930 = vmatpush1.msra.mxu0 %v3929
        %3931 = vmatprep.subr.mxu0 0.0
        %3932 = vmatpush1.msra.mxu0 0.0
        %3933 = vmatprep.subr.mxu0 0.0
        %3934 = vmatpush1.msra.mxu0 0.0
        %3935 = vmatprep.subr.mxu0 0.0
        %3936 = vmatpush1.msra.mxu0 0.0
        %3937 = vmatprep.subr.mxu0 0.0
        %3938 = vmatpush1.msra.mxu0 0.0
        %3939 = vmatprep.subr.mxu0 0.0
        %3940 = vmatpush1.msra.mxu0 0.0
        %3941 = vmatprep.subr.mxu0 0.0
        %3942 = vmatpush1.msra.mxu0 0.0
        %3943 = vmatprep.subr.mxu0 0.0
        %3944 = vmatpush1.msra.mxu0 0.0
        %3945 = vmatprep.subr.mxu0 0.0
        %3946 = vmatpush1.msra.mxu0 0.0
        %3947 = vmatprep.subr.mxu0 0.0
        %3948 = vmatpush1.msra.mxu0 0.0
        %3949 = vmatprep.subr.mxu0 0.0
        %3950 = vmatpush1.msra.mxu0 0.0
        %3951 = vmatprep.subr.mxu0 0.0
        %3952 = vmatpush1.msra.mxu0 0.0
        %3953 = vmatprep.subr.mxu0 0.0
        %3954 = vmatpush1.msra.mxu0 0.0
        %3955 = vmatprep.subr.mxu0 0.0
        %3956 = vmatpush1.msra.mxu0 0.0
        %3957 = vmatprep.subr.mxu0 0.0
        %3958 = vmatpush1.msra.mxu0 0.0
        %3959 = vmatprep.subr.mxu0 0.0
        %3960 = vmatpush1.msra.mxu0 0.0
        %3961 = vmatprep.subr.mxu0 0.0
        %3962 = vmatpush1.msra.mxu0 0.0
        %3963 = vmatprep.subr.mxu0 0.0
        %3964 = vmatpush1.msra.mxu0 0.0
        %3965 = vmatprep.subr.mxu0 0.0
        %3966 = vmatpush1.msra.mxu0 0.0
        %3967 = vmatprep.subr.mxu0 0.0
        %3968 = vmatpush1.msra.mxu0 0.0
        %3969 = vmatprep.subr.mxu0 0.0
        %3970 = vmatpush1.msra.mxu0 0.0
        %3971 = vmatprep.subr.mxu0 0.0
        %3972 = vmatpush1.msra.mxu0 0.0
        %3973 = vmatprep.subr.mxu0 0.0
        %3974 = vmatpush1.msra.mxu0 0.0
        %3975 = vmatprep.subr.mxu0 0.0
        %3976 = vmatpush1.msra.mxu0 0.0
        %3977 = vmatprep.subr.mxu0 0.0
        %3978 = vmatpush1.msra.mxu0 0.0
        %3979 = vmatprep.subr.mxu0 0.0
        %3980 = vmatpush1.msra.mxu0 0.0
        %3981 = vmatprep.subr.mxu0 0.0
        %3982 = vmatpush1.msra.mxu0 0.0
        %3983 = vmatprep.subr.mxu0 0.0
        %3984 = vmatpush1.msra.mxu0 0.0
        %3985 = vmatprep.subr.mxu0 0.0
        %3986 = vmatpush1.msra.mxu0 0.0
        %3987 = vmatprep.mubr.f32.mxu0 0.0
        %v3988 = vand.u32 %v3507, 4294901760
        %3989 = vmatmul.mubr.f32.gmra.mrb[0].mxu0 %v3988
        %v3990 = vpop.f32.mrb[0].mxu0
        %v3991 = vadd.f32 %v3916, %v3990
        %v3992 = vpop.f32.mrb[0].mxu0
        %3993 = vdwg.mxu0
        %v3994 = vmul.f32 %v3991, %v2033
        %v3995 = vmul.f32 %v3503, %v3994
        %v3996 = vsub.f32 %v2034, %v3995
        %v3997 = vld [vmem:[#allocation2] sm:$0xff]
        %v3998 = vld [vmem:[#allocation2 + $0x8] sm:$0xff]
        %v3999 = vld [vmem:[#allocation2 + $0x10] sm:$0xff]
        %v4000 = vld [vmem:[#allocation2 + $0x18] sm:$0xff]
        %v4001 = vld [vmem:[#allocation2 + $0x20] sm:$0xff]
        %v4002 = vld [vmem:[#allocation2 + $0x28] sm:$0xff]
        %v4003 = vld [vmem:[#allocation2 + $0x30] sm:$0xff]
        %v4004 = vld [vmem:[#allocation2 + $0x38] sm:$0xff]
        %v4005 = vlaneseq
        %v4006 = vshrl.u32 %v4005, 7
        %v4007 = vsub.s32 0, %v4006
        %v4008 = vrot.slane %v3994, %v4007
        %v4009 = vmul.f32 %v3997, %v4008
        %v4010 = vmul.f32 %v3998, %v4008
        %v4011 = vmul.f32 %v3999, %v4008
        %v4012 = vmul.f32 %v4000, %v4008
        %v4013 = vmul.f32 %v4001, %v4008
        %v4014 = vmul.f32 %v4002, %v4008
        %v4015 = vmul.f32 %v4003, %v4008
        %v4016 = vmul.f32 %v4004, %v4008
        %v4018 = vlaneseq
        %v4019 = vshrl.u32 %v4018, 7
        %v4020 = vsub.s32 0, %v4019
        %v4021 = vrot.slane %v3996, %v4020
        %v4023 = vadd.f32 %v4009, %v4021
        %v4024 = vadd.f32 %v4010, %v4021
        %v4025 = vadd.f32 %v4011, %v4021
        %v4026 = vadd.f32 %v4012, %v4021
        %v4027 = vadd.f32 %v4013, %v4021
        %v4028 = vadd.f32 %v4014, %v4021
        %v4029 = vadd.f32 %v4015, %v4021
        %v4030 = vadd.f32 %v4016, %v4021
        %v4031 = vmax.f32 %v4023, 0.0
        %v4032 = vmax.f32 %v4024, 0.0
        %v4033 = vmax.f32 %v4025, 0.0
        %v4034 = vmax.f32 %v4026, 0.0
        %v4035 = vmax.f32 %v4027, 0.0
        %v4036 = vmax.f32 %v4028, 0.0
        %v4037 = vmax.f32 %v4029, 0.0
        %v4038 = vmax.f32 %v4030, 0.0
        %v4039 = vld [vmem:[#allocation11] sm:$0xff]
        %v4040 = vld [vmem:[#allocation11 + $0x8] sm:$0xff]
        %v4041 = vld [vmem:[#allocation11 + $0x10] sm:$0xff]
        %v4042 = vld [vmem:[#allocation11 + $0x18] sm:$0xff]
        %v4044 = vsel %vm1964, %v4031, 0
        %v4047 = vsel %vm1964, %v4032, 0
        %v4050 = vsel %vm1964, %v4033, 0
        %v4053 = vsel %vm1964, %v4034, 0
        %v4056 = vsel %vm1964, %v4035, 0
        %v4059 = vsel %vm1964, %v4036, 0
        %v4062 = vsel %vm1964, %v4037, 0
        %v4065 = vsel %vm1964, %v4038, 0
        %4067 = vmatprep.subr.mxu0 0.0
        %v4068 = vand.u32 %v4039, 4294901760
        %4069 = vmatpush1.msra.mxu0 %v4068
        %4070 = vmatprep.subr.mxu0 0.0
        %v4071 = vand.u32 %v4040, 4294901760
        %4072 = vmatpush1.msra.mxu0 %v4071
        %4073 = vmatprep.subr.mxu0 0.0
        %v4074 = vand.u32 %v4041, 4294901760
        %4075 = vmatpush1.msra.mxu0 %v4074
        %4076 = vmatprep.subr.mxu0 0.0
        %v4077 = vand.u32 %v4042, 4294901760
        %4078 = vmatpush1.msra.mxu0 %v4077
        %4079 = vmatprep.subr.mxu0 0.0
        %4080 = vmatpush1.msra.mxu0 0.0
        %4081 = vmatprep.subr.mxu0 0.0
        %4082 = vmatpush1.msra.mxu0 0.0
        %4083 = vmatprep.subr.mxu0 0.0
        %4084 = vmatpush1.msra.mxu0 0.0
        %4085 = vmatprep.subr.mxu0 0.0
        %4086 = vmatpush1.msra.mxu0 0.0
        %4087 = vmatprep.subr.mxu0 0.0
        %4088 = vmatpush1.msra.mxu0 0.0
        %4089 = vmatprep.subr.mxu0 0.0
        %4090 = vmatpush1.msra.mxu0 0.0
        %4091 = vmatprep.subr.mxu0 0.0
        %4092 = vmatpush1.msra.mxu0 0.0
        %4093 = vmatprep.subr.mxu0 0.0
        %4094 = vmatpush1.msra.mxu0 0.0
        %4095 = vmatprep.subr.mxu0 0.0
        %4096 = vmatpush1.msra.mxu0 0.0
        %4097 = vmatprep.subr.mxu0 0.0
        %4098 = vmatpush1.msra.mxu0 0.0
        %4099 = vmatprep.subr.mxu0 0.0
        %4100 = vmatpush1.msra.mxu0 0.0
        %4101 = vmatprep.subr.mxu0 0.0
        %4102 = vmatpush1.msra.mxu0 0.0
        %4103 = vmatprep.subr.mxu0 0.0
        %4104 = vmatpush1.msra.mxu0 0.0
        %4105 = vmatprep.subr.mxu0 0.0
        %4106 = vmatpush1.msra.mxu0 0.0
        %4107 = vmatprep.subr.mxu0 0.0
        %4108 = vmatpush1.msra.mxu0 0.0
        %4109 = vmatprep.subr.mxu0 0.0
        %4110 = vmatpush1.msra.mxu0 0.0
        %4111 = vmatprep.subr.mxu0 0.0
        %4112 = vmatpush1.msra.mxu0 0.0
        %4113 = vmatprep.subr.mxu0 0.0
        %4114 = vmatpush1.msra.mxu0 0.0
        %4115 = vmatprep.subr.mxu0 0.0
        %4116 = vmatpush1.msra.mxu0 0.0
        %4117 = vmatprep.subr.mxu0 0.0
        %4118 = vmatpush1.msra.mxu0 0.0
        %4119 = vmatprep.subr.mxu0 0.0
        %4120 = vmatpush1.msra.mxu0 0.0
        %4121 = vmatprep.subr.mxu0 0.0
        %4122 = vmatpush1.msra.mxu0 0.0
        %4123 = vmatprep.subr.mxu0 0.0
        %4124 = vmatpush1.msra.mxu0 0.0
        %4125 = vmatprep.subr.mxu0 0.0
        %4126 = vmatpush1.msra.mxu0 0.0
        %4127 = vmatprep.subr.mxu0 0.0
        %4128 = vmatpush1.msra.mxu0 0.0
        %4129 = vmatprep.subr.mxu0 0.0
        %4130 = vmatpush1.msra.mxu0 0.0
        %4131 = vmatprep.subr.mxu0 0.0
        %4132 = vmatpush1.msra.mxu0 0.0
        %4133 = vmatprep.subr.mxu0 0.0
        %4134 = vmatpush1.msra.mxu0 0.0
        %4135 = vmatprep.mubr.f32.mxu0 0.0
        %v4136 = vand.u32 %v4044, 4294901760
        %v4137 = vsub.f32 %v4044, %v4136
        %v4138 = vand.u32 %v4137, 4294901760
        %v4139 = vsub.f32 %v4137, %v4138
        %v4140 = vand.u32 %v4139, 4294901760
        %4141 = vmatmul.mubr.f32.gmra.mrb[0].mxu0 %v4140
        %v4142 = vpop.f32.mrb[0].mxu0
        %v4143 = vadd.f32 0.0, %v4142
        %v4144 = vpop.f32.mrb[0].mxu0
        %4145 = vmatprep.mubr.f32.mxu0 0.0
        %v4146 = vand.u32 %v4047, 4294901760
        %v4147 = vsub.f32 %v4047, %v4146
        %v4148 = vand.u32 %v4147, 4294901760
        %v4149 = vsub.f32 %v4147, %v4148
        %v4150 = vand.u32 %v4149, 4294901760
        %4151 = vmatmul.mubr.f32.gmra.mrb[0].mxu0 %v4150
        %v4152 = vpop.f32.mrb[0].mxu0
        %v4153 = vadd.f32 0.0, %v4152
        %v4154 = vpop.f32.mrb[0].mxu0
        %4155 = vmatprep.mubr.f32.mxu0 0.0
        %v4156 = vand.u32 %v4050, 4294901760
        %v4157 = vsub.f32 %v4050, %v4156
        %v4158 = vand.u32 %v4157, 4294901760
        %v4159 = vsub.f32 %v4157, %v4158
        %v4160 = vand.u32 %v4159, 4294901760
        %4161 = vmatmul.mubr.f32.gmra.mrb[0].mxu0 %v4160
        %v4162 = vpop.f32.mrb[0].mxu0
        %v4163 = vadd.f32 0.0, %v4162
        %v4164 = vpop.f32.mrb[0].mxu0
        %4165 = vmatprep.mubr.f32.mxu0 0.0
        %v4166 = vand.u32 %v4053, 4294901760
        %v4167 = vsub.f32 %v4053, %v4166
        %v4168 = vand.u32 %v4167, 4294901760
        %v4169 = vsub.f32 %v4167, %v4168
        %v4170 = vand.u32 %v4169, 4294901760
        %4171 = vmatmul.mubr.f32.gmra.mrb[0].mxu0 %v4170
        %v4172 = vpop.f32.mrb[0].mxu0
        %v4173 = vadd.f32 0.0, %v4172
        %v4174 = vpop.f32.mrb[0].mxu0
        %4175 = vmatprep.mubr.f32.mxu0 0.0
        %v4176 = vand.u32 %v4056, 4294901760
        %v4177 = vsub.f32 %v4056, %v4176
        %v4178 = vand.u32 %v4177, 4294901760
        %v4179 = vsub.f32 %v4177, %v4178
        %v4180 = vand.u32 %v4179, 4294901760
        %4181 = vmatmul.mubr.f32.gmra.mrb[0].mxu0 %v4180
        %v4182 = vpop.f32.mrb[0].mxu0
        %v4183 = vadd.f32 0.0, %v4182
        %v4184 = vpop.f32.mrb[0].mxu0
        %4185 = vmatprep.mubr.f32.mxu0 0.0
        %v4186 = vand.u32 %v4059, 4294901760
        %v4187 = vsub.f32 %v4059, %v4186
        %v4188 = vand.u32 %v4187, 4294901760
        %v4189 = vsub.f32 %v4187, %v4188
        %v4190 = vand.u32 %v4189, 4294901760
        %4191 = vmatmul.mubr.f32.gmra.mrb[0].mxu0 %v4190
        %v4192 = vpop.f32.mrb[0].mxu0
        %v4193 = vadd.f32 0.0, %v4192
        %v4194 = vpop.f32.mrb[0].mxu0
        %4195 = vmatprep.mubr.f32.mxu0 0.0
        %v4196 = vand.u32 %v4062, 4294901760
        %v4197 = vsub.f32 %v4062, %v4196
        %v4198 = vand.u32 %v4197, 4294901760
        %v4199 = vsub.f32 %v4197, %v4198
        %v4200 = vand.u32 %v4199, 4294901760
        %4201 = vmatmul.mubr.f32.gmra.mrb[0].mxu0 %v4200
        %v4202 = vpop.f32.mrb[0].mxu0
        %v4203 = vadd.f32 0.0, %v4202
        %v4204 = vpop.f32.mrb[0].mxu0
        %4205 = vmatprep.mubr.f32.mxu0 0.0
        %v4206 = vand.u32 %v4065, 4294901760
        %v4207 = vsub.f32 %v4065, %v4206
        %v4208 = vand.u32 %v4207, 4294901760
        %v4209 = vsub.f32 %v4207, %v4208
        %v4210 = vand.u32 %v4209, 4294901760
        %4211 = vmatmul.mubr.f32.gmra.mrb[0].mxu0 %v4210
        %v4212 = vpop.f32.mrb[0].mxu0
        %v4213 = vadd.f32 0.0, %v4212
        %v4214 = vpop.f32.mrb[0].mxu0
        %4215 = vdwg.mxu0
        %4216 = vmatprep.subr.mxu0 0.0
        %v4217 = vand.u32 %v4039, 4294901760
        %v4218 = vsub.f32 %v4039, %v4217
        %v4219 = vand.u32 %v4218, 4294901760
        %v4220 = vsub.f32 %v4218, %v4219
        %v4221 = vand.u32 %v4220, 4294901760
        %4222 = vmatpush1.msra.mxu0 %v4221
        %4223 = vmatprep.subr.mxu0 0.0
        %v4224 = vand.u32 %v4040, 4294901760
        %v4225 = vsub.f32 %v4040, %v4224
        %v4226 = vand.u32 %v4225, 4294901760
        %v4227 = vsub.f32 %v4225, %v4226
        %v4228 = vand.u32 %v4227, 4294901760
        %4229 = vmatpush1.msra.mxu0 %v4228
        %4230 = vmatprep.subr.mxu0 0.0
        %v4231 = vand.u32 %v4041, 4294901760
        %v4232 = vsub.f32 %v4041, %v4231
        %v4233 = vand.u32 %v4232, 4294901760
        %v4234 = vsub.f32 %v4232, %v4233
        %v4235 = vand.u32 %v4234, 4294901760
        %4236 = vmatpush1.msra.mxu0 %v4235
        %4237 = vmatprep.subr.mxu0 0.0
        %v4238 = vand.u32 %v4042, 4294901760
        %v4239 = vsub.f32 %v4042, %v4238
        %v4240 = vand.u32 %v4239, 4294901760
        %v4241 = vsub.f32 %v4239, %v4240
        %v4242 = vand.u32 %v4241, 4294901760
        %4243 = vmatpush1.msra.mxu0 %v4242
        %4244 = vmatprep.subr.mxu0 0.0
        %4245 = vmatpush1.msra.mxu0 0.0
        %4246 = vmatprep.subr.mxu0 0.0
        %4247 = vmatpush1.msra.mxu0 0.0
        %4248 = vmatprep.subr.mxu0 0.0
        %4249 = vmatpush1.msra.mxu0 0.0
        %4250 = vmatprep.subr.mxu0 0.0
        %4251 = vmatpush1.msra.mxu0 0.0
        %4252 = vmatprep.subr.mxu0 0.0
        %4253 = vmatpush1.msra.mxu0 0.0
        %4254 = vmatprep.subr.mxu0 0.0
        %4255 = vmatpush1.msra.mxu0 0.0
        %4256 = vmatprep.subr.mxu0 0.0
        %4257 = vmatpush1.msra.mxu0 0.0
        %4258 = vmatprep.subr.mxu0 0.0
        %4259 = vmatpush1.msra.mxu0 0.0
        %4260 = vmatprep.subr.mxu0 0.0
        %4261 = vmatpush1.msra.mxu0 0.0
        %4262 = vmatprep.subr.mxu0 0.0
        %4263 = vmatpush1.msra.mxu0 0.0
        %4264 = vmatprep.subr.mxu0 0.0
        %4265 = vmatpush1.msra.mxu0 0.0
        %4266 = vmatprep.subr.mxu0 0.0
        %4267 = vmatpush1.msra.mxu0 0.0
        %4268 = vmatprep.subr.mxu0 0.0
        %4269 = vmatpush1.msra.mxu0 0.0
        %4270 = vmatprep.subr.mxu0 0.0
        %4271 = vmatpush1.msra.mxu0 0.0
        %4272 = vmatprep.subr.mxu0 0.0
        %4273 = vmatpush1.msra.mxu0 0.0
        %4274 = vmatprep.subr.mxu0 0.0
        %4275 = vmatpush1.msra.mxu0 0.0
        %4276 = vmatprep.subr.mxu0 0.0
        %4277 = vmatpush1.msra.mxu0 0.0
        %4278 = vmatprep.subr.mxu0 0.0
        %4279 = vmatpush1.msra.mxu0 0.0
        %4280 = vmatprep.subr.mxu0 0.0
        %4281 = vmatpush1.msra.mxu0 0.0
        %4282 = vmatprep.subr.mxu0 0.0
        %4283 = vmatpush1.msra.mxu0 0.0
        %4284 = vmatprep.subr.mxu0 0.0
        %4285 = vmatpush1.msra.mxu0 0.0
        %4286 = vmatprep.subr.mxu0 0.0
        %4287 = vmatpush1.msra.mxu0 0.0
        %4288 = vmatprep.subr.mxu0 0.0
        %4289 = vmatpush1.msra.mxu0 0.0
        %4290 = vmatprep.subr.mxu0 0.0
        %4291 = vmatpush1.msra.mxu0 0.0
        %4292 = vmatprep.subr.mxu0 0.0
        %4293 = vmatpush1.msra.mxu0 0.0
        %4294 = vmatprep.subr.mxu0 0.0
        %4295 = vmatpush1.msra.mxu0 0.0
        %4296 = vmatprep.subr.mxu0 0.0
        %4297 = vmatpush1.msra.mxu0 0.0
        %4298 = vmatprep.subr.mxu0 0.0
        %4299 = vmatpush1.msra.mxu0 0.0
        %4300 = vmatprep.mubr.f32.mxu0 0.0
        %v4301 = vand.u32 %v4044, 4294901760
        %4302 = vmatmul.mubr.f32.gmra.mrb[0].mxu0 %v4301
        %v4303 = vpop.f32.mrb[0].mxu0
        %v4304 = vadd.f32 %v4143, %v4303
        %v4305 = vpop.f32.mrb[0].mxu0
        %4306 = vmatprep.mubr.f32.mxu0 0.0
        %v4307 = vand.u32 %v4047, 4294901760
        %4308 = vmatmul.mubr.f32.gmra.mrb[0].mxu0 %v4307
        %v4309 = vpop.f32.mrb[0].mxu0
        %v4310 = vadd.f32 %v4153, %v4309
        %v4311 = vpop.f32.mrb[0].mxu0
        %4312 = vmatprep.mubr.f32.mxu0 0.0
        %v4313 = vand.u32 %v4050, 4294901760
        %4314 = vmatmul.mubr.f32.gmra.mrb[0].mxu0 %v4313
        %v4315 = vpop.f32.mrb[0].mxu0
        %v4316 = vadd.f32 %v4163, %v4315
        %v4317 = vpop.f32.mrb[0].mxu0
        %4318 = vmatprep.mubr.f32.mxu0 0.0
        %v4319 = vand.u32 %v4053, 4294901760
        %4320 = vmatmul.mubr.f32.gmra.mrb[0].mxu0 %v4319
        %v4321 = vpop.f32.mrb[0].mxu0
        %v4322 = vadd.f32 %v4173, %v4321
        %v4323 = vpop.f32.mrb[0].mxu0
        %4324 = vmatprep.mubr.f32.mxu0 0.0
        %v4325 = vand.u32 %v4056, 4294901760
        %4326 = vmatmul.mubr.f32.gmra.mrb[0].mxu0 %v4325
        %v4327 = vpop.f32.mrb[0].mxu0
        %v4328 = vadd.f32 %v4183, %v4327
        %v4329 = vpop.f32.mrb[0].mxu0
        %4330 = vmatprep.mubr.f32.mxu0 0.0
        %v4331 = vand.u32 %v4059, 4294901760
        %4332 = vmatmul.mubr.f32.gmra.mrb[0].mxu0 %v4331
        %v4333 = vpop.f32.mrb[0].mxu0
        %v4334 = vadd.f32 %v4193, %v4333
        %v4335 = vpop.f32.mrb[0].mxu0
        %4336 = vmatprep.mubr.f32.mxu0 0.0
        %v4337 = vand.u32 %v4062, 4294901760
        %4338 = vmatmul.mubr.f32.gmra.mrb[0].mxu0 %v4337
        %v4339 = vpop.f32.mrb[0].mxu0
        %v4340 = vadd.f32 %v4203, %v4339
        %v4341 = vpop.f32.mrb[0].mxu0
        %4342 = vmatprep.mubr.f32.mxu0 0.0
        %v4343 = vand.u32 %v4065, 4294901760
        %4344 = vmatmul.mubr.f32.gmra.mrb[0].mxu0 %v4343
        %v4345 = vpop.f32.mrb[0].mxu0
        %v4346 = vadd.f32 %v4213, %v4345
        %v4347 = vpop.f32.mrb[0].mxu0
        %4348 = vdwg.mxu0
        %4349 = vmatprep.subr.mxu0 0.0
        %v4350 = vand.u32 %v4039, 4294901760
        %v4351 = vsub.f32 %v4039, %v4350
        %4352 = vmatpush1.msra.mxu0 %v4351
        %4353 = vmatprep.subr.mxu0 0.0
        %v4354 = vand.u32 %v4040, 4294901760
        %v4355 = vsub.f32 %v4040, %v4354
        %4356 = vmatpush1.msra.mxu0 %v4355
        %4357 = vmatprep.subr.mxu0 0.0
        %v4358 = vand.u32 %v4041, 4294901760
        %v4359 = vsub.f32 %v4041, %v4358
        %4360 = vmatpush1.msra.mxu0 %v4359
        %4361 = vmatprep.subr.mxu0 0.0
        %v4362 = vand.u32 %v4042, 4294901760
        %v4363 = vsub.f32 %v4042, %v4362
        %4364 = vmatpush1.msra.mxu0 %v4363
        %4365 = vmatprep.subr.mxu0 0.0
        %4366 = vmatpush1.msra.mxu0 0.0
        %4367 = vmatprep.subr.mxu0 0.0
        %4368 = vmatpush1.msra.mxu0 0.0
        %4369 = vmatprep.subr.mxu0 0.0
        %4370 = vmatpush1.msra.mxu0 0.0
        %4371 = vmatprep.subr.mxu0 0.0
        %4372 = vmatpush1.msra.mxu0 0.0
        %4373 = vmatprep.subr.mxu0 0.0
        %4374 = vmatpush1.msra.mxu0 0.0
        %4375 = vmatprep.subr.mxu0 0.0
        %4376 = vmatpush1.msra.mxu0 0.0
        %4377 = vmatprep.subr.mxu0 0.0
        %4378 = vmatpush1.msra.mxu0 0.0
        %4379 = vmatprep.subr.mxu0 0.0
        %4380 = vmatpush1.msra.mxu0 0.0
        %4381 = vmatprep.subr.mxu0 0.0
        %4382 = vmatpush1.msra.mxu0 0.0
        %4383 = vmatprep.subr.mxu0 0.0
        %4384 = vmatpush1.msra.mxu0 0.0
        %4385 = vmatprep.subr.mxu0 0.0
        %4386 = vmatpush1.msra.mxu0 0.0
        %4387 = vmatprep.subr.mxu0 0.0
        %4388 = vmatpush1.msra.mxu0 0.0
        %4389 = vmatprep.subr.mxu0 0.0
        %4390 = vmatpush1.msra.mxu0 0.0
        %4391 = vmatprep.subr.mxu0 0.0
        %4392 = vmatpush1.msra.mxu0 0.0
        %4393 = vmatprep.subr.mxu0 0.0
        %4394 = vmatpush1.msra.mxu0 0.0
        %4395 = vmatprep.subr.mxu0 0.0
        %4396 = vmatpush1.msra.mxu0 0.0
        %4397 = vmatprep.subr.mxu0 0.0
        %4398 = vmatpush1.msra.mxu0 0.0
        %4399 = vmatprep.subr.mxu0 0.0
        %4400 = vmatpush1.msra.mxu0 0.0
        %4401 = vmatprep.subr.mxu0 0.0
        %4402 = vmatpush1.msra.mxu0 0.0
        %4403 = vmatprep.subr.mxu0 0.0
        %4404 = vmatpush1.msra.mxu0 0.0
        %4405 = vmatprep.subr.mxu0 0.0
        %4406 = vmatpush1.msra.mxu0 0.0
        %4407 = vmatprep.subr.mxu0 0.0
        %4408 = vmatpush1.msra.mxu0 0.0
        %4409 = vmatprep.subr.mxu0 0.0
        %4410 = vmatpush1.msra.mxu0 0.0
        %4411 = vmatprep.subr.mxu0 0.0
        %4412 = vmatpush1.msra.mxu0 0.0
        %4413 = vmatprep.subr.mxu0 0.0
        %4414 = vmatpush1.msra.mxu0 0.0
        %4415 = vmatprep.subr.mxu0 0.0
        %4416 = vmatpush1.msra.mxu0 0.0
        %4417 = vmatprep.subr.mxu0 0.0
        %4418 = vmatpush1.msra.mxu0 0.0
        %4419 = vmatprep.subr.mxu0 0.0
        %4420 = vmatpush1.msra.mxu0 0.0
        %4421 = vmatprep.mubr.f32.mxu0 0.0
        %v4422 = vand.u32 %v4044, 4294901760
        %v4423 = vsub.f32 %v4044, %v4422
        %4424 = vmatmul.mubr.f32.gmra.mrb[0].mxu0 %v4423
        %v4425 = vpop.f32.mrb[0].mxu0
        %v4426 = vadd.f32 %v4304, %v4425
        %v4427 = vpop.f32.mrb[0].mxu0
        %4428 = vmatprep.mubr.f32.mxu0 0.0
        %v4429 = vand.u32 %v4047, 4294901760
        %v4430 = vsub.f32 %v4047, %v4429
        %4431 = vmatmul.mubr.f32.gmra.mrb[0].mxu0 %v4430
        %v4432 = vpop.f32.mrb[0].mxu0
        %v4433 = vadd.f32 %v4310, %v4432
        %v4434 = vpop.f32.mrb[0].mxu0
        %4435 = vmatprep.mubr.f32.mxu0 0.0
        %v4436 = vand.u32 %v4050, 4294901760
        %v4437 = vsub.f32 %v4050, %v4436
        %4438 = vmatmul.mubr.f32.gmra.mrb[0].mxu0 %v4437
        %v4439 = vpop.f32.mrb[0].mxu0
        %v4440 = vadd.f32 %v4316, %v4439
        %v4441 = vpop.f32.mrb[0].mxu0
        %4442 = vmatprep.mubr.f32.mxu0 0.0
        %v4443 = vand.u32 %v4053, 4294901760
        %v4444 = vsub.f32 %v4053, %v4443
        %4445 = vmatmul.mubr.f32.gmra.mrb[0].mxu0 %v4444
        %v4446 = vpop.f32.mrb[0].mxu0
        %v4447 = vadd.f32 %v4322, %v4446
        %v4448 = vpop.f32.mrb[0].mxu0
        %4449 = vmatprep.mubr.f32.mxu0 0.0
        %v4450 = vand.u32 %v4056, 4294901760
        %v4451 = vsub.f32 %v4056, %v4450
        %4452 = vmatmul.mubr.f32.gmra.mrb[0].mxu0 %v4451
        %v4453 = vpop.f32.mrb[0].mxu0
        %v4454 = vadd.f32 %v4328, %v4453
        %v4455 = vpop.f32.mrb[0].mxu0
        %4456 = vmatprep.mubr.f32.mxu0 0.0
        %v4457 = vand.u32 %v4059, 4294901760
        %v4458 = vsub.f32 %v4059, %v4457
        %4459 = vmatmul.mubr.f32.gmra.mrb[0].mxu0 %v4458
        %v4460 = vpop.f32.mrb[0].mxu0
        %v4461 = vadd.f32 %v4334, %v4460
        %v4462 = vpop.f32.mrb[0].mxu0
        %4463 = vmatprep.mubr.f32.mxu0 0.0
        %v4464 = vand.u32 %v4062, 4294901760
        %v4465 = vsub.f32 %v4062, %v4464
        %4466 = vmatmul.mubr.f32.gmra.mrb[0].mxu0 %v4465
        %v4467 = vpop.f32.mrb[0].mxu0
        %v4468 = vadd.f32 %v4340, %v4467
        %v4469 = vpop.f32.mrb[0].mxu0
        %4470 = vmatprep.mubr.f32.mxu0 0.0
        %v4471 = vand.u32 %v4065, 4294901760
        %v4472 = vsub.f32 %v4065, %v4471
        %4473 = vmatmul.mubr.f32.gmra.mrb[0].mxu0 %v4472
        %v4474 = vpop.f32.mrb[0].mxu0
        %v4475 = vadd.f32 %v4346, %v4474
        %v4476 = vpop.f32.mrb[0].mxu0
        %4477 = vdwg.mxu0
        %4478 = vmatprep.subr.mxu0 0.0
        %v4479 = vand.u32 %v4039, 4294901760
        %4480 = vmatpush1.msra.mxu0 %v4479
        %4481 = vmatprep.subr.mxu0 0.0
        %v4482 = vand.u32 %v4040, 4294901760
        %4483 = vmatpush1.msra.mxu0 %v4482
        %4484 = vmatprep.subr.mxu0 0.0
        %v4485 = vand.u32 %v4041, 4294901760
        %4486 = vmatpush1.msra.mxu0 %v4485
        %4487 = vmatprep.subr.mxu0 0.0
        %v4488 = vand.u32 %v4042, 4294901760
        %4489 = vmatpush1.msra.mxu0 %v4488
        %4490 = vmatprep.subr.mxu0 0.0
        %4491 = vmatpush1.msra.mxu0 0.0
        %4492 = vmatprep.subr.mxu0 0.0
        %4493 = vmatpush1.msra.mxu0 0.0
        %4494 = vmatprep.subr.mxu0 0.0
        %4495 = vmatpush1.msra.mxu0 0.0
        %4496 = vmatprep.subr.mxu0 0.0
        %4497 = vmatpush1.msra.mxu0 0.0
        %4498 = vmatprep.subr.mxu0 0.0
        %4499 = vmatpush1.msra.mxu0 0.0
        %4500 = vmatprep.subr.mxu0 0.0
        %4501 = vmatpush1.msra.mxu0 0.0
        %4502 = vmatprep.subr.mxu0 0.0
        %4503 = vmatpush1.msra.mxu0 0.0
        %4504 = vmatprep.subr.mxu0 0.0
        %4505 = vmatpush1.msra.mxu0 0.0
        %4506 = vmatprep.subr.mxu0 0.0
        %4507 = vmatpush1.msra.mxu0 0.0
        %4508 = vmatprep.subr.mxu0 0.0
        %4509 = vmatpush1.msra.mxu0 0.0
        %4510 = vmatprep.subr.mxu0 0.0
        %4511 = vmatpush1.msra.mxu0 0.0
        %4512 = vmatprep.subr.mxu0 0.0
        %4513 = vmatpush1.msra.mxu0 0.0
        %4514 = vmatprep.subr.mxu0 0.0
        %4515 = vmatpush1.msra.mxu0 0.0
        %4516 = vmatprep.subr.mxu0 0.0
        %4517 = vmatpush1.msra.mxu0 0.0
        %4518 = vmatprep.subr.mxu0 0.0
        %4519 = vmatpush1.msra.mxu0 0.0
        %4520 = vmatprep.subr.mxu0 0.0
        %4521 = vmatpush1.msra.mxu0 0.0
        %4522 = vmatprep.subr.mxu0 0.0
        %4523 = vmatpush1.msra.mxu0 0.0
        %4524 = vmatprep.subr.mxu0 0.0
        %4525 = vmatpush1.msra.mxu0 0.0
        %4526 = vmatprep.subr.mxu0 0.0
        %4527 = vmatpush1.msra.mxu0 0.0
        %4528 = vmatprep.subr.mxu0 0.0
        %4529 = vmatpush1.msra.mxu0 0.0
        %4530 = vmatprep.subr.mxu0 0.0
        %4531 = vmatpush1.msra.mxu0 0.0
        %4532 = vmatprep.subr.mxu0 0.0
        %4533 = vmatpush1.msra.mxu0 0.0
        %4534 = vmatprep.subr.mxu0 0.0
        %4535 = vmatpush1.msra.mxu0 0.0
        %4536 = vmatprep.subr.mxu0 0.0
        %4537 = vmatpush1.msra.mxu0 0.0
        %4538 = vmatprep.subr.mxu0 0.0
        %4539 = vmatpush1.msra.mxu0 0.0
        %4540 = vmatprep.subr.mxu0 0.0
        %4541 = vmatpush1.msra.mxu0 0.0
        %4542 = vmatprep.subr.mxu0 0.0
        %4543 = vmatpush1.msra.mxu0 0.0
        %4544 = vmatprep.subr.mxu0 0.0
        %4545 = vmatpush1.msra.mxu0 0.0
        %4546 = vmatprep.mubr.f32.mxu0 0.0
        %v4547 = vand.u32 %v4044, 4294901760
        %v4548 = vsub.f32 %v4044, %v4547
        %v4549 = vand.u32 %v4548, 4294901760
        %4550 = vmatmul.mubr.f32.gmra.mrb[0].mxu0 %v4549
        %v4551 = vpop.f32.mrb[0].mxu0
        %v4552 = vadd.f32 %v4426, %v4551
        %v4553 = vpop.f32.mrb[0].mxu0
        %4554 = vmatprep.mubr.f32.mxu0 0.0
        %v4555 = vand.u32 %v4047, 4294901760
        %v4556 = vsub.f32 %v4047, %v4555
        %v4557 = vand.u32 %v4556, 4294901760
        %4558 = vmatmul.mubr.f32.gmra.mrb[0].mxu0 %v4557
        %v4559 = vpop.f32.mrb[0].mxu0
        %v4560 = vadd.f32 %v4433, %v4559
        %v4561 = vpop.f32.mrb[0].mxu0
        %4562 = vmatprep.mubr.f32.mxu0 0.0
        %v4563 = vand.u32 %v4050, 4294901760
        %v4564 = vsub.f32 %v4050, %v4563
        %v4565 = vand.u32 %v4564, 4294901760
        %4566 = vmatmul.mubr.f32.gmra.mrb[0].mxu0 %v4565
        %v4567 = vpop.f32.mrb[0].mxu0
        %v4568 = vadd.f32 %v4440, %v4567
        %v4569 = vpop.f32.mrb[0].mxu0
        %4570 = vmatprep.mubr.f32.mxu0 0.0
        %v4571 = vand.u32 %v4053, 4294901760
        %v4572 = vsub.f32 %v4053, %v4571
        %v4573 = vand.u32 %v4572, 4294901760
        %4574 = vmatmul.mubr.f32.gmra.mrb[0].mxu0 %v4573
        %v4575 = vpop.f32.mrb[0].mxu0
        %v4576 = vadd.f32 %v4447, %v4575
        %v4577 = vpop.f32.mrb[0].mxu0
        %4578 = vmatprep.mubr.f32.mxu0 0.0
        %v4579 = vand.u32 %v4056, 4294901760
        %v4580 = vsub.f32 %v4056, %v4579
        %v4581 = vand.u32 %v4580, 4294901760
        %4582 = vmatmul.mubr.f32.gmra.mrb[0].mxu0 %v4581
        %v4583 = vpop.f32.mrb[0].mxu0
        %v4584 = vadd.f32 %v4454, %v4583
        %v4585 = vpop.f32.mrb[0].mxu0
        %4586 = vmatprep.mubr.f32.mxu0 0.0
        %v4587 = vand.u32 %v4059, 4294901760
        %v4588 = vsub.f32 %v4059, %v4587
        %v4589 = vand.u32 %v4588, 4294901760
        %4590 = vmatmul.mubr.f32.gmra.mrb[0].mxu0 %v4589
        %v4591 = vpop.f32.mrb[0].mxu0
        %v4592 = vadd.f32 %v4461, %v4591
        %v4593 = vpop.f32.mrb[0].mxu0
        %4594 = vmatprep.mubr.f32.mxu0 0.0
        %v4595 = vand.u32 %v4062, 4294901760
        %v4596 = vsub.f32 %v4062, %v4595
        %v4597 = vand.u32 %v4596, 4294901760
        %4598 = vmatmul.mubr.f32.gmra.mrb[0].mxu0 %v4597
        %v4599 = vpop.f32.mrb[0].mxu0
        %v4600 = vadd.f32 %v4468, %v4599
        %v4601 = vpop.f32.mrb[0].mxu0
        %4602 = vmatprep.mubr.f32.mxu0 0.0
        %v4603 = vand.u32 %v4065, 4294901760
        %v4604 = vsub.f32 %v4065, %v4603
        %v4605 = vand.u32 %v4604, 4294901760
        %4606 = vmatmul.mubr.f32.gmra.mrb[0].mxu0 %v4605
        %v4607 = vpop.f32.mrb[0].mxu0
        %v4608 = vadd.f32 %v4475, %v4607
        %v4609 = vpop.f32.mrb[0].mxu0
        %4610 = vdwg.mxu0
        %4611 = vmatprep.subr.mxu0 0.0
        %v4612 = vand.u32 %v4039, 4294901760
        %v4613 = vsub.f32 %v4039, %v4612
        %v4614 = vand.u32 %v4613, 4294901760
        %4615 = vmatpush1.msra.mxu0 %v4614
        %4616 = vmatprep.subr.mxu0 0.0
        %v4617 = vand.u32 %v4040, 4294901760
        %v4618 = vsub.f32 %v4040, %v4617
        %v4619 = vand.u32 %v4618, 4294901760
        %4620 = vmatpush1.msra.mxu0 %v4619
        %4621 = vmatprep.subr.mxu0 0.0
        %v4622 = vand.u32 %v4041, 4294901760
        %v4623 = vsub.f32 %v4041, %v4622
        %v4624 = vand.u32 %v4623, 4294901760
        %4625 = vmatpush1.msra.mxu0 %v4624
        %4626 = vmatprep.subr.mxu0 0.0
        %v4627 = vand.u32 %v4042, 4294901760
        %v4628 = vsub.f32 %v4042, %v4627
        %v4629 = vand.u32 %v4628, 4294901760
        %4630 = vmatpush1.msra.mxu0 %v4629
        %4631 = vmatprep.subr.mxu0 0.0
        %4632 = vmatpush1.msra.mxu0 0.0
        %4633 = vmatprep.subr.mxu0 0.0
        %4634 = vmatpush1.msra.mxu0 0.0
        %4635 = vmatprep.subr.mxu0 0.0
        %4636 = vmatpush1.msra.mxu0 0.0
        %4637 = vmatprep.subr.mxu0 0.0
        %4638 = vmatpush1.msra.mxu0 0.0
        %4639 = vmatprep.subr.mxu0 0.0
        %4640 = vmatpush1.msra.mxu0 0.0
        %4641 = vmatprep.subr.mxu0 0.0
        %4642 = vmatpush1.msra.mxu0 0.0
        %4643 = vmatprep.subr.mxu0 0.0
        %4644 = vmatpush1.msra.mxu0 0.0
        %4645 = vmatprep.subr.mxu0 0.0
        %4646 = vmatpush1.msra.mxu0 0.0
        %4647 = vmatprep.subr.mxu0 0.0
        %4648 = vmatpush1.msra.mxu0 0.0
        %4649 = vmatprep.subr.mxu0 0.0
        %4650 = vmatpush1.msra.mxu0 0.0
        %4651 = vmatprep.subr.mxu0 0.0
        %4652 = vmatpush1.msra.mxu0 0.0
        %4653 = vmatprep.subr.mxu0 0.0
        %4654 = vmatpush1.msra.mxu0 0.0
        %4655 = vmatprep.subr.mxu0 0.0
        %4656 = vmatpush1.msra.mxu0 0.0
        %4657 = vmatprep.subr.mxu0 0.0
        %4658 = vmatpush1.msra.mxu0 0.0
        %4659 = vmatprep.subr.mxu0 0.0
        %4660 = vmatpush1.msra.mxu0 0.0
        %4661 = vmatprep.subr.mxu0 0.0
        %4662 = vmatpush1.msra.mxu0 0.0
        %4663 = vmatprep.subr.mxu0 0.0
        %4664 = vmatpush1.msra.mxu0 0.0
        %4665 = vmatprep.subr.mxu0 0.0
        %4666 = vmatpush1.msra.mxu0 0.0
        %4667 = vmatprep.subr.mxu0 0.0
        %4668 = vmatpush1.msra.mxu0 0.0
        %4669 = vmatprep.subr.mxu0 0.0
        %4670 = vmatpush1.msra.mxu0 0.0
        %4671 = vmatprep.subr.mxu0 0.0
        %4672 = vmatpush1.msra.mxu0 0.0
        %4673 = vmatprep.subr.mxu0 0.0
        %4674 = vmatpush1.msra.mxu0 0.0
        %4675 = vmatprep.subr.mxu0 0.0
        %4676 = vmatpush1.msra.mxu0 0.0
        %4677 = vmatprep.subr.mxu0 0.0
        %4678 = vmatpush1.msra.mxu0 0.0
        %4679 = vmatprep.subr.mxu0 0.0
        %4680 = vmatpush1.msra.mxu0 0.0
        %4681 = vmatprep.subr.mxu0 0.0
        %4682 = vmatpush1.msra.mxu0 0.0
        %4683 = vmatprep.subr.mxu0 0.0
        %4684 = vmatpush1.msra.mxu0 0.0
        %4685 = vmatprep.subr.mxu0 0.0
        %4686 = vmatpush1.msra.mxu0 0.0
        %4687 = vmatprep.mubr.f32.mxu0 0.0
        %v4688 = vand.u32 %v4044, 4294901760
        %4689 = vmatmul.mubr.f32.gmra.mrb[0].mxu0 %v4688
        %v4690 = vpop.f32.mrb[0].mxu0
        %v4691 = vadd.f32 %v4552, %v4690
        %v4692 = vpop.f32.mrb[0].mxu0
        %4693 = vmatprep.mubr.f32.mxu0 0.0
        %v4694 = vand.u32 %v4047, 4294901760
        %4695 = vmatmul.mubr.f32.gmra.mrb[0].mxu0 %v4694
        %v4696 = vpop.f32.mrb[0].mxu0
        %v4697 = vadd.f32 %v4560, %v4696
        %v4698 = vpop.f32.mrb[0].mxu0
        %4699 = vmatprep.mubr.f32.mxu0 0.0
        %v4700 = vand.u32 %v4050, 4294901760
        %4701 = vmatmul.mubr.f32.gmra.mrb[0].mxu0 %v4700
        %v4702 = vpop.f32.mrb[0].mxu0
        %v4703 = vadd.f32 %v4568, %v4702
        %v4704 = vpop.f32.mrb[0].mxu0
        %4705 = vmatprep.mubr.f32.mxu0 0.0
        %v4706 = vand.u32 %v4053, 4294901760
        %4707 = vmatmul.mubr.f32.gmra.mrb[0].mxu0 %v4706
        %v4708 = vpop.f32.mrb[0].mxu0
        %v4709 = vadd.f32 %v4576, %v4708
        %v4710 = vpop.f32.mrb[0].mxu0
        %4711 = vmatprep.mubr.f32.mxu0 0.0
        %v4712 = vand.u32 %v4056, 4294901760
        %4713 = vmatmul.mubr.f32.gmra.mrb[0].mxu0 %v4712
        %v4714 = vpop.f32.mrb[0].mxu0
        %v4715 = vadd.f32 %v4584, %v4714
        %v4716 = vpop.f32.mrb[0].mxu0
        %4717 = vmatprep.mubr.f32.mxu0 0.0
        %v4718 = vand.u32 %v4059, 4294901760
        %4719 = vmatmul.mubr.f32.gmra.mrb[0].mxu0 %v4718
        %v4720 = vpop.f32.mrb[0].mxu0
        %v4721 = vadd.f32 %v4592, %v4720
        %v4722 = vpop.f32.mrb[0].mxu0
        %4723 = vmatprep.mubr.f32.mxu0 0.0
        %v4724 = vand.u32 %v4062, 4294901760
        %4725 = vmatmul.mubr.f32.gmra.mrb[0].mxu0 %v4724
        %v4726 = vpop.f32.mrb[0].mxu0
        %v4727 = vadd.f32 %v4600, %v4726
        %v4728 = vpop.f32.mrb[0].mxu0
        %4729 = vmatprep.mubr.f32.mxu0 0.0
        %v4730 = vand.u32 %v4065, 4294901760
        %4731 = vmatmul.mubr.f32.gmra.mrb[0].mxu0 %v4730
        %v4732 = vpop.f32.mrb[0].mxu0
        %v4733 = vadd.f32 %v4608, %v4732
        %v4734 = vpop.f32.mrb[0].mxu0
        %4735 = vdwg.mxu0
        %4736 = vmatprep.subr.mxu0 0.0
        %v4737 = vand.u32 %v4039, 4294901760
        %4738 = vmatpush1.msra.mxu0 %v4737
        %4739 = vmatprep.subr.mxu0 0.0
        %v4740 = vand.u32 %v4040, 4294901760
        %4741 = vmatpush1.msra.mxu0 %v4740
        %4742 = vmatprep.subr.mxu0 0.0
        %v4743 = vand.u32 %v4041, 4294901760
        %4744 = vmatpush1.msra.mxu0 %v4743
        %4745 = vmatprep.subr.mxu0 0.0
        %v4746 = vand.u32 %v4042, 4294901760
        %4747 = vmatpush1.msra.mxu0 %v4746
        %4748 = vmatprep.subr.mxu0 0.0
        %4749 = vmatpush1.msra.mxu0 0.0
        %4750 = vmatprep.subr.mxu0 0.0
        %4751 = vmatpush1.msra.mxu0 0.0
        %4752 = vmatprep.subr.mxu0 0.0
        %4753 = vmatpush1.msra.mxu0 0.0
        %4754 = vmatprep.subr.mxu0 0.0
        %4755 = vmatpush1.msra.mxu0 0.0
        %4756 = vmatprep.subr.mxu0 0.0
        %4757 = vmatpush1.msra.mxu0 0.0
        %4758 = vmatprep.subr.mxu0 0.0
        %4759 = vmatpush1.msra.mxu0 0.0
        %4760 = vmatprep.subr.mxu0 0.0
        %4761 = vmatpush1.msra.mxu0 0.0
        %4762 = vmatprep.subr.mxu0 0.0
        %4763 = vmatpush1.msra.mxu0 0.0
        %4764 = vmatprep.subr.mxu0 0.0
        %4765 = vmatpush1.msra.mxu0 0.0
        %4766 = vmatprep.subr.mxu0 0.0
        %4767 = vmatpush1.msra.mxu0 0.0
        %4768 = vmatprep.subr.mxu0 0.0
        %4769 = vmatpush1.msra.mxu0 0.0
        %4770 = vmatprep.subr.mxu0 0.0
        %4771 = vmatpush1.msra.mxu0 0.0
        %4772 = vmatprep.subr.mxu0 0.0
        %4773 = vmatpush1.msra.mxu0 0.0
        %4774 = vmatprep.subr.mxu0 0.0
        %4775 = vmatpush1.msra.mxu0 0.0
        %4776 = vmatprep.subr.mxu0 0.0
        %4777 = vmatpush1.msra.mxu0 0.0
        %4778 = vmatprep.subr.mxu0 0.0
        %4779 = vmatpush1.msra.mxu0 0.0
        %4780 = vmatprep.subr.mxu0 0.0
        %4781 = vmatpush1.msra.mxu0 0.0
        %4782 = vmatprep.subr.mxu0 0.0
        %4783 = vmatpush1.msra.mxu0 0.0
        %4784 = vmatprep.subr.mxu0 0.0
        %4785 = vmatpush1.msra.mxu0 0.0
        %4786 = vmatprep.subr.mxu0 0.0
        %4787 = vmatpush1.msra.mxu0 0.0
        %4788 = vmatprep.subr.mxu0 0.0
        %4789 = vmatpush1.msra.mxu0 0.0
        %4790 = vmatprep.subr.mxu0 0.0
        %4791 = vmatpush1.msra.mxu0 0.0
        %4792 = vmatprep.subr.mxu0 0.0
        %4793 = vmatpush1.msra.mxu0 0.0
        %4794 = vmatprep.subr.mxu0 0.0
        %4795 = vmatpush1.msra.mxu0 0.0
        %4796 = vmatprep.subr.mxu0 0.0
        %4797 = vmatpush1.msra.mxu0 0.0
        %4798 = vmatprep.subr.mxu0 0.0
        %4799 = vmatpush1.msra.mxu0 0.0
        %4800 = vmatprep.subr.mxu0 0.0
        %4801 = vmatpush1.msra.mxu0 0.0
        %4802 = vmatprep.subr.mxu0 0.0
        %4803 = vmatpush1.msra.mxu0 0.0
        %4804 = vmatprep.mubr.f32.mxu0 0.0
        %v4805 = vand.u32 %v4044, 4294901760
        %4806 = vmatmul.mubr.f32.gmra.mrb[0].mxu0 %v4805
        %v4807 = vpop.f32.mrb[0].mxu0
        %v4808 = vadd.f32 %v4691, %v4807
        %v4809 = vpop.f32.mrb[0].mxu0
        %4810 = vmatprep.mubr.f32.mxu0 0.0
        %v4811 = vand.u32 %v4047, 4294901760
        %4812 = vmatmul.mubr.f32.gmra.mrb[0].mxu0 %v4811
        %v4813 = vpop.f32.mrb[0].mxu0
        %v4814 = vadd.f32 %v4697, %v4813
        %v4815 = vpop.f32.mrb[0].mxu0
        %4816 = vmatprep.mubr.f32.mxu0 0.0
        %v4817 = vand.u32 %v4050, 4294901760
        %4818 = vmatmul.mubr.f32.gmra.mrb[0].mxu0 %v4817
        %v4819 = vpop.f32.mrb[0].mxu0
        %v4820 = vadd.f32 %v4703, %v4819
        %v4821 = vpop.f32.mrb[0].mxu0
        %4822 = vmatprep.mubr.f32.mxu0 0.0
        %v4823 = vand.u32 %v4053, 4294901760
        %4824 = vmatmul.mubr.f32.gmra.mrb[0].mxu0 %v4823
        %v4825 = vpop.f32.mrb[0].mxu0
        %v4826 = vadd.f32 %v4709, %v4825
        %v4827 = vpop.f32.mrb[0].mxu0
        %4828 = vmatprep.mubr.f32.mxu0 0.0
        %v4829 = vand.u32 %v4056, 4294901760
        %4830 = vmatmul.mubr.f32.gmra.mrb[0].mxu0 %v4829
        %v4831 = vpop.f32.mrb[0].mxu0
        %v4832 = vadd.f32 %v4715, %v4831
        %v4833 = vpop.f32.mrb[0].mxu0
        %4834 = vmatprep.mubr.f32.mxu0 0.0
        %v4835 = vand.u32 %v4059, 4294901760
        %4836 = vmatmul.mubr.f32.gmra.mrb[0].mxu0 %v4835
        %v4837 = vpop.f32.mrb[0].mxu0
        %v4838 = vadd.f32 %v4721, %v4837
        %v4839 = vpop.f32.mrb[0].mxu0
        %4840 = vmatprep.mubr.f32.mxu0 0.0
        %v4841 = vand.u32 %v4062, 4294901760
        %4842 = vmatmul.mubr.f32.gmra.mrb[0].mxu0 %v4841
        %v4843 = vpop.f32.mrb[0].mxu0
        %v4844 = vadd.f32 %v4727, %v4843
        %v4845 = vpop.f32.mrb[0].mxu0
        %4846 = vmatprep.mubr.f32.mxu0 0.0
        %v4847 = vand.u32 %v4065, 4294901760
        %4848 = vmatmul.mubr.f32.gmra.mrb[0].mxu0 %v4847
        %v4849 = vpop.f32.mrb[0].mxu0
        %v4850 = vadd.f32 %v4733, %v4849
        %v4851 = vpop.f32.mrb[0].mxu0
        %4852 = vdwg.mxu0
        %v4853 = vadd.f32 %v4808, %v4814
        %v4854 = vadd.f32 %v4853, %v4820
        %v4855 = vadd.f32 %v4854, %v4826
        %v4856 = vadd.f32 %v4855, %v4832
        %v4857 = vadd.f32 %v4856, %v4838
        %v4858 = vadd.f32 %v4857, %v4844
        %v4859 = vadd.f32 %v4858, %v4850
        %v4860 = vrot.slane %v4859, 4
        %v4861 = vadd.f32 %v4859, %v4860
        %v4862 = vrot.slane %v4861, 2
        %v4863 = vadd.f32 %v4861, %v4862
        %v4864 = vrot.slane %v4863, 1
        %v4865 = vadd.f32 %v4863, %v4864
        %v4866 = vmul.f32 %v4808, %v4808
        %v4867 = vmul.f32 %v4814, %v4814
        %v4868 = vmul.f32 %v4820, %v4820
        %v4869 = vmul.f32 %v4826, %v4826
        %v4870 = vmul.f32 %v4832, %v4832
        %v4871 = vmul.f32 %v4838, %v4838
        %v4872 = vmul.f32 %v4844, %v4844
        %v4873 = vmul.f32 %v4850, %v4850
        %v4874 = vadd.f32 %v4866, %v4867
        %v4875 = vadd.f32 %v4874, %v4868
        %v4876 = vadd.f32 %v4875, %v4869
        %v4877 = vadd.f32 %v4876, %v4870
        %v4878 = vadd.f32 %v4877, %v4871
        %v4879 = vadd.f32 %v4878, %v4872
        %v4880 = vadd.f32 %v4879, %v4873
        %v4881 = vrot.slane %v4880, 4
        %v4882 = vadd.f32 %v4880, %v4881
        %v4883 = vrot.slane %v4882, 2
        %v4884 = vadd.f32 %v4882, %v4883
        %v4885 = vrot.slane %v4884, 1
        %v4886 = vadd.f32 %v4884, %v4885
        %v4887 = vld [vmem:[#allocation18] sm:$0xff]
        %v4888 = vld [vmem:[#allocation18 + $0x8] sm:$0xff]
        %v4889 = vld [vmem:[#allocation18 + $0x10] sm:$0xff]
        %v4890 = vld [vmem:[#allocation18 + $0x18] sm:$0xff]
        %v4891 = vld [vmem:[#allocation18 + $0x20] sm:$0xff]
        %v4892 = vld [vmem:[#allocation18 + $0x28] sm:$0xff]
        %v4893 = vld [vmem:[#allocation18 + $0x30] sm:$0xff]
        %v4894 = vld [vmem:[#allocation18 + $0x38] sm:$0xff]
        %v4895 = vld [vmem:[#allocation18 + $0x40] sm:$0xff]
        %v4896 = vld [vmem:[#allocation18 + $0x48] sm:$0xff]
        %v4897 = vld [vmem:[#allocation18 + $0x50] sm:$0xff]
        %v4898 = vld [vmem:[#allocation18 + $0x58] sm:$0xff]
        %v4899 = vld [vmem:[#allocation18 + $0x60] sm:$0xff]
        %v4900 = vld [vmem:[#allocation18 + $0x68] sm:$0xff]
        %v4901 = vld [vmem:[#allocation18 + $0x70] sm:$0xff]
        %v4902 = vld [vmem:[#allocation18 + $0x78] sm:$0xff]
        %v4903 = vld [vmem:[#allocation20] sm:$0xff]
        %v4904 = vld [vmem:[#allocation20 + $0x8] sm:$0xff]
        %v4905 = vld [vmem:[#allocation20 + $0x10] sm:$0xff]
        %v4906 = vld [vmem:[#allocation20 + $0x18] sm:$0xff]
        %v4907 = vld [vmem:[#allocation12] sm:$0x1]
        %v4908 = vld [vmem:[#allocation14] sm:$0x1]
        %4909 = vmatprep.subr.mxu0 0.0
        %v4910 = vand.u32 %v4887, 4294901760
        %4911 = vmatpush1.msra.mxu0 %v4910
        %4912 = vmatprep.subr.mxu0 0.0
        %v4913 = vand.u32 %v4888, 4294901760
        %4914 = vmatpush1.msra.mxu0 %v4913
        %4915 = vmatprep.subr.mxu0 0.0
        %v4916 = vand.u32 %v4889, 4294901760
        %4917 = vmatpush1.msra.mxu0 %v4916
        %4918 = vmatprep.subr.mxu0 0.0
        %v4919 = vand.u32 %v4890, 4294901760
        %4920 = vmatpush1.msra.mxu0 %v4919
        %4921 = vmatprep.subr.mxu0 0.0
        %v4922 = vand.u32 %v4891, 4294901760
        %4923 = vmatpush1.msra.mxu0 %v4922
        %4924 = vmatprep.subr.mxu0 0.0
        %v4925 = vand.u32 %v4892, 4294901760
        %4926 = vmatpush1.msra.mxu0 %v4925
        %4927 = vmatprep.subr.mxu0 0.0
        %v4928 = vand.u32 %v4893, 4294901760
        %4929 = vmatpush1.msra.mxu0 %v4928
        %4930 = vmatprep.subr.mxu0 0.0
        %v4931 = vand.u32 %v4894, 4294901760
        %4932 = vmatpush1.msra.mxu0 %v4931
        %4933 = vmatprep.subr.mxu0 0.0
        %v4934 = vand.u32 %v4895, 4294901760
        %4935 = vmatpush1.msra.mxu0 %v4934
        %4936 = vmatprep.subr.mxu0 0.0
        %v4937 = vand.u32 %v4896, 4294901760
        %4938 = vmatpush1.msra.mxu0 %v4937
        %4939 = vmatprep.subr.mxu0 0.0
        %v4940 = vand.u32 %v4897, 4294901760
        %4941 = vmatpush1.msra.mxu0 %v4940
        %4942 = vmatprep.subr.mxu0 0.0
        %v4943 = vand.u32 %v4898, 4294901760
        %4944 = vmatpush1.msra.mxu0 %v4943
        %4945 = vmatprep.subr.mxu0 0.0
        %v4946 = vand.u32 %v4899, 4294901760
        %4947 = vmatpush1.msra.mxu0 %v4946
        %4948 = vmatprep.subr.mxu0 0.0
        %v4949 = vand.u32 %v4900, 4294901760
        %4950 = vmatpush1.msra.mxu0 %v4949
        %4951 = vmatprep.subr.mxu0 0.0
        %v4952 = vand.u32 %v4901, 4294901760
        %4953 = vmatpush1.msra.mxu0 %v4952
        %4954 = vmatprep.subr.mxu0 0.0
        %v4955 = vand.u32 %v4902, 4294901760
        %4956 = vmatpush1.msra.mxu0 %v4955
        %4957 = vmatprep.subr.mxu0 0.0
        %4958 = vmatpush1.msra.mxu0 0.0
        %4959 = vmatprep.subr.mxu0 0.0
        %4960 = vmatpush1.msra.mxu0 0.0
        %4961 = vmatprep.subr.mxu0 0.0
        %4962 = vmatpush1.msra.mxu0 0.0
        %4963 = vmatprep.subr.mxu0 0.0
        %4964 = vmatpush1.msra.mxu0 0.0
        %4965 = vmatprep.subr.mxu0 0.0
        %4966 = vmatpush1.msra.mxu0 0.0
        %4967 = vmatprep.subr.mxu0 0.0
        %4968 = vmatpush1.msra.mxu0 0.0
        %4969 = vmatprep.subr.mxu0 0.0
        %4970 = vmatpush1.msra.mxu0 0.0
        %4971 = vmatprep.subr.mxu0 0.0
        %4972 = vmatpush1.msra.mxu0 0.0
        %4973 = vmatprep.subr.mxu0 0.0
        %4974 = vmatpush1.msra.mxu0 0.0
        %4975 = vmatprep.subr.mxu0 0.0
        %4976 = vmatpush1.msra.mxu0 0.0
        %4977 = vmatprep.subr.mxu0 0.0
        %4978 = vmatpush1.msra.mxu0 0.0
        %4979 = vmatprep.subr.mxu0 0.0
        %4980 = vmatpush1.msra.mxu0 0.0
        %4981 = vmatprep.subr.mxu0 0.0
        %4982 = vmatpush1.msra.mxu0 0.0
        %4983 = vmatprep.subr.mxu0 0.0
        %4984 = vmatpush1.msra.mxu0 0.0
        %4985 = vmatprep.subr.mxu0 0.0
        %4986 = vmatpush1.msra.mxu0 0.0
        %4987 = vmatprep.subr.mxu0 0.0
        %4988 = vmatpush1.msra.mxu0 0.0
        %4989 = vmatprep.mubr.f32.mxu0 0.0
        %v4990 = vand.u32 %v4865, 4294901760
        %v4991 = vsub.f32 %v4865, %v4990
        %v4992 = vand.u32 %v4991, 4294901760
        %v4993 = vsub.f32 %v4991, %v4992
        %v4994 = vand.u32 %v4993, 4294901760
        %4995 = vmatmul.mubr.f32.gmra.mrb[0].mxu0 %v4994
        %v4996 = vpop.f32.mrb[0].mxu0
        %v4997 = vadd.f32 0.0, %v4996
        %v4998 = vpop.f32.mrb[0].mxu0
        %4999 = vdwg.mxu0
        %5000 = vmatprep.subr.mxu0 0.0
        %v5001 = vand.u32 %v4887, 4294901760
        %v5002 = vsub.f32 %v4887, %v5001
        %v5003 = vand.u32 %v5002, 4294901760
        %v5004 = vsub.f32 %v5002, %v5003
        %v5005 = vand.u32 %v5004, 4294901760
        %5006 = vmatpush1.msra.mxu0 %v5005
        %5007 = vmatprep.subr.mxu0 0.0
        %v5008 = vand.u32 %v4888, 4294901760
        %v5009 = vsub.f32 %v4888, %v5008
        %v5010 = vand.u32 %v5009, 4294901760
        %v5011 = vsub.f32 %v5009, %v5010
        %v5012 = vand.u32 %v5011, 4294901760
        %5013 = vmatpush1.msra.mxu0 %v5012
        %5014 = vmatprep.subr.mxu0 0.0
        %v5015 = vand.u32 %v4889, 4294901760
        %v5016 = vsub.f32 %v4889, %v5015
        %v5017 = vand.u32 %v5016, 4294901760
        %v5018 = vsub.f32 %v5016, %v5017
        %v5019 = vand.u32 %v5018, 4294901760
        %5020 = vmatpush1.msra.mxu0 %v5019
        %5021 = vmatprep.subr.mxu0 0.0
        %v5022 = vand.u32 %v4890, 4294901760
        %v5023 = vsub.f32 %v4890, %v5022
        %v5024 = vand.u32 %v5023, 4294901760
        %v5025 = vsub.f32 %v5023, %v5024
        %v5026 = vand.u32 %v5025, 4294901760
        %5027 = vmatpush1.msra.mxu0 %v5026
        %5028 = vmatprep.subr.mxu0 0.0
        %v5029 = vand.u32 %v4891, 4294901760
        %v5030 = vsub.f32 %v4891, %v5029
        %v5031 = vand.u32 %v5030, 4294901760
        %v5032 = vsub.f32 %v5030, %v5031
        %v5033 = vand.u32 %v5032, 4294901760
        %5034 = vmatpush1.msra.mxu0 %v5033
        %5035 = vmatprep.subr.mxu0 0.0
        %v5036 = vand.u32 %v4892, 4294901760
        %v5037 = vsub.f32 %v4892, %v5036
        %v5038 = vand.u32 %v5037, 4294901760
        %v5039 = vsub.f32 %v5037, %v5038
        %v5040 = vand.u32 %v5039, 4294901760
        %5041 = vmatpush1.msra.mxu0 %v5040
        %5042 = vmatprep.subr.mxu0 0.0
        %v5043 = vand.u32 %v4893, 4294901760
        %v5044 = vsub.f32 %v4893, %v5043
        %v5045 = vand.u32 %v5044, 4294901760
        %v5046 = vsub.f32 %v5044, %v5045
        %v5047 = vand.u32 %v5046, 4294901760
        %5048 = vmatpush1.msra.mxu0 %v5047
        %5049 = vmatprep.subr.mxu0 0.0
        %v5050 = vand.u32 %v4894, 4294901760
        %v5051 = vsub.f32 %v4894, %v5050
        %v5052 = vand.u32 %v5051, 4294901760
        %v5053 = vsub.f32 %v5051, %v5052
        %v5054 = vand.u32 %v5053, 4294901760
        %5055 = vmatpush1.msra.mxu0 %v5054
        %5056 = vmatprep.subr.mxu0 0.0
        %v5057 = vand.u32 %v4895, 4294901760
        %v5058 = vsub.f32 %v4895, %v5057
        %v5059 = vand.u32 %v5058, 4294901760
        %v5060 = vsub.f32 %v5058, %v5059
        %v5061 = vand.u32 %v5060, 4294901760
        %5062 = vmatpush1.msra.mxu0 %v5061
        %5063 = vmatprep.subr.mxu0 0.0
        %v5064 = vand.u32 %v4896, 4294901760
        %v5065 = vsub.f32 %v4896, %v5064
        %v5066 = vand.u32 %v5065, 4294901760
        %v5067 = vsub.f32 %v5065, %v5066
        %v5068 = vand.u32 %v5067, 4294901760
        %5069 = vmatpush1.msra.mxu0 %v5068
        %5070 = vmatprep.subr.mxu0 0.0
        %v5071 = vand.u32 %v4897, 4294901760
        %v5072 = vsub.f32 %v4897, %v5071
        %v5073 = vand.u32 %v5072, 4294901760
        %v5074 = vsub.f32 %v5072, %v5073
        %v5075 = vand.u32 %v5074, 4294901760
        %5076 = vmatpush1.msra.mxu0 %v5075
        %5077 = vmatprep.subr.mxu0 0.0
        %v5078 = vand.u32 %v4898, 4294901760
        %v5079 = vsub.f32 %v4898, %v5078
        %v5080 = vand.u32 %v5079, 4294901760
        %v5081 = vsub.f32 %v5079, %v5080
        %v5082 = vand.u32 %v5081, 4294901760
        %5083 = vmatpush1.msra.mxu0 %v5082
        %5084 = vmatprep.subr.mxu0 0.0
        %v5085 = vand.u32 %v4899, 4294901760
        %v5086 = vsub.f32 %v4899, %v5085
        %v5087 = vand.u32 %v5086, 4294901760
        %v5088 = vsub.f32 %v5086, %v5087
        %v5089 = vand.u32 %v5088, 4294901760
        %5090 = vmatpush1.msra.mxu0 %v5089
        %5091 = vmatprep.subr.mxu0 0.0
        %v5092 = vand.u32 %v4900, 4294901760
        %v5093 = vsub.f32 %v4900, %v5092
        %v5094 = vand.u32 %v5093, 4294901760
        %v5095 = vsub.f32 %v5093, %v5094
        %v5096 = vand.u32 %v5095, 4294901760
        %5097 = vmatpush1.msra.mxu0 %v5096
        %5098 = vmatprep.subr.mxu0 0.0
        %v5099 = vand.u32 %v4901, 4294901760
        %v5100 = vsub.f32 %v4901, %v5099
        %v5101 = vand.u32 %v5100, 4294901760
        %v5102 = vsub.f32 %v5100, %v5101
        %v5103 = vand.u32 %v5102, 4294901760
        %5104 = vmatpush1.msra.mxu0 %v5103
        %5105 = vmatprep.subr.mxu0 0.0
        %v5106 = vand.u32 %v4902, 4294901760
        %v5107 = vsub.f32 %v4902, %v5106
        %v5108 = vand.u32 %v5107, 4294901760
        %v5109 = vsub.f32 %v5107, %v5108
        %v5110 = vand.u32 %v5109, 4294901760
        %5111 = vmatpush1.msra.mxu0 %v5110
        %5112 = vmatprep.subr.mxu0 0.0
        %5113 = vmatpush1.msra.mxu0 0.0
        %5114 = vmatprep.subr.mxu0 0.0
        %5115 = vmatpush1.msra.mxu0 0.0
        %5116 = vmatprep.subr.mxu0 0.0
        %5117 = vmatpush1.msra.mxu0 0.0
        %5118 = vmatprep.subr.mxu0 0.0
        %5119 = vmatpush1.msra.mxu0 0.0
        %5120 = vmatprep.subr.mxu0 0.0
        %5121 = vmatpush1.msra.mxu0 0.0
        %5122 = vmatprep.subr.mxu0 0.0
        %5123 = vmatpush1.msra.mxu0 0.0
        %5124 = vmatprep.subr.mxu0 0.0
        %5125 = vmatpush1.msra.mxu0 0.0
        %5126 = vmatprep.subr.mxu0 0.0
        %5127 = vmatpush1.msra.mxu0 0.0
        %5128 = vmatprep.subr.mxu0 0.0
        %5129 = vmatpush1.msra.mxu0 0.0
        %5130 = vmatprep.subr.mxu0 0.0
        %5131 = vmatpush1.msra.mxu0 0.0
        %5132 = vmatprep.subr.mxu0 0.0
        %5133 = vmatpush1.msra.mxu0 0.0
        %5134 = vmatprep.subr.mxu0 0.0
        %5135 = vmatpush1.msra.mxu0 0.0
        %5136 = vmatprep.subr.mxu0 0.0
        %5137 = vmatpush1.msra.mxu0 0.0
        %5138 = vmatprep.subr.mxu0 0.0
        %5139 = vmatpush1.msra.mxu0 0.0
        %5140 = vmatprep.subr.mxu0 0.0
        %5141 = vmatpush1.msra.mxu0 0.0
        %5142 = vmatprep.subr.mxu0 0.0
        %5143 = vmatpush1.msra.mxu0 0.0
        %5144 = vmatprep.mubr.f32.mxu0 0.0
        %v5145 = vand.u32 %v4865, 4294901760
        %5146 = vmatmul.mubr.f32.gmra.mrb[0].mxu0 %v5145
        %v5147 = vpop.f32.mrb[0].mxu0
        %v5148 = vadd.f32 %v4997, %v5147
        %v5149 = vpop.f32.mrb[0].mxu0
        %5150 = vdwg.mxu0
        %5151 = vmatprep.subr.mxu0 0.0
        %v5152 = vand.u32 %v4887, 4294901760
        %v5153 = vsub.f32 %v4887, %v5152
        %5154 = vmatpush1.msra.mxu0 %v5153
        %5155 = vmatprep.subr.mxu0 0.0
        %v5156 = vand.u32 %v4888, 4294901760
        %v5157 = vsub.f32 %v4888, %v5156
        %5158 = vmatpush1.msra.mxu0 %v5157
        %5159 = vmatprep.subr.mxu0 0.0
        %v5160 = vand.u32 %v4889, 4294901760
        %v5161 = vsub.f32 %v4889, %v5160
        %5162 = vmatpush1.msra.mxu0 %v5161
        %5163 = vmatprep.subr.mxu0 0.0
        %v5164 = vand.u32 %v4890, 4294901760
        %v5165 = vsub.f32 %v4890, %v5164
        %5166 = vmatpush1.msra.mxu0 %v5165
        %5167 = vmatprep.subr.mxu0 0.0
        %v5168 = vand.u32 %v4891, 4294901760
        %v5169 = vsub.f32 %v4891, %v5168
        %5170 = vmatpush1.msra.mxu0 %v5169
        %5171 = vmatprep.subr.mxu0 0.0
        %v5172 = vand.u32 %v4892, 4294901760
        %v5173 = vsub.f32 %v4892, %v5172
        %5174 = vmatpush1.msra.mxu0 %v5173
        %5175 = vmatprep.subr.mxu0 0.0
        %v5176 = vand.u32 %v4893, 4294901760
        %v5177 = vsub.f32 %v4893, %v5176
        %5178 = vmatpush1.msra.mxu0 %v5177
        %5179 = vmatprep.subr.mxu0 0.0
        %v5180 = vand.u32 %v4894, 4294901760
        %v5181 = vsub.f32 %v4894, %v5180
        %5182 = vmatpush1.msra.mxu0 %v5181
        %5183 = vmatprep.subr.mxu0 0.0
        %v5184 = vand.u32 %v4895, 4294901760
        %v5185 = vsub.f32 %v4895, %v5184
        %5186 = vmatpush1.msra.mxu0 %v5185
        %5187 = vmatprep.subr.mxu0 0.0
        %v5188 = vand.u32 %v4896, 4294901760
        %v5189 = vsub.f32 %v4896, %v5188
        %5190 = vmatpush1.msra.mxu0 %v5189
        %5191 = vmatprep.subr.mxu0 0.0
        %v5192 = vand.u32 %v4897, 4294901760
        %v5193 = vsub.f32 %v4897, %v5192
        %5194 = vmatpush1.msra.mxu0 %v5193
        %5195 = vmatprep.subr.mxu0 0.0
        %v5196 = vand.u32 %v4898, 4294901760
        %v5197 = vsub.f32 %v4898, %v5196
        %5198 = vmatpush1.msra.mxu0 %v5197
        %5199 = vmatprep.subr.mxu0 0.0
        %v5200 = vand.u32 %v4899, 4294901760
        %v5201 = vsub.f32 %v4899, %v5200
        %5202 = vmatpush1.msra.mxu0 %v5201
        %5203 = vmatprep.subr.mxu0 0.0
        %v5204 = vand.u32 %v4900, 4294901760
        %v5205 = vsub.f32 %v4900, %v5204
        %5206 = vmatpush1.msra.mxu0 %v5205
        %5207 = vmatprep.subr.mxu0 0.0
        %v5208 = vand.u32 %v4901, 4294901760
        %v5209 = vsub.f32 %v4901, %v5208
        %5210 = vmatpush1.msra.mxu0 %v5209
        %5211 = vmatprep.subr.mxu0 0.0
        %v5212 = vand.u32 %v4902, 4294901760
        %v5213 = vsub.f32 %v4902, %v5212
        %5214 = vmatpush1.msra.mxu0 %v5213
        %5215 = vmatprep.subr.mxu0 0.0
        %5216 = vmatpush1.msra.mxu0 0.0
        %5217 = vmatprep.subr.mxu0 0.0
        %5218 = vmatpush1.msra.mxu0 0.0
        %5219 = vmatprep.subr.mxu0 0.0
        %5220 = vmatpush1.msra.mxu0 0.0
        %5221 = vmatprep.subr.mxu0 0.0
        %5222 = vmatpush1.msra.mxu0 0.0
        %5223 = vmatprep.subr.mxu0 0.0
        %5224 = vmatpush1.msra.mxu0 0.0
        %5225 = vmatprep.subr.mxu0 0.0
        %5226 = vmatpush1.msra.mxu0 0.0
        %5227 = vmatprep.subr.mxu0 0.0
        %5228 = vmatpush1.msra.mxu0 0.0
        %5229 = vmatprep.subr.mxu0 0.0
        %5230 = vmatpush1.msra.mxu0 0.0
        %5231 = vmatprep.subr.mxu0 0.0
        %5232 = vmatpush1.msra.mxu0 0.0
        %5233 = vmatprep.subr.mxu0 0.0
        %5234 = vmatpush1.msra.mxu0 0.0
        %5235 = vmatprep.subr.mxu0 0.0
        %5236 = vmatpush1.msra.mxu0 0.0
        %5237 = vmatprep.subr.mxu0 0.0
        %5238 = vmatpush1.msra.mxu0 0.0
        %5239 = vmatprep.subr.mxu0 0.0
        %5240 = vmatpush1.msra.mxu0 0.0
        %5241 = vmatprep.subr.mxu0 0.0
        %5242 = vmatpush1.msra.mxu0 0.0
        %5243 = vmatprep.subr.mxu0 0.0
        %5244 = vmatpush1.msra.mxu0 0.0
        %5245 = vmatprep.subr.mxu0 0.0
        %5246 = vmatpush1.msra.mxu0 0.0
        %5247 = vmatprep.mubr.f32.mxu0 0.0
        %v5248 = vand.u32 %v4865, 4294901760
        %v5249 = vsub.f32 %v4865, %v5248
        %5250 = vmatmul.mubr.f32.gmra.mrb[0].mxu0 %v5249
        %v5251 = vpop.f32.mrb[0].mxu0
        %v5252 = vadd.f32 %v5148, %v5251
        %v5253 = vpop.f32.mrb[0].mxu0
        %5254 = vdwg.mxu0
        %5255 = vmatprep.subr.mxu0 0.0
        %v5256 = vand.u32 %v4887, 4294901760
        %5257 = vmatpush1.msra.mxu0 %v5256
        %5258 = vmatprep.subr.mxu0 0.0
        %v5259 = vand.u32 %v4888, 4294901760
        %5260 = vmatpush1.msra.mxu0 %v5259
        %5261 = vmatprep.subr.mxu0 0.0
        %v5262 = vand.u32 %v4889, 4294901760
        %5263 = vmatpush1.msra.mxu0 %v5262
        %5264 = vmatprep.subr.mxu0 0.0
        %v5265 = vand.u32 %v4890, 4294901760
        %5266 = vmatpush1.msra.mxu0 %v5265
        %5267 = vmatprep.subr.mxu0 0.0
        %v5268 = vand.u32 %v4891, 4294901760
        %5269 = vmatpush1.msra.mxu0 %v5268
        %5270 = vmatprep.subr.mxu0 0.0
        %v5271 = vand.u32 %v4892, 4294901760
        %5272 = vmatpush1.msra.mxu0 %v5271
        %5273 = vmatprep.subr.mxu0 0.0
        %v5274 = vand.u32 %v4893, 4294901760
        %5275 = vmatpush1.msra.mxu0 %v5274
        %5276 = vmatprep.subr.mxu0 0.0
        %v5277 = vand.u32 %v4894, 4294901760
        %5278 = vmatpush1.msra.mxu0 %v5277
        %5279 = vmatprep.subr.mxu0 0.0
        %v5280 = vand.u32 %v4895, 4294901760
        %5281 = vmatpush1.msra.mxu0 %v5280
        %5282 = vmatprep.subr.mxu0 0.0
        %v5283 = vand.u32 %v4896, 4294901760
        %5284 = vmatpush1.msra.mxu0 %v5283
        %5285 = vmatprep.subr.mxu0 0.0
        %v5286 = vand.u32 %v4897, 4294901760
        %5287 = vmatpush1.msra.mxu0 %v5286
        %5288 = vmatprep.subr.mxu0 0.0
        %v5289 = vand.u32 %v4898, 4294901760
        %5290 = vmatpush1.msra.mxu0 %v5289
        %5291 = vmatprep.subr.mxu0 0.0
        %v5292 = vand.u32 %v4899, 4294901760
        %5293 = vmatpush1.msra.mxu0 %v5292
        %5294 = vmatprep.subr.mxu0 0.0
        %v5295 = vand.u32 %v4900, 4294901760
        %5296 = vmatpush1.msra.mxu0 %v5295
        %5297 = vmatprep.subr.mxu0 0.0
        %v5298 = vand.u32 %v4901, 4294901760
        %5299 = vmatpush1.msra.mxu0 %v5298
        %5300 = vmatprep.subr.mxu0 0.0
        %v5301 = vand.u32 %v4902, 4294901760
        %5302 = vmatpush1.msra.mxu0 %v5301
        %5303 = vmatprep.subr.mxu0 0.0
        %5304 = vmatpush1.msra.mxu0 0.0
        %5305 = vmatprep.subr.mxu0 0.0
        %5306 = vmatpush1.msra.mxu0 0.0
        %5307 = vmatprep.subr.mxu0 0.0
        %5308 = vmatpush1.msra.mxu0 0.0
        %5309 = vmatprep.subr.mxu0 0.0
        %5310 = vmatpush1.msra.mxu0 0.0
        %5311 = vmatprep.subr.mxu0 0.0
        %5312 = vmatpush1.msra.mxu0 0.0
        %5313 = vmatprep.subr.mxu0 0.0
        %5314 = vmatpush1.msra.mxu0 0.0
        %5315 = vmatprep.subr.mxu0 0.0
        %5316 = vmatpush1.msra.mxu0 0.0
        %5317 = vmatprep.subr.mxu0 0.0
        %5318 = vmatpush1.msra.mxu0 0.0
        %5319 = vmatprep.subr.mxu0 0.0
        %5320 = vmatpush1.msra.mxu0 0.0
        %5321 = vmatprep.subr.mxu0 0.0
        %5322 = vmatpush1.msra.mxu0 0.0
        %5323 = vmatprep.subr.mxu0 0.0
        %5324 = vmatpush1.msra.mxu0 0.0
        %5325 = vmatprep.subr.mxu0 0.0
        %5326 = vmatpush1.msra.mxu0 0.0
        %5327 = vmatprep.subr.mxu0 0.0
        %5328 = vmatpush1.msra.mxu0 0.0
        %5329 = vmatprep.subr.mxu0 0.0
        %5330 = vmatpush1.msra.mxu0 0.0
        %5331 = vmatprep.subr.mxu0 0.0
        %5332 = vmatpush1.msra.mxu0 0.0
        %5333 = vmatprep.subr.mxu0 0.0
        %5334 = vmatpush1.msra.mxu0 0.0
        %5335 = vmatprep.mubr.f32.mxu0 0.0
        %v5336 = vand.u32 %v4865, 4294901760
        %v5337 = vsub.f32 %v4865, %v5336
        %v5338 = vand.u32 %v5337, 4294901760
        %5339 = vmatmul.mubr.f32.gmra.mrb[0].mxu0 %v5338
        %v5340 = vpop.f32.mrb[0].mxu0
        %v5341 = vadd.f32 %v5252, %v5340
        %v5342 = vpop.f32.mrb[0].mxu0
        %5343 = vdwg.mxu0
        %5344 = vmatprep.subr.mxu0 0.0
        %v5345 = vand.u32 %v4887, 4294901760
        %v5346 = vsub.f32 %v4887, %v5345
        %v5347 = vand.u32 %v5346, 4294901760
        %5348 = vmatpush1.msra.mxu0 %v5347
        %5349 = vmatprep.subr.mxu0 0.0
        %v5350 = vand.u32 %v4888, 4294901760
        %v5351 = vsub.f32 %v4888, %v5350
        %v5352 = vand.u32 %v5351, 4294901760
        %5353 = vmatpush1.msra.mxu0 %v5352
        %5354 = vmatprep.subr.mxu0 0.0
        %v5355 = vand.u32 %v4889, 4294901760
        %v5356 = vsub.f32 %v4889, %v5355
        %v5357 = vand.u32 %v5356, 4294901760
        %5358 = vmatpush1.msra.mxu0 %v5357
        %5359 = vmatprep.subr.mxu0 0.0
        %v5360 = vand.u32 %v4890, 4294901760
        %v5361 = vsub.f32 %v4890, %v5360
        %v5362 = vand.u32 %v5361, 4294901760
        %5363 = vmatpush1.msra.mxu0 %v5362
        %5364 = vmatprep.subr.mxu0 0.0
        %v5365 = vand.u32 %v4891, 4294901760
        %v5366 = vsub.f32 %v4891, %v5365
        %v5367 = vand.u32 %v5366, 4294901760
        %5368 = vmatpush1.msra.mxu0 %v5367
        %5369 = vmatprep.subr.mxu0 0.0
        %v5370 = vand.u32 %v4892, 4294901760
        %v5371 = vsub.f32 %v4892, %v5370
        %v5372 = vand.u32 %v5371, 4294901760
        %5373 = vmatpush1.msra.mxu0 %v5372
        %5374 = vmatprep.subr.mxu0 0.0
        %v5375 = vand.u32 %v4893, 4294901760
        %v5376 = vsub.f32 %v4893, %v5375
        %v5377 = vand.u32 %v5376, 4294901760
        %5378 = vmatpush1.msra.mxu0 %v5377
        %5379 = vmatprep.subr.mxu0 0.0
        %v5380 = vand.u32 %v4894, 4294901760
        %v5381 = vsub.f32 %v4894, %v5380
        %v5382 = vand.u32 %v5381, 4294901760
        %5383 = vmatpush1.msra.mxu0 %v5382
        %5384 = vmatprep.subr.mxu0 0.0
        %v5385 = vand.u32 %v4895, 4294901760
        %v5386 = vsub.f32 %v4895, %v5385
        %v5387 = vand.u32 %v5386, 4294901760
        %5388 = vmatpush1.msra.mxu0 %v5387
        %5389 = vmatprep.subr.mxu0 0.0
        %v5390 = vand.u32 %v4896, 4294901760
        %v5391 = vsub.f32 %v4896, %v5390
        %v5392 = vand.u32 %v5391, 4294901760
        %5393 = vmatpush1.msra.mxu0 %v5392
        %5394 = vmatprep.subr.mxu0 0.0
        %v5395 = vand.u32 %v4897, 4294901760
        %v5396 = vsub.f32 %v4897, %v5395
        %v5397 = vand.u32 %v5396, 4294901760
        %5398 = vmatpush1.msra.mxu0 %v5397
        %5399 = vmatprep.subr.mxu0 0.0
        %v5400 = vand.u32 %v4898, 4294901760
        %v5401 = vsub.f32 %v4898, %v5400
        %v5402 = vand.u32 %v5401, 4294901760
        %5403 = vmatpush1.msra.mxu0 %v5402
        %5404 = vmatprep.subr.mxu0 0.0
        %v5405 = vand.u32 %v4899, 4294901760
        %v5406 = vsub.f32 %v4899, %v5405
        %v5407 = vand.u32 %v5406, 4294901760
        %5408 = vmatpush1.msra.mxu0 %v5407
        %5409 = vmatprep.subr.mxu0 0.0
        %v5410 = vand.u32 %v4900, 4294901760
        %v5411 = vsub.f32 %v4900, %v5410
        %v5412 = vand.u32 %v5411, 4294901760
        %5413 = vmatpush1.msra.mxu0 %v5412
        %5414 = vmatprep.subr.mxu0 0.0
        %v5415 = vand.u32 %v4901, 4294901760
        %v5416 = vsub.f32 %v4901, %v5415
        %v5417 = vand.u32 %v5416, 4294901760
        %5418 = vmatpush1.msra.mxu0 %v5417
        %5419 = vmatprep.subr.mxu0 0.0
        %v5420 = vand.u32 %v4902, 4294901760
        %v5421 = vsub.f32 %v4902, %v5420
        %v5422 = vand.u32 %v5421, 4294901760
        %5423 = vmatpush1.msra.mxu0 %v5422
        %5424 = vmatprep.subr.mxu0 0.0
        %5425 = vmatpush1.msra.mxu0 0.0
        %5426 = vmatprep.subr.mxu0 0.0
        %5427 = vmatpush1.msra.mxu0 0.0
        %5428 = vmatprep.subr.mxu0 0.0
        %5429 = vmatpush1.msra.mxu0 0.0
        %5430 = vmatprep.subr.mxu0 0.0
        %5431 = vmatpush1.msra.mxu0 0.0
        %5432 = vmatprep.subr.mxu0 0.0
        %5433 = vmatpush1.msra.mxu0 0.0
        %5434 = vmatprep.subr.mxu0 0.0
        %5435 = vmatpush1.msra.mxu0 0.0
        %5436 = vmatprep.subr.mxu0 0.0
        %5437 = vmatpush1.msra.mxu0 0.0
        %5438 = vmatprep.subr.mxu0 0.0
        %5439 = vmatpush1.msra.mxu0 0.0
        %5440 = vmatprep.subr.mxu0 0.0
        %5441 = vmatpush1.msra.mxu0 0.0
        %5442 = vmatprep.subr.mxu0 0.0
        %5443 = vmatpush1.msra.mxu0 0.0
        %5444 = vmatprep.subr.mxu0 0.0
        %5445 = vmatpush1.msra.mxu0 0.0
        %5446 = vmatprep.subr.mxu0 0.0
        %5447 = vmatpush1.msra.mxu0 0.0
        %5448 = vmatprep.subr.mxu0 0.0
        %5449 = vmatpush1.msra.mxu0 0.0
        %5450 = vmatprep.subr.mxu0 0.0
        %5451 = vmatpush1.msra.mxu0 0.0
        %5452 = vmatprep.subr.mxu0 0.0
        %5453 = vmatpush1.msra.mxu0 0.0
        %5454 = vmatprep.subr.mxu0 0.0
        %5455 = vmatpush1.msra.mxu0 0.0
        %5456 = vmatprep.mubr.f32.mxu0 0.0
        %v5457 = vand.u32 %v4865, 4294901760
        %5458 = vmatmul.mubr.f32.gmra.mrb[0].mxu0 %v5457
        %v5459 = vpop.f32.mrb[0].mxu0
        %v5460 = vadd.f32 %v5341, %v5459
        %v5461 = vpop.f32.mrb[0].mxu0
        %5462 = vdwg.mxu0
        %5463 = vmatprep.subr.mxu0 0.0
        %v5464 = vand.u32 %v4887, 4294901760
        %5465 = vmatpush1.msra.mxu0 %v5464
        %5466 = vmatprep.subr.mxu0 0.0
        %v5467 = vand.u32 %v4888, 4294901760
        %5468 = vmatpush1.msra.mxu0 %v5467
        %5469 = vmatprep.subr.mxu0 0.0
        %v5470 = vand.u32 %v4889, 4294901760
        %5471 = vmatpush1.msra.mxu0 %v5470
        %5472 = vmatprep.subr.mxu0 0.0
        %v5473 = vand.u32 %v4890, 4294901760
        %5474 = vmatpush1.msra.mxu0 %v5473
        %5475 = vmatprep.subr.mxu0 0.0
        %v5476 = vand.u32 %v4891, 4294901760
        %5477 = vmatpush1.msra.mxu0 %v5476
        %5478 = vmatprep.subr.mxu0 0.0
        %v5479 = vand.u32 %v4892, 4294901760
        %5480 = vmatpush1.msra.mxu0 %v5479
        %5481 = vmatprep.subr.mxu0 0.0
        %v5482 = vand.u32 %v4893, 4294901760
        %5483 = vmatpush1.msra.mxu0 %v5482
        %5484 = vmatprep.subr.mxu0 0.0
        %v5485 = vand.u32 %v4894, 4294901760
        %5486 = vmatpush1.msra.mxu0 %v5485
        %5487 = vmatprep.subr.mxu0 0.0
        %v5488 = vand.u32 %v4895, 4294901760
        %5489 = vmatpush1.msra.mxu0 %v5488
        %5490 = vmatprep.subr.mxu0 0.0
        %v5491 = vand.u32 %v4896, 4294901760
        %5492 = vmatpush1.msra.mxu0 %v5491
        %5493 = vmatprep.subr.mxu0 0.0
        %v5494 = vand.u32 %v4897, 4294901760
        %5495 = vmatpush1.msra.mxu0 %v5494
        %5496 = vmatprep.subr.mxu0 0.0
        %v5497 = vand.u32 %v4898, 4294901760
        %5498 = vmatpush1.msra.mxu0 %v5497
        %5499 = vmatprep.subr.mxu0 0.0
        %v5500 = vand.u32 %v4899, 4294901760
        %5501 = vmatpush1.msra.mxu0 %v5500
        %5502 = vmatprep.subr.mxu0 0.0
        %v5503 = vand.u32 %v4900, 4294901760
        %5504 = vmatpush1.msra.mxu0 %v5503
        %5505 = vmatprep.subr.mxu0 0.0
        %v5506 = vand.u32 %v4901, 4294901760
        %5507 = vmatpush1.msra.mxu0 %v5506
        %5508 = vmatprep.subr.mxu0 0.0
        %v5509 = vand.u32 %v4902, 4294901760
        %5510 = vmatpush1.msra.mxu0 %v5509
        %5511 = vmatprep.subr.mxu0 0.0
        %5512 = vmatpush1.msra.mxu0 0.0
        %5513 = vmatprep.subr.mxu0 0.0
        %5514 = vmatpush1.msra.mxu0 0.0
        %5515 = vmatprep.subr.mxu0 0.0
        %5516 = vmatpush1.msra.mxu0 0.0
        %5517 = vmatprep.subr.mxu0 0.0
        %5518 = vmatpush1.msra.mxu0 0.0
        %5519 = vmatprep.subr.mxu0 0.0
        %5520 = vmatpush1.msra.mxu0 0.0
        %5521 = vmatprep.subr.mxu0 0.0
        %5522 = vmatpush1.msra.mxu0 0.0
        %5523 = vmatprep.subr.mxu0 0.0
        %5524 = vmatpush1.msra.mxu0 0.0
        %5525 = vmatprep.subr.mxu0 0.0
        %5526 = vmatpush1.msra.mxu0 0.0
        %5527 = vmatprep.subr.mxu0 0.0
        %5528 = vmatpush1.msra.mxu0 0.0
        %5529 = vmatprep.subr.mxu0 0.0
        %5530 = vmatpush1.msra.mxu0 0.0
        %5531 = vmatprep.subr.mxu0 0.0
        %5532 = vmatpush1.msra.mxu0 0.0
        %5533 = vmatprep.subr.mxu0 0.0
        %5534 = vmatpush1.msra.mxu0 0.0
        %5535 = vmatprep.subr.mxu0 0.0
        %5536 = vmatpush1.msra.mxu0 0.0
        %5537 = vmatprep.subr.mxu0 0.0
        %5538 = vmatpush1.msra.mxu0 0.0
        %5539 = vmatprep.subr.mxu0 0.0
        %5540 = vmatpush1.msra.mxu0 0.0
        %5541 = vmatprep.subr.mxu0 0.0
        %5542 = vmatpush1.msra.mxu0 0.0
        %5543 = vmatprep.mubr.f32.mxu0 0.0
        %v5544 = vand.u32 %v4865, 4294901760
        %5545 = vmatmul.mubr.f32.gmra.mrb[0].mxu0 %v5544
        %v5546 = vpop.f32.mrb[0].mxu0
        %v5547 = vadd.f32 %v5460, %v5546
        %v5548 = vpop.f32.mrb[0].mxu0
        %5549 = vdwg.mxu0
        %v5550 = vmul.f32 %v5547, 0.0078125
        %5551 = vmatprep.subr.mxu0 0.0
        %v5552 = vand.u32 %v4887, 4294901760
        %5553 = vmatpush1.msra.mxu0 %v5552
        %5554 = vmatprep.subr.mxu0 0.0
        %v5555 = vand.u32 %v4888, 4294901760
        %5556 = vmatpush1.msra.mxu0 %v5555
        %5557 = vmatprep.subr.mxu0 0.0
        %v5558 = vand.u32 %v4889, 4294901760
        %5559 = vmatpush1.msra.mxu0 %v5558
        %5560 = vmatprep.subr.mxu0 0.0
        %v5561 = vand.u32 %v4890, 4294901760
        %5562 = vmatpush1.msra.mxu0 %v5561
        %5563 = vmatprep.subr.mxu0 0.0
        %v5564 = vand.u32 %v4891, 4294901760
        %5565 = vmatpush1.msra.mxu0 %v5564
        %5566 = vmatprep.subr.mxu0 0.0
        %v5567 = vand.u32 %v4892, 4294901760
        %5568 = vmatpush1.msra.mxu0 %v5567
        %5569 = vmatprep.subr.mxu0 0.0
        %v5570 = vand.u32 %v4893, 4294901760
        %5571 = vmatpush1.msra.mxu0 %v5570
        %5572 = vmatprep.subr.mxu0 0.0
        %v5573 = vand.u32 %v4894, 4294901760
        %5574 = vmatpush1.msra.mxu0 %v5573
        %5575 = vmatprep.subr.mxu0 0.0
        %v5576 = vand.u32 %v4895, 4294901760
        %5577 = vmatpush1.msra.mxu0 %v5576
        %5578 = vmatprep.subr.mxu0 0.0
        %v5579 = vand.u32 %v4896, 4294901760
        %5580 = vmatpush1.msra.mxu0 %v5579
        %5581 = vmatprep.subr.mxu0 0.0
        %v5582 = vand.u32 %v4897, 4294901760
        %5583 = vmatpush1.msra.mxu0 %v5582
        %5584 = vmatprep.subr.mxu0 0.0
        %v5585 = vand.u32 %v4898, 4294901760
        %5586 = vmatpush1.msra.mxu0 %v5585
        %5587 = vmatprep.subr.mxu0 0.0
        %v5588 = vand.u32 %v4899, 4294901760
        %5589 = vmatpush1.msra.mxu0 %v5588
        %5590 = vmatprep.subr.mxu0 0.0
        %v5591 = vand.u32 %v4900, 4294901760
        %5592 = vmatpush1.msra.mxu0 %v5591
        %5593 = vmatprep.subr.mxu0 0.0
        %v5594 = vand.u32 %v4901, 4294901760
        %5595 = vmatpush1.msra.mxu0 %v5594
        %5596 = vmatprep.subr.mxu0 0.0
        %v5597 = vand.u32 %v4902, 4294901760
        %5598 = vmatpush1.msra.mxu0 %v5597
        %5599 = vmatprep.subr.mxu0 0.0
        %5600 = vmatpush1.msra.mxu0 0.0
        %5601 = vmatprep.subr.mxu0 0.0
        %5602 = vmatpush1.msra.mxu0 0.0
        %5603 = vmatprep.subr.mxu0 0.0
        %5604 = vmatpush1.msra.mxu0 0.0
        %5605 = vmatprep.subr.mxu0 0.0
        %5606 = vmatpush1.msra.mxu0 0.0
        %5607 = vmatprep.subr.mxu0 0.0
        %5608 = vmatpush1.msra.mxu0 0.0
        %5609 = vmatprep.subr.mxu0 0.0
        %5610 = vmatpush1.msra.mxu0 0.0
        %5611 = vmatprep.subr.mxu0 0.0
        %5612 = vmatpush1.msra.mxu0 0.0
        %5613 = vmatprep.subr.mxu0 0.0
        %5614 = vmatpush1.msra.mxu0 0.0
        %5615 = vmatprep.subr.mxu0 0.0
        %5616 = vmatpush1.msra.mxu0 0.0
        %5617 = vmatprep.subr.mxu0 0.0
        %5618 = vmatpush1.msra.mxu0 0.0
        %5619 = vmatprep.subr.mxu0 0.0
        %5620 = vmatpush1.msra.mxu0 0.0
        %5621 = vmatprep.subr.mxu0 0.0
        %5622 = vmatpush1.msra.mxu0 0.0
        %5623 = vmatprep.subr.mxu0 0.0
        %5624 = vmatpush1.msra.mxu0 0.0
        %5625 = vmatprep.subr.mxu0 0.0
        %5626 = vmatpush1.msra.mxu0 0.0
        %5627 = vmatprep.subr.mxu0 0.0
        %5628 = vmatpush1.msra.mxu0 0.0
        %5629 = vmatprep.subr.mxu0 0.0
        %5630 = vmatpush1.msra.mxu0 0.0
        %5631 = vmatprep.mubr.f32.mxu0 0.0
        %v5632 = vand.u32 %v4886, 4294901760
        %v5633 = vsub.f32 %v4886, %v5632
        %v5634 = vand.u32 %v5633, 4294901760
        %v5635 = vsub.f32 %v5633, %v5634
        %v5636 = vand.u32 %v5635, 4294901760
        %5637 = vmatmul.mubr.f32.gmra.mrb[0].mxu0 %v5636
        %v5638 = vpop.f32.mrb[0].mxu0
        %v5639 = vadd.f32 0.0, %v5638
        %v5640 = vpop.f32.mrb[0].mxu0
        %5641 = vdwg.mxu0
        %5642 = vmatprep.subr.mxu0 0.0
        %v5643 = vand.u32 %v4887, 4294901760
        %v5644 = vsub.f32 %v4887, %v5643
        %v5645 = vand.u32 %v5644, 4294901760
        %v5646 = vsub.f32 %v5644, %v5645
        %v5647 = vand.u32 %v5646, 4294901760
        %5648 = vmatpush1.msra.mxu0 %v5647
        %5649 = vmatprep.subr.mxu0 0.0
        %v5650 = vand.u32 %v4888, 4294901760
        %v5651 = vsub.f32 %v4888, %v5650
        %v5652 = vand.u32 %v5651, 4294901760
        %v5653 = vsub.f32 %v5651, %v5652
        %v5654 = vand.u32 %v5653, 4294901760
        %5655 = vmatpush1.msra.mxu0 %v5654
        %5656 = vmatprep.subr.mxu0 0.0
        %v5657 = vand.u32 %v4889, 4294901760
        %v5658 = vsub.f32 %v4889, %v5657
        %v5659 = vand.u32 %v5658, 4294901760
        %v5660 = vsub.f32 %v5658, %v5659
        %v5661 = vand.u32 %v5660, 4294901760
        %5662 = vmatpush1.msra.mxu0 %v5661
        %5663 = vmatprep.subr.mxu0 0.0
        %v5664 = vand.u32 %v4890, 4294901760
        %v5665 = vsub.f32 %v4890, %v5664
        %v5666 = vand.u32 %v5665, 4294901760
        %v5667 = vsub.f32 %v5665, %v5666
        %v5668 = vand.u32 %v5667, 4294901760
        %5669 = vmatpush1.msra.mxu0 %v5668
        %5670 = vmatprep.subr.mxu0 0.0
        %v5671 = vand.u32 %v4891, 4294901760
        %v5672 = vsub.f32 %v4891, %v5671
        %v5673 = vand.u32 %v5672, 4294901760
        %v5674 = vsub.f32 %v5672, %v5673
        %v5675 = vand.u32 %v5674, 4294901760
        %5676 = vmatpush1.msra.mxu0 %v5675
        %5677 = vmatprep.subr.mxu0 0.0
        %v5678 = vand.u32 %v4892, 4294901760
        %v5679 = vsub.f32 %v4892, %v5678
        %v5680 = vand.u32 %v5679, 4294901760
        %v5681 = vsub.f32 %v5679, %v5680
        %v5682 = vand.u32 %v5681, 4294901760
        %5683 = vmatpush1.msra.mxu0 %v5682
        %5684 = vmatprep.subr.mxu0 0.0
        %v5685 = vand.u32 %v4893, 4294901760
        %v5686 = vsub.f32 %v4893, %v5685
        %v5687 = vand.u32 %v5686, 4294901760
        %v5688 = vsub.f32 %v5686, %v5687
        %v5689 = vand.u32 %v5688, 4294901760
        %5690 = vmatpush1.msra.mxu0 %v5689
        %5691 = vmatprep.subr.mxu0 0.0
        %v5692 = vand.u32 %v4894, 4294901760
        %v5693 = vsub.f32 %v4894, %v5692
        %v5694 = vand.u32 %v5693, 4294901760
        %v5695 = vsub.f32 %v5693, %v5694
        %v5696 = vand.u32 %v5695, 4294901760
        %5697 = vmatpush1.msra.mxu0 %v5696
        %5698 = vmatprep.subr.mxu0 0.0
        %v5699 = vand.u32 %v4895, 4294901760
        %v5700 = vsub.f32 %v4895, %v5699
        %v5701 = vand.u32 %v5700, 4294901760
        %v5702 = vsub.f32 %v5700, %v5701
        %v5703 = vand.u32 %v5702, 4294901760
        %5704 = vmatpush1.msra.mxu0 %v5703
        %5705 = vmatprep.subr.mxu0 0.0
        %v5706 = vand.u32 %v4896, 4294901760
        %v5707 = vsub.f32 %v4896, %v5706
        %v5708 = vand.u32 %v5707, 4294901760
        %v5709 = vsub.f32 %v5707, %v5708
        %v5710 = vand.u32 %v5709, 4294901760
        %5711 = vmatpush1.msra.mxu0 %v5710
        %5712 = vmatprep.subr.mxu0 0.0
        %v5713 = vand.u32 %v4897, 4294901760
        %v5714 = vsub.f32 %v4897, %v5713
        %v5715 = vand.u32 %v5714, 4294901760
        %v5716 = vsub.f32 %v5714, %v5715
        %v5717 = vand.u32 %v5716, 4294901760
        %5718 = vmatpush1.msra.mxu0 %v5717
        %5719 = vmatprep.subr.mxu0 0.0
        %v5720 = vand.u32 %v4898, 4294901760
        %v5721 = vsub.f32 %v4898, %v5720
        %v5722 = vand.u32 %v5721, 4294901760
        %v5723 = vsub.f32 %v5721, %v5722
        %v5724 = vand.u32 %v5723, 4294901760
        %5725 = vmatpush1.msra.mxu0 %v5724
        %5726 = vmatprep.subr.mxu0 0.0
        %v5727 = vand.u32 %v4899, 4294901760
        %v5728 = vsub.f32 %v4899, %v5727
        %v5729 = vand.u32 %v5728, 4294901760
        %v5730 = vsub.f32 %v5728, %v5729
        %v5731 = vand.u32 %v5730, 4294901760
        %5732 = vmatpush1.msra.mxu0 %v5731
        %5733 = vmatprep.subr.mxu0 0.0
        %v5734 = vand.u32 %v4900, 4294901760
        %v5735 = vsub.f32 %v4900, %v5734
        %v5736 = vand.u32 %v5735, 4294901760
        %v5737 = vsub.f32 %v5735, %v5736
        %v5738 = vand.u32 %v5737, 4294901760
        %5739 = vmatpush1.msra.mxu0 %v5738
        %5740 = vmatprep.subr.mxu0 0.0
        %v5741 = vand.u32 %v4901, 4294901760
        %v5742 = vsub.f32 %v4901, %v5741
        %v5743 = vand.u32 %v5742, 4294901760
        %v5744 = vsub.f32 %v5742, %v5743
        %v5745 = vand.u32 %v5744, 4294901760
        %5746 = vmatpush1.msra.mxu0 %v5745
        %5747 = vmatprep.subr.mxu0 0.0
        %v5748 = vand.u32 %v4902, 4294901760
        %v5749 = vsub.f32 %v4902, %v5748
        %v5750 = vand.u32 %v5749, 4294901760
        %v5751 = vsub.f32 %v5749, %v5750
        %v5752 = vand.u32 %v5751, 4294901760
        %5753 = vmatpush1.msra.mxu0 %v5752
        %5754 = vmatprep.subr.mxu0 0.0
        %5755 = vmatpush1.msra.mxu0 0.0
        %5756 = vmatprep.subr.mxu0 0.0
        %5757 = vmatpush1.msra.mxu0 0.0
        %5758 = vmatprep.subr.mxu0 0.0
        %5759 = vmatpush1.msra.mxu0 0.0
        %5760 = vmatprep.subr.mxu0 0.0
        %5761 = vmatpush1.msra.mxu0 0.0
        %5762 = vmatprep.subr.mxu0 0.0
        %5763 = vmatpush1.msra.mxu0 0.0
        %5764 = vmatprep.subr.mxu0 0.0
        %5765 = vmatpush1.msra.mxu0 0.0
        %5766 = vmatprep.subr.mxu0 0.0
        %5767 = vmatpush1.msra.mxu0 0.0
        %5768 = vmatprep.subr.mxu0 0.0
        %5769 = vmatpush1.msra.mxu0 0.0
        %5770 = vmatprep.subr.mxu0 0.0
        %5771 = vmatpush1.msra.mxu0 0.0
        %5772 = vmatprep.subr.mxu0 0.0
        %5773 = vmatpush1.msra.mxu0 0.0
        %5774 = vmatprep.subr.mxu0 0.0
        %5775 = vmatpush1.msra.mxu0 0.0
        %5776 = vmatprep.subr.mxu0 0.0
        %5777 = vmatpush1.msra.mxu0 0.0
        %5778 = vmatprep.subr.mxu0 0.0
        %5779 = vmatpush1.msra.mxu0 0.0
        %5780 = vmatprep.subr.mxu0 0.0
        %5781 = vmatpush1.msra.mxu0 0.0
        %5782 = vmatprep.subr.mxu0 0.0
        %5783 = vmatpush1.msra.mxu0 0.0
        %5784 = vmatprep.subr.mxu0 0.0
        %5785 = vmatpush1.msra.mxu0 0.0
        %5786 = vmatprep.mubr.f32.mxu0 0.0
        %v5787 = vand.u32 %v4886, 4294901760
        %5788 = vmatmul.mubr.f32.gmra.mrb[0].mxu0 %v5787
        %v5789 = vpop.f32.mrb[0].mxu0
        %v5790 = vadd.f32 %v5639, %v5789
        %v5791 = vpop.f32.mrb[0].mxu0
        %5792 = vdwg.mxu0
        %5793 = vmatprep.subr.mxu0 0.0
        %v5794 = vand.u32 %v4887, 4294901760
        %v5795 = vsub.f32 %v4887, %v5794
        %5796 = vmatpush1.msra.mxu0 %v5795
        %5797 = vmatprep.subr.mxu0 0.0
        %v5798 = vand.u32 %v4888, 4294901760
        %v5799 = vsub.f32 %v4888, %v5798
        %5800 = vmatpush1.msra.mxu0 %v5799
        %5801 = vmatprep.subr.mxu0 0.0
        %v5802 = vand.u32 %v4889, 4294901760
        %v5803 = vsub.f32 %v4889, %v5802
        %5804 = vmatpush1.msra.mxu0 %v5803
        %5805 = vmatprep.subr.mxu0 0.0
        %v5806 = vand.u32 %v4890, 4294901760
        %v5807 = vsub.f32 %v4890, %v5806
        %5808 = vmatpush1.msra.mxu0 %v5807
        %5809 = vmatprep.subr.mxu0 0.0
        %v5810 = vand.u32 %v4891, 4294901760
        %v5811 = vsub.f32 %v4891, %v5810
        %5812 = vmatpush1.msra.mxu0 %v5811
        %5813 = vmatprep.subr.mxu0 0.0
        %v5814 = vand.u32 %v4892, 4294901760
        %v5815 = vsub.f32 %v4892, %v5814
        %5816 = vmatpush1.msra.mxu0 %v5815
        %5817 = vmatprep.subr.mxu0 0.0
        %v5818 = vand.u32 %v4893, 4294901760
        %v5819 = vsub.f32 %v4893, %v5818
        %5820 = vmatpush1.msra.mxu0 %v5819
        %5821 = vmatprep.subr.mxu0 0.0
        %v5822 = vand.u32 %v4894, 4294901760
        %v5823 = vsub.f32 %v4894, %v5822
        %5824 = vmatpush1.msra.mxu0 %v5823
        %5825 = vmatprep.subr.mxu0 0.0
        %v5826 = vand.u32 %v4895, 4294901760
        %v5827 = vsub.f32 %v4895, %v5826
        %5828 = vmatpush1.msra.mxu0 %v5827
        %5829 = vmatprep.subr.mxu0 0.0
        %v5830 = vand.u32 %v4896, 4294901760
        %v5831 = vsub.f32 %v4896, %v5830
        %5832 = vmatpush1.msra.mxu0 %v5831
        %5833 = vmatprep.subr.mxu0 0.0
        %v5834 = vand.u32 %v4897, 4294901760
        %v5835 = vsub.f32 %v4897, %v5834
        %5836 = vmatpush1.msra.mxu0 %v5835
        %5837 = vmatprep.subr.mxu0 0.0
        %v5838 = vand.u32 %v4898, 4294901760
        %v5839 = vsub.f32 %v4898, %v5838
        %5840 = vmatpush1.msra.mxu0 %v5839
        %5841 = vmatprep.subr.mxu0 0.0
        %v5842 = vand.u32 %v4899, 4294901760
        %v5843 = vsub.f32 %v4899, %v5842
        %5844 = vmatpush1.msra.mxu0 %v5843
        %5845 = vmatprep.subr.mxu0 0.0
        %v5846 = vand.u32 %v4900, 4294901760
        %v5847 = vsub.f32 %v4900, %v5846
        %5848 = vmatpush1.msra.mxu0 %v5847
        %5849 = vmatprep.subr.mxu0 0.0
        %v5850 = vand.u32 %v4901, 4294901760
        %v5851 = vsub.f32 %v4901, %v5850
        %5852 = vmatpush1.msra.mxu0 %v5851
        %5853 = vmatprep.subr.mxu0 0.0
        %v5854 = vand.u32 %v4902, 4294901760
        %v5855 = vsub.f32 %v4902, %v5854
        %5856 = vmatpush1.msra.mxu0 %v5855
        %5857 = vmatprep.subr.mxu0 0.0
        %5858 = vmatpush1.msra.mxu0 0.0
        %5859 = vmatprep.subr.mxu0 0.0
        %5860 = vmatpush1.msra.mxu0 0.0
        %5861 = vmatprep.subr.mxu0 0.0
        %5862 = vmatpush1.msra.mxu0 0.0
        %5863 = vmatprep.subr.mxu0 0.0
        %5864 = vmatpush1.msra.mxu0 0.0
        %5865 = vmatprep.subr.mxu0 0.0
        %5866 = vmatpush1.msra.mxu0 0.0
        %5867 = vmatprep.subr.mxu0 0.0
        %5868 = vmatpush1.msra.mxu0 0.0
        %5869 = vmatprep.subr.mxu0 0.0
        %5870 = vmatpush1.msra.mxu0 0.0
        %5871 = vmatprep.subr.mxu0 0.0
        %5872 = vmatpush1.msra.mxu0 0.0
        %5873 = vmatprep.subr.mxu0 0.0
        %5874 = vmatpush1.msra.mxu0 0.0
        %5875 = vmatprep.subr.mxu0 0.0
        %5876 = vmatpush1.msra.mxu0 0.0
        %5877 = vmatprep.subr.mxu0 0.0
        %5878 = vmatpush1.msra.mxu0 0.0
        %5879 = vmatprep.subr.mxu0 0.0
        %5880 = vmatpush1.msra.mxu0 0.0
        %5881 = vmatprep.subr.mxu0 0.0
        %5882 = vmatpush1.msra.mxu0 0.0
        %5883 = vmatprep.subr.mxu0 0.0
        %5884 = vmatpush1.msra.mxu0 0.0
        %5885 = vmatprep.subr.mxu0 0.0
        %5886 = vmatpush1.msra.mxu0 0.0
        %5887 = vmatprep.subr.mxu0 0.0
        %5888 = vmatpush1.msra.mxu0 0.0
        %5889 = vmatprep.mubr.f32.mxu0 0.0
        %v5890 = vand.u32 %v4886, 4294901760
        %v5891 = vsub.f32 %v4886, %v5890
        %5892 = vmatmul.mubr.f32.gmra.mrb[0].mxu0 %v5891
        %v5893 = vpop.f32.mrb[0].mxu0
        %v5894 = vadd.f32 %v5790, %v5893
        %v5895 = vpop.f32.mrb[0].mxu0
        %5896 = vdwg.mxu0
        %5897 = vmatprep.subr.mxu0 0.0
        %v5898 = vand.u32 %v4887, 4294901760
        %5899 = vmatpush1.msra.mxu0 %v5898
        %5900 = vmatprep.subr.mxu0 0.0
        %v5901 = vand.u32 %v4888, 4294901760
        %5902 = vmatpush1.msra.mxu0 %v5901
        %5903 = vmatprep.subr.mxu0 0.0
        %v5904 = vand.u32 %v4889, 4294901760
        %5905 = vmatpush1.msra.mxu0 %v5904
        %5906 = vmatprep.subr.mxu0 0.0
        %v5907 = vand.u32 %v4890, 4294901760
        %5908 = vmatpush1.msra.mxu0 %v5907
        %5909 = vmatprep.subr.mxu0 0.0
        %v5910 = vand.u32 %v4891, 4294901760
        %5911 = vmatpush1.msra.mxu0 %v5910
        %5912 = vmatprep.subr.mxu0 0.0
        %v5913 = vand.u32 %v4892, 4294901760
        %5914 = vmatpush1.msra.mxu0 %v5913
        %5915 = vmatprep.subr.mxu0 0.0
        %v5916 = vand.u32 %v4893, 4294901760
        %5917 = vmatpush1.msra.mxu0 %v5916
        %5918 = vmatprep.subr.mxu0 0.0
        %v5919 = vand.u32 %v4894, 4294901760
        %5920 = vmatpush1.msra.mxu0 %v5919
        %5921 = vmatprep.subr.mxu0 0.0
        %v5922 = vand.u32 %v4895, 4294901760
        %5923 = vmatpush1.msra.mxu0 %v5922
        %5924 = vmatprep.subr.mxu0 0.0
        %v5925 = vand.u32 %v4896, 4294901760
        %5926 = vmatpush1.msra.mxu0 %v5925
        %5927 = vmatprep.subr.mxu0 0.0
        %v5928 = vand.u32 %v4897, 4294901760
        %5929 = vmatpush1.msra.mxu0 %v5928
        %5930 = vmatprep.subr.mxu0 0.0
        %v5931 = vand.u32 %v4898, 4294901760
        %5932 = vmatpush1.msra.mxu0 %v5931
        %5933 = vmatprep.subr.mxu0 0.0
        %v5934 = vand.u32 %v4899, 4294901760
        %5935 = vmatpush1.msra.mxu0 %v5934
        %5936 = vmatprep.subr.mxu0 0.0
        %v5937 = vand.u32 %v4900, 4294901760
        %5938 = vmatpush1.msra.mxu0 %v5937
        %5939 = vmatprep.subr.mxu0 0.0
        %v5940 = vand.u32 %v4901, 4294901760
        %5941 = vmatpush1.msra.mxu0 %v5940
        %5942 = vmatprep.subr.mxu0 0.0
        %v5943 = vand.u32 %v4902, 4294901760
        %5944 = vmatpush1.msra.mxu0 %v5943
        %5945 = vmatprep.subr.mxu0 0.0
        %5946 = vmatpush1.msra.mxu0 0.0
        %5947 = vmatprep.subr.mxu0 0.0
        %5948 = vmatpush1.msra.mxu0 0.0
        %5949 = vmatprep.subr.mxu0 0.0
        %5950 = vmatpush1.msra.mxu0 0.0
        %5951 = vmatprep.subr.mxu0 0.0
        %5952 = vmatpush1.msra.mxu0 0.0
        %5953 = vmatprep.subr.mxu0 0.0
        %5954 = vmatpush1.msra.mxu0 0.0
        %5955 = vmatprep.subr.mxu0 0.0
        %5956 = vmatpush1.msra.mxu0 0.0
        %5957 = vmatprep.subr.mxu0 0.0
        %5958 = vmatpush1.msra.mxu0 0.0
        %5959 = vmatprep.subr.mxu0 0.0
        %5960 = vmatpush1.msra.mxu0 0.0
        %5961 = vmatprep.subr.mxu0 0.0
        %5962 = vmatpush1.msra.mxu0 0.0
        %5963 = vmatprep.subr.mxu0 0.0
        %5964 = vmatpush1.msra.mxu0 0.0
        %5965 = vmatprep.subr.mxu0 0.0
        %5966 = vmatpush1.msra.mxu0 0.0
        %5967 = vmatprep.subr.mxu0 0.0
        %5968 = vmatpush1.msra.mxu0 0.0
        %5969 = vmatprep.subr.mxu0 0.0
        %5970 = vmatpush1.msra.mxu0 0.0
        %5971 = vmatprep.subr.mxu0 0.0
        %5972 = vmatpush1.msra.mxu0 0.0
        %5973 = vmatprep.subr.mxu0 0.0
        %5974 = vmatpush1.msra.mxu0 0.0
        %5975 = vmatprep.subr.mxu0 0.0
        %5976 = vmatpush1.msra.mxu0 0.0
        %5977 = vmatprep.mubr.f32.mxu0 0.0
        %v5978 = vand.u32 %v4886, 4294901760
        %v5979 = vsub.f32 %v4886, %v5978
        %v5980 = vand.u32 %v5979, 4294901760
        %5981 = vmatmul.mubr.f32.gmra.mrb[0].mxu0 %v5980
        %v5982 = vpop.f32.mrb[0].mxu0
        %v5983 = vadd.f32 %v5894, %v5982
        %v5984 = vpop.f32.mrb[0].mxu0
        %5985 = vdwg.mxu0
        %5986 = vmatprep.subr.mxu0 0.0
        %v5987 = vand.u32 %v4887, 4294901760
        %v5988 = vsub.f32 %v4887, %v5987
        %v5989 = vand.u32 %v5988, 4294901760
        %5990 = vmatpush1.msra.mxu0 %v5989
        %5991 = vmatprep.subr.mxu0 0.0
        %v5992 = vand.u32 %v4888, 4294901760
        %v5993 = vsub.f32 %v4888, %v5992
        %v5994 = vand.u32 %v5993, 4294901760
        %5995 = vmatpush1.msra.mxu0 %v5994
        %5996 = vmatprep.subr.mxu0 0.0
        %v5997 = vand.u32 %v4889, 4294901760
        %v5998 = vsub.f32 %v4889, %v5997
        %v5999 = vand.u32 %v5998, 4294901760
        %6000 = vmatpush1.msra.mxu0 %v5999
        %6001 = vmatprep.subr.mxu0 0.0
        %v6002 = vand.u32 %v4890, 4294901760
        %v6003 = vsub.f32 %v4890, %v6002
        %v6004 = vand.u32 %v6003, 4294901760
        %6005 = vmatpush1.msra.mxu0 %v6004
        %6006 = vmatprep.subr.mxu0 0.0
        %v6007 = vand.u32 %v4891, 4294901760
        %v6008 = vsub.f32 %v4891, %v6007
        %v6009 = vand.u32 %v6008, 4294901760
        %6010 = vmatpush1.msra.mxu0 %v6009
        %6011 = vmatprep.subr.mxu0 0.0
        %v6012 = vand.u32 %v4892, 4294901760
        %v6013 = vsub.f32 %v4892, %v6012
        %v6014 = vand.u32 %v6013, 4294901760
        %6015 = vmatpush1.msra.mxu0 %v6014
        %6016 = vmatprep.subr.mxu0 0.0
        %v6017 = vand.u32 %v4893, 4294901760
        %v6018 = vsub.f32 %v4893, %v6017
        %v6019 = vand.u32 %v6018, 4294901760
        %6020 = vmatpush1.msra.mxu0 %v6019
        %6021 = vmatprep.subr.mxu0 0.0
        %v6022 = vand.u32 %v4894, 4294901760
        %v6023 = vsub.f32 %v4894, %v6022
        %v6024 = vand.u32 %v6023, 4294901760
        %6025 = vmatpush1.msra.mxu0 %v6024
        %6026 = vmatprep.subr.mxu0 0.0
        %v6027 = vand.u32 %v4895, 4294901760
        %v6028 = vsub.f32 %v4895, %v6027
        %v6029 = vand.u32 %v6028, 4294901760
        %6030 = vmatpush1.msra.mxu0 %v6029
        %6031 = vmatprep.subr.mxu0 0.0
        %v6032 = vand.u32 %v4896, 4294901760
        %v6033 = vsub.f32 %v4896, %v6032
        %v6034 = vand.u32 %v6033, 4294901760
        %6035 = vmatpush1.msra.mxu0 %v6034
        %6036 = vmatprep.subr.mxu0 0.0
        %v6037 = vand.u32 %v4897, 4294901760
        %v6038 = vsub.f32 %v4897, %v6037
        %v6039 = vand.u32 %v6038, 4294901760
        %6040 = vmatpush1.msra.mxu0 %v6039
        %6041 = vmatprep.subr.mxu0 0.0
        %v6042 = vand.u32 %v4898, 4294901760
        %v6043 = vsub.f32 %v4898, %v6042
        %v6044 = vand.u32 %v6043, 4294901760
        %6045 = vmatpush1.msra.mxu0 %v6044
        %6046 = vmatprep.subr.mxu0 0.0
        %v6047 = vand.u32 %v4899, 4294901760
        %v6048 = vsub.f32 %v4899, %v6047
        %v6049 = vand.u32 %v6048, 4294901760
        %6050 = vmatpush1.msra.mxu0 %v6049
        %6051 = vmatprep.subr.mxu0 0.0
        %v6052 = vand.u32 %v4900, 4294901760
        %v6053 = vsub.f32 %v4900, %v6052
        %v6054 = vand.u32 %v6053, 4294901760
        %6055 = vmatpush1.msra.mxu0 %v6054
        %6056 = vmatprep.subr.mxu0 0.0
        %v6057 = vand.u32 %v4901, 4294901760
        %v6058 = vsub.f32 %v4901, %v6057
        %v6059 = vand.u32 %v6058, 4294901760
        %6060 = vmatpush1.msra.mxu0 %v6059
        %6061 = vmatprep.subr.mxu0 0.0
        %v6062 = vand.u32 %v4902, 4294901760
        %v6063 = vsub.f32 %v4902, %v6062
        %v6064 = vand.u32 %v6063, 4294901760
        %6065 = vmatpush1.msra.mxu0 %v6064
        %6066 = vmatprep.subr.mxu0 0.0
        %6067 = vmatpush1.msra.mxu0 0.0
        %6068 = vmatprep.subr.mxu0 0.0
        %6069 = vmatpush1.msra.mxu0 0.0
        %6070 = vmatprep.subr.mxu0 0.0
        %6071 = vmatpush1.msra.mxu0 0.0
        %6072 = vmatprep.subr.mxu0 0.0
        %6073 = vmatpush1.msra.mxu0 0.0
        %6074 = vmatprep.subr.mxu0 0.0
        %6075 = vmatpush1.msra.mxu0 0.0
        %6076 = vmatprep.subr.mxu0 0.0
        %6077 = vmatpush1.msra.mxu0 0.0
        %6078 = vmatprep.subr.mxu0 0.0
        %6079 = vmatpush1.msra.mxu0 0.0
        %6080 = vmatprep.subr.mxu0 0.0
        %6081 = vmatpush1.msra.mxu0 0.0
        %6082 = vmatprep.subr.mxu0 0.0
        %6083 = vmatpush1.msra.mxu0 0.0
        %6084 = vmatprep.subr.mxu0 0.0
        %6085 = vmatpush1.msra.mxu0 0.0
        %6086 = vmatprep.subr.mxu0 0.0
        %6087 = vmatpush1.msra.mxu0 0.0
        %6088 = vmatprep.subr.mxu0 0.0
        %6089 = vmatpush1.msra.mxu0 0.0
        %6090 = vmatprep.subr.mxu0 0.0
        %6091 = vmatpush1.msra.mxu0 0.0
        %6092 = vmatprep.subr.mxu0 0.0
        %6093 = vmatpush1.msra.mxu0 0.0
        %6094 = vmatprep.subr.mxu0 0.0
        %6095 = vmatpush1.msra.mxu0 0.0
        %6096 = vmatprep.subr.mxu0 0.0
        %6097 = vmatpush1.msra.mxu0 0.0
        %6098 = vmatprep.mubr.f32.mxu0 0.0
        %v6099 = vand.u32 %v4886, 4294901760
        %6100 = vmatmul.mubr.f32.gmra.mrb[0].mxu0 %v6099
        %v6101 = vpop.f32.mrb[0].mxu0
        %v6102 = vadd.f32 %v5983, %v6101
        %v6103 = vpop.f32.mrb[0].mxu0
        %6104 = vdwg.mxu0
        %6105 = vmatprep.subr.mxu0 0.0
        %v6106 = vand.u32 %v4887, 4294901760
        %6107 = vmatpush1.msra.mxu0 %v6106
        %6108 = vmatprep.subr.mxu0 0.0
        %v6109 = vand.u32 %v4888, 4294901760
        %6110 = vmatpush1.msra.mxu0 %v6109
        %6111 = vmatprep.subr.mxu0 0.0
        %v6112 = vand.u32 %v4889, 4294901760
        %6113 = vmatpush1.msra.mxu0 %v6112
        %6114 = vmatprep.subr.mxu0 0.0
        %v6115 = vand.u32 %v4890, 4294901760
        %6116 = vmatpush1.msra.mxu0 %v6115
        %6117 = vmatprep.subr.mxu0 0.0
        %v6118 = vand.u32 %v4891, 4294901760
        %6119 = vmatpush1.msra.mxu0 %v6118
        %6120 = vmatprep.subr.mxu0 0.0
        %v6121 = vand.u32 %v4892, 4294901760
        %6122 = vmatpush1.msra.mxu0 %v6121
        %6123 = vmatprep.subr.mxu0 0.0
        %v6124 = vand.u32 %v4893, 4294901760
        %6125 = vmatpush1.msra.mxu0 %v6124
        %6126 = vmatprep.subr.mxu0 0.0
        %v6127 = vand.u32 %v4894, 4294901760
        %6128 = vmatpush1.msra.mxu0 %v6127
        %6129 = vmatprep.subr.mxu0 0.0
        %v6130 = vand.u32 %v4895, 4294901760
        %6131 = vmatpush1.msra.mxu0 %v6130
        %6132 = vmatprep.subr.mxu0 0.0
        %v6133 = vand.u32 %v4896, 4294901760
        %6134 = vmatpush1.msra.mxu0 %v6133
        %6135 = vmatprep.subr.mxu0 0.0
        %v6136 = vand.u32 %v4897, 4294901760
        %6137 = vmatpush1.msra.mxu0 %v6136
        %6138 = vmatprep.subr.mxu0 0.0
        %v6139 = vand.u32 %v4898, 4294901760
        %6140 = vmatpush1.msra.mxu0 %v6139
        %6141 = vmatprep.subr.mxu0 0.0
        %v6142 = vand.u32 %v4899, 4294901760
        %6143 = vmatpush1.msra.mxu0 %v6142
        %6144 = vmatprep.subr.mxu0 0.0
        %v6145 = vand.u32 %v4900, 4294901760
        %6146 = vmatpush1.msra.mxu0 %v6145
        %6147 = vmatprep.subr.mxu0 0.0
        %v6148 = vand.u32 %v4901, 4294901760
        %6149 = vmatpush1.msra.mxu0 %v6148
        %6150 = vmatprep.subr.mxu0 0.0
        %v6151 = vand.u32 %v4902, 4294901760
        %6152 = vmatpush1.msra.mxu0 %v6151
        %6153 = vmatprep.subr.mxu0 0.0
        %6154 = vmatpush1.msra.mxu0 0.0
        %6155 = vmatprep.subr.mxu0 0.0
        %6156 = vmatpush1.msra.mxu0 0.0
        %6157 = vmatprep.subr.mxu0 0.0
        %6158 = vmatpush1.msra.mxu0 0.0
        %6159 = vmatprep.subr.mxu0 0.0
        %6160 = vmatpush1.msra.mxu0 0.0
        %6161 = vmatprep.subr.mxu0 0.0
        %6162 = vmatpush1.msra.mxu0 0.0
        %6163 = vmatprep.subr.mxu0 0.0
        %6164 = vmatpush1.msra.mxu0 0.0
        %6165 = vmatprep.subr.mxu0 0.0
        %6166 = vmatpush1.msra.mxu0 0.0
        %6167 = vmatprep.subr.mxu0 0.0
        %6168 = vmatpush1.msra.mxu0 0.0
        %6169 = vmatprep.subr.mxu0 0.0
        %6170 = vmatpush1.msra.mxu0 0.0
        %6171 = vmatprep.subr.mxu0 0.0
        %6172 = vmatpush1.msra.mxu0 0.0
        %6173 = vmatprep.subr.mxu0 0.0
        %6174 = vmatpush1.msra.mxu0 0.0
        %6175 = vmatprep.subr.mxu0 0.0
        %6176 = vmatpush1.msra.mxu0 0.0
        %6177 = vmatprep.subr.mxu0 0.0
        %6178 = vmatpush1.msra.mxu0 0.0
        %6179 = vmatprep.subr.mxu0 0.0
        %6180 = vmatpush1.msra.mxu0 0.0
        %6181 = vmatprep.subr.mxu0 0.0
        %6182 = vmatpush1.msra.mxu0 0.0
        %6183 = vmatprep.subr.mxu0 0.0
        %6184 = vmatpush1.msra.mxu0 0.0
        %6185 = vmatprep.mubr.f32.mxu0 0.0
        %v6186 = vand.u32 %v4886, 4294901760
        %6187 = vmatmul.mubr.f32.gmra.mrb[0].mxu0 %v6186
        %v6188 = vpop.f32.mrb[0].mxu0
        %v6189 = vadd.f32 %v6102, %v6188
        %v6190 = vpop.f32.mrb[0].mxu0
        %6191 = vdwg.mxu0
        %v6192 = vmul.f32 %v6189, 0.0078125
        %v6193 = vmul.f32 %v5550, %v5550
        %v6194 = vsub.f32 %v6192, %v6193
        %v6195 = vmax.f32 %v6194, 0.0
        %v6196 = vadd.f32 %v6195, 1e-05
        %v6197 = vrsqrt.pop %v6196
        %v6199 = vsel %vm1964, %v5550, 0
        %6201 = vmatprep.subr.mxu0 0.0
        %v6202 = vand.u32 %v4903, 4294901760
        %6203 = vmatpush1.msra.mxu0 %v6202
        %6204 = vmatprep.subr.mxu0 0.0
        %v6205 = vand.u32 %v4904, 4294901760
        %6206 = vmatpush1.msra.mxu0 %v6205
        %6207 = vmatprep.subr.mxu0 0.0
        %v6208 = vand.u32 %v4905, 4294901760
        %6209 = vmatpush1.msra.mxu0 %v6208
        %6210 = vmatprep.subr.mxu0 0.0
        %v6211 = vand.u32 %v4906, 4294901760
        %6212 = vmatpush1.msra.mxu0 %v6211
        %6213 = vmatprep.subr.mxu0 0.0
        %6214 = vmatpush1.msra.mxu0 0.0
        %6215 = vmatprep.subr.mxu0 0.0
        %6216 = vmatpush1.msra.mxu0 0.0
        %6217 = vmatprep.subr.mxu0 0.0
        %6218 = vmatpush1.msra.mxu0 0.0
        %6219 = vmatprep.subr.mxu0 0.0
        %6220 = vmatpush1.msra.mxu0 0.0
        %6221 = vmatprep.subr.mxu0 0.0
        %6222 = vmatpush1.msra.mxu0 0.0
        %6223 = vmatprep.subr.mxu0 0.0
        %6224 = vmatpush1.msra.mxu0 0.0
        %6225 = vmatprep.subr.mxu0 0.0
        %6226 = vmatpush1.msra.mxu0 0.0
        %6227 = vmatprep.subr.mxu0 0.0
        %6228 = vmatpush1.msra.mxu0 0.0
        %6229 = vmatprep.subr.mxu0 0.0
        %6230 = vmatpush1.msra.mxu0 0.0
        %6231 = vmatprep.subr.mxu0 0.0
        %6232 = vmatpush1.msra.mxu0 0.0
        %6233 = vmatprep.subr.mxu0 0.0
        %6234 = vmatpush1.msra.mxu0 0.0
        %6235 = vmatprep.subr.mxu0 0.0
        %6236 = vmatpush1.msra.mxu0 0.0
        %6237 = vmatprep.subr.mxu0 0.0
        %6238 = vmatpush1.msra.mxu0 0.0
        %6239 = vmatprep.subr.mxu0 0.0
        %6240 = vmatpush1.msra.mxu0 0.0
        %6241 = vmatprep.subr.mxu0 0.0
        %6242 = vmatpush1.msra.mxu0 0.0
        %6243 = vmatprep.subr.mxu0 0.0
        %6244 = vmatpush1.msra.mxu0 0.0
        %6245 = vmatprep.subr.mxu0 0.0
        %6246 = vmatpush1.msra.mxu0 0.0
        %6247 = vmatprep.subr.mxu0 0.0
        %6248 = vmatpush1.msra.mxu0 0.0
        %6249 = vmatprep.subr.mxu0 0.0
        %6250 = vmatpush1.msra.mxu0 0.0
        %6251 = vmatprep.subr.mxu0 0.0
        %6252 = vmatpush1.msra.mxu0 0.0
        %6253 = vmatprep.subr.mxu0 0.0
        %6254 = vmatpush1.msra.mxu0 0.0
        %6255 = vmatprep.subr.mxu0 0.0
        %6256 = vmatpush1.msra.mxu0 0.0
        %6257 = vmatprep.subr.mxu0 0.0
        %6258 = vmatpush1.msra.mxu0 0.0
        %6259 = vmatprep.subr.mxu0 0.0
        %6260 = vmatpush1.msra.mxu0 0.0
        %6261 = vmatprep.subr.mxu0 0.0
        %6262 = vmatpush1.msra.mxu0 0.0
        %6263 = vmatprep.subr.mxu0 0.0
        %6264 = vmatpush1.msra.mxu0 0.0
        %6265 = vmatprep.subr.mxu0 0.0
        %6266 = vmatpush1.msra.mxu0 0.0
        %6267 = vmatprep.subr.mxu0 0.0
        %6268 = vmatpush1.msra.mxu0 0.0
        %6269 = vmatprep.mubr.f32.mxu0 0.0
        %v6270 = vand.u32 %v6199, 4294901760
        %v6271 = vsub.f32 %v6199, %v6270
        %v6272 = vand.u32 %v6271, 4294901760
        %v6273 = vsub.f32 %v6271, %v6272
        %v6274 = vand.u32 %v6273, 4294901760
        %6275 = vmatmul.mubr.f32.gmra.mrb[0].mxu0 %v6274
        %v6276 = vpop.f32.mrb[0].mxu0
        %v6277 = vadd.f32 0.0, %v6276
        %v6278 = vpop.f32.mrb[0].mxu0
        %6279 = vdwg.mxu0
        %6280 = vmatprep.subr.mxu0 0.0
        %v6281 = vand.u32 %v4903, 4294901760
        %v6282 = vsub.f32 %v4903, %v6281
        %v6283 = vand.u32 %v6282, 4294901760
        %v6284 = vsub.f32 %v6282, %v6283
        %v6285 = vand.u32 %v6284, 4294901760
        %6286 = vmatpush1.msra.mxu0 %v6285
        %6287 = vmatprep.subr.mxu0 0.0
        %v6288 = vand.u32 %v4904, 4294901760
        %v6289 = vsub.f32 %v4904, %v6288
        %v6290 = vand.u32 %v6289, 4294901760
        %v6291 = vsub.f32 %v6289, %v6290
        %v6292 = vand.u32 %v6291, 4294901760
        %6293 = vmatpush1.msra.mxu0 %v6292
        %6294 = vmatprep.subr.mxu0 0.0
        %v6295 = vand.u32 %v4905, 4294901760
        %v6296 = vsub.f32 %v4905, %v6295
        %v6297 = vand.u32 %v6296, 4294901760
        %v6298 = vsub.f32 %v6296, %v6297
        %v6299 = vand.u32 %v6298, 4294901760
        %6300 = vmatpush1.msra.mxu0 %v6299
        %6301 = vmatprep.subr.mxu0 0.0
        %v6302 = vand.u32 %v4906, 4294901760
        %v6303 = vsub.f32 %v4906, %v6302
        %v6304 = vand.u32 %v6303, 4294901760
        %v6305 = vsub.f32 %v6303, %v6304
        %v6306 = vand.u32 %v6305, 4294901760
        %6307 = vmatpush1.msra.mxu0 %v6306
        %6308 = vmatprep.subr.mxu0 0.0
        %6309 = vmatpush1.msra.mxu0 0.0
        %6310 = vmatprep.subr.mxu0 0.0
        %6311 = vmatpush1.msra.mxu0 0.0
        %6312 = vmatprep.subr.mxu0 0.0
        %6313 = vmatpush1.msra.mxu0 0.0
        %6314 = vmatprep.subr.mxu0 0.0
        %6315 = vmatpush1.msra.mxu0 0.0
        %6316 = vmatprep.subr.mxu0 0.0
        %6317 = vmatpush1.msra.mxu0 0.0
        %6318 = vmatprep.subr.mxu0 0.0
        %6319 = vmatpush1.msra.mxu0 0.0
        %6320 = vmatprep.subr.mxu0 0.0
        %6321 = vmatpush1.msra.mxu0 0.0
        %6322 = vmatprep.subr.mxu0 0.0
        %6323 = vmatpush1.msra.mxu0 0.0
        %6324 = vmatprep.subr.mxu0 0.0
        %6325 = vmatpush1.msra.mxu0 0.0
        %6326 = vmatprep.subr.mxu0 0.0
        %6327 = vmatpush1.msra.mxu0 0.0
        %6328 = vmatprep.subr.mxu0 0.0
        %6329 = vmatpush1.msra.mxu0 0.0
        %6330 = vmatprep.subr.mxu0 0.0
        %6331 = vmatpush1.msra.mxu0 0.0
        %6332 = vmatprep.subr.mxu0 0.0
        %6333 = vmatpush1.msra.mxu0 0.0
        %6334 = vmatprep.subr.mxu0 0.0
        %6335 = vmatpush1.msra.mxu0 0.0
        %6336 = vmatprep.subr.mxu0 0.0
        %6337 = vmatpush1.msra.mxu0 0.0
        %6338 = vmatprep.subr.mxu0 0.0
        %6339 = vmatpush1.msra.mxu0 0.0
        %6340 = vmatprep.subr.mxu0 0.0
        %6341 = vmatpush1.msra.mxu0 0.0
        %6342 = vmatprep.subr.mxu0 0.0
        %6343 = vmatpush1.msra.mxu0 0.0
        %6344 = vmatprep.subr.mxu0 0.0
        %6345 = vmatpush1.msra.mxu0 0.0
        %6346 = vmatprep.subr.mxu0 0.0
        %6347 = vmatpush1.msra.mxu0 0.0
        %6348 = vmatprep.subr.mxu0 0.0
        %6349 = vmatpush1.msra.mxu0 0.0
        %6350 = vmatprep.subr.mxu0 0.0
        %6351 = vmatpush1.msra.mxu0 0.0
        %6352 = vmatprep.subr.mxu0 0.0
        %6353 = vmatpush1.msra.mxu0 0.0
        %6354 = vmatprep.subr.mxu0 0.0
        %6355 = vmatpush1.msra.mxu0 0.0
        %6356 = vmatprep.subr.mxu0 0.0
        %6357 = vmatpush1.msra.mxu0 0.0
        %6358 = vmatprep.subr.mxu0 0.0
        %6359 = vmatpush1.msra.mxu0 0.0
        %6360 = vmatprep.subr.mxu0 0.0
        %6361 = vmatpush1.msra.mxu0 0.0
        %6362 = vmatprep.subr.mxu0 0.0
        %6363 = vmatpush1.msra.mxu0 0.0
        %6364 = vmatprep.mubr.f32.mxu0 0.0
        %v6365 = vand.u32 %v6199, 4294901760
        %6366 = vmatmul.mubr.f32.gmra.mrb[0].mxu0 %v6365
        %v6367 = vpop.f32.mrb[0].mxu0
        %v6368 = vadd.f32 %v6277, %v6367
        %v6369 = vpop.f32.mrb[0].mxu0
        %6370 = vdwg.mxu0
        %6371 = vmatprep.subr.mxu0 0.0
        %v6372 = vand.u32 %v4903, 4294901760
        %v6373 = vsub.f32 %v4903, %v6372
        %6374 = vmatpush1.msra.mxu0 %v6373
        %6375 = vmatprep.subr.mxu0 0.0
        %v6376 = vand.u32 %v4904, 4294901760
        %v6377 = vsub.f32 %v4904, %v6376
        %6378 = vmatpush1.msra.mxu0 %v6377
        %6379 = vmatprep.subr.mxu0 0.0
        %v6380 = vand.u32 %v4905, 4294901760
        %v6381 = vsub.f32 %v4905, %v6380
        %6382 = vmatpush1.msra.mxu0 %v6381
        %6383 = vmatprep.subr.mxu0 0.0
        %v6384 = vand.u32 %v4906, 4294901760
        %v6385 = vsub.f32 %v4906, %v6384
        %6386 = vmatpush1.msra.mxu0 %v6385
        %6387 = vmatprep.subr.mxu0 0.0
        %6388 = vmatpush1.msra.mxu0 0.0
        %6389 = vmatprep.subr.mxu0 0.0
        %6390 = vmatpush1.msra.mxu0 0.0
        %6391 = vmatprep.subr.mxu0 0.0
        %6392 = vmatpush1.msra.mxu0 0.0
        %6393 = vmatprep.subr.mxu0 0.0
        %6394 = vmatpush1.msra.mxu0 0.0
        %6395 = vmatprep.subr.mxu0 0.0
        %6396 = vmatpush1.msra.mxu0 0.0
        %6397 = vmatprep.subr.mxu0 0.0
        %6398 = vmatpush1.msra.mxu0 0.0
        %6399 = vmatprep.subr.mxu0 0.0
        %6400 = vmatpush1.msra.mxu0 0.0
        %6401 = vmatprep.subr.mxu0 0.0
        %6402 = vmatpush1.msra.mxu0 0.0
        %6403 = vmatprep.subr.mxu0 0.0
        %6404 = vmatpush1.msra.mxu0 0.0
        %6405 = vmatprep.subr.mxu0 0.0
        %6406 = vmatpush1.msra.mxu0 0.0
        %6407 = vmatprep.subr.mxu0 0.0
        %6408 = vmatpush1.msra.mxu0 0.0
        %6409 = vmatprep.subr.mxu0 0.0
        %6410 = vmatpush1.msra.mxu0 0.0
        %6411 = vmatprep.subr.mxu0 0.0
        %6412 = vmatpush1.msra.mxu0 0.0
        %6413 = vmatprep.subr.mxu0 0.0
        %6414 = vmatpush1.msra.mxu0 0.0
        %6415 = vmatprep.subr.mxu0 0.0
        %6416 = vmatpush1.msra.mxu0 0.0
        %6417 = vmatprep.subr.mxu0 0.0
        %6418 = vmatpush1.msra.mxu0 0.0
        %6419 = vmatprep.subr.mxu0 0.0
        %6420 = vmatpush1.msra.mxu0 0.0
        %6421 = vmatprep.subr.mxu0 0.0
        %6422 = vmatpush1.msra.mxu0 0.0
        %6423 = vmatprep.subr.mxu0 0.0
        %6424 = vmatpush1.msra.mxu0 0.0
        %6425 = vmatprep.subr.mxu0 0.0
        %6426 = vmatpush1.msra.mxu0 0.0
        %6427 = vmatprep.subr.mxu0 0.0
        %6428 = vmatpush1.msra.mxu0 0.0
        %6429 = vmatprep.subr.mxu0 0.0
        %6430 = vmatpush1.msra.mxu0 0.0
        %6431 = vmatprep.subr.mxu0 0.0
        %6432 = vmatpush1.msra.mxu0 0.0
        %6433 = vmatprep.subr.mxu0 0.0
        %6434 = vmatpush1.msra.mxu0 0.0
        %6435 = vmatprep.subr.mxu0 0.0
        %6436 = vmatpush1.msra.mxu0 0.0
        %6437 = vmatprep.subr.mxu0 0.0
        %6438 = vmatpush1.msra.mxu0 0.0
        %6439 = vmatprep.subr.mxu0 0.0
        %6440 = vmatpush1.msra.mxu0 0.0
        %6441 = vmatprep.subr.mxu0 0.0
        %6442 = vmatpush1.msra.mxu0 0.0
        %6443 = vmatprep.mubr.f32.mxu0 0.0
        %v6444 = vand.u32 %v6199, 4294901760
        %v6445 = vsub.f32 %v6199, %v6444
        %6446 = vmatmul.mubr.f32.gmra.mrb[0].mxu0 %v6445
        %v6447 = vpop.f32.mrb[0].mxu0
        %v6448 = vadd.f32 %v6368, %v6447
        %v6449 = vpop.f32.mrb[0].mxu0
        %6450 = vdwg.mxu0
        %6451 = vmatprep.subr.mxu0 0.0
        %v6452 = vand.u32 %v4903, 4294901760
        %6453 = vmatpush1.msra.mxu0 %v6452
        %6454 = vmatprep.subr.mxu0 0.0
        %v6455 = vand.u32 %v4904, 4294901760
        %6456 = vmatpush1.msra.mxu0 %v6455
        %6457 = vmatprep.subr.mxu0 0.0
        %v6458 = vand.u32 %v4905, 4294901760
        %6459 = vmatpush1.msra.mxu0 %v6458
        %6460 = vmatprep.subr.mxu0 0.0
        %v6461 = vand.u32 %v4906, 4294901760
        %6462 = vmatpush1.msra.mxu0 %v6461
        %6463 = vmatprep.subr.mxu0 0.0
        %6464 = vmatpush1.msra.mxu0 0.0
        %6465 = vmatprep.subr.mxu0 0.0
        %6466 = vmatpush1.msra.mxu0 0.0
        %6467 = vmatprep.subr.mxu0 0.0
        %6468 = vmatpush1.msra.mxu0 0.0
        %6469 = vmatprep.subr.mxu0 0.0
        %6470 = vmatpush1.msra.mxu0 0.0
        %6471 = vmatprep.subr.mxu0 0.0
        %6472 = vmatpush1.msra.mxu0 0.0
        %6473 = vmatprep.subr.mxu0 0.0
        %6474 = vmatpush1.msra.mxu0 0.0
        %6475 = vmatprep.subr.mxu0 0.0
        %6476 = vmatpush1.msra.mxu0 0.0
        %6477 = vmatprep.subr.mxu0 0.0
        %6478 = vmatpush1.msra.mxu0 0.0
        %6479 = vmatprep.subr.mxu0 0.0
        %6480 = vmatpush1.msra.mxu0 0.0
        %6481 = vmatprep.subr.mxu0 0.0
        %6482 = vmatpush1.msra.mxu0 0.0
        %6483 = vmatprep.subr.mxu0 0.0
        %6484 = vmatpush1.msra.mxu0 0.0
        %6485 = vmatprep.subr.mxu0 0.0
        %6486 = vmatpush1.msra.mxu0 0.0
        %6487 = vmatprep.subr.mxu0 0.0
        %6488 = vmatpush1.msra.mxu0 0.0
        %6489 = vmatprep.subr.mxu0 0.0
        %6490 = vmatpush1.msra.mxu0 0.0
        %6491 = vmatprep.subr.mxu0 0.0
        %6492 = vmatpush1.msra.mxu0 0.0
        %6493 = vmatprep.subr.mxu0 0.0
        %6494 = vmatpush1.msra.mxu0 0.0
        %6495 = vmatprep.subr.mxu0 0.0
        %6496 = vmatpush1.msra.mxu0 0.0
        %6497 = vmatprep.subr.mxu0 0.0
        %6498 = vmatpush1.msra.mxu0 0.0
        %6499 = vmatprep.subr.mxu0 0.0
        %6500 = vmatpush1.msra.mxu0 0.0
        %6501 = vmatprep.subr.mxu0 0.0
        %6502 = vmatpush1.msra.mxu0 0.0
        %6503 = vmatprep.subr.mxu0 0.0
        %6504 = vmatpush1.msra.mxu0 0.0
        %6505 = vmatprep.subr.mxu0 0.0
        %6506 = vmatpush1.msra.mxu0 0.0
        %6507 = vmatprep.subr.mxu0 0.0
        %6508 = vmatpush1.msra.mxu0 0.0
        %6509 = vmatprep.subr.mxu0 0.0
        %6510 = vmatpush1.msra.mxu0 0.0
        %6511 = vmatprep.subr.mxu0 0.0
        %6512 = vmatpush1.msra.mxu0 0.0
        %6513 = vmatprep.subr.mxu0 0.0
        %6514 = vmatpush1.msra.mxu0 0.0
        %6515 = vmatprep.subr.mxu0 0.0
        %6516 = vmatpush1.msra.mxu0 0.0
        %6517 = vmatprep.subr.mxu0 0.0
        %6518 = vmatpush1.msra.mxu0 0.0
        %6519 = vmatprep.mubr.f32.mxu0 0.0
        %v6520 = vand.u32 %v6199, 4294901760
        %v6521 = vsub.f32 %v6199, %v6520
        %v6522 = vand.u32 %v6521, 4294901760
        %6523 = vmatmul.mubr.f32.gmra.mrb[0].mxu0 %v6522
        %v6524 = vpop.f32.mrb[0].mxu0
        %v6525 = vadd.f32 %v6448, %v6524
        %v6526 = vpop.f32.mrb[0].mxu0
        %6527 = vdwg.mxu0
        %6528 = vmatprep.subr.mxu0 0.0
        %v6529 = vand.u32 %v4903, 4294901760
        %v6530 = vsub.f32 %v4903, %v6529
        %v6531 = vand.u32 %v6530, 4294901760
        %6532 = vmatpush1.msra.mxu0 %v6531
        %6533 = vmatprep.subr.mxu0 0.0
        %v6534 = vand.u32 %v4904, 4294901760
        %v6535 = vsub.f32 %v4904, %v6534
        %v6536 = vand.u32 %v6535, 4294901760
        %6537 = vmatpush1.msra.mxu0 %v6536
        %6538 = vmatprep.subr.mxu0 0.0
        %v6539 = vand.u32 %v4905, 4294901760
        %v6540 = vsub.f32 %v4905, %v6539
        %v6541 = vand.u32 %v6540, 4294901760
        %6542 = vmatpush1.msra.mxu0 %v6541
        %6543 = vmatprep.subr.mxu0 0.0
        %v6544 = vand.u32 %v4906, 4294901760
        %v6545 = vsub.f32 %v4906, %v6544
        %v6546 = vand.u32 %v6545, 4294901760
        %6547 = vmatpush1.msra.mxu0 %v6546
        %6548 = vmatprep.subr.mxu0 0.0
        %6549 = vmatpush1.msra.mxu0 0.0
        %6550 = vmatprep.subr.mxu0 0.0
        %6551 = vmatpush1.msra.mxu0 0.0
        %6552 = vmatprep.subr.mxu0 0.0
        %6553 = vmatpush1.msra.mxu0 0.0
        %6554 = vmatprep.subr.mxu0 0.0
        %6555 = vmatpush1.msra.mxu0 0.0
        %6556 = vmatprep.subr.mxu0 0.0
        %6557 = vmatpush1.msra.mxu0 0.0
        %6558 = vmatprep.subr.mxu0 0.0
        %6559 = vmatpush1.msra.mxu0 0.0
        %6560 = vmatprep.subr.mxu0 0.0
        %6561 = vmatpush1.msra.mxu0 0.0
        %6562 = vmatprep.subr.mxu0 0.0
        %6563 = vmatpush1.msra.mxu0 0.0
        %6564 = vmatprep.subr.mxu0 0.0
        %6565 = vmatpush1.msra.mxu0 0.0
        %6566 = vmatprep.subr.mxu0 0.0
        %6567 = vmatpush1.msra.mxu0 0.0
        %6568 = vmatprep.subr.mxu0 0.0
        %6569 = vmatpush1.msra.mxu0 0.0
        %6570 = vmatprep.subr.mxu0 0.0
        %6571 = vmatpush1.msra.mxu0 0.0
        %6572 = vmatprep.subr.mxu0 0.0
        %6573 = vmatpush1.msra.mxu0 0.0
        %6574 = vmatprep.subr.mxu0 0.0
        %6575 = vmatpush1.msra.mxu0 0.0
        %6576 = vmatprep.subr.mxu0 0.0
        %6577 = vmatpush1.msra.mxu0 0.0
        %6578 = vmatprep.subr.mxu0 0.0
        %6579 = vmatpush1.msra.mxu0 0.0
        %6580 = vmatprep.subr.mxu0 0.0
        %6581 = vmatpush1.msra.mxu0 0.0
        %6582 = vmatprep.subr.mxu0 0.0
        %6583 = vmatpush1.msra.mxu0 0.0
        %6584 = vmatprep.subr.mxu0 0.0
        %6585 = vmatpush1.msra.mxu0 0.0
        %6586 = vmatprep.subr.mxu0 0.0
        %6587 = vmatpush1.msra.mxu0 0.0
        %6588 = vmatprep.subr.mxu0 0.0
        %6589 = vmatpush1.msra.mxu0 0.0
        %6590 = vmatprep.subr.mxu0 0.0
        %6591 = vmatpush1.msra.mxu0 0.0
        %6592 = vmatprep.subr.mxu0 0.0
        %6593 = vmatpush1.msra.mxu0 0.0
        %6594 = vmatprep.subr.mxu0 0.0
        %6595 = vmatpush1.msra.mxu0 0.0
        %6596 = vmatprep.subr.mxu0 0.0
        %6597 = vmatpush1.msra.mxu0 0.0
        %6598 = vmatprep.subr.mxu0 0.0
        %6599 = vmatpush1.msra.mxu0 0.0
        %6600 = vmatprep.subr.mxu0 0.0
        %6601 = vmatpush1.msra.mxu0 0.0
        %6602 = vmatprep.subr.mxu0 0.0
        %6603 = vmatpush1.msra.mxu0 0.0
        %6604 = vmatprep.mubr.f32.mxu0 0.0
        %v6605 = vand.u32 %v6199, 4294901760
        %6606 = vmatmul.mubr.f32.gmra.mrb[0].mxu0 %v6605
        %v6607 = vpop.f32.mrb[0].mxu0
        %v6608 = vadd.f32 %v6525, %v6607
        %v6609 = vpop.f32.mrb[0].mxu0
        %6610 = vdwg.mxu0
        %6611 = vmatprep.subr.mxu0 0.0
        %v6612 = vand.u32 %v4903, 4294901760
        %6613 = vmatpush1.msra.mxu0 %v6612
        %6614 = vmatprep.subr.mxu0 0.0
        %v6615 = vand.u32 %v4904, 4294901760
        %6616 = vmatpush1.msra.mxu0 %v6615
        %6617 = vmatprep.subr.mxu0 0.0
        %v6618 = vand.u32 %v4905, 4294901760
        %6619 = vmatpush1.msra.mxu0 %v6618
        %6620 = vmatprep.subr.mxu0 0.0
        %v6621 = vand.u32 %v4906, 4294901760
        %6622 = vmatpush1.msra.mxu0 %v6621
        %6623 = vmatprep.subr.mxu0 0.0
        %6624 = vmatpush1.msra.mxu0 0.0
        %6625 = vmatprep.subr.mxu0 0.0
        %6626 = vmatpush1.msra.mxu0 0.0
        %6627 = vmatprep.subr.mxu0 0.0
        %6628 = vmatpush1.msra.mxu0 0.0
        %6629 = vmatprep.subr.mxu0 0.0
        %6630 = vmatpush1.msra.mxu0 0.0
        %6631 = vmatprep.subr.mxu0 0.0
        %6632 = vmatpush1.msra.mxu0 0.0
        %6633 = vmatprep.subr.mxu0 0.0
        %6634 = vmatpush1.msra.mxu0 0.0
        %6635 = vmatprep.subr.mxu0 0.0
        %6636 = vmatpush1.msra.mxu0 0.0
        %6637 = vmatprep.subr.mxu0 0.0
        %6638 = vmatpush1.msra.mxu0 0.0
        %6639 = vmatprep.subr.mxu0 0.0
        %6640 = vmatpush1.msra.mxu0 0.0
        %6641 = vmatprep.subr.mxu0 0.0
        %6642 = vmatpush1.msra.mxu0 0.0
        %6643 = vmatprep.subr.mxu0 0.0
        %6644 = vmatpush1.msra.mxu0 0.0
        %6645 = vmatprep.subr.mxu0 0.0
        %6646 = vmatpush1.msra.mxu0 0.0
        %6647 = vmatprep.subr.mxu0 0.0
        %6648 = vmatpush1.msra.mxu0 0.0
        %6649 = vmatprep.subr.mxu0 0.0
        %6650 = vmatpush1.msra.mxu0 0.0
        %6651 = vmatprep.subr.mxu0 0.0
        %6652 = vmatpush1.msra.mxu0 0.0
        %6653 = vmatprep.subr.mxu0 0.0
        %6654 = vmatpush1.msra.mxu0 0.0
        %6655 = vmatprep.subr.mxu0 0.0
        %6656 = vmatpush1.msra.mxu0 0.0
        %6657 = vmatprep.subr.mxu0 0.0
        %6658 = vmatpush1.msra.mxu0 0.0
        %6659 = vmatprep.subr.mxu0 0.0
        %6660 = vmatpush1.msra.mxu0 0.0
        %6661 = vmatprep.subr.mxu0 0.0
        %6662 = vmatpush1.msra.mxu0 0.0
        %6663 = vmatprep.subr.mxu0 0.0
        %6664 = vmatpush1.msra.mxu0 0.0
        %6665 = vmatprep.subr.mxu0 0.0
        %6666 = vmatpush1.msra.mxu0 0.0
        %6667 = vmatprep.subr.mxu0 0.0
        %6668 = vmatpush1.msra.mxu0 0.0
        %6669 = vmatprep.subr.mxu0 0.0
        %6670 = vmatpush1.msra.mxu0 0.0
        %6671 = vmatprep.subr.mxu0 0.0
        %6672 = vmatpush1.msra.mxu0 0.0
        %6673 = vmatprep.subr.mxu0 0.0
        %6674 = vmatpush1.msra.mxu0 0.0
        %6675 = vmatprep.subr.mxu0 0.0
        %6676 = vmatpush1.msra.mxu0 0.0
        %6677 = vmatprep.subr.mxu0 0.0
        %6678 = vmatpush1.msra.mxu0 0.0
        %6679 = vmatprep.mubr.f32.mxu0 0.0
        %v6680 = vand.u32 %v6199, 4294901760
        %6681 = vmatmul.mubr.f32.gmra.mrb[0].mxu0 %v6680
        %v6682 = vpop.f32.mrb[0].mxu0
        %v6683 = vadd.f32 %v6608, %v6682
        %v6684 = vpop.f32.mrb[0].mxu0
        %6685 = vdwg.mxu0
        %v6687 = vsel %vm1964, %v6197, 0
        %6689 = vmatprep.subr.mxu0 0.0
        %v6690 = vand.u32 %v4903, 4294901760
        %6691 = vmatpush1.msra.mxu0 %v6690
        %6692 = vmatprep.subr.mxu0 0.0
        %v6693 = vand.u32 %v4904, 4294901760
        %6694 = vmatpush1.msra.mxu0 %v6693
        %6695 = vmatprep.subr.mxu0 0.0
        %v6696 = vand.u32 %v4905, 4294901760
        %6697 = vmatpush1.msra.mxu0 %v6696
        %6698 = vmatprep.subr.mxu0 0.0
        %v6699 = vand.u32 %v4906, 4294901760
        %6700 = vmatpush1.msra.mxu0 %v6699
        %6701 = vmatprep.subr.mxu0 0.0
        %6702 = vmatpush1.msra.mxu0 0.0
        %6703 = vmatprep.subr.mxu0 0.0
        %6704 = vmatpush1.msra.mxu0 0.0
        %6705 = vmatprep.subr.mxu0 0.0
        %6706 = vmatpush1.msra.mxu0 0.0
        %6707 = vmatprep.subr.mxu0 0.0
        %6708 = vmatpush1.msra.mxu0 0.0
        %6709 = vmatprep.subr.mxu0 0.0
        %6710 = vmatpush1.msra.mxu0 0.0
        %6711 = vmatprep.subr.mxu0 0.0
        %6712 = vmatpush1.msra.mxu0 0.0
        %6713 = vmatprep.subr.mxu0 0.0
        %6714 = vmatpush1.msra.mxu0 0.0
        %6715 = vmatprep.subr.mxu0 0.0
        %6716 = vmatpush1.msra.mxu0 0.0
        %6717 = vmatprep.subr.mxu0 0.0
        %6718 = vmatpush1.msra.mxu0 0.0
        %6719 = vmatprep.subr.mxu0 0.0
        %6720 = vmatpush1.msra.mxu0 0.0
        %6721 = vmatprep.subr.mxu0 0.0
        %6722 = vmatpush1.msra.mxu0 0.0
        %6723 = vmatprep.subr.mxu0 0.0
        %6724 = vmatpush1.msra.mxu0 0.0
        %6725 = vmatprep.subr.mxu0 0.0
        %6726 = vmatpush1.msra.mxu0 0.0
        %6727 = vmatprep.subr.mxu0 0.0
        %6728 = vmatpush1.msra.mxu0 0.0
        %6729 = vmatprep.subr.mxu0 0.0
        %6730 = vmatpush1.msra.mxu0 0.0
        %6731 = vmatprep.subr.mxu0 0.0
        %6732 = vmatpush1.msra.mxu0 0.0
        %6733 = vmatprep.subr.mxu0 0.0
        %6734 = vmatpush1.msra.mxu0 0.0
        %6735 = vmatprep.subr.mxu0 0.0
        %6736 = vmatpush1.msra.mxu0 0.0
        %6737 = vmatprep.subr.mxu0 0.0
        %6738 = vmatpush1.msra.mxu0 0.0
        %6739 = vmatprep.subr.mxu0 0.0
        %6740 = vmatpush1.msra.mxu0 0.0
        %6741 = vmatprep.subr.mxu0 0.0
        %6742 = vmatpush1.msra.mxu0 0.0
        %6743 = vmatprep.subr.mxu0 0.0
        %6744 = vmatpush1.msra.mxu0 0.0
        %6745 = vmatprep.subr.mxu0 0.0
        %6746 = vmatpush1.msra.mxu0 0.0
        %6747 = vmatprep.subr.mxu0 0.0
        %6748 = vmatpush1.msra.mxu0 0.0
        %6749 = vmatprep.subr.mxu0 0.0
        %6750 = vmatpush1.msra.mxu0 0.0
        %6751 = vmatprep.subr.mxu0 0.0
        %6752 = vmatpush1.msra.mxu0 0.0
        %6753 = vmatprep.subr.mxu0 0.0
        %6754 = vmatpush1.msra.mxu0 0.0
        %6755 = vmatprep.subr.mxu0 0.0
        %6756 = vmatpush1.msra.mxu0 0.0
        %6757 = vmatprep.mubr.f32.mxu0 0.0
        %v6758 = vand.u32 %v6687, 4294901760
        %v6759 = vsub.f32 %v6687, %v6758
        %v6760 = vand.u32 %v6759, 4294901760
        %v6761 = vsub.f32 %v6759, %v6760
        %v6762 = vand.u32 %v6761, 4294901760
        %6763 = vmatmul.mubr.f32.gmra.mrb[0].mxu0 %v6762
        %v6764 = vpop.f32.mrb[0].mxu0
        %v6765 = vadd.f32 0.0, %v6764
        %v6766 = vpop.f32.mrb[0].mxu0
        %6767 = vdwg.mxu0
        %6768 = vmatprep.subr.mxu0 0.0
        %v6769 = vand.u32 %v4903, 4294901760
        %v6770 = vsub.f32 %v4903, %v6769
        %v6771 = vand.u32 %v6770, 4294901760
        %v6772 = vsub.f32 %v6770, %v6771
        %v6773 = vand.u32 %v6772, 4294901760
        %6774 = vmatpush1.msra.mxu0 %v6773
        %6775 = vmatprep.subr.mxu0 0.0
        %v6776 = vand.u32 %v4904, 4294901760
        %v6777 = vsub.f32 %v4904, %v6776
        %v6778 = vand.u32 %v6777, 4294901760
        %v6779 = vsub.f32 %v6777, %v6778
        %v6780 = vand.u32 %v6779, 4294901760
        %6781 = vmatpush1.msra.mxu0 %v6780
        %6782 = vmatprep.subr.mxu0 0.0
        %v6783 = vand.u32 %v4905, 4294901760
        %v6784 = vsub.f32 %v4905, %v6783
        %v6785 = vand.u32 %v6784, 4294901760
        %v6786 = vsub.f32 %v6784, %v6785
        %v6787 = vand.u32 %v6786, 4294901760
        %6788 = vmatpush1.msra.mxu0 %v6787
        %6789 = vmatprep.subr.mxu0 0.0
        %v6790 = vand.u32 %v4906, 4294901760
        %v6791 = vsub.f32 %v4906, %v6790
        %v6792 = vand.u32 %v6791, 4294901760
        %v6793 = vsub.f32 %v6791, %v6792
        %v6794 = vand.u32 %v6793, 4294901760
        %6795 = vmatpush1.msra.mxu0 %v6794
        %6796 = vmatprep.subr.mxu0 0.0
        %6797 = vmatpush1.msra.mxu0 0.0
        %6798 = vmatprep.subr.mxu0 0.0
        %6799 = vmatpush1.msra.mxu0 0.0
        %6800 = vmatprep.subr.mxu0 0.0
        %6801 = vmatpush1.msra.mxu0 0.0
        %6802 = vmatprep.subr.mxu0 0.0
        %6803 = vmatpush1.msra.mxu0 0.0
        %6804 = vmatprep.subr.mxu0 0.0
        %6805 = vmatpush1.msra.mxu0 0.0
        %6806 = vmatprep.subr.mxu0 0.0
        %6807 = vmatpush1.msra.mxu0 0.0
        %6808 = vmatprep.subr.mxu0 0.0
        %6809 = vmatpush1.msra.mxu0 0.0
        %6810 = vmatprep.subr.mxu0 0.0
        %6811 = vmatpush1.msra.mxu0 0.0
        %6812 = vmatprep.subr.mxu0 0.0
        %6813 = vmatpush1.msra.mxu0 0.0
        %6814 = vmatprep.subr.mxu0 0.0
        %6815 = vmatpush1.msra.mxu0 0.0
        %6816 = vmatprep.subr.mxu0 0.0
        %6817 = vmatpush1.msra.mxu0 0.0
        %6818 = vmatprep.subr.mxu0 0.0
        %6819 = vmatpush1.msra.mxu0 0.0
        %6820 = vmatprep.subr.mxu0 0.0
        %6821 = vmatpush1.msra.mxu0 0.0
        %6822 = vmatprep.subr.mxu0 0.0
        %6823 = vmatpush1.msra.mxu0 0.0
        %6824 = vmatprep.subr.mxu0 0.0
        %6825 = vmatpush1.msra.mxu0 0.0
        %6826 = vmatprep.subr.mxu0 0.0
        %6827 = vmatpush1.msra.mxu0 0.0
        %6828 = vmatprep.subr.mxu0 0.0
        %6829 = vmatpush1.msra.mxu0 0.0
        %6830 = vmatprep.subr.mxu0 0.0
        %6831 = vmatpush1.msra.mxu0 0.0
        %6832 = vmatprep.subr.mxu0 0.0
        %6833 = vmatpush1.msra.mxu0 0.0
        %6834 = vmatprep.subr.mxu0 0.0
        %6835 = vmatpush1.msra.mxu0 0.0
        %6836 = vmatprep.subr.mxu0 0.0
        %6837 = vmatpush1.msra.mxu0 0.0
        %6838 = vmatprep.subr.mxu0 0.0
        %6839 = vmatpush1.msra.mxu0 0.0
        %6840 = vmatprep.subr.mxu0 0.0
        %6841 = vmatpush1.msra.mxu0 0.0
        %6842 = vmatprep.subr.mxu0 0.0
        %6843 = vmatpush1.msra.mxu0 0.0
        %6844 = vmatprep.subr.mxu0 0.0
        %6845 = vmatpush1.msra.mxu0 0.0
        %6846 = vmatprep.subr.mxu0 0.0
        %6847 = vmatpush1.msra.mxu0 0.0
        %6848 = vmatprep.subr.mxu0 0.0
        %6849 = vmatpush1.msra.mxu0 0.0
        %6850 = vmatprep.subr.mxu0 0.0
        %6851 = vmatpush1.msra.mxu0 0.0
        %6852 = vmatprep.mubr.f32.mxu0 0.0
        %v6853 = vand.u32 %v6687, 4294901760
        %6854 = vmatmul.mubr.f32.gmra.mrb[0].mxu0 %v6853
        %v6855 = vpop.f32.mrb[0].mxu0
        %v6856 = vadd.f32 %v6765, %v6855
        %v6857 = vpop.f32.mrb[0].mxu0
        %6858 = vdwg.mxu0
        %6859 = vmatprep.subr.mxu0 0.0
        %v6860 = vand.u32 %v4903, 4294901760
        %v6861 = vsub.f32 %v4903, %v6860
        %6862 = vmatpush1.msra.mxu0 %v6861
        %6863 = vmatprep.subr.mxu0 0.0
        %v6864 = vand.u32 %v4904, 4294901760
        %v6865 = vsub.f32 %v4904, %v6864
        %6866 = vmatpush1.msra.mxu0 %v6865
        %6867 = vmatprep.subr.mxu0 0.0
        %v6868 = vand.u32 %v4905, 4294901760
        %v6869 = vsub.f32 %v4905, %v6868
        %6870 = vmatpush1.msra.mxu0 %v6869
        %6871 = vmatprep.subr.mxu0 0.0
        %v6872 = vand.u32 %v4906, 4294901760
        %v6873 = vsub.f32 %v4906, %v6872
        %6874 = vmatpush1.msra.mxu0 %v6873
        %6875 = vmatprep.subr.mxu0 0.0
        %6876 = vmatpush1.msra.mxu0 0.0
        %6877 = vmatprep.subr.mxu0 0.0
        %6878 = vmatpush1.msra.mxu0 0.0
        %6879 = vmatprep.subr.mxu0 0.0
        %6880 = vmatpush1.msra.mxu0 0.0
        %6881 = vmatprep.subr.mxu0 0.0
        %6882 = vmatpush1.msra.mxu0 0.0
        %6883 = vmatprep.subr.mxu0 0.0
        %6884 = vmatpush1.msra.mxu0 0.0
        %6885 = vmatprep.subr.mxu0 0.0
        %6886 = vmatpush1.msra.mxu0 0.0
        %6887 = vmatprep.subr.mxu0 0.0
        %6888 = vmatpush1.msra.mxu0 0.0
        %6889 = vmatprep.subr.mxu0 0.0
        %6890 = vmatpush1.msra.mxu0 0.0
        %6891 = vmatprep.subr.mxu0 0.0
        %6892 = vmatpush1.msra.mxu0 0.0
        %6893 = vmatprep.subr.mxu0 0.0
        %6894 = vmatpush1.msra.mxu0 0.0
        %6895 = vmatprep.subr.mxu0 0.0
        %6896 = vmatpush1.msra.mxu0 0.0
        %6897 = vmatprep.subr.mxu0 0.0
        %6898 = vmatpush1.msra.mxu0 0.0
        %6899 = vmatprep.subr.mxu0 0.0
        %6900 = vmatpush1.msra.mxu0 0.0
        %6901 = vmatprep.subr.mxu0 0.0
        %6902 = vmatpush1.msra.mxu0 0.0
        %6903 = vmatprep.subr.mxu0 0.0
        %6904 = vmatpush1.msra.mxu0 0.0
        %6905 = vmatprep.subr.mxu0 0.0
        %6906 = vmatpush1.msra.mxu0 0.0
        %6907 = vmatprep.subr.mxu0 0.0
        %6908 = vmatpush1.msra.mxu0 0.0
        %6909 = vmatprep.subr.mxu0 0.0
        %6910 = vmatpush1.msra.mxu0 0.0
        %6911 = vmatprep.subr.mxu0 0.0
        %6912 = vmatpush1.msra.mxu0 0.0
        %6913 = vmatprep.subr.mxu0 0.0
        %6914 = vmatpush1.msra.mxu0 0.0
        %6915 = vmatprep.subr.mxu0 0.0
        %6916 = vmatpush1.msra.mxu0 0.0
        %6917 = vmatprep.subr.mxu0 0.0
        %6918 = vmatpush1.msra.mxu0 0.0
        %6919 = vmatprep.subr.mxu0 0.0
        %6920 = vmatpush1.msra.mxu0 0.0
        %6921 = vmatprep.subr.mxu0 0.0
        %6922 = vmatpush1.msra.mxu0 0.0
        %6923 = vmatprep.subr.mxu0 0.0
        %6924 = vmatpush1.msra.mxu0 0.0
        %6925 = vmatprep.subr.mxu0 0.0
        %6926 = vmatpush1.msra.mxu0 0.0
        %6927 = vmatprep.subr.mxu0 0.0
        %6928 = vmatpush1.msra.mxu0 0.0
        %6929 = vmatprep.subr.mxu0 0.0
        %6930 = vmatpush1.msra.mxu0 0.0
        %6931 = vmatprep.mubr.f32.mxu0 0.0
        %v6932 = vand.u32 %v6687, 4294901760
        %v6933 = vsub.f32 %v6687, %v6932
        %6934 = vmatmul.mubr.f32.gmra.mrb[0].mxu0 %v6933
        %v6935 = vpop.f32.mrb[0].mxu0
        %v6936 = vadd.f32 %v6856, %v6935
        %v6937 = vpop.f32.mrb[0].mxu0
        %6938 = vdwg.mxu0
        %6939 = vmatprep.subr.mxu0 0.0
        %v6940 = vand.u32 %v4903, 4294901760
        %6941 = vmatpush1.msra.mxu0 %v6940
        %6942 = vmatprep.subr.mxu0 0.0
        %v6943 = vand.u32 %v4904, 4294901760
        %6944 = vmatpush1.msra.mxu0 %v6943
        %6945 = vmatprep.subr.mxu0 0.0
        %v6946 = vand.u32 %v4905, 4294901760
        %6947 = vmatpush1.msra.mxu0 %v6946
        %6948 = vmatprep.subr.mxu0 0.0
        %v6949 = vand.u32 %v4906, 4294901760
        %6950 = vmatpush1.msra.mxu0 %v6949
        %6951 = vmatprep.subr.mxu0 0.0
        %6952 = vmatpush1.msra.mxu0 0.0
        %6953 = vmatprep.subr.mxu0 0.0
        %6954 = vmatpush1.msra.mxu0 0.0
        %6955 = vmatprep.subr.mxu0 0.0
        %6956 = vmatpush1.msra.mxu0 0.0
        %6957 = vmatprep.subr.mxu0 0.0
        %6958 = vmatpush1.msra.mxu0 0.0
        %6959 = vmatprep.subr.mxu0 0.0
        %6960 = vmatpush1.msra.mxu0 0.0
        %6961 = vmatprep.subr.mxu0 0.0
        %6962 = vmatpush1.msra.mxu0 0.0
        %6963 = vmatprep.subr.mxu0 0.0
        %6964 = vmatpush1.msra.mxu0 0.0
        %6965 = vmatprep.subr.mxu0 0.0
        %6966 = vmatpush1.msra.mxu0 0.0
        %6967 = vmatprep.subr.mxu0 0.0
        %6968 = vmatpush1.msra.mxu0 0.0
        %6969 = vmatprep.subr.mxu0 0.0
        %6970 = vmatpush1.msra.mxu0 0.0
        %6971 = vmatprep.subr.mxu0 0.0
        %6972 = vmatpush1.msra.mxu0 0.0
        %6973 = vmatprep.subr.mxu0 0.0
        %6974 = vmatpush1.msra.mxu0 0.0
        %6975 = vmatprep.subr.mxu0 0.0
        %6976 = vmatpush1.msra.mxu0 0.0
        %6977 = vmatprep.subr.mxu0 0.0
        %6978 = vmatpush1.msra.mxu0 0.0
        %6979 = vmatprep.subr.mxu0 0.0
        %6980 = vmatpush1.msra.mxu0 0.0
        %6981 = vmatprep.subr.mxu0 0.0
        %6982 = vmatpush1.msra.mxu0 0.0
        %6983 = vmatprep.subr.mxu0 0.0
        %6984 = vmatpush1.msra.mxu0 0.0
        %6985 = vmatprep.subr.mxu0 0.0
        %6986 = vmatpush1.msra.mxu0 0.0
        %6987 = vmatprep.subr.mxu0 0.0
        %6988 = vmatpush1.msra.mxu0 0.0
        %6989 = vmatprep.subr.mxu0 0.0
        %6990 = vmatpush1.msra.mxu0 0.0
        %6991 = vmatprep.subr.mxu0 0.0
        %6992 = vmatpush1.msra.mxu0 0.0
        %6993 = vmatprep.subr.mxu0 0.0
        %6994 = vmatpush1.msra.mxu0 0.0
        %6995 = vmatprep.subr.mxu0 0.0
        %6996 = vmatpush1.msra.mxu0 0.0
        %6997 = vmatprep.subr.mxu0 0.0
        %6998 = vmatpush1.msra.mxu0 0.0
        %6999 = vmatprep.subr.mxu0 0.0
        %7000 = vmatpush1.msra.mxu0 0.0
        %7001 = vmatprep.subr.mxu0 0.0
        %7002 = vmatpush1.msra.mxu0 0.0
        %7003 = vmatprep.subr.mxu0 0.0
        %7004 = vmatpush1.msra.mxu0 0.0
        %7005 = vmatprep.subr.mxu0 0.0
        %7006 = vmatpush1.msra.mxu0 0.0
        %7007 = vmatprep.mubr.f32.mxu0 0.0
        %v7008 = vand.u32 %v6687, 4294901760
        %v7009 = vsub.f32 %v6687, %v7008
        %v7010 = vand.u32 %v7009, 4294901760
        %7011 = vmatmul.mubr.f32.gmra.mrb[0].mxu0 %v7010
        %v7012 = vpop.f32.mrb[0].mxu0
        %v7013 = vadd.f32 %v6936, %v7012
        %v7014 = vpop.f32.mrb[0].mxu0
        %7015 = vdwg.mxu0
        %7016 = vmatprep.subr.mxu0 0.0
        %v7017 = vand.u32 %v4903, 4294901760
        %v7018 = vsub.f32 %v4903, %v7017
        %v7019 = vand.u32 %v7018, 4294901760
        %7020 = vmatpush1.msra.mxu0 %v7019
        %7021 = vmatprep.subr.mxu0 0.0
        %v7022 = vand.u32 %v4904, 4294901760
        %v7023 = vsub.f32 %v4904, %v7022
        %v7024 = vand.u32 %v7023, 4294901760
        %7025 = vmatpush1.msra.mxu0 %v7024
        %7026 = vmatprep.subr.mxu0 0.0
        %v7027 = vand.u32 %v4905, 4294901760
        %v7028 = vsub.f32 %v4905, %v7027
        %v7029 = vand.u32 %v7028, 4294901760
        %7030 = vmatpush1.msra.mxu0 %v7029
        %7031 = vmatprep.subr.mxu0 0.0
        %v7032 = vand.u32 %v4906, 4294901760
        %v7033 = vsub.f32 %v4906, %v7032
        %v7034 = vand.u32 %v7033, 4294901760
        %7035 = vmatpush1.msra.mxu0 %v7034
        %7036 = vmatprep.subr.mxu0 0.0
        %7037 = vmatpush1.msra.mxu0 0.0
        %7038 = vmatprep.subr.mxu0 0.0
        %7039 = vmatpush1.msra.mxu0 0.0
        %7040 = vmatprep.subr.mxu0 0.0
        %7041 = vmatpush1.msra.mxu0 0.0
        %7042 = vmatprep.subr.mxu0 0.0
        %7043 = vmatpush1.msra.mxu0 0.0
        %7044 = vmatprep.subr.mxu0 0.0
        %7045 = vmatpush1.msra.mxu0 0.0
        %7046 = vmatprep.subr.mxu0 0.0
        %7047 = vmatpush1.msra.mxu0 0.0
        %7048 = vmatprep.subr.mxu0 0.0
        %7049 = vmatpush1.msra.mxu0 0.0
        %7050 = vmatprep.subr.mxu0 0.0
        %7051 = vmatpush1.msra.mxu0 0.0
        %7052 = vmatprep.subr.mxu0 0.0
        %7053 = vmatpush1.msra.mxu0 0.0
        %7054 = vmatprep.subr.mxu0 0.0
        %7055 = vmatpush1.msra.mxu0 0.0
        %7056 = vmatprep.subr.mxu0 0.0
        %7057 = vmatpush1.msra.mxu0 0.0
        %7058 = vmatprep.subr.mxu0 0.0
        %7059 = vmatpush1.msra.mxu0 0.0
        %7060 = vmatprep.subr.mxu0 0.0
        %7061 = vmatpush1.msra.mxu0 0.0
        %7062 = vmatprep.subr.mxu0 0.0
        %7063 = vmatpush1.msra.mxu0 0.0
        %7064 = vmatprep.subr.mxu0 0.0
        %7065 = vmatpush1.msra.mxu0 0.0
        %7066 = vmatprep.subr.mxu0 0.0
        %7067 = vmatpush1.msra.mxu0 0.0
        %7068 = vmatprep.subr.mxu0 0.0
        %7069 = vmatpush1.msra.mxu0 0.0
        %7070 = vmatprep.subr.mxu0 0.0
        %7071 = vmatpush1.msra.mxu0 0.0
        %7072 = vmatprep.subr.mxu0 0.0
        %7073 = vmatpush1.msra.mxu0 0.0
        %7074 = vmatprep.subr.mxu0 0.0
        %7075 = vmatpush1.msra.mxu0 0.0
        %7076 = vmatprep.subr.mxu0 0.0
        %7077 = vmatpush1.msra.mxu0 0.0
        %7078 = vmatprep.subr.mxu0 0.0
        %7079 = vmatpush1.msra.mxu0 0.0
        %7080 = vmatprep.subr.mxu0 0.0
        %7081 = vmatpush1.msra.mxu0 0.0
        %7082 = vmatprep.subr.mxu0 0.0
        %7083 = vmatpush1.msra.mxu0 0.0
        %7084 = vmatprep.subr.mxu0 0.0
        %7085 = vmatpush1.msra.mxu0 0.0
        %7086 = vmatprep.subr.mxu0 0.0
        %7087 = vmatpush1.msra.mxu0 0.0
        %7088 = vmatprep.subr.mxu0 0.0
        %7089 = vmatpush1.msra.mxu0 0.0
        %7090 = vmatprep.subr.mxu0 0.0
        %7091 = vmatpush1.msra.mxu0 0.0
        %7092 = vmatprep.mubr.f32.mxu0 0.0
        %v7093 = vand.u32 %v6687, 4294901760
        %7094 = vmatmul.mubr.f32.gmra.mrb[0].mxu0 %v7093
        %v7095 = vpop.f32.mrb[0].mxu0
        %v7096 = vadd.f32 %v7013, %v7095
        %v7097 = vpop.f32.mrb[0].mxu0
        %7098 = vdwg.mxu0
        %7099 = vmatprep.subr.mxu0 0.0
        %v7100 = vand.u32 %v4903, 4294901760
        %7101 = vmatpush1.msra.mxu0 %v7100
        %7102 = vmatprep.subr.mxu0 0.0
        %v7103 = vand.u32 %v4904, 4294901760
        %7104 = vmatpush1.msra.mxu0 %v7103
        %7105 = vmatprep.subr.mxu0 0.0
        %v7106 = vand.u32 %v4905, 4294901760
        %7107 = vmatpush1.msra.mxu0 %v7106
        %7108 = vmatprep.subr.mxu0 0.0
        %v7109 = vand.u32 %v4906, 4294901760
        %7110 = vmatpush1.msra.mxu0 %v7109
        %7111 = vmatprep.subr.mxu0 0.0
        %7112 = vmatpush1.msra.mxu0 0.0
        %7113 = vmatprep.subr.mxu0 0.0
        %7114 = vmatpush1.msra.mxu0 0.0
        %7115 = vmatprep.subr.mxu0 0.0
        %7116 = vmatpush1.msra.mxu0 0.0
        %7117 = vmatprep.subr.mxu0 0.0
        %7118 = vmatpush1.msra.mxu0 0.0
        %7119 = vmatprep.subr.mxu0 0.0
        %7120 = vmatpush1.msra.mxu0 0.0
        %7121 = vmatprep.subr.mxu0 0.0
        %7122 = vmatpush1.msra.mxu0 0.0
        %7123 = vmatprep.subr.mxu0 0.0
        %7124 = vmatpush1.msra.mxu0 0.0
        %7125 = vmatprep.subr.mxu0 0.0
        %7126 = vmatpush1.msra.mxu0 0.0
        %7127 = vmatprep.subr.mxu0 0.0
        %7128 = vmatpush1.msra.mxu0 0.0
        %7129 = vmatprep.subr.mxu0 0.0
        %7130 = vmatpush1.msra.mxu0 0.0
        %7131 = vmatprep.subr.mxu0 0.0
        %7132 = vmatpush1.msra.mxu0 0.0
        %7133 = vmatprep.subr.mxu0 0.0
        %7134 = vmatpush1.msra.mxu0 0.0
        %7135 = vmatprep.subr.mxu0 0.0
        %7136 = vmatpush1.msra.mxu0 0.0
        %7137 = vmatprep.subr.mxu0 0.0
        %7138 = vmatpush1.msra.mxu0 0.0
        %7139 = vmatprep.subr.mxu0 0.0
        %7140 = vmatpush1.msra.mxu0 0.0
        %7141 = vmatprep.subr.mxu0 0.0
        %7142 = vmatpush1.msra.mxu0 0.0
        %7143 = vmatprep.subr.mxu0 0.0
        %7144 = vmatpush1.msra.mxu0 0.0
        %7145 = vmatprep.subr.mxu0 0.0
        %7146 = vmatpush1.msra.mxu0 0.0
        %7147 = vmatprep.subr.mxu0 0.0
        %7148 = vmatpush1.msra.mxu0 0.0
        %7149 = vmatprep.subr.mxu0 0.0
        %7150 = vmatpush1.msra.mxu0 0.0
        %7151 = vmatprep.subr.mxu0 0.0
        %7152 = vmatpush1.msra.mxu0 0.0
        %7153 = vmatprep.subr.mxu0 0.0
        %7154 = vmatpush1.msra.mxu0 0.0
        %7155 = vmatprep.subr.mxu0 0.0
        %7156 = vmatpush1.msra.mxu0 0.0
        %7157 = vmatprep.subr.mxu0 0.0
        %7158 = vmatpush1.msra.mxu0 0.0
        %7159 = vmatprep.subr.mxu0 0.0
        %7160 = vmatpush1.msra.mxu0 0.0
        %7161 = vmatprep.subr.mxu0 0.0
        %7162 = vmatpush1.msra.mxu0 0.0
        %7163 = vmatprep.subr.mxu0 0.0
        %7164 = vmatpush1.msra.mxu0 0.0
        %7165 = vmatprep.subr.mxu0 0.0
        %7166 = vmatpush1.msra.mxu0 0.0
        %7167 = vmatprep.mubr.f32.mxu0 0.0
        %v7168 = vand.u32 %v6687, 4294901760
        %7169 = vmatmul.mubr.f32.gmra.mrb[0].mxu0 %v7168
        %v7170 = vpop.f32.mrb[0].mxu0
        %v7171 = vadd.f32 %v7096, %v7170
        %v7172 = vpop.f32.mrb[0].mxu0
        %7173 = vdwg.mxu0
        %v7174 = vmul.f32 %v7171, %v4907
        %v7175 = vmul.f32 %v6683, %v7174
        %v7176 = vsub.f32 %v4908, %v7175
        %v7177 = vlaneseq
        %v7178 = vshrl.u32 %v7177, 7
        %v7179 = vsub.s32 0, %v7178
        %v7180 = vrot.slane %v7174, %v7179
        %v7181 = vmul.f32 %v4808, %v7180
        %v7182 = vmul.f32 %v4814, %v7180
        %v7183 = vmul.f32 %v4820, %v7180
        %v7184 = vmul.f32 %v4826, %v7180
        %v7185 = vmul.f32 %v4832, %v7180
        %v7186 = vmul.f32 %v4838, %v7180
        %v7187 = vmul.f32 %v4844, %v7180
        %v7188 = vmul.f32 %v4850, %v7180
        %v7190 = vlaneseq
        %v7191 = vshrl.u32 %v7190, 7
        %v7192 = vsub.s32 0, %v7191
        %v7193 = vrot.slane %v7176, %v7192
        %v7195 = vadd.f32 %v7181, %v7193
        %v7196 = vadd.f32 %v7182, %v7193
        %v7197 = vadd.f32 %v7183, %v7193
        %v7198 = vadd.f32 %v7184, %v7193
        %v7199 = vadd.f32 %v7185, %v7193
        %v7200 = vadd.f32 %v7186, %v7193
        %v7201 = vadd.f32 %v7187, %v7193
        %v7202 = vadd.f32 %v7188, %v7193
        %v7203 = vmax.f32 %v7195, 0.0
        %v7204 = vmax.f32 %v7196, 0.0
        %v7205 = vmax.f32 %v7197, 0.0
        %v7206 = vmax.f32 %v7198, 0.0
        %v7207 = vmax.f32 %v7199, 0.0
        %v7208 = vmax.f32 %v7200, 0.0
        %v7209 = vmax.f32 %v7201, 0.0
        %v7210 = vmax.f32 %v7202, 0.0
        %7211 = vst [vmem:[%s541] sm:$0xff] %v7203
        %7212 = vst [vmem:[%s541 + $0x8] sm:$0xff] %v7204
        %7213 = vst [vmem:[%s541 + $0x10] sm:$0xff] %v7205
        %7214 = vst [vmem:[%s541 + $0x18] sm:$0xff] %v7206
        %7215 = vst [vmem:[%s541 + $0x20] sm:$0xff] %v7207
        %7216 = vst [vmem:[%s541 + $0x28] sm:$0xff] %v7208
        %7217 = vst [vmem:[%s541 + $0x30] sm:$0xff] %v7209
        %7218 = vst [vmem:[%s541 + $0x38] sm:$0xff] %v7210
        %s7219 = sand.u32 %s277, 1
        %s7220 = scalar_lea.sflag [#allocation5], %s7219
        %s7221 = sand.u32 %s277, 1
        %s7222 = smul.addr %s7221, 64
        %s7223 = scalar_lea.vmem [#allocation21], %s7222
        // Predicated region
        $region109: #{tpu_custom_call.1} parent=63 // pred_check
          %p7224 = pneg %p287
        $region110: #{tpu_custom_call.1} parent=63 // pred_check_branch
          %7226 = sbr.rel (%p7224) target = $region112
        $region111: #{tpu_custom_call.1} parent=63 // pred_region
          %s7228 = ssub.s32 1024, 1024
          %7229 = vsyncadd %s7220, %s7228
          %s7230 = smul.addr %s33, 8
          %s7231 = smul.addr %s7230, 128
          %s7232 = scalar_lea.hbm %s11, %s7231
          %s7233 = sshll.u32 %s7223, 4
          %s7234 = int_to_ptr.vmem [resolvable:$true] %s7233
          %7239 = dma.vmem_to_hbm [thread:$0]  %s7234, 1024, %s7232, %s7220, 128, 128, 8
        $region112: #{tpu_custom_call.1} parent=63 // pred_fallthru
          _
      $region64: #{tpu_custom_call.1} parent=5 // pred_fallthru
        _
      %p7240 = scmp.le.s32.totalorder 2, %s28
      // Predicated region
      $region113: #{tpu_custom_call.1} parent=5 // pred_check
        %p7241 = pneg %p7240
      $region114: #{tpu_custom_call.1} parent=5 // pred_check_branch
        %7243 = sbr.rel (%p7241) target = $region116
      $region115: #{tpu_custom_call.1} parent=5 // pred_region
        %s7244 = ssub.s32 %s28, 2
        // Predicated region
        $region117: #{tpu_custom_call.1} parent=115 // pred_check
          %p7245 = pneg %p293
        $region118: #{tpu_custom_call.1} parent=115 // pred_check_branch
          %7247 = sbr.rel (%p7245) target = $region120
        $region119: #{tpu_custom_call.1} parent=115 // pred_region
          %s7248 = sand.u32 %s278, 1
          %s7249 = scalar_lea.sflag [#allocation5], %s7248
          %s7250 = sand.u32 %s278, 1
          %s7251 = smul.addr %s7250, 64
          %s7252 = scalar_lea.vmem [#allocation21], %s7251
          %7253 = dma.done %s7249, 1024
        $region120: #{tpu_custom_call.1} parent=115 // pred_fallthru
          _
      $region116: #{tpu_custom_call.1} parent=5 // pred_fallthru
        _
    $region6: #{tpu_custom_call.1} parent=1 // loop_footer
      %s32 = sadd.s32 1, %s28
    $region7: #{tpu_custom_call.1} parent=1 // loop_footer_branch
      %27 = sbr.rel target = $region3
    $region8: #{tpu_custom_call.1} parent=1 // loop_exit
      _
    %7254 = vsyncpa [#allocation4], 1
    %s7255 = scalar_lea.sflag [#allocation4], 1
    %7256 = vsyncpa %s7255, 1
    %7257 = vsyncpa [#allocation7], 1
    %7258 = vsyncpa [#allocation10], 1
    %7259 = vsyncpa [#allocation13], 1
    %7260 = vsyncpa [#allocation16], 1
    %7261 = vsyncpa [#allocation19], 1
    %7262 = vsyncpa [#allocation5], 1
    %s7263 = scalar_lea.sflag [#allocation5], 1
    %7264 = vsyncpa %s7263, 1

</llo_original>
